<compile_context>
chip_gen: v7x
topology: tpu7x:2x2x1
jax: 0.10.0
libtpu: 0.0.40
codegen_flags: <defaults>
</compile_context>

<pallas_src>
import functools

import jax
import jax.numpy as jnp
from jax import lax
from jax.experimental import pallas as pl
from jax.experimental.pallas import tpu as pltpu


# ----------------------------------------------------------------------------
# Fused BIE kernel: shared ResidualBlock_noBN + 1x1 convs + LayerNorm2d +
# CxC cross-attention + unclustering + residual adds.   grid = (B,)
# ----------------------------------------------------------------------------
def _bie_fused_kernel(xpad_ref, wrb_ref, brb_ref, mask_ref, wfs_ref, wa1_ref,
                      wa2_ref, wc_ref, wu_ref, bp_ref, o12_ref, os_ref,
                      tpad_ref, *, h, w, c, scale, eps):
    f32, bf16 = jnp.float32, jnp.bfloat16
    wp = w + 2                       # wide row length (includes L/R pad cols)
    hwp = h * wp                     # rows of the wide grid
    hpwp = (h + 3) * wp              # rows of the padded frame (H pad (1,2))

    x1p = xpad_ref[0, 0]             # (HpWp, C) f32, zero-padded
    x2p = xpad_ref[0, 1]
    xsp = xpad_ref[0, 2]
    x1pb = x1p.astype(bf16)
    x2pb = x2p.astype(bf16)
    maskf = mask_ref[...]            # (HWp, 1): 1.0 real column, 0.0 pad column

    # -------- shared ResidualBlock_noBN on both streams (shift-and-acc) ------
    offs = [dy * wp + dx for dy in range(3) for dx in range(3)]

    def conv3x3(xb, widx):           # xb: (HpWp, C) bf16 value (zero-padded)
        acc = jnp.dot(xb[offs[0]:offs[0] + hwp, :], wrb_ref[widx, 0],
                      preferred_element_type=f32)
        for k in range(1, 9):
            o = offs[k]
            acc = acc + jnp.dot(xb[o:o + hwp, :], wrb_ref[widx, k],
                                preferred_element_type=f32)
        return acc                   # (HWp, C) f32

    b1, b2 = brb_ref[0:1, :], brb_ref[1:2, :]
    t1 = jnp.maximum(conv3x3(x1pb, 0) + b1, 0.0) * maskf   # mask pad columns
    t2 = jnp.maximum(conv3x3(x2pb, 0) + b1, 0.0) * maskf

    # re-embed the post-ReLU intermediate into a zero-padded bf16 frame: only
    # the halo rows need zeroing, the interior is fully rewritten every step.
    zhead = jnp.zeros((wp + 1, c), bf16)
    ztail = jnp.zeros((hpwp - hwp - wp - 1, c), bf16)
    tpad_ref[0, 0:wp + 1, :] = zhead
    tpad_ref[1, 0:wp + 1, :] = zhead
    tpad_ref[0, wp + 1 + hwp:hpwp, :] = ztail
    tpad_ref[1, wp + 1 + hwp:hpwp, :] = ztail
    tpad_ref[0, wp + 1:wp + 1 + hwp, :] = t1.astype(bf16)
    tpad_ref[1, wp + 1:wp + 1 + hwp, :] = t2.astype(bf16)

    r1 = conv3x3(tpad_ref[0], 1) + b2 + x1p[wp + 1:wp + 1 + hwp, :]   # x_1_
    r2 = conv3x3(tpad_ref[1], 1) + b2 + x2p[wp + 1:wp + 1 + hwp, :]   # x_2_

    # -------- 1x1 convs / LayerNorm2d / attention (wide grid) ----------------
    # wide views of the unpadded inputs: pad columns read the zero padding.
    x1w = x1pb[wp + 1:wp + 1 + hwp, :]
    x2w = x2pb[wp + 1:wp + 1 + hwp, :]
    xsw = xsp[wp + 1:wp + 1 + hwp, :]          # f32 (kept for the residual add)
    xswb = xsw.astype(bf16)

    bf_, gamma, beta = bp_ref[0:1, :], bp_ref[1:2, :], bp_ref[2:3, :]
    bc, bv1 = bp_ref[3:4, :], bp_ref[4:5, :]
    bv2, bu = bp_ref[5:6, :], bp_ref[6:7, :]

    # N-packed 1x1 convs: a1 = x1 @ [wf_x | wv1],  a2 = x2 @ [wf_x | wv2]
    fs = jnp.dot(xswb, wfs_ref[...], preferred_element_type=f32)
    a1 = jnp.dot(x1w, wa1_ref[...], preferred_element_type=f32)
    a2 = jnp.dot(x2w, wa2_ref[...], preferred_element_type=f32)
    f1 = fs + a2[:, :c] + bf_                  # convf1(cat[x_s, x_2])
    f2 = fs + a1[:, :c] + bf_                  # convf2(cat[x_s, x_1])
    v1 = (a1[:, c:] + bv1) * maskf             # mask pad rows out of the bmm
    v2 = (a2[:, c:] + bv2) * maskf

    def layernorm(f):                          # LayerNorm2d over channels
        mu = jnp.mean(f, axis=-1, keepdims=True)
        d = f - mu
        var = jnp.mean(d * d, axis=-1, keepdims=True)
        return (d * lax.rsqrt(var + eps)) * gamma + beta

    y1 = layernorm(f1).astype(bf16)
    y2 = layernorm(f2).astype(bf16)
    scc1 = jnp.dot(y1, wc_ref[...], preferred_element_type=f32) + bc
    scc2 = jnp.dot(y2, wc_ref[...], preferred_element_type=f32) + bc

    def attend(scc, v):
        sccb, vb = scc.astype(bf16), v.astype(bf16)
        # att[c, d] = sum_m scc[m, c] * v[m, d]   (== torch bmm(scc_cf, v))
        att = lax.dot_general(sccb, vb, (((0,), (0,)), ((), ())),
                              preferred_element_type=f32) * scale
        m = jnp.max(att, axis=-1, keepdims=True)
        e = jnp.exp(att - m)
        p = e * pl.reciprocal(jnp.sum(e, axis=-1, keepdims=True), approx=True)
        # out[m, c] = sum_d v[m, d] * p[c, d]
        return lax.dot_general(vb, p.astype(bf16), (((1,), (1,)), ((), ())),
                               preferred_element_type=f32)

    o1 = attend(scc1, v1) + r2                 # out_1 + x_2_
    o2 = attend(scc2, v2) + r1                 # out_2 + x_1_
    o12_ref[0] = jnp.concatenate([o1, o2], axis=-1)     # lane-dense (HWp, 2C)

    # unclustering as one K=2C matmul: [scc1 | scc2] @ [wu1 ; wu2]
    sccu = jnp.concatenate([scc1.astype(bf16), scc2.astype(bf16)], axis=-1)
    os_ref[0] = (jnp.dot(sccu, wu_ref[...], preferred_element_type=f32)
                 + bu + xsw)                             # x_s_


@jax.jit
def bie_forward(x1_nhwc, x2_nhwc, xs_nhwc, params):
    b, h, w, c = x1_nhwc.shape
    wp, hp = w + 2, h + 3
    hwp, hpwp = h * wp, hp * wp

    # one padded, stacked input for all three streams: H pad (1, 2), W pad (1, 1)
    x3 = jnp.stack([x1_nhwc, x2_nhwc, xs_nhwc], axis=1)           # (B,3,H,W,C)
    xpad = jnp.pad(x3, ((0, 0), (0, 0), (1, 2), (1, 1), (0, 0)))
    xpad = xpad.reshape(b, 3, hpwp, c)

    # packed bf16 weights / f32 biases
    wrb = jnp.stack([params["wrb1"], params["wrb2"]]).astype(jnp.bfloat16)
    brb = jnp.stack([params["brb1"], params["brb2"]])
    wfs = params["wf_s"].astype(jnp.bfloat16)
    wa1 = jnp.concatenate([params["wf_x"], params["wv1"]],
                          axis=1).astype(jnp.bfloat16)            # (C, 2C)
    wa2 = jnp.concatenate([params["wf_x"], params["wv2"]],
                          axis=1).astype(jnp.bfloat16)            # (C, 2C)
    wcc = params["wc"].astype(jnp.bfloat16)
    wu = jnp.concatenate([params["wu1"], params["wu2"]],
                         axis=0).astype(jnp.bfloat16)             # (2C, C)
    bp = jnp.stack([params["bf"], params["gamma"], params["beta"], params["bc"],
                    params["bv1"], params["bv2"], params["bu"]])

    # pad-column mask on the wide grid (tiny (HWp, 1) f32 operand)
    mask = (jnp.arange(hwp) % wp < w).astype(jnp.float32).reshape(hwp, 1)

    # per-step VMEM footprint -> scoped-VMEM limit (headroom; <= v7x physical)
    est = (2 * 3 * hpwp * c * 4           # double-buffered padded inputs
           + 2 * 3 * hwp * c * 4          # double-buffered outputs
           + 2 * hpwp * c * 2             # conv2 intermediate scratch (bf16)
           + 20 * hwp * c * 4             # live f32 temporaries (rough)
           + 26 * c * c * 2)              # weights
    vmem_limit = int(min(max(3 * est // 2, 32 * 1024 * 1024), 56 * 1024 * 1024))

    kernel = functools.partial(_bie_fused_kernel, h=h, w=w, c=c,
                               scale=float(c) ** (-0.5), eps=1e-6)
    o12, osd = pl.pallas_call(
        kernel,
        out_shape=(jax.ShapeDtypeStruct((b, hwp, 2 * c), jnp.float32),
                   jax.ShapeDtypeStruct((b, hwp, c), jnp.float32)),
        grid=(b,),
        in_specs=[pl.BlockSpec((1, 3, hpwp, c), lambda i: (i, 0, 0, 0)),
                  pl.BlockSpec((2, 9, c, c), lambda i: (0, 0, 0, 0)),
                  pl.BlockSpec((2, c), lambda i: (0, 0)),
                  pl.BlockSpec((hwp, 1), lambda i: (0, 0)),
                  pl.BlockSpec((c, c), lambda i: (0, 0)),
                  pl.BlockSpec((c, 2 * c), lambda i: (0, 0)),
                  pl.BlockSpec((c, 2 * c), lambda i: (0, 0)),
                  pl.BlockSpec((c, c), lambda i: (0, 0)),
                  pl.BlockSpec((2 * c, c), lambda i: (0, 0)),
                  pl.BlockSpec((7, c), lambda i: (0, 0))],
        out_specs=(pl.BlockSpec((1, hwp, 2 * c), lambda i: (i, 0, 0)),
                   pl.BlockSpec((1, hwp, c), lambda i: (i, 0, 0))),
        scratch_shapes=[pltpu.VMEM((2, hpwp, c), jnp.bfloat16)],
        compiler_params=pltpu.CompilerParams(
            dimension_semantics=("parallel",),
            vmem_limit_bytes=vmem_limit),
    )(xpad, wrb, brb, mask, wfs, wa1, wa2, wcc, wu, bp)

    # drop the horizontal-pad columns and split the lane-dense out_1|out_2 slab
    o12 = o12.reshape(b, h, wp, 2 * c)[:, :, :w, :]
    out1 = o12[..., :c]
    out2 = o12[..., c:]
    outs = osd.reshape(b, h, wp, c)[:, :, :w, :]
    return out1, out2, outs


# ----------------------------------------------------------------------------
# float32 (HIGHEST precision) pure-JAX reference of the PyTorch BIE.forward
# ----------------------------------------------------------------------------
def _resblock_ref(x, w9a, b1, w9b, b2):
    c = x.shape[-1]
    dn = ('NHWC', 'HWIO', 'NHWC')
    hp = lax.Precision.HIGHEST
    t = lax.conv_general_dilated(x, w9a.reshape(3, 3, c, c), (1, 1),
                                 ((1, 1), (1, 1)), dimension_numbers=dn,
                                 precision=hp) + b1
    t = jnp.maximum(t, 0.0)
    o = lax.conv_general_dilated(t, w9b.reshape(3, 3, c, c), (1, 1),
                                 ((1, 1), (1, 1)), dimension_numbers=dn,
                                 precision=hp) + b2
    return x + o


def bie_reference(x1, x2, xs, p):
    b, h, w, c = x1.shape
    hp = lax.Precision.HIGHEST
    mm = lambda a, wgt: jnp.einsum('bhwi,io->bhwo', a, wgt, precision=hp)

    r1 = _resblock_ref(x1, p["wrb1"], p["brb1"], p["wrb2"], p["brb2"])
    r2 = _resblock_ref(x2, p["wrb1"], p["brb1"], p["wrb2"], p["brb2"])

    f1 = mm(xs, p["wf_s"]) + mm(x2, p["wf_x"]) + p["bf"]
    f2 = mm(xs, p["wf_s"]) + mm(x1, p["wf_x"]) + p["bf"]

    def ln(f):
        mu = jnp.mean(f, -1, keepdims=True)
        var = jnp.mean((f - mu) ** 2, -1, keepdims=True)
        return (f - mu) / jnp.sqrt(var + 1e-6) * p["gamma"] + p["beta"]

    scc1 = mm(ln(f1), p["wc"]) + p["bc"]
    scc2 = mm(ln(f2), p["wc"]) + p["bc"]
    v1 = mm(x1, p["wv1"]) + p["bv1"]
    v2 = mm(x2, p["wv2"]) + p["bv2"]

    scale = float(c) ** (-0.5)

    def attn(scc, v):
        s = scc.reshape(b, h * w, c)
        vv = v.reshape(b, h * w, c)
        att = jnp.einsum('bmc,bmd->bcd', s, vv, precision=hp) * scale
        pr = jax.nn.softmax(att, axis=-1)
        return jnp.einsum('bmd,bcd->bmc', vv, pr, precision=hp).reshape(b, h, w, c)

    o1 = attn(scc1, v1) + r2
    o2 = attn(scc2, v2) + r1
    os = mm(scc1, p["wu1"]) + mm(scc2, p["wu2"]) + p["bu"] + xs
    return o1, o2, os


# ----------------------------------------------------------------------------
# Parameter init (kaiming fan_in * 0.1 like the torch module; small random
# biases/affines instead of zeros so the parity check exercises the masking).
# ----------------------------------------------------------------------------
def init_params(key, c):
    ks = jax.random.split(key, 18)

    def kaiming(k, shape, fan_in):
        return (jax.random.normal(k, shape, jnp.float32)
                * (2.0 / fan_in) ** 0.5 * 0.1)

    def small(k):
        return jax.random.normal(k, (c,), jnp.float32) * 0.1

    return {
        # ResidualBlock_noBN (shared between BIE.conv1 and BIE.conv2)
        "wrb1": kaiming(ks[0], (9, c, c), 9 * c), "brb1": small(ks[1]),
        "wrb2": kaiming(ks[2], (9, c, c), 9 * c), "brb2": small(ks[3]),
        # convf1 (== convf2): 1x1 conv 2C -> C, split over the channel concat
        "wf_s": kaiming(ks[4], (c, c), 2 * c),
        "wf_x": kaiming(ks[5], (c, c), 2 * c),
        "bf": small(ks[6]),
        # LayerNorm2d affine
        "gamma": 1.0 + 0.1 * jax.random.normal(ks[7], (c,), jnp.float32),
        "beta": small(ks[8]),
        # clustering / v1 / v2 1x1 convs
        "wc": kaiming(ks[9], (c, c), c), "bc": small(ks[10]),
        "wv1": kaiming(ks[11], (c, c), c), "bv1": small(ks[12]),
        "wv2": kaiming(ks[13], (c, c), c), "bv2": small(ks[14]),
        # unclustering 1x1 conv 2C -> C, split over the channel concat
        "wu1": kaiming(ks[15], (c, c), 2 * c),
        "wu2": kaiming(ks[16], (c, c), 2 * c),
        "bu": small(ks[17]),
    }


if __name__ == "__main__":
    B, H, W, NF = 2, 8, 8, 64   # nf=64 (module default), small spatial extent

    key = jax.random.PRNGKey(0)
    k_p, k1, k2, k3 = jax.random.split(key, 4)
    params = init_params(k_p, NF)

    x_1 = jax.random.normal(k1, (B, H, W, NF), jnp.float32)
    x_2 = jax.random.normal(k2, (B, H, W, NF), jnp.float32)
    x_s = jax.random.normal(k3, (B, H, W, NF), jnp.float32)

    out1, out2, outs = bie_forward(x_1, x_2, x_s, params)
    jax.block_until_ready((out1, out2, outs))

    # parity check against the float32 HIGHEST-precision reference
    ref1, ref2, refs = bie_reference(x_1, x_2, x_s, params)
    for name, got, ref in (("out1", out1, ref1), ("out2", out2, ref2),
                           ("x_s_", outs, refs)):
        assert got.shape == (B, H, W, NF), name
        assert bool(jnp.all(jnp.isfinite(got))), name
        err = float(jnp.max(jnp.abs(got - ref)))
        assert err < 2e-2, f"{name}: max abs err {err}"
    print("KERNEL_OK")
</pallas_src>

<mosaic_0001>
module attributes {stable_mosaic.version = 11 : i64} {
  func.func @_bie_fused_kernel(%arg0: i32, %arg1: memref<1x3x110x64xf32, #tpu.memory_space<vmem>>, %arg2: memref<2x9x64x64xbf16, #tpu.memory_space<vmem>>, %arg3: memref<2x64xf32, #tpu.memory_space<vmem>>, %arg4: memref<80x1xf32, #tpu.memory_space<vmem>>, %arg5: memref<64x64xbf16, #tpu.memory_space<vmem>>, %arg6: memref<64x128xbf16, #tpu.memory_space<vmem>>, %arg7: memref<64x128xbf16, #tpu.memory_space<vmem>>, %arg8: memref<64x64xbf16, #tpu.memory_space<vmem>>, %arg9: memref<128x64xbf16, #tpu.memory_space<vmem>>, %arg10: memref<7x64xf32, #tpu.memory_space<vmem>>, %arg11: memref<1x80x128xf32, #tpu.memory_space<vmem>>, %arg12: memref<1x80x64xf32, #tpu.memory_space<vmem>>, %arg13: memref<2x110x64xbf16, #tpu.memory_space<vmem>>) attributes {dimension_semantics = [#tpu.dimension_semantics<parallel>], iteration_bounds = array<i64: 2>, scalar_prefetch = 0 : i64, scratch_operands = 1 : i64, tpu.core_type = #tpu.core_type<tc>, window_params = [{transform_indices = @transform_0, window_bounds = array<i64: 1, 3, 110, 64>}, {pipeline_mode = #tpu.pipeline_mode<synchronous>, transform_indices = @transform_1, window_bounds = array<i64: 2, 9, 64, 64>}, {pipeline_mode = #tpu.pipeline_mode<synchronous>, transform_indices = @transform_2, window_bounds = array<i64: 2, 64>}, {pipeline_mode = #tpu.pipeline_mode<synchronous>, transform_indices = @transform_3, window_bounds = array<i64: 80, 1>}, {pipeline_mode = #tpu.pipeline_mode<synchronous>, transform_indices = @transform_4, window_bounds = array<i64: 64, 64>}, {pipeline_mode = #tpu.pipeline_mode<synchronous>, transform_indices = @transform_5, window_bounds = array<i64: 64, 128>}, {pipeline_mode = #tpu.pipeline_mode<synchronous>, transform_indices = @transform_6, window_bounds = array<i64: 64, 128>}, {pipeline_mode = #tpu.pipeline_mode<synchronous>, transform_indices = @transform_7, window_bounds = array<i64: 64, 64>}, {pipeline_mode = #tpu.pipeline_mode<synchronous>, transform_indices = @transform_8, window_bounds = array<i64: 128, 64>}, {pipeline_mode = #tpu.pipeline_mode<synchronous>, transform_indices = @transform_9, window_bounds = array<i64: 7, 64>}, {transform_indices = @transform_10, window_bounds = array<i64: 1, 80, 128>}, {transform_indices = @transform_11, window_bounds = array<i64: 1, 80, 64>}]} {
    %c0 = arith.constant 0 : index
    %c0_0 = arith.constant 0 : index
    %c0_1 = arith.constant 0 : index
    %c0_2 = arith.constant 0 : index
    %0 = vector.load %arg1[%c0, %c0_0, %c0_1, %c0_2] : memref<1x3x110x64xf32, #tpu.memory_space<vmem>>, vector<1x1x110x64xf32>
    %1 = vector.shape_cast %0 : vector<1x1x110x64xf32> to vector<110x64xf32>
    %c0_3 = arith.constant 0 : index
    %c1 = arith.constant 1 : index
    %c0_4 = arith.constant 0 : index
    %c0_5 = arith.constant 0 : index
    %2 = vector.load %arg1[%c0_3, %c1, %c0_4, %c0_5] : memref<1x3x110x64xf32, #tpu.memory_space<vmem>>, vector<1x1x110x64xf32>
    %3 = vector.shape_cast %2 : vector<1x1x110x64xf32> to vector<110x64xf32>
    %c0_6 = arith.constant 0 : index
    %c2 = arith.constant 2 : index
    %c0_7 = arith.constant 0 : index
    %c0_8 = arith.constant 0 : index
    %4 = vector.load %arg1[%c0_6, %c2, %c0_7, %c0_8] : memref<1x3x110x64xf32, #tpu.memory_space<vmem>>, vector<1x1x110x64xf32>
    %5 = vector.shape_cast %4 : vector<1x1x110x64xf32> to vector<110x64xf32>
    %6 = arith.truncf %1 : vector<110x64xf32> to vector<110x64xbf16>
    %7 = arith.truncf %3 : vector<110x64xf32> to vector<110x64xbf16>
    %c0_9 = arith.constant 0 : index
    %c0_10 = arith.constant 0 : index
    %8 = vector.load %arg4[%c0_9, %c0_10] : memref<80x1xf32, #tpu.memory_space<vmem>>, vector<80x1xf32>
    %c0_11 = arith.constant 0 : index
    %c0_12 = arith.constant 0 : index
    %9 = vector.load %arg3[%c0_11, %c0_12] : memref<2x64xf32, #tpu.memory_space<vmem>>, vector<1x64xf32>
    %c1_13 = arith.constant 1 : index
    %c0_14 = arith.constant 0 : index
    %10 = vector.load %arg3[%c1_13, %c0_14] : memref<2x64xf32, #tpu.memory_space<vmem>>, vector<1x64xf32>
    %11 = vector.extract_strided_slice %6 {offsets = [0, 0], sizes = [80, 64], strides = [1, 1]} : vector<110x64xbf16> to vector<80x64xbf16>
    %c0_15 = arith.constant 0 : index
    %c0_16 = arith.constant 0 : index
    %c0_17 = arith.constant 0 : index
    %c0_18 = arith.constant 0 : index
    %12 = vector.load %arg2[%c0_15, %c0_16, %c0_17, %c0_18] : memref<2x9x64x64xbf16, #tpu.memory_space<vmem>>, vector<1x1x64x64xbf16>
    %13 = vector.shape_cast %12 : vector<1x1x64x64xbf16> to vector<64x64xbf16>
    %cst = arith.constant dense<0.000000e+00> : vector<80x64xf32>
    %14 = tpu.matmul %11, %13, %cst {dimension_numbers = #tpu.dot_dimension_numbers<[1], [0], [0], [1], [0, 0, 1, 1], [], []>} : vector<80x64xbf16>, vector<64x64xbf16>, vector<80x64xf32> -> vector<80x64xf32>
    %15 = vector.extract_strided_slice %6 {offsets = [1, 0], sizes = [80, 64], strides = [1, 1]} : vector<110x64xbf16> to vector<80x64xbf16>
    %c0_19 = arith.constant 0 : index
    %c1_20 = arith.constant 1 : index
    %c0_21 = arith.constant 0 : index
    %c0_22 = arith.constant 0 : index
    %16 = vector.load %arg2[%c0_19, %c1_20, %c0_21, %c0_22] : memref<2x9x64x64xbf16, #tpu.memory_space<vmem>>, vector<1x1x64x64xbf16>
    %17 = vector.shape_cast %16 : vector<1x1x64x64xbf16> to vector<64x64xbf16>
    %cst_23 = arith.constant dense<0.000000e+00> : vector<80x64xf32>
    %18 = tpu.matmul %15, %17, %cst_23 {dimension_numbers = #tpu.dot_dimension_numbers<[1], [0], [0], [1], [0, 0, 1, 1], [], []>} : vector<80x64xbf16>, vector<64x64xbf16>, vector<80x64xf32> -> vector<80x64xf32>
    %19 = arith.addf %14, %18 : vector<80x64xf32>
    %20 = vector.extract_strided_slice %6 {offsets = [2, 0], sizes = [80, 64], strides = [1, 1]} : vector<110x64xbf16> to vector<80x64xbf16>
    %c0_24 = arith.constant 0 : index
    %c2_25 = arith.constant 2 : index
    %c0_26 = arith.constant 0 : index
    %c0_27 = arith.constant 0 : index
    %21 = vector.load %arg2[%c0_24, %c2_25, %c0_26, %c0_27] : memref<2x9x64x64xbf16, #tpu.memory_space<vmem>>, vector<1x1x64x64xbf16>
    %22 = vector.shape_cast %21 : vector<1x1x64x64xbf16> to vector<64x64xbf16>
    %cst_28 = arith.constant dense<0.000000e+00> : vector<80x64xf32>
    %23 = tpu.matmul %20, %22, %cst_28 {dimension_numbers = #tpu.dot_dimension_numbers<[1], [0], [0], [1], [0, 0, 1, 1], [], []>} : vector<80x64xbf16>, vector<64x64xbf16>, vector<80x64xf32> -> vector<80x64xf32>
    %24 = arith.addf %19, %23 : vector<80x64xf32>
    %25 = vector.extract_strided_slice %6 {offsets = [10, 0], sizes = [80, 64], strides = [1, 1]} : vector<110x64xbf16> to vector<80x64xbf16>
    %c0_29 = arith.constant 0 : index
    %c3 = arith.constant 3 : index
    %c0_30 = arith.constant 0 : index
    %c0_31 = arith.constant 0 : index
    %26 = vector.load %arg2[%c0_29, %c3, %c0_30, %c0_31] : memref<2x9x64x64xbf16, #tpu.memory_space<vmem>>, vector<1x1x64x64xbf16>
    %27 = vector.shape_cast %26 : vector<1x1x64x64xbf16> to vector<64x64xbf16>
    %cst_32 = arith.constant dense<0.000000e+00> : vector<80x64xf32>
    %28 = tpu.matmul %25, %27, %cst_32 {dimension_numbers = #tpu.dot_dimension_numbers<[1], [0], [0], [1], [0, 0, 1, 1], [], []>} : vector<80x64xbf16>, vector<64x64xbf16>, vector<80x64xf32> -> vector<80x64xf32>
    %29 = arith.addf %24, %28 : vector<80x64xf32>
    %30 = vector.extract_strided_slice %6 {offsets = [11, 0], sizes = [80, 64], strides = [1, 1]} : vector<110x64xbf16> to vector<80x64xbf16>
    %c0_33 = arith.constant 0 : index
    %c4 = arith.constant 4 : index
    %c0_34 = arith.constant 0 : index
    %c0_35 = arith.constant 0 : index
    %31 = vector.load %arg2[%c0_33, %c4, %c0_34, %c0_35] : memref<2x9x64x64xbf16, #tpu.memory_space<vmem>>, vector<1x1x64x64xbf16>
    %32 = vector.shape_cast %31 : vector<1x1x64x64xbf16> to vector<64x64xbf16>
    %cst_36 = arith.constant dense<0.000000e+00> : vector<80x64xf32>
    %33 = tpu.matmul %30, %32, %cst_36 {dimension_numbers = #tpu.dot_dimension_numbers<[1], [0], [0], [1], [0, 0, 1, 1], [], []>} : vector<80x64xbf16>, vector<64x64xbf16>, vector<80x64xf32> -> vector<80x64xf32>
    %34 = arith.addf %29, %33 : vector<80x64xf32>
    %35 = vector.extract_strided_slice %6 {offsets = [12, 0], sizes = [80, 64], strides = [1, 1]} : vector<110x64xbf16> to vector<80x64xbf16>
    %c0_37 = arith.constant 0 : index
    %c5 = arith.constant 5 : index
    %c0_38 = arith.constant 0 : index
    %c0_39 = arith.constant 0 : index
    %36 = vector.load %arg2[%c0_37, %c5, %c0_38, %c0_39] : memref<2x9x64x64xbf16, #tpu.memory_space<vmem>>, vector<1x1x64x64xbf16>
    %37 = vector.shape_cast %36 : vector<1x1x64x64xbf16> to vector<64x64xbf16>
    %cst_40 = arith.constant dense<0.000000e+00> : vector<80x64xf32>
    %38 = tpu.matmul %35, %37, %cst_40 {dimension_numbers = #tpu.dot_dimension_numbers<[1], [0], [0], [1], [0, 0, 1, 1], [], []>} : vector<80x64xbf16>, vector<64x64xbf16>, vector<80x64xf32> -> vector<80x64xf32>
    %39 = arith.addf %34, %38 : vector<80x64xf32>
    %40 = vector.extract_strided_slice %6 {offsets = [20, 0], sizes = [80, 64], strides = [1, 1]} : vector<110x64xbf16> to vector<80x64xbf16>
    %c0_41 = arith.constant 0 : index
    %c6 = arith.constant 6 : index
    %c0_42 = arith.constant 0 : index
    %c0_43 = arith.constant 0 : index
    %41 = vector.load %arg2[%c0_41, %c6, %c0_42, %c0_43] : memref<2x9x64x64xbf16, #tpu.memory_space<vmem>>, vector<1x1x64x64xbf16>
    %42 = vector.shape_cast %41 : vector<1x1x64x64xbf16> to vector<64x64xbf16>
    %cst_44 = arith.constant dense<0.000000e+00> : vector<80x64xf32>
    %43 = tpu.matmul %40, %42, %cst_44 {dimension_numbers = #tpu.dot_dimension_numbers<[1], [0], [0], [1], [0, 0, 1, 1], [], []>} : vector<80x64xbf16>, vector<64x64xbf16>, vector<80x64xf32> -> vector<80x64xf32>
    %44 = arith.addf %39, %43 : vector<80x64xf32>
    %45 = vector.extract_strided_slice %6 {offsets = [21, 0], sizes = [80, 64], strides = [1, 1]} : vector<110x64xbf16> to vector<80x64xbf16>
    %c0_45 = arith.constant 0 : index
    %c7 = arith.constant 7 : index
    %c0_46 = arith.constant 0 : index
    %c0_47 = arith.constant 0 : index
    %46 = vector.load %arg2[%c0_45, %c7, %c0_46, %c0_47] : memref<2x9x64x64xbf16, #tpu.memory_space<vmem>>, vector<1x1x64x64xbf16>
    %47 = vector.shape_cast %46 : vector<1x1x64x64xbf16> to vector<64x64xbf16>
    %cst_48 = arith.constant dense<0.000000e+00> : vector<80x64xf32>
    %48 = tpu.matmul %45, %47, %cst_48 {dimension_numbers = #tpu.dot_dimension_numbers<[1], [0], [0], [1], [0, 0, 1, 1], [], []>} : vector<80x64xbf16>, vector<64x64xbf16>, vector<80x64xf32> -> vector<80x64xf32>
    %49 = arith.addf %44, %48 : vector<80x64xf32>
    %50 = vector.extract_strided_slice %6 {offsets = [22, 0], sizes = [80, 64], strides = [1, 1]} : vector<110x64xbf16> to vector<80x64xbf16>
    %c0_49 = arith.constant 0 : index
    %c8 = arith.constant 8 : index
    %c0_50 = arith.constant 0 : index
    %c0_51 = arith.constant 0 : index
    %51 = vector.load %arg2[%c0_49, %c8, %c0_50, %c0_51] : memref<2x9x64x64xbf16, #tpu.memory_space<vmem>>, vector<1x1x64x64xbf16>
    %52 = vector.shape_cast %51 : vector<1x1x64x64xbf16> to vector<64x64xbf16>
    %cst_52 = arith.constant dense<0.000000e+00> : vector<80x64xf32>
    %53 = tpu.matmul %50, %52, %cst_52 {dimension_numbers = #tpu.dot_dimension_numbers<[1], [0], [0], [1], [0, 0, 1, 1], [], []>} : vector<80x64xbf16>, vector<64x64xbf16>, vector<80x64xf32> -> vector<80x64xf32>
    %54 = arith.addf %49, %53 : vector<80x64xf32>
    %55 = vector.broadcast %9 : vector<1x64xf32> to vector<80x64xf32>
    %56 = arith.addf %54, %55 : vector<80x64xf32>
    %cst_53 = arith.constant 0.000000e+00 : f32
    %57 = vector.broadcast %cst_53 : f32 to vector<80x64xf32>
    %58 = arith.maximumf %56, %57 : vector<80x64xf32>
    %59 = vector.broadcast %8 : vector<80x1xf32> to vector<80x64xf32>
    %60 = arith.mulf %58, %59 : vector<80x64xf32>
    %61 = vector.extract_strided_slice %7 {offsets = [0, 0], sizes = [80, 64], strides = [1, 1]} : vector<110x64xbf16> to vector<80x64xbf16>
    %c0_54 = arith.constant 0 : index
    %c0_55 = arith.constant 0 : index
    %c0_56 = arith.constant 0 : index
    %c0_57 = arith.constant 0 : index
    %62 = vector.load %arg2[%c0_54, %c0_55, %c0_56, %c0_57] : memref<2x9x64x64xbf16, #tpu.memory_space<vmem>>, vector<1x1x64x64xbf16>
    %63 = vector.shape_cast %62 : vector<1x1x64x64xbf16> to vector<64x64xbf16>
    %cst_58 = arith.constant dense<0.000000e+00> : vector<80x64xf32>
    %64 = tpu.matmul %61, %63, %cst_58 {dimension_numbers = #tpu.dot_dimension_numbers<[1], [0], [0], [1], [0, 0, 1, 1], [], []>} : vector<80x64xbf16>, vector<64x64xbf16>, vector<80x64xf32> -> vector<80x64xf32>
    %65 = vector.extract_strided_slice %7 {offsets = [1, 0], sizes = [80, 64], strides = [1, 1]} : vector<110x64xbf16> to vector<80x64xbf16>
    %c0_59 = arith.constant 0 : index
    %c1_60 = arith.constant 1 : index
    %c0_61 = arith.constant 0 : index
    %c0_62 = arith.constant 0 : index
    %66 = vector.load %arg2[%c0_59, %c1_60, %c0_61, %c0_62] : memref<2x9x64x64xbf16, #tpu.memory_space<vmem>>, vector<1x1x64x64xbf16>
    %67 = vector.shape_cast %66 : vector<1x1x64x64xbf16> to vector<64x64xbf16>
    %cst_63 = arith.constant dense<0.000000e+00> : vector<80x64xf32>
    %68 = tpu.matmul %65, %67, %cst_63 {dimension_numbers = #tpu.dot_dimension_numbers<[1], [0], [0], [1], [0, 0, 1, 1], [], []>} : vector<80x64xbf16>, vector<64x64xbf16>, vector<80x64xf32> -> vector<80x64xf32>
    %69 = arith.addf %64, %68 : vector<80x64xf32>
    %70 = vector.extract_strided_slice %7 {offsets = [2, 0], sizes = [80, 64], strides = [1, 1]} : vector<110x64xbf16> to vector<80x64xbf16>
    %c0_64 = arith.constant 0 : index
    %c2_65 = arith.constant 2 : index
    %c0_66 = arith.constant 0 : index
    %c0_67 = arith.constant 0 : index
    %71 = vector.load %arg2[%c0_64, %c2_65, %c0_66, %c0_67] : memref<2x9x64x64xbf16, #tpu.memory_space<vmem>>, vector<1x1x64x64xbf16>
    %72 = vector.shape_cast %71 : vector<1x1x64x64xbf16> to vector<64x64xbf16>
    %cst_68 = arith.constant dense<0.000000e+00> : vector<80x64xf32>
    %73 = tpu.matmul %70, %72, %cst_68 {dimension_numbers = #tpu.dot_dimension_numbers<[1], [0], [0], [1], [0, 0, 1, 1], [], []>} : vector<80x64xbf16>, vector<64x64xbf16>, vector<80x64xf32> -> vector<80x64xf32>
    %74 = arith.addf %69, %73 : vector<80x64xf32>
    %75 = vector.extract_strided_slice %7 {offsets = [10, 0], sizes = [80, 64], strides = [1, 1]} : vector<110x64xbf16> to vector<80x64xbf16>
    %c0_69 = arith.constant 0 : index
    %c3_70 = arith.constant 3 : index
    %c0_71 = arith.constant 0 : index
    %c0_72 = arith.constant 0 : index
    %76 = vector.load %arg2[%c0_69, %c3_70, %c0_71, %c0_72] : memref<2x9x64x64xbf16, #tpu.memory_space<vmem>>, vector<1x1x64x64xbf16>
    %77 = vector.shape_cast %76 : vector<1x1x64x64xbf16> to vector<64x64xbf16>
    %cst_73 = arith.constant dense<0.000000e+00> : vector<80x64xf32>
    %78 = tpu.matmul %75, %77, %cst_73 {dimension_numbers = #tpu.dot_dimension_numbers<[1], [0], [0], [1], [0, 0, 1, 1], [], []>} : vector<80x64xbf16>, vector<64x64xbf16>, vector<80x64xf32> -> vector<80x64xf32>
    %79 = arith.addf %74, %78 : vector<80x64xf32>
    %80 = vector.extract_strided_slice %7 {offsets = [11, 0], sizes = [80, 64], strides = [1, 1]} : vector<110x64xbf16> to vector<80x64xbf16>
    %c0_74 = arith.constant 0 : index
    %c4_75 = arith.constant 4 : index
    %c0_76 = arith.constant 0 : index
    %c0_77 = arith.constant 0 : index
    %81 = vector.load %arg2[%c0_74, %c4_75, %c0_76, %c0_77] : memref<2x9x64x64xbf16, #tpu.memory_space<vmem>>, vector<1x1x64x64xbf16>
    %82 = vector.shape_cast %81 : vector<1x1x64x64xbf16> to vector<64x64xbf16>
    %cst_78 = arith.constant dense<0.000000e+00> : vector<80x64xf32>
    %83 = tpu.matmul %80, %82, %cst_78 {dimension_numbers = #tpu.dot_dimension_numbers<[1], [0], [0], [1], [0, 0, 1, 1], [], []>} : vector<80x64xbf16>, vector<64x64xbf16>, vector<80x64xf32> -> vector<80x64xf32>
    %84 = arith.addf %79, %83 : vector<80x64xf32>
    %85 = vector.extract_strided_slice %7 {offsets = [12, 0], sizes = [80, 64], strides = [1, 1]} : vector<110x64xbf16> to vector<80x64xbf16>
    %c0_79 = arith.constant 0 : index
    %c5_80 = arith.constant 5 : index
    %c0_81 = arith.constant 0 : index
    %c0_82 = arith.constant 0 : index
    %86 = vector.load %arg2[%c0_79, %c5_80, %c0_81, %c0_82] : memref<2x9x64x64xbf16, #tpu.memory_space<vmem>>, vector<1x1x64x64xbf16>
    %87 = vector.shape_cast %86 : vector<1x1x64x64xbf16> to vector<64x64xbf16>
    %cst_83 = arith.constant dense<0.000000e+00> : vector<80x64xf32>
    %88 = tpu.matmul %85, %87, %cst_83 {dimension_numbers = #tpu.dot_dimension_numbers<[1], [0], [0], [1], [0, 0, 1, 1], [], []>} : vector<80x64xbf16>, vector<64x64xbf16>, vector<80x64xf32> -> vector<80x64xf32>
    %89 = arith.addf %84, %88 : vector<80x64xf32>
    %90 = vector.extract_strided_slice %7 {offsets = [20, 0], sizes = [80, 64], strides = [1, 1]} : vector<110x64xbf16> to vector<80x64xbf16>
    %c0_84 = arith.constant 0 : index
    %c6_85 = arith.constant 6 : index
    %c0_86 = arith.constant 0 : index
    %c0_87 = arith.constant 0 : index
    %91 = vector.load %arg2[%c0_84, %c6_85, %c0_86, %c0_87] : memref<2x9x64x64xbf16, #tpu.memory_space<vmem>>, vector<1x1x64x64xbf16>
    %92 = vector.shape_cast %91 : vector<1x1x64x64xbf16> to vector<64x64xbf16>
    %cst_88 = arith.constant dense<0.000000e+00> : vector<80x64xf32>
    %93 = tpu.matmul %90, %92, %cst_88 {dimension_numbers = #tpu.dot_dimension_numbers<[1], [0], [0], [1], [0, 0, 1, 1], [], []>} : vector<80x64xbf16>, vector<64x64xbf16>, vector<80x64xf32> -> vector<80x64xf32>
    %94 = arith.addf %89, %93 : vector<80x64xf32>
    %95 = vector.extract_strided_slice %7 {offsets = [21, 0], sizes = [80, 64], strides = [1, 1]} : vector<110x64xbf16> to vector<80x64xbf16>
    %c0_89 = arith.constant 0 : index
    %c7_90 = arith.constant 7 : index
    %c0_91 = arith.constant 0 : index
    %c0_92 = arith.constant 0 : index
    %96 = vector.load %arg2[%c0_89, %c7_90, %c0_91, %c0_92] : memref<2x9x64x64xbf16, #tpu.memory_space<vmem>>, vector<1x1x64x64xbf16>
    %97 = vector.shape_cast %96 : vector<1x1x64x64xbf16> to vector<64x64xbf16>
    %cst_93 = arith.constant dense<0.000000e+00> : vector<80x64xf32>
    %98 = tpu.matmul %95, %97, %cst_93 {dimension_numbers = #tpu.dot_dimension_numbers<[1], [0], [0], [1], [0, 0, 1, 1], [], []>} : vector<80x64xbf16>, vector<64x64xbf16>, vector<80x64xf32> -> vector<80x64xf32>
    %99 = arith.addf %94, %98 : vector<80x64xf32>
    %100 = vector.extract_strided_slice %7 {offsets = [22, 0], sizes = [80, 64], strides = [1, 1]} : vector<110x64xbf16> to vector<80x64xbf16>
    %c0_94 = arith.constant 0 : index
    %c8_95 = arith.constant 8 : index
    %c0_96 = arith.constant 0 : index
    %c0_97 = arith.constant 0 : index
    %101 = vector.load %arg2[%c0_94, %c8_95, %c0_96, %c0_97] : memref<2x9x64x64xbf16, #tpu.memory_space<vmem>>, vector<1x1x64x64xbf16>
    %102 = vector.shape_cast %101 : vector<1x1x64x64xbf16> to vector<64x64xbf16>
    %cst_98 = arith.constant dense<0.000000e+00> : vector<80x64xf32>
    %103 = tpu.matmul %100, %102, %cst_98 {dimension_numbers = #tpu.dot_dimension_numbers<[1], [0], [0], [1], [0, 0, 1, 1], [], []>} : vector<80x64xbf16>, vector<64x64xbf16>, vector<80x64xf32> -> vector<80x64xf32>
    %104 = arith.addf %99, %103 : vector<80x64xf32>
    %105 = vector.broadcast %9 : vector<1x64xf32> to vector<80x64xf32>
    %106 = arith.addf %104, %105 : vector<80x64xf32>
    %cst_99 = arith.constant 0.000000e+00 : f32
    %107 = vector.broadcast %cst_99 : f32 to vector<80x64xf32>
    %108 = arith.maximumf %106, %107 : vector<80x64xf32>
    %109 = vector.broadcast %8 : vector<80x1xf32> to vector<80x64xf32>
    %110 = arith.mulf %108, %109 : vector<80x64xf32>
    %cst_100 = arith.constant 0.000000e+00 : bf16
    %111 = vector.broadcast %cst_100 : bf16 to vector<11x64xbf16>
    %cst_101 = arith.constant 0.000000e+00 : bf16
    %112 = vector.broadcast %cst_101 : bf16 to vector<19x64xbf16>
    %c0_102 = arith.constant 0 : index
    %c0_103 = arith.constant 0 : index
    %c0_104 = arith.constant 0 : index
    %113 = vector.load %arg13[%c0_102, %c0_103, %c0_104] : memref<2x110x64xbf16, #tpu.memory_space<vmem>>, vector<1x11x64xbf16>
    %114 = vector.shape_cast %113 : vector<1x11x64xbf16> to vector<11x64xbf16>
    %115 = vector.shape_cast %111 : vector<11x64xbf16> to vector<1x11x64xbf16>
    tpu.vector_store %arg13[%c0_102, %c0_103, %c0_104], %115 {strides = array<i32>} : memref<2x110x64xbf16, #tpu.memory_space<vmem>>, vector<1x11x64xbf16>,
    %c1_105 = arith.constant 1 : index
    %c0_106 = arith.constant 0 : index
    %c0_107 = arith.constant 0 : index
    %116 = vector.load %arg13[%c1_105, %c0_106, %c0_107] : memref<2x110x64xbf16, #tpu.memory_space<vmem>>, vector<1x11x64xbf16>
    %117 = vector.shape_cast %116 : vector<1x11x64xbf16> to vector<11x64xbf16>
    %118 = vector.shape_cast %111 : vector<11x64xbf16> to vector<1x11x64xbf16>
    tpu.vector_store %arg13[%c1_105, %c0_106, %c0_107], %118 {strides = array<i32>} : memref<2x110x64xbf16, #tpu.memory_space<vmem>>, vector<1x11x64xbf16>,
    %c0_108 = arith.constant 0 : index
    %c91 = arith.constant 91 : index
    %c0_109 = arith.constant 0 : index
    %119 = vector.load %arg13[%c0_108, %c91, %c0_109] : memref<2x110x64xbf16, #tpu.memory_space<vmem>>, vector<1x19x64xbf16>
    %120 = vector.shape_cast %119 : vector<1x19x64xbf16> to vector<19x64xbf16>
    %121 = vector.shape_cast %112 : vector<19x64xbf16> to vector<1x19x64xbf16>
    tpu.vector_store %arg13[%c0_108, %c91, %c0_109], %121 {strides = array<i32>} : memref<2x110x64xbf16, #tpu.memory_space<vmem>>, vector<1x19x64xbf16>,
    %c1_110 = arith.constant 1 : index
    %c91_111 = arith.constant 91 : index
    %c0_112 = arith.constant 0 : index
    %122 = vector.load %arg13[%c1_110, %c91_111, %c0_112] : memref<2x110x64xbf16, #tpu.memory_space<vmem>>, vector<1x19x64xbf16>
    %123 = vector.shape_cast %122 : vector<1x19x64xbf16> to vector<19x64xbf16>
    %124 = vector.shape_cast %112 : vector<19x64xbf16> to vector<1x19x64xbf16>
    tpu.vector_store %arg13[%c1_110, %c91_111, %c0_112], %124 {strides = array<i32>} : memref<2x110x64xbf16, #tpu.memory_space<vmem>>, vector<1x19x64xbf16>,
    %125 = arith.truncf %60 : vector<80x64xf32> to vector<80x64xbf16>
    %c0_113 = arith.constant 0 : index
    %c11 = arith.constant 11 : index
    %c0_114 = arith.constant 0 : index
    %126 = vector.load %arg13[%c0_113, %c11, %c0_114] : memref<2x110x64xbf16, #tpu.memory_space<vmem>>, vector<1x80x64xbf16>
    %127 = vector.shape_cast %126 : vector<1x80x64xbf16> to vector<80x64xbf16>
    %128 = vector.shape_cast %125 : vector<80x64xbf16> to vector<1x80x64xbf16>
    tpu.vector_store %arg13[%c0_113, %c11, %c0_114], %128 {strides = array<i32>} : memref<2x110x64xbf16, #tpu.memory_space<vmem>>, vector<1x80x64xbf16>,
    %129 = arith.truncf %110 : vector<80x64xf32> to vector<80x64xbf16>
    %c1_115 = arith.constant 1 : index
    %c11_116 = arith.constant 11 : index
    %c0_117 = arith.constant 0 : index
    %130 = vector.load %arg13[%c1_115, %c11_116, %c0_117] : memref<2x110x64xbf16, #tpu.memory_space<vmem>>, vector<1x80x64xbf16>
    %131 = vector.shape_cast %130 : vector<1x80x64xbf16> to vector<80x64xbf16>
    %132 = vector.shape_cast %129 : vector<80x64xbf16> to vector<1x80x64xbf16>
    tpu.vector_store %arg13[%c1_115, %c11_116, %c0_117], %132 {strides = array<i32>} : memref<2x110x64xbf16, #tpu.memory_space<vmem>>, vector<1x80x64xbf16>,
    %c0_118 = arith.constant 0 : index
    %c0_119 = arith.constant 0 : index
    %c0_120 = arith.constant 0 : index
    %133 = vector.load %arg13[%c0_118, %c0_119, %c0_120] : memref<2x110x64xbf16, #tpu.memory_space<vmem>>, vector<1x110x64xbf16>
    %134 = vector.shape_cast %133 : vector<1x110x64xbf16> to vector<110x64xbf16>
    %135 = vector.extract_strided_slice %134 {offsets = [0, 0], sizes = [80, 64], strides = [1, 1]} : vector<110x64xbf16> to vector<80x64xbf16>
    %c1_121 = arith.constant 1 : index
    %c0_122 = arith.constant 0 : index
    %c0_123 = arith.constant 0 : index
    %c0_124 = arith.constant 0 : index
    %136 = vector.load %arg2[%c1_121, %c0_122, %c0_123, %c0_124] : memref<2x9x64x64xbf16, #tpu.memory_space<vmem>>, vector<1x1x64x64xbf16>
    %137 = vector.shape_cast %136 : vector<1x1x64x64xbf16> to vector<64x64xbf16>
    %cst_125 = arith.constant dense<0.000000e+00> : vector<80x64xf32>
    %138 = tpu.matmul %135, %137, %cst_125 {dimension_numbers = #tpu.dot_dimension_numbers<[1], [0], [0], [1], [0, 0, 1, 1], [], []>} : vector<80x64xbf16>, vector<64x64xbf16>, vector<80x64xf32> -> vector<80x64xf32>
    %139 = vector.extract_strided_slice %134 {offsets = [1, 0], sizes = [80, 64], strides = [1, 1]} : vector<110x64xbf16> to vector<80x64xbf16>
    %c1_126 = arith.constant 1 : index
    %c1_127 = arith.constant 1 : index
    %c0_128 = arith.constant 0 : index
    %c0_129 = arith.constant 0 : index
    %140 = vector.load %arg2[%c1_126, %c1_127, %c0_128, %c0_129] : memref<2x9x64x64xbf16, #tpu.memory_space<vmem>>, vector<1x1x64x64xbf16>
    %141 = vector.shape_cast %140 : vector<1x1x64x64xbf16> to vector<64x64xbf16>
    %cst_130 = arith.constant dense<0.000000e+00> : vector<80x64xf32>
    %142 = tpu.matmul %139, %141, %cst_130 {dimension_numbers = #tpu.dot_dimension_numbers<[1], [0], [0], [1], [0, 0, 1, 1], [], []>} : vector<80x64xbf16>, vector<64x64xbf16>, vector<80x64xf32> -> vector<80x64xf32>
    %143 = arith.addf %138, %142 : vector<80x64xf32>
    %144 = vector.extract_strided_slice %134 {offsets = [2, 0], sizes = [80, 64], strides = [1, 1]} : vector<110x64xbf16> to vector<80x64xbf16>
    %c1_131 = arith.constant 1 : index
    %c2_132 = arith.constant 2 : index
    %c0_133 = arith.constant 0 : index
    %c0_134 = arith.constant 0 : index
    %145 = vector.load %arg2[%c1_131, %c2_132, %c0_133, %c0_134] : memref<2x9x64x64xbf16, #tpu.memory_space<vmem>>, vector<1x1x64x64xbf16>
    %146 = vector.shape_cast %145 : vector<1x1x64x64xbf16> to vector<64x64xbf16>
    %cst_135 = arith.constant dense<0.000000e+00> : vector<80x64xf32>
    %147 = tpu.matmul %144, %146, %cst_135 {dimension_numbers = #tpu.dot_dimension_numbers<[1], [0], [0], [1], [0, 0, 1, 1], [], []>} : vector<80x64xbf16>, vector<64x64xbf16>, vector<80x64xf32> -> vector<80x64xf32>
    %148 = arith.addf %143, %147 : vector<80x64xf32>
    %149 = vector.extract_strided_slice %134 {offsets = [10, 0], sizes = [80, 64], strides = [1, 1]} : vector<110x64xbf16> to vector<80x64xbf16>
    %c1_136 = arith.constant 1 : index
    %c3_137 = arith.constant 3 : index
    %c0_138 = arith.constant 0 : index
    %c0_139 = arith.constant 0 : index
    %150 = vector.load %arg2[%c1_136, %c3_137, %c0_138, %c0_139] : memref<2x9x64x64xbf16, #tpu.memory_space<vmem>>, vector<1x1x64x64xbf16>
    %151 = vector.shape_cast %150 : vector<1x1x64x64xbf16> to vector<64x64xbf16>
    %cst_140 = arith.constant dense<0.000000e+00> : vector<80x64xf32>
    %152 = tpu.matmul %149, %151, %cst_140 {dimension_numbers = #tpu.dot_dimension_numbers<[1], [0], [0], [1], [0, 0, 1, 1], [], []>} : vector<80x64xbf16>, vector<64x64xbf16>, vector<80x64xf32> -> vector<80x64xf32>
    %153 = arith.addf %148, %152 : vector<80x64xf32>
    %154 = vector.extract_strided_slice %134 {offsets = [11, 0], sizes = [80, 64], strides = [1, 1]} : vector<110x64xbf16> to vector<80x64xbf16>
    %c1_141 = arith.constant 1 : index
    %c4_142 = arith.constant 4 : index
    %c0_143 = arith.constant 0 : index
    %c0_144 = arith.constant 0 : index
    %155 = vector.load %arg2[%c1_141, %c4_142, %c0_143, %c0_144] : memref<2x9x64x64xbf16, #tpu.memory_space<vmem>>, vector<1x1x64x64xbf16>
    %156 = vector.shape_cast %155 : vector<1x1x64x64xbf16> to vector<64x64xbf16>
    %cst_145 = arith.constant dense<0.000000e+00> : vector<80x64xf32>
    %157 = tpu.matmul %154, %156, %cst_145 {dimension_numbers = #tpu.dot_dimension_numbers<[1], [0], [0], [1], [0, 0, 1, 1], [], []>} : vector<80x64xbf16>, vector<64x64xbf16>, vector<80x64xf32> -> vector<80x64xf32>
    %158 = arith.addf %153, %157 : vector<80x64xf32>
    %159 = vector.extract_strided_slice %134 {offsets = [12, 0], sizes = [80, 64], strides = [1, 1]} : vector<110x64xbf16> to vector<80x64xbf16>
    %c1_146 = arith.constant 1 : index
    %c5_147 = arith.constant 5 : index
    %c0_148 = arith.constant 0 : index
    %c0_149 = arith.constant 0 : index
    %160 = vector.load %arg2[%c1_146, %c5_147, %c0_148, %c0_149] : memref<2x9x64x64xbf16, #tpu.memory_space<vmem>>, vector<1x1x64x64xbf16>
    %161 = vector.shape_cast %160 : vector<1x1x64x64xbf16> to vector<64x64xbf16>
    %cst_150 = arith.constant dense<0.000000e+00> : vector<80x64xf32>
    %162 = tpu.matmul %159, %161, %cst_150 {dimension_numbers = #tpu.dot_dimension_numbers<[1], [0], [0], [1], [0, 0, 1, 1], [], []>} : vector<80x64xbf16>, vector<64x64xbf16>, vector<80x64xf32> -> vector<80x64xf32>
    %163 = arith.addf %158, %162 : vector<80x64xf32>
    %164 = vector.extract_strided_slice %134 {offsets = [20, 0], sizes = [80, 64], strides = [1, 1]} : vector<110x64xbf16> to vector<80x64xbf16>
    %c1_151 = arith.constant 1 : index
    %c6_152 = arith.constant 6 : index
    %c0_153 = arith.constant 0 : index
    %c0_154 = arith.constant 0 : index
    %165 = vector.load %arg2[%c1_151, %c6_152, %c0_153, %c0_154] : memref<2x9x64x64xbf16, #tpu.memory_space<vmem>>, vector<1x1x64x64xbf16>
    %166 = vector.shape_cast %165 : vector<1x1x64x64xbf16> to vector<64x64xbf16>
    %cst_155 = arith.constant dense<0.000000e+00> : vector<80x64xf32>
    %167 = tpu.matmul %164, %166, %cst_155 {dimension_numbers = #tpu.dot_dimension_numbers<[1], [0], [0], [1], [0, 0, 1, 1], [], []>} : vector<80x64xbf16>, vector<64x64xbf16>, vector<80x64xf32> -> vector<80x64xf32>
    %168 = arith.addf %163, %167 : vector<80x64xf32>
    %169 = vector.extract_strided_slice %134 {offsets = [21, 0], sizes = [80, 64], strides = [1, 1]} : vector<110x64xbf16> to vector<80x64xbf16>
    %c1_156 = arith.constant 1 : index
    %c7_157 = arith.constant 7 : index
    %c0_158 = arith.constant 0 : index
    %c0_159 = arith.constant 0 : index
    %170 = vector.load %arg2[%c1_156, %c7_157, %c0_158, %c0_159] : memref<2x9x64x64xbf16, #tpu.memory_space<vmem>>, vector<1x1x64x64xbf16>
    %171 = vector.shape_cast %170 : vector<1x1x64x64xbf16> to vector<64x64xbf16>
    %cst_160 = arith.constant dense<0.000000e+00> : vector<80x64xf32>
    %172 = tpu.matmul %169, %171, %cst_160 {dimension_numbers = #tpu.dot_dimension_numbers<[1], [0], [0], [1], [0, 0, 1, 1], [], []>} : vector<80x64xbf16>, vector<64x64xbf16>, vector<80x64xf32> -> vector<80x64xf32>
    %173 = arith.addf %168, %172 : vector<80x64xf32>
    %174 = vector.extract_strided_slice %134 {offsets = [22, 0], sizes = [80, 64], strides = [1, 1]} : vector<110x64xbf16> to vector<80x64xbf16>
    %c1_161 = arith.constant 1 : index
    %c8_162 = arith.constant 8 : index
    %c0_163 = arith.constant 0 : index
    %c0_164 = arith.constant 0 : index
    %175 = vector.load %arg2[%c1_161, %c8_162, %c0_163, %c0_164] : memref<2x9x64x64xbf16, #tpu.memory_space<vmem>>, vector<1x1x64x64xbf16>
    %176 = vector.shape_cast %175 : vector<1x1x64x64xbf16> to vector<64x64xbf16>
    %cst_165 = arith.constant dense<0.000000e+00> : vector<80x64xf32>
    %177 = tpu.matmul %174, %176, %cst_165 {dimension_numbers = #tpu.dot_dimension_numbers<[1], [0], [0], [1], [0, 0, 1, 1], [], []>} : vector<80x64xbf16>, vector<64x64xbf16>, vector<80x64xf32> -> vector<80x64xf32>
    %178 = arith.addf %173, %177 : vector<80x64xf32>
    %179 = vector.broadcast %10 : vector<1x64xf32> to vector<80x64xf32>
    %180 = arith.addf %178, %179 : vector<80x64xf32>
    %181 = vector.extract_strided_slice %1 {offsets = [11, 0], sizes = [80, 64], strides = [1, 1]} : vector<110x64xf32> to vector<80x64xf32>
    %182 = arith.addf %180, %181 : vector<80x64xf32>
    %c1_166 = arith.constant 1 : index
    %c0_167 = arith.constant 0 : index
    %c0_168 = arith.constant 0 : index
    %183 = vector.load %arg13[%c1_166, %c0_167, %c0_168] : memref<2x110x64xbf16, #tpu.memory_space<vmem>>, vector<1x110x64xbf16>
    %184 = vector.shape_cast %183 : vector<1x110x64xbf16> to vector<110x64xbf16>
    %185 = vector.extract_strided_slice %184 {offsets = [0, 0], sizes = [80, 64], strides = [1, 1]} : vector<110x64xbf16> to vector<80x64xbf16>
    %c1_169 = arith.constant 1 : index
    %c0_170 = arith.constant 0 : index
    %c0_171 = arith.constant 0 : index
    %c0_172 = arith.constant 0 : index
    %186 = vector.load %arg2[%c1_169, %c0_170, %c0_171, %c0_172] : memref<2x9x64x64xbf16, #tpu.memory_space<vmem>>, vector<1x1x64x64xbf16>
    %187 = vector.shape_cast %186 : vector<1x1x64x64xbf16> to vector<64x64xbf16>
    %cst_173 = arith.constant dense<0.000000e+00> : vector<80x64xf32>
    %188 = tpu.matmul %185, %187, %cst_173 {dimension_numbers = #tpu.dot_dimension_numbers<[1], [0], [0], [1], [0, 0, 1, 1], [], []>} : vector<80x64xbf16>, vector<64x64xbf16>, vector<80x64xf32> -> vector<80x64xf32>
    %189 = vector.extract_strided_slice %184 {offsets = [1, 0], sizes = [80, 64], strides = [1, 1]} : vector<110x64xbf16> to vector<80x64xbf16>
    %c1_174 = arith.constant 1 : index
    %c1_175 = arith.constant 1 : index
    %c0_176 = arith.constant 0 : index
    %c0_177 = arith.constant 0 : index
    %190 = vector.load %arg2[%c1_174, %c1_175, %c0_176, %c0_177] : memref<2x9x64x64xbf16, #tpu.memory_space<vmem>>, vector<1x1x64x64xbf16>
    %191 = vector.shape_cast %190 : vector<1x1x64x64xbf16> to vector<64x64xbf16>
    %cst_178 = arith.constant dense<0.000000e+00> : vector<80x64xf32>
    %192 = tpu.matmul %189, %191, %cst_178 {dimension_numbers = #tpu.dot_dimension_numbers<[1], [0], [0], [1], [0, 0, 1, 1], [], []>} : vector<80x64xbf16>, vector<64x64xbf16>, vector<80x64xf32> -> vector<80x64xf32>
    %193 = arith.addf %188, %192 : vector<80x64xf32>
    %194 = vector.extract_strided_slice %184 {offsets = [2, 0], sizes = [80, 64], strides = [1, 1]} : vector<110x64xbf16> to vector<80x64xbf16>
    %c1_179 = arith.constant 1 : index
    %c2_180 = arith.constant 2 : index
    %c0_181 = arith.constant 0 : index
    %c0_182 = arith.constant 0 : index
    %195 = vector.load %arg2[%c1_179, %c2_180, %c0_181, %c0_182] : memref<2x9x64x64xbf16, #tpu.memory_space<vmem>>, vector<1x1x64x64xbf16>
    %196 = vector.shape_cast %195 : vector<1x1x64x64xbf16> to vector<64x64xbf16>
    %cst_183 = arith.constant dense<0.000000e+00> : vector<80x64xf32>
    %197 = tpu.matmul %194, %196, %cst_183 {dimension_numbers = #tpu.dot_dimension_numbers<[1], [0], [0], [1], [0, 0, 1, 1], [], []>} : vector<80x64xbf16>, vector<64x64xbf16>, vector<80x64xf32> -> vector<80x64xf32>
    %198 = arith.addf %193, %197 : vector<80x64xf32>
    %199 = vector.extract_strided_slice %184 {offsets = [10, 0], sizes = [80, 64], strides = [1, 1]} : vector<110x64xbf16> to vector<80x64xbf16>
    %c1_184 = arith.constant 1 : index
    %c3_185 = arith.constant 3 : index
    %c0_186 = arith.constant 0 : index
    %c0_187 = arith.constant 0 : index
    %200 = vector.load %arg2[%c1_184, %c3_185, %c0_186, %c0_187] : memref<2x9x64x64xbf16, #tpu.memory_space<vmem>>, vector<1x1x64x64xbf16>
    %201 = vector.shape_cast %200 : vector<1x1x64x64xbf16> to vector<64x64xbf16>
    %cst_188 = arith.constant dense<0.000000e+00> : vector<80x64xf32>
    %202 = tpu.matmul %199, %201, %cst_188 {dimension_numbers = #tpu.dot_dimension_numbers<[1], [0], [0], [1], [0, 0, 1, 1], [], []>} : vector<80x64xbf16>, vector<64x64xbf16>, vector<80x64xf32> -> vector<80x64xf32>
    %203 = arith.addf %198, %202 : vector<80x64xf32>
    %204 = vector.extract_strided_slice %184 {offsets = [11, 0], sizes = [80, 64], strides = [1, 1]} : vector<110x64xbf16> to vector<80x64xbf16>
    %c1_189 = arith.constant 1 : index
    %c4_190 = arith.constant 4 : index
    %c0_191 = arith.constant 0 : index
    %c0_192 = arith.constant 0 : index
    %205 = vector.load %arg2[%c1_189, %c4_190, %c0_191, %c0_192] : memref<2x9x64x64xbf16, #tpu.memory_space<vmem>>, vector<1x1x64x64xbf16>
    %206 = vector.shape_cast %205 : vector<1x1x64x64xbf16> to vector<64x64xbf16>
    %cst_193 = arith.constant dense<0.000000e+00> : vector<80x64xf32>
    %207 = tpu.matmul %204, %206, %cst_193 {dimension_numbers = #tpu.dot_dimension_numbers<[1], [0], [0], [1], [0, 0, 1, 1], [], []>} : vector<80x64xbf16>, vector<64x64xbf16>, vector<80x64xf32> -> vector<80x64xf32>
    %208 = arith.addf %203, %207 : vector<80x64xf32>
    %209 = vector.extract_strided_slice %184 {offsets = [12, 0], sizes = [80, 64], strides = [1, 1]} : vector<110x64xbf16> to vector<80x64xbf16>
    %c1_194 = arith.constant 1 : index
    %c5_195 = arith.constant 5 : index
    %c0_196 = arith.constant 0 : index
    %c0_197 = arith.constant 0 : index
    %210 = vector.load %arg2[%c1_194, %c5_195, %c0_196, %c0_197] : memref<2x9x64x64xbf16, #tpu.memory_space<vmem>>, vector<1x1x64x64xbf16>
    %211 = vector.shape_cast %210 : vector<1x1x64x64xbf16> to vector<64x64xbf16>
    %cst_198 = arith.constant dense<0.000000e+00> : vector<80x64xf32>
    %212 = tpu.matmul %209, %211, %cst_198 {dimension_numbers = #tpu.dot_dimension_numbers<[1], [0], [0], [1], [0, 0, 1, 1], [], []>} : vector<80x64xbf16>, vector<64x64xbf16>, vector<80x64xf32> -> vector<80x64xf32>
    %213 = arith.addf %208, %212 : vector<80x64xf32>
    %214 = vector.extract_strided_slice %184 {offsets = [20, 0], sizes = [80, 64], strides = [1, 1]} : vector<110x64xbf16> to vector<80x64xbf16>
    %c1_199 = arith.constant 1 : index
    %c6_200 = arith.constant 6 : index
    %c0_201 = arith.constant 0 : index
    %c0_202 = arith.constant 0 : index
    %215 = vector.load %arg2[%c1_199, %c6_200, %c0_201, %c0_202] : memref<2x9x64x64xbf16, #tpu.memory_space<vmem>>, vector<1x1x64x64xbf16>
    %216 = vector.shape_cast %215 : vector<1x1x64x64xbf16> to vector<64x64xbf16>
    %cst_203 = arith.constant dense<0.000000e+00> : vector<80x64xf32>
    %217 = tpu.matmul %214, %216, %cst_203 {dimension_numbers = #tpu.dot_dimension_numbers<[1], [0], [0], [1], [0, 0, 1, 1], [], []>} : vector<80x64xbf16>, vector<64x64xbf16>, vector<80x64xf32> -> vector<80x64xf32>
    %218 = arith.addf %213, %217 : vector<80x64xf32>
    %219 = vector.extract_strided_slice %184 {offsets = [21, 0], sizes = [80, 64], strides = [1, 1]} : vector<110x64xbf16> to vector<80x64xbf16>
    %c1_204 = arith.constant 1 : index
    %c7_205 = arith.constant 7 : index
    %c0_206 = arith.constant 0 : index
    %c0_207 = arith.constant 0 : index
    %220 = vector.load %arg2[%c1_204, %c7_205, %c0_206, %c0_207] : memref<2x9x64x64xbf16, #tpu.memory_space<vmem>>, vector<1x1x64x64xbf16>
    %221 = vector.shape_cast %220 : vector<1x1x64x64xbf16> to vector<64x64xbf16>
    %cst_208 = arith.constant dense<0.000000e+00> : vector<80x64xf32>
    %222 = tpu.matmul %219, %221, %cst_208 {dimension_numbers = #tpu.dot_dimension_numbers<[1], [0], [0], [1], [0, 0, 1, 1], [], []>} : vector<80x64xbf16>, vector<64x64xbf16>, vector<80x64xf32> -> vector<80x64xf32>
    %223 = arith.addf %218, %222 : vector<80x64xf32>
    %224 = vector.extract_strided_slice %184 {offsets = [22, 0], sizes = [80, 64], strides = [1, 1]} : vector<110x64xbf16> to vector<80x64xbf16>
    %c1_209 = arith.constant 1 : index
    %c8_210 = arith.constant 8 : index
    %c0_211 = arith.constant 0 : index
    %c0_212 = arith.constant 0 : index
    %225 = vector.load %arg2[%c1_209, %c8_210, %c0_211, %c0_212] : memref<2x9x64x64xbf16, #tpu.memory_space<vmem>>, vector<1x1x64x64xbf16>
    %226 = vector.shape_cast %225 : vector<1x1x64x64xbf16> to vector<64x64xbf16>
    %cst_213 = arith.constant dense<0.000000e+00> : vector<80x64xf32>
    %227 = tpu.matmul %224, %226, %cst_213 {dimension_numbers = #tpu.dot_dimension_numbers<[1], [0], [0], [1], [0, 0, 1, 1], [], []>} : vector<80x64xbf16>, vector<64x64xbf16>, vector<80x64xf32> -> vector<80x64xf32>
    %228 = arith.addf %223, %227 : vector<80x64xf32>
    %229 = vector.broadcast %10 : vector<1x64xf32> to vector<80x64xf32>
    %230 = arith.addf %228, %229 : vector<80x64xf32>
    %231 = vector.extract_strided_slice %3 {offsets = [11, 0], sizes = [80, 64], strides = [1, 1]} : vector<110x64xf32> to vector<80x64xf32>
    %232 = arith.addf %230, %231 : vector<80x64xf32>
    %233 = vector.extract_strided_slice %6 {offsets = [11, 0], sizes = [80, 64], strides = [1, 1]} : vector<110x64xbf16> to vector<80x64xbf16>
    %234 = vector.extract_strided_slice %7 {offsets = [11, 0], sizes = [80, 64], strides = [1, 1]} : vector<110x64xbf16> to vector<80x64xbf16>
    %235 = vector.extract_strided_slice %5 {offsets = [11, 0], sizes = [80, 64], strides = [1, 1]} : vector<110x64xf32> to vector<80x64xf32>
    %236 = arith.truncf %235 : vector<80x64xf32> to vector<80x64xbf16>
    %c0_214 = arith.constant 0 : index
    %c0_215 = arith.constant 0 : index
    %237 = vector.load %arg10[%c0_214, %c0_215] : memref<7x64xf32, #tpu.memory_space<vmem>>, vector<1x64xf32>
    %c1_216 = arith.constant 1 : index
    %c0_217 = arith.constant 0 : index
    %238 = vector.load %arg10[%c1_216, %c0_217] : memref<7x64xf32, #tpu.memory_space<vmem>>, vector<1x64xf32>
    %c2_218 = arith.constant 2 : index
    %c0_219 = arith.constant 0 : index
    %239 = vector.load %arg10[%c2_218, %c0_219] : memref<7x64xf32, #tpu.memory_space<vmem>>, vector<1x64xf32>
    %c3_220 = arith.constant 3 : index
    %c0_221 = arith.constant 0 : index
    %240 = vector.load %arg10[%c3_220, %c0_221] : memref<7x64xf32, #tpu.memory_space<vmem>>, vector<1x64xf32>
    %c4_222 = arith.constant 4 : index
    %c0_223 = arith.constant 0 : index
    %241 = vector.load %arg10[%c4_222, %c0_223] : memref<7x64xf32, #tpu.memory_space<vmem>>, vector<1x64xf32>
    %c5_224 = arith.constant 5 : index
    %c0_225 = arith.constant 0 : index
    %242 = vector.load %arg10[%c5_224, %c0_225] : memref<7x64xf32, #tpu.memory_space<vmem>>, vector<1x64xf32>
    %c6_226 = arith.constant 6 : index
    %c0_227 = arith.constant 0 : index
    %243 = vector.load %arg10[%c6_226, %c0_227] : memref<7x64xf32, #tpu.memory_space<vmem>>, vector<1x64xf32>
    %c0_228 = arith.constant 0 : index
    %c0_229 = arith.constant 0 : index
    %244 = vector.load %arg5[%c0_228, %c0_229] : memref<64x64xbf16, #tpu.memory_space<vmem>>, vector<64x64xbf16>
    %cst_230 = arith.constant dense<0.000000e+00> : vector<80x64xf32>
    %245 = tpu.matmul %236, %244, %cst_230 {dimension_numbers = #tpu.dot_dimension_numbers<[1], [0], [0], [1], [0, 0, 1, 1], [], []>} : vector<80x64xbf16>, vector<64x64xbf16>, vector<80x64xf32> -> vector<80x64xf32>
    %c0_231 = arith.constant 0 : index
    %c0_232 = arith.constant 0 : index
    %246 = vector.load %arg6[%c0_231, %c0_232] : memref<64x128xbf16, #tpu.memory_space<vmem>>, vector<64x128xbf16>
    %cst_233 = arith.constant dense<0.000000e+00> : vector<80x128xf32>
    %247 = tpu.matmul %233, %246, %cst_233 {dimension_numbers = #tpu.dot_dimension_numbers<[1], [0], [0], [1], [0, 0, 1, 1], [], []>} : vector<80x64xbf16>, vector<64x128xbf16>, vector<80x128xf32> -> vector<80x128xf32>
    %c0_234 = arith.constant 0 : index
    %c0_235 = arith.constant 0 : index
    %248 = vector.load %arg7[%c0_234, %c0_235] : memref<64x128xbf16, #tpu.memory_space<vmem>>, vector<64x128xbf16>
    %cst_236 = arith.constant dense<0.000000e+00> : vector<80x128xf32>
    %249 = tpu.matmul %234, %248, %cst_236 {dimension_numbers = #tpu.dot_dimension_numbers<[1], [0], [0], [1], [0, 0, 1, 1], [], []>} : vector<80x64xbf16>, vector<64x128xbf16>, vector<80x128xf32> -> vector<80x128xf32>
    %250 = vector.extract_strided_slice %249 {offsets = [0, 0], sizes = [80, 64], strides = [1, 1]} : vector<80x128xf32> to vector<80x64xf32>
    %251 = arith.addf %245, %250 : vector<80x64xf32>
    %252 = vector.broadcast %237 : vector<1x64xf32> to vector<80x64xf32>
    %253 = arith.addf %251, %252 : vector<80x64xf32>
    %254 = vector.extract_strided_slice %247 {offsets = [0, 0], sizes = [80, 64], strides = [1, 1]} : vector<80x128xf32> to vector<80x64xf32>
    %255 = arith.addf %245, %254 : vector<80x64xf32>
    %256 = vector.broadcast %237 : vector<1x64xf32> to vector<80x64xf32>
    %257 = arith.addf %255, %256 : vector<80x64xf32>
    %258 = vector.extract_strided_slice %247 {offsets = [0, 64], sizes = [80, 64], strides = [1, 1]} : vector<80x128xf32> to vector<80x64xf32>
    %259 = vector.broadcast %241 : vector<1x64xf32> to vector<80x64xf32>
    %260 = arith.addf %258, %259 : vector<80x64xf32>
    %261 = vector.broadcast %8 : vector<80x1xf32> to vector<80x64xf32>
    %262 = arith.mulf %260, %261 : vector<80x64xf32>
    %263 = vector.extract_strided_slice %249 {offsets = [0, 64], sizes = [80, 64], strides = [1, 1]} : vector<80x128xf32> to vector<80x64xf32>
    %264 = vector.broadcast %242 : vector<1x64xf32> to vector<80x64xf32>
    %265 = arith.addf %263, %264 : vector<80x64xf32>
    %266 = vector.broadcast %8 : vector<80x1xf32> to vector<80x64xf32>
    %267 = arith.mulf %265, %266 : vector<80x64xf32>
    %cst_237 = arith.constant dense<0.000000e+00> : vector<80xf32>
    %268 = vector.multi_reduction <add>, %253, %cst_237 [1] : vector<80x64xf32> to vector<80xf32>
    %269 = vector.shape_cast %268 : vector<80xf32> to vector<80x1xf32>
    %cst_238 = arith.constant 6.400000e+01 : f32
    %270 = vector.broadcast %cst_238 : f32 to vector<80x1xf32>
    %271 = arith.divf %269, %270 : vector<80x1xf32>
    %272 = vector.broadcast %271 : vector<80x1xf32> to vector<80x64xf32>
    %273 = arith.subf %253, %272 : vector<80x64xf32>
    %274 = arith.mulf %273, %273 : vector<80x64xf32>
    %cst_239 = arith.constant dense<0.000000e+00> : vector<80xf32>
    %275 = vector.multi_reduction <add>, %274, %cst_239 [1] : vector<80x64xf32> to vector<80xf32>
    %276 = vector.shape_cast %275 : vector<80xf32> to vector<80x1xf32>
    %cst_240 = arith.constant 6.400000e+01 : f32
    %277 = vector.broadcast %cst_240 : f32 to vector<80x1xf32>
    %278 = arith.divf %276, %277 : vector<80x1xf32>
    %cst_241 = arith.constant 9.99999997E-7 : f32
    %279 = vector.broadcast %cst_241 : f32 to vector<80x1xf32>
    %280 = arith.addf %278, %279 : vector<80x1xf32>
    %281 = math.rsqrt %280 : vector<80x1xf32>
    %282 = vector.broadcast %281 : vector<80x1xf32> to vector<80x64xf32>
    %283 = arith.mulf %273, %282 : vector<80x64xf32>
    %284 = vector.broadcast %238 : vector<1x64xf32> to vector<80x64xf32>
    %285 = arith.mulf %283, %284 : vector<80x64xf32>
    %286 = vector.broadcast %239 : vector<1x64xf32> to vector<80x64xf32>
    %287 = arith.addf %285, %286 : vector<80x64xf32>
    %288 = arith.truncf %287 : vector<80x64xf32> to vector<80x64xbf16>
    %cst_242 = arith.constant dense<0.000000e+00> : vector<80xf32>
    %289 = vector.multi_reduction <add>, %257, %cst_242 [1] : vector<80x64xf32> to vector<80xf32>
    %290 = vector.shape_cast %289 : vector<80xf32> to vector<80x1xf32>
    %cst_243 = arith.constant 6.400000e+01 : f32
    %291 = vector.broadcast %cst_243 : f32 to vector<80x1xf32>
    %292 = arith.divf %290, %291 : vector<80x1xf32>
    %293 = vector.broadcast %292 : vector<80x1xf32> to vector<80x64xf32>
    %294 = arith.subf %257, %293 : vector<80x64xf32>
    %295 = arith.mulf %294, %294 : vector<80x64xf32>
    %cst_244 = arith.constant dense<0.000000e+00> : vector<80xf32>
    %296 = vector.multi_reduction <add>, %295, %cst_244 [1] : vector<80x64xf32> to vector<80xf32>
    %297 = vector.shape_cast %296 : vector<80xf32> to vector<80x1xf32>
    %cst_245 = arith.constant 6.400000e+01 : f32
    %298 = vector.broadcast %cst_245 : f32 to vector<80x1xf32>
    %299 = arith.divf %297, %298 : vector<80x1xf32>
    %cst_246 = arith.constant 9.99999997E-7 : f32
    %300 = vector.broadcast %cst_246 : f32 to vector<80x1xf32>
    %301 = arith.addf %299, %300 : vector<80x1xf32>
    %302 = math.rsqrt %301 : vector<80x1xf32>
    %303 = vector.broadcast %302 : vector<80x1xf32> to vector<80x64xf32>
    %304 = arith.mulf %294, %303 : vector<80x64xf32>
    %305 = vector.broadcast %238 : vector<1x64xf32> to vector<80x64xf32>
    %306 = arith.mulf %304, %305 : vector<80x64xf32>
    %307 = vector.broadcast %239 : vector<1x64xf32> to vector<80x64xf32>
    %308 = arith.addf %306, %307 : vector<80x64xf32>
    %309 = arith.truncf %308 : vector<80x64xf32> to vector<80x64xbf16>
    %c0_247 = arith.constant 0 : index
    %c0_248 = arith.constant 0 : index
    %310 = vector.load %arg8[%c0_247, %c0_248] : memref<64x64xbf16, #tpu.memory_space<vmem>>, vector<64x64xbf16>
    %cst_249 = arith.constant dense<0.000000e+00> : vector<80x64xf32>
    %311 = tpu.matmul %288, %310, %cst_249 {dimension_numbers = #tpu.dot_dimension_numbers<[1], [0], [0], [1], [0, 0, 1, 1], [], []>} : vector<80x64xbf16>, vector<64x64xbf16>, vector<80x64xf32> -> vector<80x64xf32>
    %312 = vector.broadcast %240 : vector<1x64xf32> to vector<80x64xf32>
    %313 = arith.addf %311, %312 : vector<80x64xf32>
    %c0_250 = arith.constant 0 : index
    %c0_251 = arith.constant 0 : index
    %314 = vector.load %arg8[%c0_250, %c0_251] : memref<64x64xbf16, #tpu.memory_space<vmem>>, vector<64x64xbf16>
    %cst_252 = arith.constant dense<0.000000e+00> : vector<80x64xf32>
    %315 = tpu.matmul %309, %314, %cst_252 {dimension_numbers = #tpu.dot_dimension_numbers<[1], [0], [0], [1], [0, 0, 1, 1], [], []>} : vector<80x64xbf16>, vector<64x64xbf16>, vector<80x64xf32> -> vector<80x64xf32>
    %316 = vector.broadcast %240 : vector<1x64xf32> to vector<80x64xf32>
    %317 = arith.addf %315, %316 : vector<80x64xf32>
    %318 = arith.truncf %313 : vector<80x64xf32> to vector<80x64xbf16>
    %319 = arith.truncf %262 : vector<80x64xf32> to vector<80x64xbf16>
    %cst_253 = arith.constant dense<0.000000e+00> : vector<64x64xf32>
    %320 = tpu.matmul %318, %319, %cst_253 {dimension_numbers = #tpu.dot_dimension_numbers<[0], [0], [1], [1], [0, 1, 1, 1], [], []>} : vector<80x64xbf16>, vector<80x64xbf16>, vector<64x64xf32> -> vector<64x64xf32>
    %cst_254 = arith.constant 1.250000e-01 : f32
    %321 = vector.broadcast %cst_254 : f32 to vector<64x64xf32>
    %322 = arith.mulf %320, %321 : vector<64x64xf32>
    %cst_255 = arith.constant dense<0xFF800000> : vector<64xf32>
    %323 = vector.multi_reduction <maximumf>, %322, %cst_255 [1] : vector<64x64xf32> to vector<64xf32>
    %324 = vector.shape_cast %323 : vector<64xf32> to vector<64x1xf32>
    %325 = vector.broadcast %324 : vector<64x1xf32> to vector<64x64xf32>
    %326 = arith.subf %322, %325 : vector<64x64xf32>
    %327 = math.exp %326 : vector<64x64xf32>
    %cst_256 = arith.constant dense<0.000000e+00> : vector<64xf32>
    %328 = vector.multi_reduction <add>, %327, %cst_256 [1] : vector<64x64xf32> to vector<64xf32>
    %329 = vector.shape_cast %328 : vector<64xf32> to vector<64x1xf32>
    %330 = tpu.reciprocal %329 {approx = true} : vector<64x1xf32> -> vector<64x1xf32>
    %331 = vector.broadcast %330 : vector<64x1xf32> to vector<64x64xf32>
    %332 = arith.mulf %327, %331 : vector<64x64xf32>
    %333 = arith.truncf %332 : vector<64x64xf32> to vector<64x64xbf16>
    %cst_257 = arith.constant dense<0.000000e+00> : vector<80x64xf32>
    %334 = tpu.matmul %319, %333, %cst_257 {dimension_numbers = #tpu.dot_dimension_numbers<[1], [1], [0], [0], [0, 0, 1, 0], [], []>} : vector<80x64xbf16>, vector<64x64xbf16>, vector<80x64xf32> -> vector<80x64xf32>
    %335 = arith.addf %334, %232 : vector<80x64xf32>
    %336 = arith.truncf %317 : vector<80x64xf32> to vector<80x64xbf16>
    %337 = arith.truncf %267 : vector<80x64xf32> to vector<80x64xbf16>
    %cst_258 = arith.constant dense<0.000000e+00> : vector<64x64xf32>
    %338 = tpu.matmul %336, %337, %cst_258 {dimension_numbers = #tpu.dot_dimension_numbers<[0], [0], [1], [1], [0, 1, 1, 1], [], []>} : vector<80x64xbf16>, vector<80x64xbf16>, vector<64x64xf32> -> vector<64x64xf32>
    %cst_259 = arith.constant 1.250000e-01 : f32
    %339 = vector.broadcast %cst_259 : f32 to vector<64x64xf32>
    %340 = arith.mulf %338, %339 : vector<64x64xf32>
    %cst_260 = arith.constant dense<0xFF800000> : vector<64xf32>
    %341 = vector.multi_reduction <maximumf>, %340, %cst_260 [1] : vector<64x64xf32> to vector<64xf32>
    %342 = vector.shape_cast %341 : vector<64xf32> to vector<64x1xf32>
    %343 = vector.broadcast %342 : vector<64x1xf32> to vector<64x64xf32>
    %344 = arith.subf %340, %343 : vector<64x64xf32>
    %345 = math.exp %344 : vector<64x64xf32>
    %cst_261 = arith.constant dense<0.000000e+00> : vector<64xf32>
    %346 = vector.multi_reduction <add>, %345, %cst_261 [1] : vector<64x64xf32> to vector<64xf32>
    %347 = vector.shape_cast %346 : vector<64xf32> to vector<64x1xf32>
    %348 = tpu.reciprocal %347 {approx = true} : vector<64x1xf32> -> vector<64x1xf32>
    %349 = vector.broadcast %348 : vector<64x1xf32> to vector<64x64xf32>
    %350 = arith.mulf %345, %349 : vector<64x64xf32>
    %351 = arith.truncf %350 : vector<64x64xf32> to vector<64x64xbf16>
    %cst_262 = arith.constant dense<0.000000e+00> : vector<80x64xf32>
    %352 = tpu.matmul %337, %351, %cst_262 {dimension_numbers = #tpu.dot_dimension_numbers<[1], [1], [0], [0], [0, 0, 1, 0], [], []>} : vector<80x64xbf16>, vector<64x64xbf16>, vector<80x64xf32> -> vector<80x64xf32>
    %353 = arith.addf %352, %182 : vector<80x64xf32>
    %354 = tpu.concatenate %335, %353 in 1 : vector<80x64xf32>, vector<80x64xf32> -> vector<80x128xf32>
    %c0_263 = arith.constant 0 : index
    %c0_264 = arith.constant 0 : index
    %c0_265 = arith.constant 0 : index
    %355 = vector.load %arg11[%c0_263, %c0_264, %c0_265] : memref<1x80x128xf32, #tpu.memory_space<vmem>>, vector<1x80x128xf32>
    %356 = vector.shape_cast %355 : vector<1x80x128xf32> to vector<80x128xf32>
    %357 = vector.shape_cast %354 : vector<80x128xf32> to vector<1x80x128xf32>
    tpu.vector_store %arg11[%c0_263, %c0_264, %c0_265], %357 {strides = array<i32>} : memref<1x80x128xf32, #tpu.memory_space<vmem>>, vector<1x80x128xf32>,
    %358 = arith.truncf %313 : vector<80x64xf32> to vector<80x64xbf16>
    %359 = arith.truncf %317 : vector<80x64xf32> to vector<80x64xbf16>
    %360 = tpu.concatenate %358, %359 in 1 : vector<80x64xbf16>, vector<80x64xbf16> -> vector<80x128xbf16>
    %c0_266 = arith.constant 0 : index
    %c0_267 = arith.constant 0 : index
    %361 = vector.load %arg9[%c0_266, %c0_267] : memref<128x64xbf16, #tpu.memory_space<vmem>>, vector<128x64xbf16>
    %cst_268 = arith.constant dense<0.000000e+00> : vector<80x64xf32>
    %362 = tpu.matmul %360, %361, %cst_268 {dimension_numbers = #tpu.dot_dimension_numbers<[1], [0], [0], [1], [0, 0, 1, 1], [], []>} : vector<80x128xbf16>, vector<128x64xbf16>, vector<80x64xf32> -> vector<80x64xf32>
    %363 = vector.broadcast %243 : vector<1x64xf32> to vector<80x64xf32>
    %364 = arith.addf %362, %363 : vector<80x64xf32>
    %365 = arith.addf %364, %235 : vector<80x64xf32>
    %c0_269 = arith.constant 0 : index
    %c0_270 = arith.constant 0 : index
    %c0_271 = arith.constant 0 : index
    %366 = vector.load %arg12[%c0_269, %c0_270, %c0_271] : memref<1x80x64xf32, #tpu.memory_space<vmem>>, vector<1x80x64xf32>
    %367 = vector.shape_cast %366 : vector<1x80x64xf32> to vector<80x64xf32>
    %368 = vector.shape_cast %365 : vector<80x64xf32> to vector<1x80x64xf32>
    tpu.vector_store %arg12[%c0_269, %c0_270, %c0_271], %368 {strides = array<i32>} : memref<1x80x64xf32, #tpu.memory_space<vmem>>, vector<1x80x64xf32>,
    return
  }
  func.func @transform_0(%arg0: i32) -> (i32, i32, i32, i32) {
    %c0_i32 = arith.constant 0 : i32
    %c0_i32_0 = arith.constant 0 : i32
    %c0_i32_1 = arith.constant 0 : i32
    %c0_i32_2 = arith.constant 0 : i32
    return %arg0, %c0_i32, %c0_i32_0, %c0_i32_1 : i32, i32, i32, i32
  }
  func.func @transform_1(%arg0: i32) -> (i32, i32, i32, i32) {
    %c0_i32 = arith.constant 0 : i32
    %c0_i32_0 = arith.constant 0 : i32
    %c0_i32_1 = arith.constant 0 : i32
    %c0_i32_2 = arith.constant 0 : i32
    %c0_i32_3 = arith.constant 0 : i32
    return %c0_i32, %c0_i32_0, %c0_i32_1, %c0_i32_2 : i32, i32, i32, i32
  }
  func.func @transform_2(%arg0: i32) -> (i32, i32) {
    %c0_i32 = arith.constant 0 : i32
    %c0_i32_0 = arith.constant 0 : i32
    %c0_i32_1 = arith.constant 0 : i32
    return %c0_i32, %c0_i32_0 : i32, i32
  }
  func.func @transform_3(%arg0: i32) -> (i32, i32) {
    %c0_i32 = arith.constant 0 : i32
    %c0_i32_0 = arith.constant 0 : i32
    %c0_i32_1 = arith.constant 0 : i32
    return %c0_i32, %c0_i32_0 : i32, i32
  }
  func.func @transform_4(%arg0: i32) -> (i32, i32) {
    %c0_i32 = arith.constant 0 : i32
    %c0_i32_0 = arith.constant 0 : i32
    %c0_i32_1 = arith.constant 0 : i32
    return %c0_i32, %c0_i32_0 : i32, i32
  }
  func.func @transform_5(%arg0: i32) -> (i32, i32) {
    %c0_i32 = arith.constant 0 : i32
    %c0_i32_0 = arith.constant 0 : i32
    %c0_i32_1 = arith.constant 0 : i32
    return %c0_i32, %c0_i32_0 : i32, i32
  }
  func.func @transform_6(%arg0: i32) -> (i32, i32) {
    %c0_i32 = arith.constant 0 : i32
    %c0_i32_0 = arith.constant 0 : i32
    %c0_i32_1 = arith.constant 0 : i32
    return %c0_i32, %c0_i32_0 : i32, i32
  }
  func.func @transform_7(%arg0: i32) -> (i32, i32) {
    %c0_i32 = arith.constant 0 : i32
    %c0_i32_0 = arith.constant 0 : i32
    %c0_i32_1 = arith.constant 0 : i32
    return %c0_i32, %c0_i32_0 : i32, i32
  }
  func.func @transform_8(%arg0: i32) -> (i32, i32) {
    %c0_i32 = arith.constant 0 : i32
    %c0_i32_0 = arith.constant 0 : i32
    %c0_i32_1 = arith.constant 0 : i32
    return %c0_i32, %c0_i32_0 : i32, i32
  }
  func.func @transform_9(%arg0: i32) -> (i32, i32) {
    %c0_i32 = arith.constant 0 : i32
    %c0_i32_0 = arith.constant 0 : i32
    %c0_i32_1 = arith.constant 0 : i32
    return %c0_i32, %c0_i32_0 : i32, i32
  }
  func.func @transform_10(%arg0: i32) -> (i32, i32, i32) {
    %c0_i32 = arith.constant 0 : i32
    %c0_i32_0 = arith.constant 0 : i32
    %c0_i32_1 = arith.constant 0 : i32
    return %arg0, %c0_i32, %c0_i32_0 : i32, i32, i32
  }
  func.func @transform_11(%arg0: i32) -> (i32, i32, i32) {
    %c0_i32 = arith.constant 0 : i32
    %c0_i32_0 = arith.constant 0 : i32
    %c0_i32_1 = arith.constant 0 : i32
    return %arg0, %c0_i32, %c0_i32_0 : i32, i32, i32
  }
}

</mosaic_0001>

<llo_original>
// kernel: bie_forward.1
$region0: #{bie_forward.1}
  #allocation0 [shape = 'u32[]', space=smem, size = 0x4, offset = 0x4, fixed_abs, tag = 'smem constant byte address 0x4 - core index']
  #allocation1 [shape = 'u32[144,128]{1,0:T(1,128)}', space=vmem, size = 0x12000, scoped, tag = 'internal scratch']
  #allocation2 [shape = 'bf16[2,110,64]{2,1,0:T(8,128)(2,1)}', space=vmem, size = 0xe000, scoped, tag = 'scratch operand']
  %s0 = inlined_call_operand.vmem [shape: f32[2,3,110,64], index: 0, kind: input, shape index: {}]
  %s1 = inlined_call_operand.vmem [shape: bf16[2,9,64,64], index: 1, kind: input, shape index: {}]
  %s2 = inlined_call_operand.vmem [shape: f32[2,64], index: 2, kind: input, shape index: {}]
  %s3 = inlined_call_operand.vmem [shape: f32[80,1], index: 3, kind: input, shape index: {}]
  %s4 = inlined_call_operand.vmem [shape: bf16[64,64], index: 4, kind: input, shape index: {}]
  %s5 = inlined_call_operand.vmem [shape: bf16[64,128], index: 5, kind: input, shape index: {}]
  %s6 = inlined_call_operand.vmem [shape: bf16[64,128], index: 6, kind: input, shape index: {}]
  %s7 = inlined_call_operand.vmem [shape: bf16[64,64], index: 7, kind: input, shape index: {}]
  %s8 = inlined_call_operand.vmem [shape: bf16[128,64], index: 8, kind: input, shape index: {}]
  %s9 = inlined_call_operand.vmem [shape: f32[7,64], index: 9, kind: input, shape index: {}]
  %s10 = inlined_call_operand.vmem [shape: f32[2,80,128], index: 10, kind: output, shape index: {0}]
  %s11 = inlined_call_operand.vmem [shape: f32[2,80,64], index: 11, kind: output, shape index: {1}]
  %12 = xla_tuple %s10, %s11
  %s13 = sld [smem:[#allocation0]]
  $region81: #{bie_forward.1} parent=0
    _
  %s15 = ssub.s32 1, %s13
  %s16 = scalar_select 0, %s15, %s13
  loop: start=0, step=1, limit=4
  $region2: #{bie_forward.1} parent=0 // loop_pre_header
    _
  $region3: #{bie_forward.1} parent=0 // loop_header
    %s18 = sphi 0, %s22
    %p19 = scmp.ge.s32.totalorder %s18, 4
    %s28 = sphi 0, %s30
    %s31 = sphi 0, %s28
    %s32 = sphi 0, %s31
    %s48 = sphi 0, %s32
    %s52 = sphi 0, %s52
    %s54 = sphi 0, %s52
    %s55 = sphi 0, %s54
    %s69 = sphi 0, %s55
    %s73 = sphi 0, %s73
    %s75 = sphi 0, %s73
    %s76 = sphi 0, %s75
    %s90 = sphi 0, %s76
    %s94 = sphi 0, %s94
    %s96 = sphi 0, %s94
    %s97 = sphi 0, %s96
    %s111 = sphi 0, %s97
    %s115 = sphi 0, %s115
    %s117 = sphi 0, %s115
    %s118 = sphi 0, %s117
    %s132 = sphi 0, %s118
    %s136 = sphi 0, %s136
    %s138 = sphi 0, %s136
    %s139 = sphi 0, %s138
    %s153 = sphi 0, %s139
    %s157 = sphi 0, %s157
    %s159 = sphi 0, %s157
    %s160 = sphi 0, %s159
    %s174 = sphi 0, %s160
    %s178 = sphi 0, %s178
    %s180 = sphi 0, %s178
    %s181 = sphi 0, %s180
    %s195 = sphi 0, %s181
    %s199 = sphi 0, %s199
    %s201 = sphi 0, %s199
    %s202 = sphi 0, %s201
    %s216 = sphi 0, %s202
    %s220 = sphi 0, %s220
    %s222 = sphi 0, %s220
    %s223 = sphi 0, %s222
    %s237 = sphi 0, %s223
    %s243 = sphi 0, %s245
    %s246 = sphi 0, %s243
    %s247 = sphi 0, %s246
    %s263 = sphi 0, %s247
    %s269 = sphi 0, %s271
    %s272 = sphi 0, %s269
    %s273 = sphi 0, %s272
    %s289 = sphi 0, %s273
  $region4: #{bie_forward.1} parent=0 // loop_header_branch
    %21 = sbr.rel (%p19) target = $region8
  $region5: #{bie_forward.1} parent=0 // loop_body
    %s23 = ssub.s32 %s18, 1
    %s24 = ssub.s32 %s18, 2
    %s25 = sadd.s32 %s18, 1
    %s26 = ssub.s32 %s18, %s25
    %p27 = scmp.eq.s32.totalorder %s26, 0
    %s29 = sadd.s32 %s28, 1
    %s30 = scalar_select %p27, %s28, %s29
    %p33 = pneg %p27
    %p34 = scmp.eq.s32.totalorder %s18, 1
    %p35 = por %p33, %p34
    %p36 = scmp.ne.s32.totalorder %s28, %s31
    %p37 = scmp.eq.s32.totalorder %s18, 0
    %p38 = por %p36, %p37
    %p39 = scmp.ne.s32.totalorder %s28, %s31
    %p40 = scmp.eq.s32.totalorder %s23, 1
    %p41 = por %p39, %p40
    %p42 = scmp.ne.s32.totalorder %s31, %s32
    %p43 = scmp.eq.s32.totalorder %s23, 0
    %p44 = por %p42, %p43
    %p45 = scmp.ne.s32.totalorder %s31, %s32
    %p46 = scmp.eq.s32.totalorder %s24, 1
    %p47 = por %p45, %p46
    %p49 = scmp.ne.s32.totalorder %s32, %s48
    %p50 = scmp.eq.s32.totalorder %s24, 0
    %p51 = por %p49, %p50
    %s53 = sadd.s32 %s52, 1
    %p56 = scmp.eq.s32.totalorder %s18, 1
    %p57 = scmp.ne.s32.totalorder %s52, %s54
    %p58 = scmp.eq.s32.totalorder %s18, 0
    %p59 = por %p57, %p58
    %p60 = scmp.ne.s32.totalorder %s52, %s54
    %p61 = scmp.eq.s32.totalorder %s23, 1
    %p62 = por %p60, %p61
    %p63 = scmp.ne.s32.totalorder %s54, %s55
    %p64 = scmp.eq.s32.totalorder %s23, 0
    %p65 = por %p63, %p64
    %p66 = scmp.ne.s32.totalorder %s54, %s55
    %p67 = scmp.eq.s32.totalorder %s24, 1
    %p68 = por %p66, %p67
    %p70 = scmp.ne.s32.totalorder %s55, %s69
    %p71 = scmp.eq.s32.totalorder %s24, 0
    %p72 = por %p70, %p71
    %s74 = sadd.s32 %s73, 1
    %p77 = scmp.eq.s32.totalorder %s18, 1
    %p78 = scmp.ne.s32.totalorder %s73, %s75
    %p79 = scmp.eq.s32.totalorder %s18, 0
    %p80 = por %p78, %p79
    %p81 = scmp.ne.s32.totalorder %s73, %s75
    %p82 = scmp.eq.s32.totalorder %s23, 1
    %p83 = por %p81, %p82
    %p84 = scmp.ne.s32.totalorder %s75, %s76
    %p85 = scmp.eq.s32.totalorder %s23, 0
    %p86 = por %p84, %p85
    %p87 = scmp.ne.s32.totalorder %s75, %s76
    %p88 = scmp.eq.s32.totalorder %s24, 1
    %p89 = por %p87, %p88
    %p91 = scmp.ne.s32.totalorder %s76, %s90
    %p92 = scmp.eq.s32.totalorder %s24, 0
    %p93 = por %p91, %p92
    %s95 = sadd.s32 %s94, 1
    %p98 = scmp.eq.s32.totalorder %s18, 1
    %p99 = scmp.ne.s32.totalorder %s94, %s96
    %p100 = scmp.eq.s32.totalorder %s18, 0
    %p101 = por %p99, %p100
    %p102 = scmp.ne.s32.totalorder %s94, %s96
    %p103 = scmp.eq.s32.totalorder %s23, 1
    %p104 = por %p102, %p103
    %p105 = scmp.ne.s32.totalorder %s96, %s97
    %p106 = scmp.eq.s32.totalorder %s23, 0
    %p107 = por %p105, %p106
    %p108 = scmp.ne.s32.totalorder %s96, %s97
    %p109 = scmp.eq.s32.totalorder %s24, 1
    %p110 = por %p108, %p109
    %p112 = scmp.ne.s32.totalorder %s97, %s111
    %p113 = scmp.eq.s32.totalorder %s24, 0
    %p114 = por %p112, %p113
    %s116 = sadd.s32 %s115, 1
    %p119 = scmp.eq.s32.totalorder %s18, 1
    %p120 = scmp.ne.s32.totalorder %s115, %s117
    %p121 = scmp.eq.s32.totalorder %s18, 0
    %p122 = por %p120, %p121
    %p123 = scmp.ne.s32.totalorder %s115, %s117
    %p124 = scmp.eq.s32.totalorder %s23, 1
    %p125 = por %p123, %p124
    %p126 = scmp.ne.s32.totalorder %s117, %s118
    %p127 = scmp.eq.s32.totalorder %s23, 0
    %p128 = por %p126, %p127
    %p129 = scmp.ne.s32.totalorder %s117, %s118
    %p130 = scmp.eq.s32.totalorder %s24, 1
    %p131 = por %p129, %p130
    %p133 = scmp.ne.s32.totalorder %s118, %s132
    %p134 = scmp.eq.s32.totalorder %s24, 0
    %p135 = por %p133, %p134
    %s137 = sadd.s32 %s136, 1
    %p140 = scmp.eq.s32.totalorder %s18, 1
    %p141 = scmp.ne.s32.totalorder %s136, %s138
    %p142 = scmp.eq.s32.totalorder %s18, 0
    %p143 = por %p141, %p142
    %p144 = scmp.ne.s32.totalorder %s136, %s138
    %p145 = scmp.eq.s32.totalorder %s23, 1
    %p146 = por %p144, %p145
    %p147 = scmp.ne.s32.totalorder %s138, %s139
    %p148 = scmp.eq.s32.totalorder %s23, 0
    %p149 = por %p147, %p148
    %p150 = scmp.ne.s32.totalorder %s138, %s139
    %p151 = scmp.eq.s32.totalorder %s24, 1
    %p152 = por %p150, %p151
    %p154 = scmp.ne.s32.totalorder %s139, %s153
    %p155 = scmp.eq.s32.totalorder %s24, 0
    %p156 = por %p154, %p155
    %s158 = sadd.s32 %s157, 1
    %p161 = scmp.eq.s32.totalorder %s18, 1
    %p162 = scmp.ne.s32.totalorder %s157, %s159
    %p163 = scmp.eq.s32.totalorder %s18, 0
    %p164 = por %p162, %p163
    %p165 = scmp.ne.s32.totalorder %s157, %s159
    %p166 = scmp.eq.s32.totalorder %s23, 1
    %p167 = por %p165, %p166
    %p168 = scmp.ne.s32.totalorder %s159, %s160
    %p169 = scmp.eq.s32.totalorder %s23, 0
    %p170 = por %p168, %p169
    %p171 = scmp.ne.s32.totalorder %s159, %s160
    %p172 = scmp.eq.s32.totalorder %s24, 1
    %p173 = por %p171, %p172
    %p175 = scmp.ne.s32.totalorder %s160, %s174
    %p176 = scmp.eq.s32.totalorder %s24, 0
    %p177 = por %p175, %p176
    %s179 = sadd.s32 %s178, 1
    %p182 = scmp.eq.s32.totalorder %s18, 1
    %p183 = scmp.ne.s32.totalorder %s178, %s180
    %p184 = scmp.eq.s32.totalorder %s18, 0
    %p185 = por %p183, %p184
    %p186 = scmp.ne.s32.totalorder %s178, %s180
    %p187 = scmp.eq.s32.totalorder %s23, 1
    %p188 = por %p186, %p187
    %p189 = scmp.ne.s32.totalorder %s180, %s181
    %p190 = scmp.eq.s32.totalorder %s23, 0
    %p191 = por %p189, %p190
    %p192 = scmp.ne.s32.totalorder %s180, %s181
    %p193 = scmp.eq.s32.totalorder %s24, 1
    %p194 = por %p192, %p193
    %p196 = scmp.ne.s32.totalorder %s181, %s195
    %p197 = scmp.eq.s32.totalorder %s24, 0
    %p198 = por %p196, %p197
    %s200 = sadd.s32 %s199, 1
    %p203 = scmp.eq.s32.totalorder %s18, 1
    %p204 = scmp.ne.s32.totalorder %s199, %s201
    %p205 = scmp.eq.s32.totalorder %s18, 0
    %p206 = por %p204, %p205
    %p207 = scmp.ne.s32.totalorder %s199, %s201
    %p208 = scmp.eq.s32.totalorder %s23, 1
    %p209 = por %p207, %p208
    %p210 = scmp.ne.s32.totalorder %s201, %s202
    %p211 = scmp.eq.s32.totalorder %s23, 0
    %p212 = por %p210, %p211
    %p213 = scmp.ne.s32.totalorder %s201, %s202
    %p214 = scmp.eq.s32.totalorder %s24, 1
    %p215 = por %p213, %p214
    %p217 = scmp.ne.s32.totalorder %s202, %s216
    %p218 = scmp.eq.s32.totalorder %s24, 0
    %p219 = por %p217, %p218
    %s221 = sadd.s32 %s220, 1
    %p224 = scmp.eq.s32.totalorder %s18, 1
    %p225 = scmp.ne.s32.totalorder %s220, %s222
    %p226 = scmp.eq.s32.totalorder %s18, 0
    %p227 = por %p225, %p226
    %p228 = scmp.ne.s32.totalorder %s220, %s222
    %p229 = scmp.eq.s32.totalorder %s23, 1
    %p230 = por %p228, %p229
    %p231 = scmp.ne.s32.totalorder %s222, %s223
    %p232 = scmp.eq.s32.totalorder %s23, 0
    %p233 = por %p231, %p232
    %p234 = scmp.ne.s32.totalorder %s222, %s223
    %p235 = scmp.eq.s32.totalorder %s24, 1
    %p236 = por %p234, %p235
    %p238 = scmp.ne.s32.totalorder %s223, %s237
    %p239 = scmp.eq.s32.totalorder %s24, 0
    %p240 = por %p238, %p239
    %s241 = ssub.s32 %s18, %s25
    %p242 = scmp.eq.s32.totalorder %s241, 0
    %s244 = sadd.s32 %s243, 1
    %s245 = scalar_select %p242, %s243, %s244
    %p248 = pneg %p242
    %p249 = scmp.eq.s32.totalorder %s18, 1
    %p250 = por %p248, %p249
    %p251 = scmp.ne.s32.totalorder %s243, %s246
    %p252 = scmp.eq.s32.totalorder %s18, 0
    %p253 = por %p251, %p252
    %p254 = scmp.ne.s32.totalorder %s243, %s246
    %p255 = scmp.eq.s32.totalorder %s23, 1
    %p256 = por %p254, %p255
    %p257 = scmp.ne.s32.totalorder %s246, %s247
    %p258 = scmp.eq.s32.totalorder %s23, 0
    %p259 = por %p257, %p258
    %p260 = scmp.ne.s32.totalorder %s246, %s247
    %p261 = scmp.eq.s32.totalorder %s24, 1
    %p262 = por %p260, %p261
    %p264 = scmp.ne.s32.totalorder %s247, %s263
    %p265 = scmp.eq.s32.totalorder %s24, 0
    %p266 = por %p264, %p265
    %s267 = ssub.s32 %s18, %s25
    %p268 = scmp.eq.s32.totalorder %s267, 0
    %s270 = sadd.s32 %s269, 1
    %s271 = scalar_select %p268, %s269, %s270
    %p274 = pneg %p268
    %p275 = scmp.eq.s32.totalorder %s18, 1
    %p276 = por %p274, %p275
    %p277 = scmp.ne.s32.totalorder %s269, %s272
    %p278 = scmp.eq.s32.totalorder %s18, 0
    %p279 = por %p277, %p278
    %p280 = scmp.ne.s32.totalorder %s269, %s272
    %p281 = scmp.eq.s32.totalorder %s23, 1
    %p282 = por %p280, %p281
    %p283 = scmp.ne.s32.totalorder %s272, %s273
    %p284 = scmp.eq.s32.totalorder %s23, 0
    %p285 = por %p283, %p284
    %p286 = scmp.ne.s32.totalorder %s272, %s273
    %p287 = scmp.eq.s32.totalorder %s24, 1
    %p288 = por %p286, %p287
    %p290 = scmp.ne.s32.totalorder %s273, %s289
    %p291 = scmp.eq.s32.totalorder %s24, 0
    %p292 = por %p290, %p291
    %p293 = scmp.le.s32.totalorder 1, %s18
    %p294 = scmp.lt.s32.totalorder %s18, 3
    %p295 = pnand %p293, %p294
    %p296 = pneg %p295
    // Predicated region
    $region9: #{bie_forward.1} parent=5 // pred_check
      _
    $region10: #{bie_forward.1} parent=5 // pred_check_branch
      %298 = sbr.rel (%p295) target = $region12
    $region11: #{bie_forward.1} parent=5 // pred_region
      %s299 = ssub.s32 %s18, 1
      // Predicated region
      $region13: #{bie_forward.1} parent=11 // pred_check
        %p300 = pneg %p65
      $region14: #{bie_forward.1} parent=11 // pred_check_branch
        %302 = sbr.rel (%p300) target = $region16
      $region15: #{bie_forward.1} parent=11 // pred_region
        _
      $region16: #{bie_forward.1} parent=11 // pred_fallthru
        _
      // Predicated region
      $region17: #{bie_forward.1} parent=11 // pred_check
        %p303 = pneg %p86
      $region18: #{bie_forward.1} parent=11 // pred_check_branch
        %305 = sbr.rel (%p303) target = $region20
      $region19: #{bie_forward.1} parent=11 // pred_region
        _
      $region20: #{bie_forward.1} parent=11 // pred_fallthru
        _
      // Predicated region
      $region21: #{bie_forward.1} parent=11 // pred_check
        %p306 = pneg %p107
      $region22: #{bie_forward.1} parent=11 // pred_check_branch
        %308 = sbr.rel (%p306) target = $region24
      $region23: #{bie_forward.1} parent=11 // pred_region
        _
      $region24: #{bie_forward.1} parent=11 // pred_fallthru
        _
      // Predicated region
      $region25: #{bie_forward.1} parent=11 // pred_check
        %p309 = pneg %p128
      $region26: #{bie_forward.1} parent=11 // pred_check_branch
        %311 = sbr.rel (%p309) target = $region28
      $region27: #{bie_forward.1} parent=11 // pred_region
        _
      $region28: #{bie_forward.1} parent=11 // pred_fallthru
        _
      // Predicated region
      $region29: #{bie_forward.1} parent=11 // pred_check
        %p312 = pneg %p149
      $region30: #{bie_forward.1} parent=11 // pred_check_branch
        %314 = sbr.rel (%p312) target = $region32
      $region31: #{bie_forward.1} parent=11 // pred_region
        _
      $region32: #{bie_forward.1} parent=11 // pred_fallthru
        _
      // Predicated region
      $region33: #{bie_forward.1} parent=11 // pred_check
        %p315 = pneg %p170
      $region34: #{bie_forward.1} parent=11 // pred_check_branch
        %317 = sbr.rel (%p315) target = $region36
      $region35: #{bie_forward.1} parent=11 // pred_region
        _
      $region36: #{bie_forward.1} parent=11 // pred_fallthru
        _
      // Predicated region
      $region37: #{bie_forward.1} parent=11 // pred_check
        %p318 = pneg %p191
      $region38: #{bie_forward.1} parent=11 // pred_check_branch
        %320 = sbr.rel (%p318) target = $region40
      $region39: #{bie_forward.1} parent=11 // pred_region
        _
      $region40: #{bie_forward.1} parent=11 // pred_fallthru
        _
      // Predicated region
      $region41: #{bie_forward.1} parent=11 // pred_check
        %p321 = pneg %p212
      $region42: #{bie_forward.1} parent=11 // pred_check_branch
        %323 = sbr.rel (%p321) target = $region44
      $region43: #{bie_forward.1} parent=11 // pred_region
        _
      $region44: #{bie_forward.1} parent=11 // pred_fallthru
        _
      // Predicated region
      $region45: #{bie_forward.1} parent=11 // pred_check
        %p324 = pneg %p233
      $region46: #{bie_forward.1} parent=11 // pred_check_branch
        %326 = sbr.rel (%p324) target = $region48
      $region47: #{bie_forward.1} parent=11 // pred_region
        _
      $region48: #{bie_forward.1} parent=11 // pred_fallthru
        _
    $region12: #{bie_forward.1} parent=5 // pred_fallthru
      _
    %p327 = scmp.lt.s32.totalorder %s18, 2
    // Predicated region
    $region49: #{bie_forward.1} parent=5 // pred_check
      %p328 = pneg %p327
    $region50: #{bie_forward.1} parent=5 // pred_check_branch
      %330 = sbr.rel (%p328) target = $region52
    $region51: #{bie_forward.1} parent=5 // pred_region
      // Predicated region
      $region53: #{bie_forward.1} parent=51 // pred_check
        %p331 = pneg %p38
      $region54: #{bie_forward.1} parent=51 // pred_check_branch
        %333 = sbr.rel (%p331) target = $region56
      $region55: #{bie_forward.1} parent=51 // pred_region
        %p334 = scmp.lt.s32.totalorder %s18, 1
        %s335 = scalar_select %p334, %s18, 1
        %s336 = smul.addr %s335, 42
        %s337 = smul.addr %s336, 8
        %s338 = scalar_lea.vmem %s0, %s337
      $region56: #{bie_forward.1} parent=51 // pred_fallthru
        _
    $region52: #{bie_forward.1} parent=5 // pred_fallthru
      _
    %p339 = scmp.le.s32.totalorder 1, %s18
    %p340 = scmp.lt.s32.totalorder %s18, 3
    %p341 = pnand %p339, %p340
    %p342 = pneg %p341
    // Predicated region
    $region57: #{bie_forward.1} parent=5 // pred_check
      _
    $region58: #{bie_forward.1} parent=5 // pred_check_branch
      %344 = sbr.rel (%p341) target = $region60
    $region59: #{bie_forward.1} parent=5 // pred_region
      %s345 = ssub.s32 %s18, 1
      %p346 = scmp.lt.s32.totalorder %s23, 1
      %s347 = scalar_select %p346, %s23, 1
      %s348 = smul.addr %s347, 42
      %s349 = smul.addr %s348, 8
      %s350 = scalar_lea.vmem %s0, %s349
      %p351 = pneg %p44
      %p352 = pneg %p41
      %p353 = pneg %p65
      %p354 = pneg %p62
      %p355 = pneg %p86
      %p356 = pneg %p83
      %p357 = pneg %p107
      %p358 = pneg %p104
      %p359 = pneg %p128
      %p360 = pneg %p125
      %p361 = pneg %p149
      %p362 = pneg %p146
      %p363 = pneg %p170
      %p364 = pneg %p167
      %p365 = pneg %p191
      %p366 = pneg %p188
      %p367 = pneg %p212
      %p368 = pneg %p209
      %p369 = pneg %p233
      %p370 = pneg %p230
      %p371 = pneg %p259
      %p372 = pneg %p256
      %p373 = scmp.lt.s32.totalorder %s23, 1
      %s374 = scalar_select %p373, %s23, 1
      %s375 = smul.addr %s374, 10
      %s376 = smul.addr %s375, 8
      %s377 = scalar_lea.vmem %s10, %s376
      %p378 = pneg %p285
      %p379 = pneg %p282
      %p380 = scmp.lt.s32.totalorder %s23, 1
      %s381 = scalar_select %p380, %s23, 1
      %s382 = smul.addr %s381, 10
      %s383 = smul.addr %s382, 8
      %s384 = scalar_lea.vmem %s11, %s383
      %p385 = scmp.lt.s32.totalorder %s23, 1
      %s386 = scalar_select %p385, %s23, 1
      %s387 = smul.addr %s386, 42
      %s388 = smul.addr %s387, 8
      %s389 = scalar_lea.vmem %s0, %s388
      %p390 = scmp.lt.s32.totalorder %s23, 1
      %s391 = scalar_select %p390, %s23, 1
      %s392 = smul.addr %s391, 10
      %s393 = smul.addr %s392, 8
      %s394 = scalar_lea.vmem %s10, %s393
      %p395 = scmp.lt.s32.totalorder %s23, 1
      %s396 = scalar_select %p395, %s23, 1
      %s397 = smul.addr %s396, 10
      %s398 = smul.addr %s397, 8
      %s399 = scalar_lea.vmem %s11, %s398
      %v401 = vld [vmem:[%s389] sm:$0xff]
      %v402 = vld [vmem:[%s389 + $0x8] sm:$0xff]
      %v403 = vld [vmem:[%s389 + $0x10] sm:$0xff]
      %v404 = vld [vmem:[%s389 + $0x18] sm:$0xff]
      %v405 = vld [vmem:[%s389 + $0x20] sm:$0xff]
      %v406 = vld [vmem:[%s389 + $0x28] sm:$0xff]
      %v407 = vld [vmem:[%s389 + $0x30] sm:$0xff]
      %v408 = vld [vmem:[%s389 + $0x38] sm:$0xff]
      %v409 = vld [vmem:[%s389 + $0x40] sm:$0xff]
      %v410 = vld [vmem:[%s389 + $0x48] sm:$0xff]
      %v411 = vld [vmem:[%s389 + $0x50] sm:$0xff]
      %v412 = vld [vmem:[%s389 + $0x58] sm:$0xff]
      %v413 = vld [vmem:[%s389 + $0x60] sm:$0xff]
      %v414 = vld [vmem:[%s389 + $0x68] sm:$0x3f]
      %s415 = scalar_lea.vmem %s389, 112
      %v416 = vld [vmem:[%s415] sm:$0xff]
      %v417 = vld [vmem:[%s415 + $0x8] sm:$0xff]
      %v418 = vld [vmem:[%s415 + $0x10] sm:$0xff]
      %v419 = vld [vmem:[%s415 + $0x18] sm:$0xff]
      %v420 = vld [vmem:[%s415 + $0x20] sm:$0xff]
      %v421 = vld [vmem:[%s415 + $0x28] sm:$0xff]
      %v422 = vld [vmem:[%s415 + $0x30] sm:$0xff]
      %v423 = vld [vmem:[%s415 + $0x38] sm:$0xff]
      %v424 = vld [vmem:[%s415 + $0x40] sm:$0xff]
      %v425 = vld [vmem:[%s415 + $0x48] sm:$0xff]
      %v426 = vld [vmem:[%s415 + $0x50] sm:$0xff]
      %v427 = vld [vmem:[%s415 + $0x58] sm:$0xff]
      %v428 = vld [vmem:[%s415 + $0x60] sm:$0xff]
      %v429 = vld [vmem:[%s415 + $0x68] sm:$0x3f]
      %s430 = scalar_lea.vmem %s389, 224
      %v431 = vld [vmem:[%s430 + $0x8] sm:$0xff]
      %v432 = vld [vmem:[%s430 + $0x10] sm:$0xff]
      %v433 = vld [vmem:[%s430 + $0x18] sm:$0xff]
      %v434 = vld [vmem:[%s430 + $0x20] sm:$0xff]
      %v435 = vld [vmem:[%s430 + $0x28] sm:$0xff]
      %v436 = vld [vmem:[%s430 + $0x30] sm:$0xff]
      %v437 = vld [vmem:[%s430 + $0x38] sm:$0xff]
      %v438 = vld [vmem:[%s430 + $0x40] sm:$0xff]
      %v439 = vld [vmem:[%s430 + $0x48] sm:$0xff]
      %v440 = vld [vmem:[%s430 + $0x50] sm:$0xff]
      %v441 = vld [vmem:[%s430 + $0x58] sm:$0xff]
      %v442 = vpack.c.bf16 %v402, %v401
      %v443 = vpack.c.bf16 %v404, %v403
      %v444 = vpack.c.bf16 %v406, %v405
      %v445 = vpack.c.bf16 %v408, %v407
      %v446 = vpack.c.bf16 %v410, %v409
      %v447 = vpack.c.bf16 %v412, %v411
      %v448 = vpack.c.bf16 %v414, %v413
      %v449 = vpack.c.bf16 %v417, %v416
      %v450 = vpack.c.bf16 %v419, %v418
      %v451 = vpack.c.bf16 %v421, %v420
      %v452 = vpack.c.bf16 %v423, %v422
      %v453 = vpack.c.bf16 %v425, %v424
      %v454 = vpack.c.bf16 %v427, %v426
      %v455 = vpack.c.bf16 %v429, %v428
      %v456 = vld [vmem:[%s3] sm:$0xff]
      %v457 = vld [vmem:[%s3 + $0x8] sm:$0xff]
      %v458 = vld [vmem:[%s3 + $0x10] sm:$0xff]
      %v459 = vld [vmem:[%s3 + $0x18] sm:$0xff]
      %v460 = vld [vmem:[%s3 + $0x20] sm:$0xff]
      %v461 = vld [vmem:[%s3 + $0x28] sm:$0xff]
      %v462 = vld [vmem:[%s3 + $0x30] sm:$0xff]
      %v463 = vld [vmem:[%s3 + $0x38] sm:$0xff]
      %v464 = vld [vmem:[%s3 + $0x40] sm:$0xff]
      %v465 = vld [vmem:[%s3 + $0x48] sm:$0xff]
      %v466 = vld [vmem:[%s2] sm:$0x1]
      %v467 = vld [vmem:[%s2 + $0x1] sm:$0x1]
      %v468 = vld [vmem:[%s1] sm:$0xf]
      %v469 = vld [vmem:[%s1 + $0x4] sm:$0xf]
      %v470 = vld [vmem:[%s1 + $0x8] sm:$0xf]
      %v471 = vld [vmem:[%s1 + $0xc] sm:$0xf]
      %v472 = vld [vmem:[%s1 + $0x10] sm:$0xf]
      %v473 = vld [vmem:[%s1 + $0x14] sm:$0xf]
      %v474 = vld [vmem:[%s1 + $0x18] sm:$0xf]
      %v475 = vld [vmem:[%s1 + $0x1c] sm:$0xf]
      %s476 = scalar_lea.vmem %s1, 32
      %v477 = vld [vmem:[%s476] sm:$0xf]
      %v478 = vld [vmem:[%s476 + $0x4] sm:$0xf]
      %v479 = vld [vmem:[%s476 + $0x8] sm:$0xf]
      %v480 = vld [vmem:[%s476 + $0xc] sm:$0xf]
      %v481 = vld [vmem:[%s476 + $0x10] sm:$0xf]
      %v482 = vld [vmem:[%s476 + $0x14] sm:$0xf]
      %v483 = vld [vmem:[%s476 + $0x18] sm:$0xf]
      %v484 = vld [vmem:[%s476 + $0x1c] sm:$0xf]
      %vm485 = vsmask.f32 7424
      %v487 = vshrl.u32 %v442, 16
      %v489 = vshll.u32 %v442, 16
      %v491 = vrot.slane %v489, 1
      %v492 = vor.u32 %v487, %v491
      %v494 = vshll.u32 %v443, 16
      %v496 = vrot.slane %v494, 1
      %v497 = vsel %vm485, %v492, %v496
      %v498 = vshrl.u32 %v443, 16
      %v500 = vor.u32 %v498, %v496
      %v502 = vshll.u32 %v444, 16
      %v504 = vrot.slane %v502, 1
      %v505 = vsel %vm485, %v500, %v504
      %v506 = vshrl.u32 %v444, 16
      %v508 = vor.u32 %v506, %v504
      %v510 = vshll.u32 %v445, 16
      %v512 = vrot.slane %v510, 1
      %v513 = vsel %vm485, %v508, %v512
      %v514 = vshrl.u32 %v445, 16
      %v516 = vor.u32 %v514, %v512
      %v518 = vshll.u32 %v446, 16
      %v520 = vrot.slane %v518, 1
      %v521 = vsel %vm485, %v516, %v520
      %v522 = vshrl.u32 %v446, 16
      %v524 = vor.u32 %v522, %v520
      %v526 = vshll.u32 %v447, 16
      %v528 = vrot.slane %v526, 1
      %v529 = vsel %vm485, %v524, %v528
      %v538 = vunpack.c.l.b16 %v477
      %v539 = vunpack.c.l.b16 %v478
      %v540 = vunpack.c.l.b16 %v479
      %v541 = vunpack.c.l.b16 %v480
      %v542 = vunpack.c.l.b16 %v481
      %v543 = vunpack.c.l.b16 %v482
      %v544 = vunpack.c.l.b16 %v483
      %v545 = vunpack.c.l.b16 %v484
      %v546 = vpack.c.b16 %v539, %v538
      %v547 = vpack.c.b16 %v541, %v540
      %v548 = vpack.c.b16 %v543, %v542
      %v549 = vpack.c.b16 %v545, %v544
      %vm554 = vcmask 523264
      %v556 = vsel %vm554, %v497, 0
      %v559 = vsel %vm554, %v505, 0
      %v562 = vsel %vm554, %v513, 0
      %v565 = vsel %vm554, %v521, 0
      %v568 = vsel %vm554, %v529, 0
      %570 = vmatprep.subr.bf16.mxu0 0
      %571 = vmatpush1.bf16.msra.mxu0 %v546
      %572 = vmatprep.subr.bf16.mxu0 0
      %573 = vmatpush1.bf16.msra.mxu0 %v547
      %574 = vmatprep.subr.bf16.mxu0 0
      %575 = vmatpush1.bf16.msra.mxu0 %v548
      %576 = vmatprep.subr.bf16.mxu0 0
      %577 = vmatpush1.bf16.msra.mxu0 %v549
      %578 = vmatprep.subr.bf16.mxu0 0
      %579 = vmatpush1.bf16.msra.mxu0 0
      %580 = vmatprep.subr.bf16.mxu0 0
      %581 = vmatpush1.bf16.msra.mxu0 0
      %582 = vmatprep.subr.bf16.mxu0 0
      %583 = vmatpush1.bf16.msra.mxu0 0
      %584 = vmatprep.subr.bf16.mxu0 0
      %585 = vmatpush1.bf16.msra.mxu0 0
      %586 = vmatprep.subr.bf16.mxu0 0
      %587 = vmatpush1.bf16.msra.mxu0 0
      %588 = vmatprep.subr.bf16.mxu0 0
      %589 = vmatpush1.bf16.msra.mxu0 0
      %590 = vmatprep.subr.bf16.mxu0 0
      %591 = vmatpush1.bf16.msra.mxu0 0
      %592 = vmatprep.subr.bf16.mxu0 0
      %593 = vmatpush1.bf16.msra.mxu0 0
      %594 = vmatprep.subr.bf16.mxu0 0
      %595 = vmatpush1.bf16.msra.mxu0 0
      %596 = vmatprep.subr.bf16.mxu0 0
      %597 = vmatpush1.bf16.msra.mxu0 0
      %598 = vmatprep.subr.bf16.mxu0 0
      %599 = vmatpush1.bf16.msra.mxu0 0
      %600 = vmatprep.subr.bf16.mxu0 0
      %601 = vmatpush1.bf16.msra.mxu0 0
      %602 = vmatprep.mubr.bf16.mxu0 0
      %603 = vmatmul.mubr.bf16.gmra.mrb[0].mxu0 %v556
      %v604 = vpop.f32.mrb[0].mxu0
      %v605 = vadd.f32 0.0, %v604
      %v606 = vpop.f32.mrb[0].mxu0
      %v607 = vpop.f32.mrb[0].mxu0
      %v608 = vadd.f32 0.0, %v607
      %v609 = vpop.f32.mrb[0].mxu0
      %610 = vmatprep.mubr.bf16.mxu0 0
      %611 = vmatmul.mubr.bf16.gmra.mrb[0].mxu0 %v559
      %v612 = vpop.f32.mrb[0].mxu0
      %v613 = vadd.f32 0.0, %v612
      %v614 = vpop.f32.mrb[0].mxu0
      %v615 = vpop.f32.mrb[0].mxu0
      %v616 = vadd.f32 0.0, %v615
      %v617 = vpop.f32.mrb[0].mxu0
      %618 = vmatprep.mubr.bf16.mxu0 0
      %619 = vmatmul.mubr.bf16.gmra.mrb[0].mxu0 %v562
      %v620 = vpop.f32.mrb[0].mxu0
      %v621 = vadd.f32 0.0, %v620
      %v622 = vpop.f32.mrb[0].mxu0
      %v623 = vpop.f32.mrb[0].mxu0
      %v624 = vadd.f32 0.0, %v623
      %v625 = vpop.f32.mrb[0].mxu0
      %626 = vmatprep.mubr.bf16.mxu0 0
      %627 = vmatmul.mubr.bf16.gmra.mrb[0].mxu0 %v565
      %v628 = vpop.f32.mrb[0].mxu0
      %v629 = vadd.f32 0.0, %v628
      %v630 = vpop.f32.mrb[0].mxu0
      %v631 = vpop.f32.mrb[0].mxu0
      %v632 = vadd.f32 0.0, %v631
      %v633 = vpop.f32.mrb[0].mxu0
      %634 = vmatprep.mubr.bf16.mxu0 0
      %635 = vmatmul.mubr.bf16.gmra.mrb[0].mxu0 %v568
      %v636 = vpop.f32.mrb[0].mxu0
      %v637 = vadd.f32 0.0, %v636
      %v638 = vpop.f32.mrb[0].mxu0
      %v639 = vpop.f32.mrb[0].mxu0
      %v640 = vadd.f32 0.0, %v639
      %v641 = vpop.f32.mrb[0].mxu0
      %642 = vdwg.mxu0
      %v651 = vunpack.c.l.b16 %v468
      %v652 = vunpack.c.l.b16 %v469
      %v653 = vunpack.c.l.b16 %v470
      %v654 = vunpack.c.l.b16 %v471
      %v655 = vunpack.c.l.b16 %v472
      %v656 = vunpack.c.l.b16 %v473
      %v657 = vunpack.c.l.b16 %v474
      %v658 = vunpack.c.l.b16 %v475
      %v659 = vpack.c.b16 %v652, %v651
      %v660 = vpack.c.b16 %v654, %v653
      %v661 = vpack.c.b16 %v656, %v655
      %v662 = vpack.c.b16 %v658, %v657
      %v667 = vsel %vm554, %v442, 0
      %v669 = vsel %vm554, %v443, 0
      %v671 = vsel %vm554, %v444, 0
      %v673 = vsel %vm554, %v445, 0
      %v675 = vsel %vm554, %v446, 0
      %677 = vmatprep.subr.bf16.mxu0 0
      %678 = vmatpush1.bf16.msra.mxu0 %v659
      %679 = vmatprep.subr.bf16.mxu0 0
      %680 = vmatpush1.bf16.msra.mxu0 %v660
      %681 = vmatprep.subr.bf16.mxu0 0
      %682 = vmatpush1.bf16.msra.mxu0 %v661
      %683 = vmatprep.subr.bf16.mxu0 0
      %684 = vmatpush1.bf16.msra.mxu0 %v662
      %685 = vmatprep.subr.bf16.mxu0 0
      %686 = vmatpush1.bf16.msra.mxu0 0
      %687 = vmatprep.subr.bf16.mxu0 0
      %688 = vmatpush1.bf16.msra.mxu0 0
      %689 = vmatprep.subr.bf16.mxu0 0
      %690 = vmatpush1.bf16.msra.mxu0 0
      %691 = vmatprep.subr.bf16.mxu0 0
      %692 = vmatpush1.bf16.msra.mxu0 0
      %693 = vmatprep.subr.bf16.mxu0 0
      %694 = vmatpush1.bf16.msra.mxu0 0
      %695 = vmatprep.subr.bf16.mxu0 0
      %696 = vmatpush1.bf16.msra.mxu0 0
      %697 = vmatprep.subr.bf16.mxu0 0
      %698 = vmatpush1.bf16.msra.mxu0 0
      %699 = vmatprep.subr.bf16.mxu0 0
      %700 = vmatpush1.bf16.msra.mxu0 0
      %701 = vmatprep.subr.bf16.mxu0 0
      %702 = vmatpush1.bf16.msra.mxu0 0
      %703 = vmatprep.subr.bf16.mxu0 0
      %704 = vmatpush1.bf16.msra.mxu0 0
      %705 = vmatprep.subr.bf16.mxu0 0
      %706 = vmatpush1.bf16.msra.mxu0 0
      %707 = vmatprep.subr.bf16.mxu0 0
      %708 = vmatpush1.bf16.msra.mxu0 0
      %709 = vmatprep.mubr.bf16.mxu0 0
      %710 = vmatmul.mubr.bf16.gmra.mrb[0].mxu0 %v667
      %v711 = vpop.f32.mrb[0].mxu0
      %v712 = vadd.f32 %v605, %v711
      %v713 = vpop.f32.mrb[0].mxu0
      %v714 = vpop.f32.mrb[0].mxu0
      %v715 = vadd.f32 %v608, %v714
      %v716 = vpop.f32.mrb[0].mxu0
      %717 = vmatprep.mubr.bf16.mxu0 0
      %718 = vmatmul.mubr.bf16.gmra.mrb[0].mxu0 %v669
      %v719 = vpop.f32.mrb[0].mxu0
      %v720 = vadd.f32 %v613, %v719
      %v721 = vpop.f32.mrb[0].mxu0
      %v722 = vpop.f32.mrb[0].mxu0
      %v723 = vadd.f32 %v616, %v722
      %v724 = vpop.f32.mrb[0].mxu0
      %725 = vmatprep.mubr.bf16.mxu0 0
      %726 = vmatmul.mubr.bf16.gmra.mrb[0].mxu0 %v671
      %v727 = vpop.f32.mrb[0].mxu0
      %v728 = vadd.f32 %v621, %v727
      %v729 = vpop.f32.mrb[0].mxu0
      %v730 = vpop.f32.mrb[0].mxu0
      %v731 = vadd.f32 %v624, %v730
      %v732 = vpop.f32.mrb[0].mxu0
      %733 = vmatprep.mubr.bf16.mxu0 0
      %734 = vmatmul.mubr.bf16.gmra.mrb[0].mxu0 %v673
      %v735 = vpop.f32.mrb[0].mxu0
      %v736 = vadd.f32 %v629, %v735
      %v737 = vpop.f32.mrb[0].mxu0
      %v738 = vpop.f32.mrb[0].mxu0
      %v739 = vadd.f32 %v632, %v738
      %v740 = vpop.f32.mrb[0].mxu0
      %741 = vmatprep.mubr.bf16.mxu0 0
      %742 = vmatmul.mubr.bf16.gmra.mrb[0].mxu0 %v675
      %v743 = vpop.f32.mrb[0].mxu0
      %v744 = vadd.f32 %v637, %v743
      %v745 = vpop.f32.mrb[0].mxu0
      %v746 = vpop.f32.mrb[0].mxu0
      %v747 = vadd.f32 %v640, %v746
      %v748 = vpop.f32.mrb[0].mxu0
      %749 = vdwg.mxu0
      %s750 = scalar_lea.vmem %s1, 64
      %v751 = vld [vmem:[%s750] sm:$0xf]
      %v752 = vld [vmem:[%s750 + $0x4] sm:$0xf]
      %v753 = vld [vmem:[%s750 + $0x8] sm:$0xf]
      %v754 = vld [vmem:[%s750 + $0xc] sm:$0xf]
      %v755 = vld [vmem:[%s750 + $0x10] sm:$0xf]
      %v756 = vld [vmem:[%s750 + $0x14] sm:$0xf]
      %v757 = vld [vmem:[%s750 + $0x18] sm:$0xf]
      %v758 = vld [vmem:[%s750 + $0x1c] sm:$0xf]
      %vm765 = vcmask 1046528
      %v766 = vrot.slane %v442, 1
      %v767 = vrot.slane %v443, 1
      %v768 = vsel %vm765, %v766, %v767
      %v769 = vrot.slane %v444, 1
      %v770 = vsel %vm765, %v767, %v769
      %v771 = vrot.slane %v445, 1
      %v772 = vsel %vm765, %v769, %v771
      %v773 = vrot.slane %v446, 1
      %v774 = vsel %vm765, %v771, %v773
      %v775 = vrot.slane %v447, 1
      %v776 = vsel %vm765, %v773, %v775
      %v785 = vunpack.c.l.b16 %v751
      %v786 = vunpack.c.l.b16 %v752
      %v787 = vunpack.c.l.b16 %v753
      %v788 = vunpack.c.l.b16 %v754
      %v789 = vunpack.c.l.b16 %v755
      %v790 = vunpack.c.l.b16 %v756
      %v791 = vunpack.c.l.b16 %v757
      %v792 = vunpack.c.l.b16 %v758
      %v793 = vpack.c.b16 %v786, %v785
      %v794 = vpack.c.b16 %v788, %v787
      %v795 = vpack.c.b16 %v790, %v789
      %v796 = vpack.c.b16 %v792, %v791
      %v802 = vsel %vm554, %v768, 0
      %v805 = vsel %vm554, %v770, 0
      %v808 = vsel %vm554, %v772, 0
      %v811 = vsel %vm554, %v774, 0
      %v814 = vsel %vm554, %v776, 0
      %816 = vmatprep.subr.bf16.mxu0 0
      %817 = vmatpush1.bf16.msra.mxu0 %v793
      %818 = vmatprep.subr.bf16.mxu0 0
      %819 = vmatpush1.bf16.msra.mxu0 %v794
      %820 = vmatprep.subr.bf16.mxu0 0
      %821 = vmatpush1.bf16.msra.mxu0 %v795
      %822 = vmatprep.subr.bf16.mxu0 0
      %823 = vmatpush1.bf16.msra.mxu0 %v796
      %824 = vmatprep.subr.bf16.mxu0 0
      %825 = vmatpush1.bf16.msra.mxu0 0
      %826 = vmatprep.subr.bf16.mxu0 0
      %827 = vmatpush1.bf16.msra.mxu0 0
      %828 = vmatprep.subr.bf16.mxu0 0
      %829 = vmatpush1.bf16.msra.mxu0 0
      %830 = vmatprep.subr.bf16.mxu0 0
      %831 = vmatpush1.bf16.msra.mxu0 0
      %832 = vmatprep.subr.bf16.mxu0 0
      %833 = vmatpush1.bf16.msra.mxu0 0
      %834 = vmatprep.subr.bf16.mxu0 0
      %835 = vmatpush1.bf16.msra.mxu0 0
      %836 = vmatprep.subr.bf16.mxu0 0
      %837 = vmatpush1.bf16.msra.mxu0 0
      %838 = vmatprep.subr.bf16.mxu0 0
      %839 = vmatpush1.bf16.msra.mxu0 0
      %840 = vmatprep.subr.bf16.mxu0 0
      %841 = vmatpush1.bf16.msra.mxu0 0
      %842 = vmatprep.subr.bf16.mxu0 0
      %843 = vmatpush1.bf16.msra.mxu0 0
      %844 = vmatprep.subr.bf16.mxu0 0
      %845 = vmatpush1.bf16.msra.mxu0 0
      %846 = vmatprep.subr.bf16.mxu0 0
      %847 = vmatpush1.bf16.msra.mxu0 0
      %848 = vmatprep.mubr.bf16.mxu0 0
      %849 = vmatmul.mubr.bf16.gmra.mrb[0].mxu0 %v802
      %v850 = vpop.f32.mrb[0].mxu0
      %v851 = vadd.f32 0.0, %v850
      %v852 = vpop.f32.mrb[0].mxu0
      %v853 = vpop.f32.mrb[0].mxu0
      %v854 = vadd.f32 0.0, %v853
      %v855 = vpop.f32.mrb[0].mxu0
      %856 = vmatprep.mubr.bf16.mxu0 0
      %857 = vmatmul.mubr.bf16.gmra.mrb[0].mxu0 %v805
      %v858 = vpop.f32.mrb[0].mxu0
      %v859 = vadd.f32 0.0, %v858
      %v860 = vpop.f32.mrb[0].mxu0
      %v861 = vpop.f32.mrb[0].mxu0
      %v862 = vadd.f32 0.0, %v861
      %v863 = vpop.f32.mrb[0].mxu0
      %864 = vmatprep.mubr.bf16.mxu0 0
      %865 = vmatmul.mubr.bf16.gmra.mrb[0].mxu0 %v808
      %v866 = vpop.f32.mrb[0].mxu0
      %v867 = vadd.f32 0.0, %v866
      %v868 = vpop.f32.mrb[0].mxu0
      %v869 = vpop.f32.mrb[0].mxu0
      %v870 = vadd.f32 0.0, %v869
      %v871 = vpop.f32.mrb[0].mxu0
      %872 = vmatprep.mubr.bf16.mxu0 0
      %873 = vmatmul.mubr.bf16.gmra.mrb[0].mxu0 %v811
      %v874 = vpop.f32.mrb[0].mxu0
      %v875 = vadd.f32 0.0, %v874
      %v876 = vpop.f32.mrb[0].mxu0
      %v877 = vpop.f32.mrb[0].mxu0
      %v878 = vadd.f32 0.0, %v877
      %v879 = vpop.f32.mrb[0].mxu0
      %880 = vmatprep.mubr.bf16.mxu0 0
      %881 = vmatmul.mubr.bf16.gmra.mrb[0].mxu0 %v814
      %v882 = vpop.f32.mrb[0].mxu0
      %v883 = vadd.f32 0.0, %v882
      %v884 = vpop.f32.mrb[0].mxu0
      %v885 = vpop.f32.mrb[0].mxu0
      %v886 = vadd.f32 0.0, %v885
      %v887 = vpop.f32.mrb[0].mxu0
      %888 = vdwg.mxu0
      %v889 = vadd.f32 %v712, %v851
      %v890 = vadd.f32 %v715, %v854
      %v891 = vadd.f32 %v720, %v859
      %v892 = vadd.f32 %v723, %v862
      %v893 = vadd.f32 %v728, %v867
      %v894 = vadd.f32 %v731, %v870
      %v895 = vadd.f32 %v736, %v875
      %v896 = vadd.f32 %v739, %v878
      %v897 = vadd.f32 %v744, %v883
      %v898 = vadd.f32 %v747, %v886
      %s899 = scalar_lea.vmem %s1, 96
      %v900 = vld [vmem:[%s899] sm:$0xf]
      %v901 = vld [vmem:[%s899 + $0x4] sm:$0xf]
      %v902 = vld [vmem:[%s899 + $0x8] sm:$0xf]
      %v903 = vld [vmem:[%s899 + $0xc] sm:$0xf]
      %v904 = vld [vmem:[%s899 + $0x10] sm:$0xf]
      %v905 = vld [vmem:[%s899 + $0x14] sm:$0xf]
      %v906 = vld [vmem:[%s899 + $0x18] sm:$0xf]
      %v907 = vld [vmem:[%s899 + $0x1c] sm:$0xf]
      %vm908 = vcmask 1042432
      %v909 = vrot.slane %v442, 5
      %v910 = vrot.slane %v443, 5
      %v911 = vsel %vm908, %v909, %v910
      %v912 = vrot.slane %v444, 5
      %v913 = vsel %vm908, %v910, %v912
      %v914 = vrot.slane %v445, 5
      %v915 = vsel %vm908, %v912, %v914
      %v916 = vrot.slane %v446, 5
      %v917 = vsel %vm908, %v914, %v916
      %v918 = vrot.slane %v447, 5
      %v919 = vsel %vm908, %v916, %v918
      %v928 = vunpack.c.l.b16 %v900
      %v929 = vunpack.c.l.b16 %v901
      %v930 = vunpack.c.l.b16 %v902
      %v931 = vunpack.c.l.b16 %v903
      %v932 = vunpack.c.l.b16 %v904
      %v933 = vunpack.c.l.b16 %v905
      %v934 = vunpack.c.l.b16 %v906
      %v935 = vunpack.c.l.b16 %v907
      %v936 = vpack.c.b16 %v929, %v928
      %v937 = vpack.c.b16 %v931, %v930
      %v938 = vpack.c.b16 %v933, %v932
      %v939 = vpack.c.b16 %v935, %v934
      %v945 = vsel %vm554, %v911, 0
      %v948 = vsel %vm554, %v913, 0
      %v951 = vsel %vm554, %v915, 0
      %v954 = vsel %vm554, %v917, 0
      %v957 = vsel %vm554, %v919, 0
      %959 = vmatprep.subr.bf16.mxu0 0
      %960 = vmatpush1.bf16.msra.mxu0 %v936
      %961 = vmatprep.subr.bf16.mxu0 0
      %962 = vmatpush1.bf16.msra.mxu0 %v937
      %963 = vmatprep.subr.bf16.mxu0 0
      %964 = vmatpush1.bf16.msra.mxu0 %v938
      %965 = vmatprep.subr.bf16.mxu0 0
      %966 = vmatpush1.bf16.msra.mxu0 %v939
      %967 = vmatprep.subr.bf16.mxu0 0
      %968 = vmatpush1.bf16.msra.mxu0 0
      %969 = vmatprep.subr.bf16.mxu0 0
      %970 = vmatpush1.bf16.msra.mxu0 0
      %971 = vmatprep.subr.bf16.mxu0 0
      %972 = vmatpush1.bf16.msra.mxu0 0
      %973 = vmatprep.subr.bf16.mxu0 0
      %974 = vmatpush1.bf16.msra.mxu0 0
      %975 = vmatprep.subr.bf16.mxu0 0
      %976 = vmatpush1.bf16.msra.mxu0 0
      %977 = vmatprep.subr.bf16.mxu0 0
      %978 = vmatpush1.bf16.msra.mxu0 0
      %979 = vmatprep.subr.bf16.mxu0 0
      %980 = vmatpush1.bf16.msra.mxu0 0
      %981 = vmatprep.subr.bf16.mxu0 0
      %982 = vmatpush1.bf16.msra.mxu0 0
      %983 = vmatprep.subr.bf16.mxu0 0
      %984 = vmatpush1.bf16.msra.mxu0 0
      %985 = vmatprep.subr.bf16.mxu0 0
      %986 = vmatpush1.bf16.msra.mxu0 0
      %987 = vmatprep.subr.bf16.mxu0 0
      %988 = vmatpush1.bf16.msra.mxu0 0
      %989 = vmatprep.subr.bf16.mxu0 0
      %990 = vmatpush1.bf16.msra.mxu0 0
      %991 = vmatprep.mubr.bf16.mxu0 0
      %992 = vmatmul.mubr.bf16.gmra.mrb[0].mxu0 %v945
      %v993 = vpop.f32.mrb[0].mxu0
      %v994 = vadd.f32 0.0, %v993
      %v995 = vpop.f32.mrb[0].mxu0
      %v996 = vpop.f32.mrb[0].mxu0
      %v997 = vadd.f32 0.0, %v996
      %v998 = vpop.f32.mrb[0].mxu0
      %999 = vmatprep.mubr.bf16.mxu0 0
      %1000 = vmatmul.mubr.bf16.gmra.mrb[0].mxu0 %v948
      %v1001 = vpop.f32.mrb[0].mxu0
      %v1002 = vadd.f32 0.0, %v1001
      %v1003 = vpop.f32.mrb[0].mxu0
      %v1004 = vpop.f32.mrb[0].mxu0
      %v1005 = vadd.f32 0.0, %v1004
      %v1006 = vpop.f32.mrb[0].mxu0
      %1007 = vmatprep.mubr.bf16.mxu0 0
      %1008 = vmatmul.mubr.bf16.gmra.mrb[0].mxu0 %v951
      %v1009 = vpop.f32.mrb[0].mxu0
      %v1010 = vadd.f32 0.0, %v1009
      %v1011 = vpop.f32.mrb[0].mxu0
      %v1012 = vpop.f32.mrb[0].mxu0
      %v1013 = vadd.f32 0.0, %v1012
      %v1014 = vpop.f32.mrb[0].mxu0
      %1015 = vmatprep.mubr.bf16.mxu0 0
      %1016 = vmatmul.mubr.bf16.gmra.mrb[0].mxu0 %v954
      %v1017 = vpop.f32.mrb[0].mxu0
      %v1018 = vadd.f32 0.0, %v1017
      %v1019 = vpop.f32.mrb[0].mxu0
      %v1020 = vpop.f32.mrb[0].mxu0
      %v1021 = vadd.f32 0.0, %v1020
      %v1022 = vpop.f32.mrb[0].mxu0
      %1023 = vmatprep.mubr.bf16.mxu0 0
      %1024 = vmatmul.mubr.bf16.gmra.mrb[0].mxu0 %v957
      %v1025 = vpop.f32.mrb[0].mxu0
      %v1026 = vadd.f32 0.0, %v1025
      %v1027 = vpop.f32.mrb[0].mxu0
      %v1028 = vpop.f32.mrb[0].mxu0
      %v1029 = vadd.f32 0.0, %v1028
      %v1030 = vpop.f32.mrb[0].mxu0
      %1031 = vdwg.mxu0
      %v1032 = vadd.f32 %v889, %v994
      %v1033 = vadd.f32 %v890, %v997
      %v1034 = vadd.f32 %v891, %v1002
      %v1035 = vadd.f32 %v892, %v1005
      %v1036 = vadd.f32 %v893, %v1010
      %v1037 = vadd.f32 %v894, %v1013
      %v1038 = vadd.f32 %v895, %v1018
      %v1039 = vadd.f32 %v896, %v1021
      %v1040 = vadd.f32 %v897, %v1026
      %v1041 = vadd.f32 %v898, %v1029
      %s1042 = scalar_lea.vmem %s1, 128
      %v1043 = vld [vmem:[%s1042] sm:$0xf]
      %v1044 = vld [vmem:[%s1042 + $0x4] sm:$0xf]
      %v1045 = vld [vmem:[%s1042 + $0x8] sm:$0xf]
      %v1046 = vld [vmem:[%s1042 + $0xc] sm:$0xf]
      %v1047 = vld [vmem:[%s1042 + $0x10] sm:$0xf]
      %v1048 = vld [vmem:[%s1042 + $0x14] sm:$0xf]
      %v1049 = vld [vmem:[%s1042 + $0x18] sm:$0xf]
      %v1050 = vld [vmem:[%s1042 + $0x1c] sm:$0xf]
      %vm1051 = vsmask.f32 2304
      %v1052 = vrot.slane %v487, 5
      %v1053 = vrot.slane %v489, 6
      %v1054 = vor.u32 %v1052, %v1053
      %v1055 = vrot.slane %v498, 5
      %v1056 = vrot.slane %v494, 6
      %v1057 = vor.u32 %v1055, %v1056
      %v1058 = vsel %vm1051, %v1054, %v1057
      %v1059 = vrot.slane %v506, 5
      %v1060 = vrot.slane %v502, 6
      %v1061 = vor.u32 %v1059, %v1060
      %v1062 = vsel %vm1051, %v1057, %v1061
      %v1063 = vrot.slane %v514, 5
      %v1064 = vrot.slane %v510, 6
      %v1065 = vor.u32 %v1063, %v1064
      %v1066 = vsel %vm1051, %v1061, %v1065
      %v1067 = vrot.slane %v522, 5
      %v1068 = vrot.slane %v518, 6
      %v1069 = vor.u32 %v1067, %v1068
      %v1070 = vsel %vm1051, %v1065, %v1069
      %v1071 = vshrl.u32 %v447, 16
      %v1073 = vrot.slane %v1071, 5
      %v1074 = vrot.slane %v526, 6
      %v1075 = vor.u32 %v1073, %v1074
      %v1076 = vsel %vm1051, %v1069, %v1075
      %v1085 = vunpack.c.l.b16 %v1043
      %v1086 = vunpack.c.l.b16 %v1044
      %v1087 = vunpack.c.l.b16 %v1045
      %v1088 = vunpack.c.l.b16 %v1046
      %v1089 = vunpack.c.l.b16 %v1047
      %v1090 = vunpack.c.l.b16 %v1048
      %v1091 = vunpack.c.l.b16 %v1049
      %v1092 = vunpack.c.l.b16 %v1050
      %v1093 = vpack.c.b16 %v1086, %v1085
      %v1094 = vpack.c.b16 %v1088, %v1087
      %v1095 = vpack.c.b16 %v1090, %v1089
      %v1096 = vpack.c.b16 %v1092, %v1091
      %v1102 = vsel %vm554, %v1058, 0
      %v1105 = vsel %vm554, %v1062, 0
      %v1108 = vsel %vm554, %v1066, 0
      %v1111 = vsel %vm554, %v1070, 0
      %v1114 = vsel %vm554, %v1076, 0
      %1116 = vmatprep.subr.bf16.mxu0 0
      %1117 = vmatpush1.bf16.msra.mxu0 %v1093
      %1118 = vmatprep.subr.bf16.mxu0 0
      %1119 = vmatpush1.bf16.msra.mxu0 %v1094
      %1120 = vmatprep.subr.bf16.mxu0 0
      %1121 = vmatpush1.bf16.msra.mxu0 %v1095
      %1122 = vmatprep.subr.bf16.mxu0 0
      %1123 = vmatpush1.bf16.msra.mxu0 %v1096
      %1124 = vmatprep.subr.bf16.mxu0 0
      %1125 = vmatpush1.bf16.msra.mxu0 0
      %1126 = vmatprep.subr.bf16.mxu0 0
      %1127 = vmatpush1.bf16.msra.mxu0 0
      %1128 = vmatprep.subr.bf16.mxu0 0
      %1129 = vmatpush1.bf16.msra.mxu0 0
      %1130 = vmatprep.subr.bf16.mxu0 0
      %1131 = vmatpush1.bf16.msra.mxu0 0
      %1132 = vmatprep.subr.bf16.mxu0 0
      %1133 = vmatpush1.bf16.msra.mxu0 0
      %1134 = vmatprep.subr.bf16.mxu0 0
      %1135 = vmatpush1.bf16.msra.mxu0 0
      %1136 = vmatprep.subr.bf16.mxu0 0
      %1137 = vmatpush1.bf16.msra.mxu0 0
      %1138 = vmatprep.subr.bf16.mxu0 0
      %1139 = vmatpush1.bf16.msra.mxu0 0
      %1140 = vmatprep.subr.bf16.mxu0 0
      %1141 = vmatpush1.bf16.msra.mxu0 0
      %1142 = vmatprep.subr.bf16.mxu0 0
      %1143 = vmatpush1.bf16.msra.mxu0 0
      %1144 = vmatprep.subr.bf16.mxu0 0
      %1145 = vmatpush1.bf16.msra.mxu0 0
      %1146 = vmatprep.subr.bf16.mxu0 0
      %1147 = vmatpush1.bf16.msra.mxu0 0
      %1148 = vmatprep.mubr.bf16.mxu0 0
      %1149 = vmatmul.mubr.bf16.gmra.mrb[0].mxu0 %v1102
      %v1150 = vpop.f32.mrb[0].mxu0
      %v1151 = vadd.f32 0.0, %v1150
      %v1152 = vpop.f32.mrb[0].mxu0
      %v1153 = vpop.f32.mrb[0].mxu0
      %v1154 = vadd.f32 0.0, %v1153
      %v1155 = vpop.f32.mrb[0].mxu0
      %1156 = vmatprep.mubr.bf16.mxu0 0
      %1157 = vmatmul.mubr.bf16.gmra.mrb[0].mxu0 %v1105
      %v1158 = vpop.f32.mrb[0].mxu0
      %v1159 = vadd.f32 0.0, %v1158
      %v1160 = vpop.f32.mrb[0].mxu0
      %v1161 = vpop.f32.mrb[0].mxu0
      %v1162 = vadd.f32 0.0, %v1161
      %v1163 = vpop.f32.mrb[0].mxu0
      %1164 = vmatprep.mubr.bf16.mxu0 0
      %1165 = vmatmul.mubr.bf16.gmra.mrb[0].mxu0 %v1108
      %v1166 = vpop.f32.mrb[0].mxu0
      %v1167 = vadd.f32 0.0, %v1166
      %v1168 = vpop.f32.mrb[0].mxu0
      %v1169 = vpop.f32.mrb[0].mxu0
      %v1170 = vadd.f32 0.0, %v1169
      %v1171 = vpop.f32.mrb[0].mxu0
      %1172 = vmatprep.mubr.bf16.mxu0 0
      %1173 = vmatmul.mubr.bf16.gmra.mrb[0].mxu0 %v1111
      %v1174 = vpop.f32.mrb[0].mxu0
      %v1175 = vadd.f32 0.0, %v1174
      %v1176 = vpop.f32.mrb[0].mxu0
      %v1177 = vpop.f32.mrb[0].mxu0
      %v1178 = vadd.f32 0.0, %v1177
      %v1179 = vpop.f32.mrb[0].mxu0
      %1180 = vmatprep.mubr.bf16.mxu0 0
      %1181 = vmatmul.mubr.bf16.gmra.mrb[0].mxu0 %v1114
      %v1182 = vpop.f32.mrb[0].mxu0
      %v1183 = vadd.f32 0.0, %v1182
      %v1184 = vpop.f32.mrb[0].mxu0
      %v1185 = vpop.f32.mrb[0].mxu0
      %v1186 = vadd.f32 0.0, %v1185
      %v1187 = vpop.f32.mrb[0].mxu0
      %1188 = vdwg.mxu0
      %v1189 = vadd.f32 %v1032, %v1151
      %v1190 = vadd.f32 %v1033, %v1154
      %v1191 = vadd.f32 %v1034, %v1159
      %v1192 = vadd.f32 %v1035, %v1162
      %v1193 = vadd.f32 %v1036, %v1167
      %v1194 = vadd.f32 %v1037, %v1170
      %v1195 = vadd.f32 %v1038, %v1175
      %v1196 = vadd.f32 %v1039, %v1178
      %v1197 = vadd.f32 %v1040, %v1183
      %v1198 = vadd.f32 %v1041, %v1186
      %s1199 = scalar_lea.vmem %s1, 160
      %v1200 = vld [vmem:[%s1199] sm:$0xf]
      %v1201 = vld [vmem:[%s1199 + $0x4] sm:$0xf]
      %v1202 = vld [vmem:[%s1199 + $0x8] sm:$0xf]
      %v1203 = vld [vmem:[%s1199 + $0xc] sm:$0xf]
      %v1204 = vld [vmem:[%s1199 + $0x10] sm:$0xf]
      %v1205 = vld [vmem:[%s1199 + $0x14] sm:$0xf]
      %v1206 = vld [vmem:[%s1199 + $0x18] sm:$0xf]
      %v1207 = vld [vmem:[%s1199 + $0x1c] sm:$0xf]
      %vm1208 = vcmask 1041408
      %v1209 = vrot.slane %v442, 6
      %v1210 = vrot.slane %v443, 6
      %v1211 = vsel %vm1208, %v1209, %v1210
      %v1212 = vrot.slane %v444, 6
      %v1213 = vsel %vm1208, %v1210, %v1212
      %v1214 = vrot.slane %v445, 6
      %v1215 = vsel %vm1208, %v1212, %v1214
      %v1216 = vrot.slane %v446, 6
      %v1217 = vsel %vm1208, %v1214, %v1216
      %v1218 = vrot.slane %v447, 6
      %v1219 = vsel %vm1208, %v1216, %v1218
      %v1228 = vunpack.c.l.b16 %v1200
      %v1229 = vunpack.c.l.b16 %v1201
      %v1230 = vunpack.c.l.b16 %v1202
      %v1231 = vunpack.c.l.b16 %v1203
      %v1232 = vunpack.c.l.b16 %v1204
      %v1233 = vunpack.c.l.b16 %v1205
      %v1234 = vunpack.c.l.b16 %v1206
      %v1235 = vunpack.c.l.b16 %v1207
      %v1236 = vpack.c.b16 %v1229, %v1228
      %v1237 = vpack.c.b16 %v1231, %v1230
      %v1238 = vpack.c.b16 %v1233, %v1232
      %v1239 = vpack.c.b16 %v1235, %v1234
      %v1245 = vsel %vm554, %v1211, 0
      %v1248 = vsel %vm554, %v1213, 0
      %v1251 = vsel %vm554, %v1215, 0
      %v1254 = vsel %vm554, %v1217, 0
      %v1257 = vsel %vm554, %v1219, 0
      %1259 = vmatprep.subr.bf16.mxu0 0
      %1260 = vmatpush1.bf16.msra.mxu0 %v1236
      %1261 = vmatprep.subr.bf16.mxu0 0
      %1262 = vmatpush1.bf16.msra.mxu0 %v1237
      %1263 = vmatprep.subr.bf16.mxu0 0
      %1264 = vmatpush1.bf16.msra.mxu0 %v1238
      %1265 = vmatprep.subr.bf16.mxu0 0
      %1266 = vmatpush1.bf16.msra.mxu0 %v1239
      %1267 = vmatprep.subr.bf16.mxu0 0
      %1268 = vmatpush1.bf16.msra.mxu0 0
      %1269 = vmatprep.subr.bf16.mxu0 0
      %1270 = vmatpush1.bf16.msra.mxu0 0
      %1271 = vmatprep.subr.bf16.mxu0 0
      %1272 = vmatpush1.bf16.msra.mxu0 0
      %1273 = vmatprep.subr.bf16.mxu0 0
      %1274 = vmatpush1.bf16.msra.mxu0 0
      %1275 = vmatprep.subr.bf16.mxu0 0
      %1276 = vmatpush1.bf16.msra.mxu0 0
      %1277 = vmatprep.subr.bf16.mxu0 0
      %1278 = vmatpush1.bf16.msra.mxu0 0
      %1279 = vmatprep.subr.bf16.mxu0 0
      %1280 = vmatpush1.bf16.msra.mxu0 0
      %1281 = vmatprep.subr.bf16.mxu0 0
      %1282 = vmatpush1.bf16.msra.mxu0 0
      %1283 = vmatprep.subr.bf16.mxu0 0
      %1284 = vmatpush1.bf16.msra.mxu0 0
      %1285 = vmatprep.subr.bf16.mxu0 0
      %1286 = vmatpush1.bf16.msra.mxu0 0
      %1287 = vmatprep.subr.bf16.mxu0 0
      %1288 = vmatpush1.bf16.msra.mxu0 0
      %1289 = vmatprep.subr.bf16.mxu0 0
      %1290 = vmatpush1.bf16.msra.mxu0 0
      %1291 = vmatprep.mubr.bf16.mxu0 0
      %1292 = vmatmul.mubr.bf16.gmra.mrb[0].mxu0 %v1245
      %v1293 = vpop.f32.mrb[0].mxu0
      %v1294 = vadd.f32 0.0, %v1293
      %v1295 = vpop.f32.mrb[0].mxu0
      %v1296 = vpop.f32.mrb[0].mxu0
      %v1297 = vadd.f32 0.0, %v1296
      %v1298 = vpop.f32.mrb[0].mxu0
      %1299 = vmatprep.mubr.bf16.mxu0 0
      %1300 = vmatmul.mubr.bf16.gmra.mrb[0].mxu0 %v1248
      %v1301 = vpop.f32.mrb[0].mxu0
      %v1302 = vadd.f32 0.0, %v1301
      %v1303 = vpop.f32.mrb[0].mxu0
      %v1304 = vpop.f32.mrb[0].mxu0
      %v1305 = vadd.f32 0.0, %v1304
      %v1306 = vpop.f32.mrb[0].mxu0
      %1307 = vmatprep.mubr.bf16.mxu0 0
      %1308 = vmatmul.mubr.bf16.gmra.mrb[0].mxu0 %v1251
      %v1309 = vpop.f32.mrb[0].mxu0
      %v1310 = vadd.f32 0.0, %v1309
      %v1311 = vpop.f32.mrb[0].mxu0
      %v1312 = vpop.f32.mrb[0].mxu0
      %v1313 = vadd.f32 0.0, %v1312
      %v1314 = vpop.f32.mrb[0].mxu0
      %1315 = vmatprep.mubr.bf16.mxu0 0
      %1316 = vmatmul.mubr.bf16.gmra.mrb[0].mxu0 %v1254
      %v1317 = vpop.f32.mrb[0].mxu0
      %v1318 = vadd.f32 0.0, %v1317
      %v1319 = vpop.f32.mrb[0].mxu0
      %v1320 = vpop.f32.mrb[0].mxu0
      %v1321 = vadd.f32 0.0, %v1320
      %v1322 = vpop.f32.mrb[0].mxu0
      %1323 = vmatprep.mubr.bf16.mxu0 0
      %1324 = vmatmul.mubr.bf16.gmra.mrb[0].mxu0 %v1257
      %v1325 = vpop.f32.mrb[0].mxu0
      %v1326 = vadd.f32 0.0, %v1325
      %v1327 = vpop.f32.mrb[0].mxu0
      %v1328 = vpop.f32.mrb[0].mxu0
      %v1329 = vadd.f32 0.0, %v1328
      %v1330 = vpop.f32.mrb[0].mxu0
      %1331 = vdwg.mxu0
      %v1332 = vadd.f32 %v1189, %v1294
      %v1333 = vadd.f32 %v1190, %v1297
      %v1334 = vadd.f32 %v1191, %v1302
      %v1335 = vadd.f32 %v1192, %v1305
      %v1336 = vadd.f32 %v1193, %v1310
      %v1337 = vadd.f32 %v1194, %v1313
      %v1338 = vadd.f32 %v1195, %v1318
      %v1339 = vadd.f32 %v1196, %v1321
      %v1340 = vadd.f32 %v1197, %v1326
      %v1341 = vadd.f32 %v1198, %v1329
      %s1342 = scalar_lea.vmem %s1, 192
      %v1343 = vld [vmem:[%s1342] sm:$0xf]
      %v1344 = vld [vmem:[%s1342 + $0x4] sm:$0xf]
      %v1345 = vld [vmem:[%s1342 + $0x8] sm:$0xf]
      %v1346 = vld [vmem:[%s1342 + $0xc] sm:$0xf]
      %v1347 = vld [vmem:[%s1342 + $0x10] sm:$0xf]
      %v1348 = vld [vmem:[%s1342 + $0x14] sm:$0xf]
      %v1349 = vld [vmem:[%s1342 + $0x18] sm:$0xf]
      %v1350 = vld [vmem:[%s1342 + $0x1c] sm:$0xf]
      %vm1352 = vcmask 1045504
      %v1353 = vrot.slane %v443, 2
      %v1354 = vrot.slane %v444, 2
      %v1355 = vsel %vm1352, %v1353, %v1354
      %v1356 = vrot.slane %v445, 2
      %v1357 = vsel %vm1352, %v1354, %v1356
      %v1358 = vrot.slane %v446, 2
      %v1359 = vsel %vm1352, %v1356, %v1358
      %v1360 = vrot.slane %v447, 2
      %v1361 = vsel %vm1352, %v1358, %v1360
      %v1362 = vrot.slane %v448, 2
      %v1363 = vsel %vm1352, %v1360, %v1362
      %v1372 = vunpack.c.l.b16 %v1343
      %v1373 = vunpack.c.l.b16 %v1344
      %v1374 = vunpack.c.l.b16 %v1345
      %v1375 = vunpack.c.l.b16 %v1346
      %v1376 = vunpack.c.l.b16 %v1347
      %v1377 = vunpack.c.l.b16 %v1348
      %v1378 = vunpack.c.l.b16 %v1349
      %v1379 = vunpack.c.l.b16 %v1350
      %v1380 = vpack.c.b16 %v1373, %v1372
      %v1381 = vpack.c.b16 %v1375, %v1374
      %v1382 = vpack.c.b16 %v1377, %v1376
      %v1383 = vpack.c.b16 %v1379, %v1378
      %v1389 = vsel %vm554, %v1355, 0
      %v1392 = vsel %vm554, %v1357, 0
      %v1395 = vsel %vm554, %v1359, 0
      %v1398 = vsel %vm554, %v1361, 0
      %v1401 = vsel %vm554, %v1363, 0
      %1403 = vmatprep.subr.bf16.mxu0 0
      %1404 = vmatpush1.bf16.msra.mxu0 %v1380
      %1405 = vmatprep.subr.bf16.mxu0 0
      %1406 = vmatpush1.bf16.msra.mxu0 %v1381
      %1407 = vmatprep.subr.bf16.mxu0 0
      %1408 = vmatpush1.bf16.msra.mxu0 %v1382
      %1409 = vmatprep.subr.bf16.mxu0 0
      %1410 = vmatpush1.bf16.msra.mxu0 %v1383
      %1411 = vmatprep.subr.bf16.mxu0 0
      %1412 = vmatpush1.bf16.msra.mxu0 0
      %1413 = vmatprep.subr.bf16.mxu0 0
      %1414 = vmatpush1.bf16.msra.mxu0 0
      %1415 = vmatprep.subr.bf16.mxu0 0
      %1416 = vmatpush1.bf16.msra.mxu0 0
      %1417 = vmatprep.subr.bf16.mxu0 0
      %1418 = vmatpush1.bf16.msra.mxu0 0
      %1419 = vmatprep.subr.bf16.mxu0 0
      %1420 = vmatpush1.bf16.msra.mxu0 0
      %1421 = vmatprep.subr.bf16.mxu0 0
      %1422 = vmatpush1.bf16.msra.mxu0 0
      %1423 = vmatprep.subr.bf16.mxu0 0
      %1424 = vmatpush1.bf16.msra.mxu0 0
      %1425 = vmatprep.subr.bf16.mxu0 0
      %1426 = vmatpush1.bf16.msra.mxu0 0
      %1427 = vmatprep.subr.bf16.mxu0 0
      %1428 = vmatpush1.bf16.msra.mxu0 0
      %1429 = vmatprep.subr.bf16.mxu0 0
      %1430 = vmatpush1.bf16.msra.mxu0 0
      %1431 = vmatprep.subr.bf16.mxu0 0
      %1432 = vmatpush1.bf16.msra.mxu0 0
      %1433 = vmatprep.subr.bf16.mxu0 0
      %1434 = vmatpush1.bf16.msra.mxu0 0
      %1435 = vmatprep.mubr.bf16.mxu0 0
      %1436 = vmatmul.mubr.bf16.gmra.mrb[0].mxu0 %v1389
      %v1437 = vpop.f32.mrb[0].mxu0
      %v1438 = vadd.f32 0.0, %v1437
      %v1439 = vpop.f32.mrb[0].mxu0
      %v1440 = vpop.f32.mrb[0].mxu0
      %v1441 = vadd.f32 0.0, %v1440
      %v1442 = vpop.f32.mrb[0].mxu0
      %1443 = vmatprep.mubr.bf16.mxu0 0
      %1444 = vmatmul.mubr.bf16.gmra.mrb[0].mxu0 %v1392
      %v1445 = vpop.f32.mrb[0].mxu0
      %v1446 = vadd.f32 0.0, %v1445
      %v1447 = vpop.f32.mrb[0].mxu0
      %v1448 = vpop.f32.mrb[0].mxu0
      %v1449 = vadd.f32 0.0, %v1448
      %v1450 = vpop.f32.mrb[0].mxu0
      %1451 = vmatprep.mubr.bf16.mxu0 0
      %1452 = vmatmul.mubr.bf16.gmra.mrb[0].mxu0 %v1395
      %v1453 = vpop.f32.mrb[0].mxu0
      %v1454 = vadd.f32 0.0, %v1453
      %v1455 = vpop.f32.mrb[0].mxu0
      %v1456 = vpop.f32.mrb[0].mxu0
      %v1457 = vadd.f32 0.0, %v1456
      %v1458 = vpop.f32.mrb[0].mxu0
      %1459 = vmatprep.mubr.bf16.mxu0 0
      %1460 = vmatmul.mubr.bf16.gmra.mrb[0].mxu0 %v1398
      %v1461 = vpop.f32.mrb[0].mxu0
      %v1462 = vadd.f32 0.0, %v1461
      %v1463 = vpop.f32.mrb[0].mxu0
      %v1464 = vpop.f32.mrb[0].mxu0
      %v1465 = vadd.f32 0.0, %v1464
      %v1466 = vpop.f32.mrb[0].mxu0
      %1467 = vmatprep.mubr.bf16.mxu0 0
      %1468 = vmatmul.mubr.bf16.gmra.mrb[0].mxu0 %v1401
      %v1469 = vpop.f32.mrb[0].mxu0
      %v1470 = vadd.f32 0.0, %v1469
      %v1471 = vpop.f32.mrb[0].mxu0
      %v1472 = vpop.f32.mrb[0].mxu0
      %v1473 = vadd.f32 0.0, %v1472
      %v1474 = vpop.f32.mrb[0].mxu0
      %1475 = vdwg.mxu0
      %v1476 = vadd.f32 %v1332, %v1438
      %v1477 = vadd.f32 %v1333, %v1441
      %v1478 = vadd.f32 %v1334, %v1446
      %v1479 = vadd.f32 %v1335, %v1449
      %v1480 = vadd.f32 %v1336, %v1454
      %v1481 = vadd.f32 %v1337, %v1457
      %v1482 = vadd.f32 %v1338, %v1462
      %v1483 = vadd.f32 %v1339, %v1465
      %v1484 = vadd.f32 %v1340, %v1470
      %v1485 = vadd.f32 %v1341, %v1473
      %s1486 = scalar_lea.vmem %s1, 224
      %v1487 = vld [vmem:[%s1486] sm:$0xf]
      %v1488 = vld [vmem:[%s1486 + $0x4] sm:$0xf]
      %v1489 = vld [vmem:[%s1486 + $0x8] sm:$0xf]
      %v1490 = vld [vmem:[%s1486 + $0xc] sm:$0xf]
      %v1491 = vld [vmem:[%s1486 + $0x10] sm:$0xf]
      %v1492 = vld [vmem:[%s1486 + $0x14] sm:$0xf]
      %v1493 = vld [vmem:[%s1486 + $0x18] sm:$0xf]
      %v1494 = vld [vmem:[%s1486 + $0x1c] sm:$0xf]
      %vm1495 = vsmask.f32 5376
      %v1496 = vrot.slane %v498, 2
      %v1497 = vrot.slane %v494, 3
      %v1498 = vor.u32 %v1496, %v1497
      %v1499 = vrot.slane %v506, 2
      %v1500 = vrot.slane %v502, 3
      %v1501 = vor.u32 %v1499, %v1500
      %v1502 = vsel %vm1495, %v1498, %v1501
      %v1503 = vrot.slane %v514, 2
      %v1504 = vrot.slane %v510, 3
      %v1505 = vor.u32 %v1503, %v1504
      %v1506 = vsel %vm1495, %v1501, %v1505
      %v1507 = vrot.slane %v522, 2
      %v1508 = vrot.slane %v518, 3
      %v1509 = vor.u32 %v1507, %v1508
      %v1510 = vsel %vm1495, %v1505, %v1509
      %v1511 = vrot.slane %v1071, 2
      %v1512 = vrot.slane %v526, 3
      %v1513 = vor.u32 %v1511, %v1512
      %v1514 = vsel %vm1495, %v1509, %v1513
      %v1516 = vshrl.u32 %v448, 16
      %v1518 = vrot.slane %v1516, 2
      %v1519 = vshll.u32 %v448, 16
      %v1521 = vrot.slane %v1519, 3
      %v1522 = vor.u32 %v1518, %v1521
      %v1523 = vsel %vm1495, %v1513, %v1522
      %v1532 = vunpack.c.l.b16 %v1487
      %v1533 = vunpack.c.l.b16 %v1488
      %v1534 = vunpack.c.l.b16 %v1489
      %v1535 = vunpack.c.l.b16 %v1490
      %v1536 = vunpack.c.l.b16 %v1491
      %v1537 = vunpack.c.l.b16 %v1492
      %v1538 = vunpack.c.l.b16 %v1493
      %v1539 = vunpack.c.l.b16 %v1494
      %v1540 = vpack.c.b16 %v1533, %v1532
      %v1541 = vpack.c.b16 %v1535, %v1534
      %v1542 = vpack.c.b16 %v1537, %v1536
      %v1543 = vpack.c.b16 %v1539, %v1538
      %v1549 = vsel %vm554, %v1502, 0
      %v1552 = vsel %vm554, %v1506, 0
      %v1555 = vsel %vm554, %v1510, 0
      %v1558 = vsel %vm554, %v1514, 0
      %v1561 = vsel %vm554, %v1523, 0
      %1563 = vmatprep.subr.bf16.mxu0 0
      %1564 = vmatpush1.bf16.msra.mxu0 %v1540
      %1565 = vmatprep.subr.bf16.mxu0 0
      %1566 = vmatpush1.bf16.msra.mxu0 %v1541
      %1567 = vmatprep.subr.bf16.mxu0 0
      %1568 = vmatpush1.bf16.msra.mxu0 %v1542
      %1569 = vmatprep.subr.bf16.mxu0 0
      %1570 = vmatpush1.bf16.msra.mxu0 %v1543
      %1571 = vmatprep.subr.bf16.mxu0 0
      %1572 = vmatpush1.bf16.msra.mxu0 0
      %1573 = vmatprep.subr.bf16.mxu0 0
      %1574 = vmatpush1.bf16.msra.mxu0 0
      %1575 = vmatprep.subr.bf16.mxu0 0
      %1576 = vmatpush1.bf16.msra.mxu0 0
      %1577 = vmatprep.subr.bf16.mxu0 0
      %1578 = vmatpush1.bf16.msra.mxu0 0
      %1579 = vmatprep.subr.bf16.mxu0 0
      %1580 = vmatpush1.bf16.msra.mxu0 0
      %1581 = vmatprep.subr.bf16.mxu0 0
      %1582 = vmatpush1.bf16.msra.mxu0 0
      %1583 = vmatprep.subr.bf16.mxu0 0
      %1584 = vmatpush1.bf16.msra.mxu0 0
      %1585 = vmatprep.subr.bf16.mxu0 0
      %1586 = vmatpush1.bf16.msra.mxu0 0
      %1587 = vmatprep.subr.bf16.mxu0 0
      %1588 = vmatpush1.bf16.msra.mxu0 0
      %1589 = vmatprep.subr.bf16.mxu0 0
      %1590 = vmatpush1.bf16.msra.mxu0 0
      %1591 = vmatprep.subr.bf16.mxu0 0
      %1592 = vmatpush1.bf16.msra.mxu0 0
      %1593 = vmatprep.subr.bf16.mxu0 0
      %1594 = vmatpush1.bf16.msra.mxu0 0
      %1595 = vmatprep.mubr.bf16.mxu0 0
      %1596 = vmatmul.mubr.bf16.gmra.mrb[0].mxu0 %v1549
      %v1597 = vpop.f32.mrb[0].mxu0
      %v1598 = vadd.f32 0.0, %v1597
      %v1599 = vpop.f32.mrb[0].mxu0
      %v1600 = vpop.f32.mrb[0].mxu0
      %v1601 = vadd.f32 0.0, %v1600
      %v1602 = vpop.f32.mrb[0].mxu0
      %1603 = vmatprep.mubr.bf16.mxu0 0
      %1604 = vmatmul.mubr.bf16.gmra.mrb[0].mxu0 %v1552
      %v1605 = vpop.f32.mrb[0].mxu0
      %v1606 = vadd.f32 0.0, %v1605
      %v1607 = vpop.f32.mrb[0].mxu0
      %v1608 = vpop.f32.mrb[0].mxu0
      %v1609 = vadd.f32 0.0, %v1608
      %v1610 = vpop.f32.mrb[0].mxu0
      %1611 = vmatprep.mubr.bf16.mxu0 0
      %1612 = vmatmul.mubr.bf16.gmra.mrb[0].mxu0 %v1555
      %v1613 = vpop.f32.mrb[0].mxu0
      %v1614 = vadd.f32 0.0, %v1613
      %v1615 = vpop.f32.mrb[0].mxu0
      %v1616 = vpop.f32.mrb[0].mxu0
      %v1617 = vadd.f32 0.0, %v1616
      %v1618 = vpop.f32.mrb[0].mxu0
      %1619 = vmatprep.mubr.bf16.mxu0 0
      %1620 = vmatmul.mubr.bf16.gmra.mrb[0].mxu0 %v1558
      %v1621 = vpop.f32.mrb[0].mxu0
      %v1622 = vadd.f32 0.0, %v1621
      %v1623 = vpop.f32.mrb[0].mxu0
      %v1624 = vpop.f32.mrb[0].mxu0
      %v1625 = vadd.f32 0.0, %v1624
      %v1626 = vpop.f32.mrb[0].mxu0
      %1627 = vmatprep.mubr.bf16.mxu0 0
      %1628 = vmatmul.mubr.bf16.gmra.mrb[0].mxu0 %v1561
      %v1629 = vpop.f32.mrb[0].mxu0
      %v1630 = vadd.f32 0.0, %v1629
      %v1631 = vpop.f32.mrb[0].mxu0
      %v1632 = vpop.f32.mrb[0].mxu0
      %v1633 = vadd.f32 0.0, %v1632
      %v1634 = vpop.f32.mrb[0].mxu0
      %1635 = vdwg.mxu0
      %v1636 = vadd.f32 %v1476, %v1598
      %v1637 = vadd.f32 %v1477, %v1601
      %v1638 = vadd.f32 %v1478, %v1606
      %v1639 = vadd.f32 %v1479, %v1609
      %v1640 = vadd.f32 %v1480, %v1614
      %v1641 = vadd.f32 %v1481, %v1617
      %v1642 = vadd.f32 %v1482, %v1622
      %v1643 = vadd.f32 %v1483, %v1625
      %v1644 = vadd.f32 %v1484, %v1630
      %v1645 = vadd.f32 %v1485, %v1633
      %s1646 = scalar_lea.vmem %s1, 256
      %v1647 = vld [vmem:[%s1646] sm:$0xf]
      %v1648 = vld [vmem:[%s1646 + $0x4] sm:$0xf]
      %v1649 = vld [vmem:[%s1646 + $0x8] sm:$0xf]
      %v1650 = vld [vmem:[%s1646 + $0xc] sm:$0xf]
      %v1651 = vld [vmem:[%s1646 + $0x10] sm:$0xf]
      %v1652 = vld [vmem:[%s1646 + $0x14] sm:$0xf]
      %v1653 = vld [vmem:[%s1646 + $0x18] sm:$0xf]
      %v1654 = vld [vmem:[%s1646 + $0x1c] sm:$0xf]
      %vm1655 = vcmask 1044480
      %v1656 = vrot.slane %v443, 3
      %v1657 = vrot.slane %v444, 3
      %v1658 = vsel %vm1655, %v1656, %v1657
      %v1659 = vrot.slane %v445, 3
      %v1660 = vsel %vm1655, %v1657, %v1659
      %v1661 = vrot.slane %v446, 3
      %v1662 = vsel %vm1655, %v1659, %v1661
      %v1663 = vrot.slane %v447, 3
      %v1664 = vsel %vm1655, %v1661, %v1663
      %v1665 = vrot.slane %v448, 3
      %v1666 = vsel %vm1655, %v1663, %v1665
      %v1675 = vunpack.c.l.b16 %v1647
      %v1676 = vunpack.c.l.b16 %v1648
      %v1677 = vunpack.c.l.b16 %v1649
      %v1678 = vunpack.c.l.b16 %v1650
      %v1679 = vunpack.c.l.b16 %v1651
      %v1680 = vunpack.c.l.b16 %v1652
      %v1681 = vunpack.c.l.b16 %v1653
      %v1682 = vunpack.c.l.b16 %v1654
      %v1683 = vpack.c.b16 %v1676, %v1675
      %v1684 = vpack.c.b16 %v1678, %v1677
      %v1685 = vpack.c.b16 %v1680, %v1679
      %v1686 = vpack.c.b16 %v1682, %v1681
      %v1692 = vsel %vm554, %v1658, 0
      %v1695 = vsel %vm554, %v1660, 0
      %v1698 = vsel %vm554, %v1662, 0
      %v1701 = vsel %vm554, %v1664, 0
      %v1704 = vsel %vm554, %v1666, 0
      %1706 = vmatprep.subr.bf16.mxu0 0
      %1707 = vmatpush1.bf16.msra.mxu0 %v1683
      %1708 = vmatprep.subr.bf16.mxu0 0
      %1709 = vmatpush1.bf16.msra.mxu0 %v1684
      %1710 = vmatprep.subr.bf16.mxu0 0
      %1711 = vmatpush1.bf16.msra.mxu0 %v1685
      %1712 = vmatprep.subr.bf16.mxu0 0
      %1713 = vmatpush1.bf16.msra.mxu0 %v1686
      %1714 = vmatprep.subr.bf16.mxu0 0
      %1715 = vmatpush1.bf16.msra.mxu0 0
      %1716 = vmatprep.subr.bf16.mxu0 0
      %1717 = vmatpush1.bf16.msra.mxu0 0
      %1718 = vmatprep.subr.bf16.mxu0 0
      %1719 = vmatpush1.bf16.msra.mxu0 0
      %1720 = vmatprep.subr.bf16.mxu0 0
      %1721 = vmatpush1.bf16.msra.mxu0 0
      %1722 = vmatprep.subr.bf16.mxu0 0
      %1723 = vmatpush1.bf16.msra.mxu0 0
      %1724 = vmatprep.subr.bf16.mxu0 0
      %1725 = vmatpush1.bf16.msra.mxu0 0
      %1726 = vmatprep.subr.bf16.mxu0 0
      %1727 = vmatpush1.bf16.msra.mxu0 0
      %1728 = vmatprep.subr.bf16.mxu0 0
      %1729 = vmatpush1.bf16.msra.mxu0 0
      %1730 = vmatprep.subr.bf16.mxu0 0
      %1731 = vmatpush1.bf16.msra.mxu0 0
      %1732 = vmatprep.subr.bf16.mxu0 0
      %1733 = vmatpush1.bf16.msra.mxu0 0
      %1734 = vmatprep.subr.bf16.mxu0 0
      %1735 = vmatpush1.bf16.msra.mxu0 0
      %1736 = vmatprep.subr.bf16.mxu0 0
      %1737 = vmatpush1.bf16.msra.mxu0 0
      %1738 = vmatprep.mubr.bf16.mxu0 0
      %1739 = vmatmul.mubr.bf16.gmra.mrb[0].mxu0 %v1692
      %v1740 = vpop.f32.mrb[0].mxu0
      %v1741 = vadd.f32 0.0, %v1740
      %v1742 = vpop.f32.mrb[0].mxu0
      %v1743 = vpop.f32.mrb[0].mxu0
      %v1744 = vadd.f32 0.0, %v1743
      %v1745 = vpop.f32.mrb[0].mxu0
      %1746 = vmatprep.mubr.bf16.mxu0 0
      %1747 = vmatmul.mubr.bf16.gmra.mrb[0].mxu0 %v1695
      %v1748 = vpop.f32.mrb[0].mxu0
      %v1749 = vadd.f32 0.0, %v1748
      %v1750 = vpop.f32.mrb[0].mxu0
      %v1751 = vpop.f32.mrb[0].mxu0
      %v1752 = vadd.f32 0.0, %v1751
      %v1753 = vpop.f32.mrb[0].mxu0
      %1754 = vmatprep.mubr.bf16.mxu0 0
      %1755 = vmatmul.mubr.bf16.gmra.mrb[0].mxu0 %v1698
      %v1756 = vpop.f32.mrb[0].mxu0
      %v1757 = vadd.f32 0.0, %v1756
      %v1758 = vpop.f32.mrb[0].mxu0
      %v1759 = vpop.f32.mrb[0].mxu0
      %v1760 = vadd.f32 0.0, %v1759
      %v1761 = vpop.f32.mrb[0].mxu0
      %1762 = vmatprep.mubr.bf16.mxu0 0
      %1763 = vmatmul.mubr.bf16.gmra.mrb[0].mxu0 %v1701
      %v1764 = vpop.f32.mrb[0].mxu0
      %v1765 = vadd.f32 0.0, %v1764
      %v1766 = vpop.f32.mrb[0].mxu0
      %v1767 = vpop.f32.mrb[0].mxu0
      %v1768 = vadd.f32 0.0, %v1767
      %v1769 = vpop.f32.mrb[0].mxu0
      %1770 = vmatprep.mubr.bf16.mxu0 0
      %1771 = vmatmul.mubr.bf16.gmra.mrb[0].mxu0 %v1704
      %v1772 = vpop.f32.mrb[0].mxu0
      %v1773 = vadd.f32 0.0, %v1772
      %v1774 = vpop.f32.mrb[0].mxu0
      %v1775 = vpop.f32.mrb[0].mxu0
      %v1776 = vadd.f32 0.0, %v1775
      %v1777 = vpop.f32.mrb[0].mxu0
      %1778 = vdwg.mxu0
      %v1779 = vadd.f32 %v1636, %v1741
      %v1780 = vadd.f32 %v1637, %v1744
      %v1781 = vadd.f32 %v1638, %v1749
      %v1782 = vadd.f32 %v1639, %v1752
      %v1783 = vadd.f32 %v1640, %v1757
      %v1784 = vadd.f32 %v1641, %v1760
      %v1785 = vadd.f32 %v1642, %v1765
      %v1786 = vadd.f32 %v1643, %v1768
      %v1787 = vadd.f32 %v1644, %v1773
      %v1788 = vadd.f32 %v1645, %v1776
      %v1789 = vlaneseq
      %v1790 = vshrl.u32 %v1789, 7
      %v1791 = vsub.s32 0, %v1790
      %v1792 = vrot.slane %v466, %v1791
      %v1793 = vadd.f32 %v1779, %v1792
      %v1794 = vadd.f32 %v1780, %v1792
      %v1795 = vadd.f32 %v1781, %v1792
      %v1796 = vadd.f32 %v1782, %v1792
      %v1797 = vadd.f32 %v1783, %v1792
      %v1798 = vadd.f32 %v1784, %v1792
      %v1799 = vadd.f32 %v1785, %v1792
      %v1800 = vadd.f32 %v1786, %v1792
      %v1801 = vadd.f32 %v1787, %v1792
      %v1802 = vadd.f32 %v1788, %v1792
      %v1803 = vmax.f32 %v1793, 0.0
      %v1804 = vmax.f32 %v1794, 0.0
      %v1805 = vmax.f32 %v1795, 0.0
      %v1806 = vmax.f32 %v1796, 0.0
      %v1807 = vmax.f32 %v1797, 0.0
      %v1808 = vmax.f32 %v1798, 0.0
      %v1809 = vmax.f32 %v1799, 0.0
      %v1810 = vmax.f32 %v1800, 0.0
      %v1811 = vmax.f32 %v1801, 0.0
      %v1812 = vmax.f32 %v1802, 0.0
      %1814 = vset.pattern.permute.xlu0 0
      %1815 = vperm.xlu0 %1814, %v456
      %v1816 = vpop.permute.xlu0 %1815
      %1819 = vset.pattern.permute.xlu0 0
      %1820 = vperm.xlu0 %1819, %v457
      %v1821 = vpop.permute.xlu0 %1820
      %1824 = vset.pattern.permute.xlu0 0
      %1825 = vperm.xlu0 %1824, %v458
      %v1826 = vpop.permute.xlu0 %1825
      %1829 = vset.pattern.permute.xlu0 0
      %1830 = vperm.xlu0 %1829, %v459
      %v1831 = vpop.permute.xlu0 %1830
      %1834 = vset.pattern.permute.xlu0 0
      %1835 = vperm.xlu0 %1834, %v460
      %v1836 = vpop.permute.xlu0 %1835
      %1839 = vset.pattern.permute.xlu0 0
      %1840 = vperm.xlu0 %1839, %v461
      %v1841 = vpop.permute.xlu0 %1840
      %1844 = vset.pattern.permute.xlu0 0
      %1845 = vperm.xlu0 %1844, %v462
      %v1846 = vpop.permute.xlu0 %1845
      %1849 = vset.pattern.permute.xlu0 0
      %1850 = vperm.xlu0 %1849, %v463
      %v1851 = vpop.permute.xlu0 %1850
      %1854 = vset.pattern.permute.xlu0 0
      %1855 = vperm.xlu0 %1854, %v464
      %v1856 = vpop.permute.xlu0 %1855
      %1859 = vset.pattern.permute.xlu0 0
      %1860 = vperm.xlu0 %1859, %v465
      %v1861 = vpop.permute.xlu0 %1860
      %v1863 = vmul.f32 %v1803, %v1816
      %v1864 = vmul.f32 %v1804, %v1821
      %v1865 = vmul.f32 %v1805, %v1826
      %v1866 = vmul.f32 %v1806, %v1831
      %v1867 = vmul.f32 %v1807, %v1836
      %v1868 = vmul.f32 %v1808, %v1841
      %v1869 = vmul.f32 %v1809, %v1846
      %v1870 = vmul.f32 %v1810, %v1851
      %v1871 = vmul.f32 %v1811, %v1856
      %v1872 = vmul.f32 %v1812, %v1861
      %v1874 = vshrl.u32 %v449, 16
      %v1876 = vshll.u32 %v449, 16
      %v1878 = vrot.slane %v1876, 1
      %v1879 = vor.u32 %v1874, %v1878
      %v1881 = vshll.u32 %v450, 16
      %v1883 = vrot.slane %v1881, 1
      %v1884 = vsel %vm485, %v1879, %v1883
      %v1885 = vshrl.u32 %v450, 16
      %v1887 = vor.u32 %v1885, %v1883
      %v1889 = vshll.u32 %v451, 16
      %v1891 = vrot.slane %v1889, 1
      %v1892 = vsel %vm485, %v1887, %v1891
      %v1893 = vshrl.u32 %v451, 16
      %v1895 = vor.u32 %v1893, %v1891
      %v1897 = vshll.u32 %v452, 16
      %v1899 = vrot.slane %v1897, 1
      %v1900 = vsel %vm485, %v1895, %v1899
      %v1901 = vshrl.u32 %v452, 16
      %v1903 = vor.u32 %v1901, %v1899
      %v1905 = vshll.u32 %v453, 16
      %v1907 = vrot.slane %v1905, 1
      %v1908 = vsel %vm485, %v1903, %v1907
      %v1909 = vshrl.u32 %v453, 16
      %v1911 = vor.u32 %v1909, %v1907
      %v1913 = vshll.u32 %v454, 16
      %v1915 = vrot.slane %v1913, 1
      %v1916 = vsel %vm485, %v1911, %v1915
      %v1918 = vsel %vm554, %v1884, 0
      %v1921 = vsel %vm554, %v1892, 0
      %v1924 = vsel %vm554, %v1900, 0
      %v1927 = vsel %vm554, %v1908, 0
      %v1930 = vsel %vm554, %v1916, 0
      %1932 = vmatprep.subr.bf16.mxu0 0
      %1933 = vmatpush1.bf16.msra.mxu0 %v546
      %1934 = vmatprep.subr.bf16.mxu0 0
      %1935 = vmatpush1.bf16.msra.mxu0 %v547
      %1936 = vmatprep.subr.bf16.mxu0 0
      %1937 = vmatpush1.bf16.msra.mxu0 %v548
      %1938 = vmatprep.subr.bf16.mxu0 0
      %1939 = vmatpush1.bf16.msra.mxu0 %v549
      %1940 = vmatprep.subr.bf16.mxu0 0
      %1941 = vmatpush1.bf16.msra.mxu0 0
      %1942 = vmatprep.subr.bf16.mxu0 0
      %1943 = vmatpush1.bf16.msra.mxu0 0
      %1944 = vmatprep.subr.bf16.mxu0 0
      %1945 = vmatpush1.bf16.msra.mxu0 0
      %1946 = vmatprep.subr.bf16.mxu0 0
      %1947 = vmatpush1.bf16.msra.mxu0 0
      %1948 = vmatprep.subr.bf16.mxu0 0
      %1949 = vmatpush1.bf16.msra.mxu0 0
      %1950 = vmatprep.subr.bf16.mxu0 0
      %1951 = vmatpush1.bf16.msra.mxu0 0
      %1952 = vmatprep.subr.bf16.mxu0 0
      %1953 = vmatpush1.bf16.msra.mxu0 0
      %1954 = vmatprep.subr.bf16.mxu0 0
      %1955 = vmatpush1.bf16.msra.mxu0 0
      %1956 = vmatprep.subr.bf16.mxu0 0
      %1957 = vmatpush1.bf16.msra.mxu0 0
      %1958 = vmatprep.subr.bf16.mxu0 0
      %1959 = vmatpush1.bf16.msra.mxu0 0
      %1960 = vmatprep.subr.bf16.mxu0 0
      %1961 = vmatpush1.bf16.msra.mxu0 0
      %1962 = vmatprep.subr.bf16.mxu0 0
      %1963 = vmatpush1.bf16.msra.mxu0 0
      %1964 = vmatprep.mubr.bf16.mxu0 0
      %1965 = vmatmul.mubr.bf16.gmra.mrb[0].mxu0 %v1918
      %v1966 = vpop.f32.mrb[0].mxu0
      %v1967 = vadd.f32 0.0, %v1966
      %v1968 = vpop.f32.mrb[0].mxu0
      %v1969 = vpop.f32.mrb[0].mxu0
      %v1970 = vadd.f32 0.0, %v1969
      %v1971 = vpop.f32.mrb[0].mxu0
      %1972 = vmatprep.mubr.bf16.mxu0 0
      %1973 = vmatmul.mubr.bf16.gmra.mrb[0].mxu0 %v1921
      %v1974 = vpop.f32.mrb[0].mxu0
      %v1975 = vadd.f32 0.0, %v1974
      %v1976 = vpop.f32.mrb[0].mxu0
      %v1977 = vpop.f32.mrb[0].mxu0
      %v1978 = vadd.f32 0.0, %v1977
      %v1979 = vpop.f32.mrb[0].mxu0
      %1980 = vmatprep.mubr.bf16.mxu0 0
      %1981 = vmatmul.mubr.bf16.gmra.mrb[0].mxu0 %v1924
      %v1982 = vpop.f32.mrb[0].mxu0
      %v1983 = vadd.f32 0.0, %v1982
      %v1984 = vpop.f32.mrb[0].mxu0
      %v1985 = vpop.f32.mrb[0].mxu0
      %v1986 = vadd.f32 0.0, %v1985
      %v1987 = vpop.f32.mrb[0].mxu0
      %1988 = vmatprep.mubr.bf16.mxu0 0
      %1989 = vmatmul.mubr.bf16.gmra.mrb[0].mxu0 %v1927
      %v1990 = vpop.f32.mrb[0].mxu0
      %v1991 = vadd.f32 0.0, %v1990
      %v1992 = vpop.f32.mrb[0].mxu0
      %v1993 = vpop.f32.mrb[0].mxu0
      %v1994 = vadd.f32 0.0, %v1993
      %v1995 = vpop.f32.mrb[0].mxu0
      %1996 = vmatprep.mubr.bf16.mxu0 0
      %1997 = vmatmul.mubr.bf16.gmra.mrb[0].mxu0 %v1930
      %v1998 = vpop.f32.mrb[0].mxu0
      %v1999 = vadd.f32 0.0, %v1998
      %v2000 = vpop.f32.mrb[0].mxu0
      %v2001 = vpop.f32.mrb[0].mxu0
      %v2002 = vadd.f32 0.0, %v2001
      %v2003 = vpop.f32.mrb[0].mxu0
      %2004 = vdwg.mxu0
      %v2005 = vsel %vm554, %v449, 0
      %v2007 = vsel %vm554, %v450, 0
      %v2009 = vsel %vm554, %v451, 0
      %v2011 = vsel %vm554, %v452, 0
      %v2013 = vsel %vm554, %v453, 0
      %2015 = vmatprep.subr.bf16.mxu0 0
      %2016 = vmatpush1.bf16.msra.mxu0 %v659
      %2017 = vmatprep.subr.bf16.mxu0 0
      %2018 = vmatpush1.bf16.msra.mxu0 %v660
      %2019 = vmatprep.subr.bf16.mxu0 0
      %2020 = vmatpush1.bf16.msra.mxu0 %v661
      %2021 = vmatprep.subr.bf16.mxu0 0
      %2022 = vmatpush1.bf16.msra.mxu0 %v662
      %2023 = vmatprep.subr.bf16.mxu0 0
      %2024 = vmatpush1.bf16.msra.mxu0 0
      %2025 = vmatprep.subr.bf16.mxu0 0
      %2026 = vmatpush1.bf16.msra.mxu0 0
      %2027 = vmatprep.subr.bf16.mxu0 0
      %2028 = vmatpush1.bf16.msra.mxu0 0
      %2029 = vmatprep.subr.bf16.mxu0 0
      %2030 = vmatpush1.bf16.msra.mxu0 0
      %2031 = vmatprep.subr.bf16.mxu0 0
      %2032 = vmatpush1.bf16.msra.mxu0 0
      %2033 = vmatprep.subr.bf16.mxu0 0
      %2034 = vmatpush1.bf16.msra.mxu0 0
      %2035 = vmatprep.subr.bf16.mxu0 0
      %2036 = vmatpush1.bf16.msra.mxu0 0
      %2037 = vmatprep.subr.bf16.mxu0 0
      %2038 = vmatpush1.bf16.msra.mxu0 0
      %2039 = vmatprep.subr.bf16.mxu0 0
      %2040 = vmatpush1.bf16.msra.mxu0 0
      %2041 = vmatprep.subr.bf16.mxu0 0
      %2042 = vmatpush1.bf16.msra.mxu0 0
      %2043 = vmatprep.subr.bf16.mxu0 0
      %2044 = vmatpush1.bf16.msra.mxu0 0
      %2045 = vmatprep.subr.bf16.mxu0 0
      %2046 = vmatpush1.bf16.msra.mxu0 0
      %2047 = vmatprep.mubr.bf16.mxu0 0
      %2048 = vmatmul.mubr.bf16.gmra.mrb[0].mxu0 %v2005
      %v2049 = vpop.f32.mrb[0].mxu0
      %v2050 = vadd.f32 %v1967, %v2049
      %v2051 = vpop.f32.mrb[0].mxu0
      %v2052 = vpop.f32.mrb[0].mxu0
      %v2053 = vadd.f32 %v1970, %v2052
      %v2054 = vpop.f32.mrb[0].mxu0
      %2055 = vmatprep.mubr.bf16.mxu0 0
      %2056 = vmatmul.mubr.bf16.gmra.mrb[0].mxu0 %v2007
      %v2057 = vpop.f32.mrb[0].mxu0
      %v2058 = vadd.f32 %v1975, %v2057
      %v2059 = vpop.f32.mrb[0].mxu0
      %v2060 = vpop.f32.mrb[0].mxu0
      %v2061 = vadd.f32 %v1978, %v2060
      %v2062 = vpop.f32.mrb[0].mxu0
      %2063 = vmatprep.mubr.bf16.mxu0 0
      %2064 = vmatmul.mubr.bf16.gmra.mrb[0].mxu0 %v2009
      %v2065 = vpop.f32.mrb[0].mxu0
      %v2066 = vadd.f32 %v1983, %v2065
      %v2067 = vpop.f32.mrb[0].mxu0
      %v2068 = vpop.f32.mrb[0].mxu0
      %v2069 = vadd.f32 %v1986, %v2068
      %v2070 = vpop.f32.mrb[0].mxu0
      %2071 = vmatprep.mubr.bf16.mxu0 0
      %2072 = vmatmul.mubr.bf16.gmra.mrb[0].mxu0 %v2011
      %v2073 = vpop.f32.mrb[0].mxu0
      %v2074 = vadd.f32 %v1991, %v2073
      %v2075 = vpop.f32.mrb[0].mxu0
      %v2076 = vpop.f32.mrb[0].mxu0
      %v2077 = vadd.f32 %v1994, %v2076
      %v2078 = vpop.f32.mrb[0].mxu0
      %2079 = vmatprep.mubr.bf16.mxu0 0
      %2080 = vmatmul.mubr.bf16.gmra.mrb[0].mxu0 %v2013
      %v2081 = vpop.f32.mrb[0].mxu0
      %v2082 = vadd.f32 %v1999, %v2081
      %v2083 = vpop.f32.mrb[0].mxu0
      %v2084 = vpop.f32.mrb[0].mxu0
      %v2085 = vadd.f32 %v2002, %v2084
      %v2086 = vpop.f32.mrb[0].mxu0
      %2087 = vdwg.mxu0
      %v2094 = vrot.slane %v449, 1
      %v2095 = vrot.slane %v450, 1
      %v2096 = vsel %vm765, %v2094, %v2095
      %v2097 = vrot.slane %v451, 1
      %v2098 = vsel %vm765, %v2095, %v2097
      %v2099 = vrot.slane %v452, 1
      %v2100 = vsel %vm765, %v2097, %v2099
      %v2101 = vrot.slane %v453, 1
      %v2102 = vsel %vm765, %v2099, %v2101
      %v2103 = vrot.slane %v454, 1
      %v2104 = vsel %vm765, %v2101, %v2103
      %v2106 = vsel %vm554, %v2096, 0
      %v2109 = vsel %vm554, %v2098, 0
      %v2112 = vsel %vm554, %v2100, 0
      %v2115 = vsel %vm554, %v2102, 0
      %v2118 = vsel %vm554, %v2104, 0
      %2120 = vmatprep.subr.bf16.mxu0 0
      %2121 = vmatpush1.bf16.msra.mxu0 %v793
      %2122 = vmatprep.subr.bf16.mxu0 0
      %2123 = vmatpush1.bf16.msra.mxu0 %v794
      %2124 = vmatprep.subr.bf16.mxu0 0
      %2125 = vmatpush1.bf16.msra.mxu0 %v795
      %2126 = vmatprep.subr.bf16.mxu0 0
      %2127 = vmatpush1.bf16.msra.mxu0 %v796
      %2128 = vmatprep.subr.bf16.mxu0 0
      %2129 = vmatpush1.bf16.msra.mxu0 0
      %2130 = vmatprep.subr.bf16.mxu0 0
      %2131 = vmatpush1.bf16.msra.mxu0 0
      %2132 = vmatprep.subr.bf16.mxu0 0
      %2133 = vmatpush1.bf16.msra.mxu0 0
      %2134 = vmatprep.subr.bf16.mxu0 0
      %2135 = vmatpush1.bf16.msra.mxu0 0
      %2136 = vmatprep.subr.bf16.mxu0 0
      %2137 = vmatpush1.bf16.msra.mxu0 0
      %2138 = vmatprep.subr.bf16.mxu0 0
      %2139 = vmatpush1.bf16.msra.mxu0 0
      %2140 = vmatprep.subr.bf16.mxu0 0
      %2141 = vmatpush1.bf16.msra.mxu0 0
      %2142 = vmatprep.subr.bf16.mxu0 0
      %2143 = vmatpush1.bf16.msra.mxu0 0
      %2144 = vmatprep.subr.bf16.mxu0 0
      %2145 = vmatpush1.bf16.msra.mxu0 0
      %2146 = vmatprep.subr.bf16.mxu0 0
      %2147 = vmatpush1.bf16.msra.mxu0 0
      %2148 = vmatprep.subr.bf16.mxu0 0
      %2149 = vmatpush1.bf16.msra.mxu0 0
      %2150 = vmatprep.subr.bf16.mxu0 0
      %2151 = vmatpush1.bf16.msra.mxu0 0
      %2152 = vmatprep.mubr.bf16.mxu0 0
      %2153 = vmatmul.mubr.bf16.gmra.mrb[0].mxu0 %v2106
      %v2154 = vpop.f32.mrb[0].mxu0
      %v2155 = vadd.f32 0.0, %v2154
      %v2156 = vpop.f32.mrb[0].mxu0
      %v2157 = vpop.f32.mrb[0].mxu0
      %v2158 = vadd.f32 0.0, %v2157
      %v2159 = vpop.f32.mrb[0].mxu0
      %2160 = vmatprep.mubr.bf16.mxu0 0
      %2161 = vmatmul.mubr.bf16.gmra.mrb[0].mxu0 %v2109
      %v2162 = vpop.f32.mrb[0].mxu0
      %v2163 = vadd.f32 0.0, %v2162
      %v2164 = vpop.f32.mrb[0].mxu0
      %v2165 = vpop.f32.mrb[0].mxu0
      %v2166 = vadd.f32 0.0, %v2165
      %v2167 = vpop.f32.mrb[0].mxu0
      %2168 = vmatprep.mubr.bf16.mxu0 0
      %2169 = vmatmul.mubr.bf16.gmra.mrb[0].mxu0 %v2112
      %v2170 = vpop.f32.mrb[0].mxu0
      %v2171 = vadd.f32 0.0, %v2170
      %v2172 = vpop.f32.mrb[0].mxu0
      %v2173 = vpop.f32.mrb[0].mxu0
      %v2174 = vadd.f32 0.0, %v2173
      %v2175 = vpop.f32.mrb[0].mxu0
      %2176 = vmatprep.mubr.bf16.mxu0 0
      %2177 = vmatmul.mubr.bf16.gmra.mrb[0].mxu0 %v2115
      %v2178 = vpop.f32.mrb[0].mxu0
      %v2179 = vadd.f32 0.0, %v2178
      %v2180 = vpop.f32.mrb[0].mxu0
      %v2181 = vpop.f32.mrb[0].mxu0
      %v2182 = vadd.f32 0.0, %v2181
      %v2183 = vpop.f32.mrb[0].mxu0
      %2184 = vmatprep.mubr.bf16.mxu0 0
      %2185 = vmatmul.mubr.bf16.gmra.mrb[0].mxu0 %v2118
      %v2186 = vpop.f32.mrb[0].mxu0
      %v2187 = vadd.f32 0.0, %v2186
      %v2188 = vpop.f32.mrb[0].mxu0
      %v2189 = vpop.f32.mrb[0].mxu0
      %v2190 = vadd.f32 0.0, %v2189
      %v2191 = vpop.f32.mrb[0].mxu0
      %2192 = vdwg.mxu0
      %v2193 = vadd.f32 %v2050, %v2155
      %v2194 = vadd.f32 %v2053, %v2158
      %v2195 = vadd.f32 %v2058, %v2163
      %v2196 = vadd.f32 %v2061, %v2166
      %v2197 = vadd.f32 %v2066, %v2171
      %v2198 = vadd.f32 %v2069, %v2174
      %v2199 = vadd.f32 %v2074, %v2179
      %v2200 = vadd.f32 %v2077, %v2182
      %v2201 = vadd.f32 %v2082, %v2187
      %v2202 = vadd.f32 %v2085, %v2190
      %v2203 = vrot.slane %v449, 5
      %v2204 = vrot.slane %v450, 5
      %v2205 = vsel %vm908, %v2203, %v2204
      %v2206 = vrot.slane %v451, 5
      %v2207 = vsel %vm908, %v2204, %v2206
      %v2208 = vrot.slane %v452, 5
      %v2209 = vsel %vm908, %v2206, %v2208
      %v2210 = vrot.slane %v453, 5
      %v2211 = vsel %vm908, %v2208, %v2210
      %v2212 = vrot.slane %v454, 5
      %v2213 = vsel %vm908, %v2210, %v2212
      %v2215 = vsel %vm554, %v2205, 0
      %v2218 = vsel %vm554, %v2207, 0
      %v2221 = vsel %vm554, %v2209, 0
      %v2224 = vsel %vm554, %v2211, 0
      %v2227 = vsel %vm554, %v2213, 0
      %2229 = vmatprep.subr.bf16.mxu0 0
      %2230 = vmatpush1.bf16.msra.mxu0 %v936
      %2231 = vmatprep.subr.bf16.mxu0 0
      %2232 = vmatpush1.bf16.msra.mxu0 %v937
      %2233 = vmatprep.subr.bf16.mxu0 0
      %2234 = vmatpush1.bf16.msra.mxu0 %v938
      %2235 = vmatprep.subr.bf16.mxu0 0
      %2236 = vmatpush1.bf16.msra.mxu0 %v939
      %2237 = vmatprep.subr.bf16.mxu0 0
      %2238 = vmatpush1.bf16.msra.mxu0 0
      %2239 = vmatprep.subr.bf16.mxu0 0
      %2240 = vmatpush1.bf16.msra.mxu0 0
      %2241 = vmatprep.subr.bf16.mxu0 0
      %2242 = vmatpush1.bf16.msra.mxu0 0
      %2243 = vmatprep.subr.bf16.mxu0 0
      %2244 = vmatpush1.bf16.msra.mxu0 0
      %2245 = vmatprep.subr.bf16.mxu0 0
      %2246 = vmatpush1.bf16.msra.mxu0 0
      %2247 = vmatprep.subr.bf16.mxu0 0
      %2248 = vmatpush1.bf16.msra.mxu0 0
      %2249 = vmatprep.subr.bf16.mxu0 0
      %2250 = vmatpush1.bf16.msra.mxu0 0
      %2251 = vmatprep.subr.bf16.mxu0 0
      %2252 = vmatpush1.bf16.msra.mxu0 0
      %2253 = vmatprep.subr.bf16.mxu0 0
      %2254 = vmatpush1.bf16.msra.mxu0 0
      %2255 = vmatprep.subr.bf16.mxu0 0
      %2256 = vmatpush1.bf16.msra.mxu0 0
      %2257 = vmatprep.subr.bf16.mxu0 0
      %2258 = vmatpush1.bf16.msra.mxu0 0
      %2259 = vmatprep.subr.bf16.mxu0 0
      %2260 = vmatpush1.bf16.msra.mxu0 0
      %2261 = vmatprep.mubr.bf16.mxu0 0
      %2262 = vmatmul.mubr.bf16.gmra.mrb[0].mxu0 %v2215
      %v2263 = vpop.f32.mrb[0].mxu0
      %v2264 = vadd.f32 0.0, %v2263
      %v2265 = vpop.f32.mrb[0].mxu0
      %v2266 = vpop.f32.mrb[0].mxu0
      %v2267 = vadd.f32 0.0, %v2266
      %v2268 = vpop.f32.mrb[0].mxu0
      %2269 = vmatprep.mubr.bf16.mxu0 0
      %2270 = vmatmul.mubr.bf16.gmra.mrb[0].mxu0 %v2218
      %v2271 = vpop.f32.mrb[0].mxu0
      %v2272 = vadd.f32 0.0, %v2271
      %v2273 = vpop.f32.mrb[0].mxu0
      %v2274 = vpop.f32.mrb[0].mxu0
      %v2275 = vadd.f32 0.0, %v2274
      %v2276 = vpop.f32.mrb[0].mxu0
      %2277 = vmatprep.mubr.bf16.mxu0 0
      %2278 = vmatmul.mubr.bf16.gmra.mrb[0].mxu0 %v2221
      %v2279 = vpop.f32.mrb[0].mxu0
      %v2280 = vadd.f32 0.0, %v2279
      %v2281 = vpop.f32.mrb[0].mxu0
      %v2282 = vpop.f32.mrb[0].mxu0
      %v2283 = vadd.f32 0.0, %v2282
      %v2284 = vpop.f32.mrb[0].mxu0
      %2285 = vmatprep.mubr.bf16.mxu0 0
      %2286 = vmatmul.mubr.bf16.gmra.mrb[0].mxu0 %v2224
      %v2287 = vpop.f32.mrb[0].mxu0
      %v2288 = vadd.f32 0.0, %v2287
      %v2289 = vpop.f32.mrb[0].mxu0
      %v2290 = vpop.f32.mrb[0].mxu0
      %v2291 = vadd.f32 0.0, %v2290
      %v2292 = vpop.f32.mrb[0].mxu0
      %2293 = vmatprep.mubr.bf16.mxu0 0
      %2294 = vmatmul.mubr.bf16.gmra.mrb[0].mxu0 %v2227
      %v2295 = vpop.f32.mrb[0].mxu0
      %v2296 = vadd.f32 0.0, %v2295
      %v2297 = vpop.f32.mrb[0].mxu0
      %v2298 = vpop.f32.mrb[0].mxu0
      %v2299 = vadd.f32 0.0, %v2298
      %v2300 = vpop.f32.mrb[0].mxu0
      %2301 = vdwg.mxu0
      %v2302 = vadd.f32 %v2193, %v2264
      %v2303 = vadd.f32 %v2194, %v2267
      %v2304 = vadd.f32 %v2195, %v2272
      %v2305 = vadd.f32 %v2196, %v2275
      %v2306 = vadd.f32 %v2197, %v2280
      %v2307 = vadd.f32 %v2198, %v2283
      %v2308 = vadd.f32 %v2199, %v2288
      %v2309 = vadd.f32 %v2200, %v2291
      %v2310 = vadd.f32 %v2201, %v2296
      %v2311 = vadd.f32 %v2202, %v2299
      %v2312 = vrot.slane %v1874, 5
      %v2313 = vrot.slane %v1876, 6
      %v2314 = vor.u32 %v2312, %v2313
      %v2315 = vrot.slane %v1885, 5
      %v2316 = vrot.slane %v1881, 6
      %v2317 = vor.u32 %v2315, %v2316
      %v2318 = vsel %vm1051, %v2314, %v2317
      %v2319 = vrot.slane %v1893, 5
      %v2320 = vrot.slane %v1889, 6
      %v2321 = vor.u32 %v2319, %v2320
      %v2322 = vsel %vm1051, %v2317, %v2321
      %v2323 = vrot.slane %v1901, 5
      %v2324 = vrot.slane %v1897, 6
      %v2325 = vor.u32 %v2323, %v2324
      %v2326 = vsel %vm1051, %v2321, %v2325
      %v2327 = vrot.slane %v1909, 5
      %v2328 = vrot.slane %v1905, 6
      %v2329 = vor.u32 %v2327, %v2328
      %v2330 = vsel %vm1051, %v2325, %v2329
      %v2331 = vshrl.u32 %v454, 16
      %v2333 = vrot.slane %v2331, 5
      %v2334 = vrot.slane %v1913, 6
      %v2335 = vor.u32 %v2333, %v2334
      %v2336 = vsel %vm1051, %v2329, %v2335
      %v2338 = vsel %vm554, %v2318, 0
      %v2341 = vsel %vm554, %v2322, 0
      %v2344 = vsel %vm554, %v2326, 0
      %v2347 = vsel %vm554, %v2330, 0
      %v2350 = vsel %vm554, %v2336, 0
      %2352 = vmatprep.subr.bf16.mxu0 0
      %2353 = vmatpush1.bf16.msra.mxu0 %v1093
      %2354 = vmatprep.subr.bf16.mxu0 0
      %2355 = vmatpush1.bf16.msra.mxu0 %v1094
      %2356 = vmatprep.subr.bf16.mxu0 0
      %2357 = vmatpush1.bf16.msra.mxu0 %v1095
      %2358 = vmatprep.subr.bf16.mxu0 0
      %2359 = vmatpush1.bf16.msra.mxu0 %v1096
      %2360 = vmatprep.subr.bf16.mxu0 0
      %2361 = vmatpush1.bf16.msra.mxu0 0
      %2362 = vmatprep.subr.bf16.mxu0 0
      %2363 = vmatpush1.bf16.msra.mxu0 0
      %2364 = vmatprep.subr.bf16.mxu0 0
      %2365 = vmatpush1.bf16.msra.mxu0 0
      %2366 = vmatprep.subr.bf16.mxu0 0
      %2367 = vmatpush1.bf16.msra.mxu0 0
      %2368 = vmatprep.subr.bf16.mxu0 0
      %2369 = vmatpush1.bf16.msra.mxu0 0
      %2370 = vmatprep.subr.bf16.mxu0 0
      %2371 = vmatpush1.bf16.msra.mxu0 0
      %2372 = vmatprep.subr.bf16.mxu0 0
      %2373 = vmatpush1.bf16.msra.mxu0 0
      %2374 = vmatprep.subr.bf16.mxu0 0
      %2375 = vmatpush1.bf16.msra.mxu0 0
      %2376 = vmatprep.subr.bf16.mxu0 0
      %2377 = vmatpush1.bf16.msra.mxu0 0
      %2378 = vmatprep.subr.bf16.mxu0 0
      %2379 = vmatpush1.bf16.msra.mxu0 0
      %2380 = vmatprep.subr.bf16.mxu0 0
      %2381 = vmatpush1.bf16.msra.mxu0 0
      %2382 = vmatprep.subr.bf16.mxu0 0
      %2383 = vmatpush1.bf16.msra.mxu0 0
      %2384 = vmatprep.mubr.bf16.mxu0 0
      %2385 = vmatmul.mubr.bf16.gmra.mrb[0].mxu0 %v2338
      %v2386 = vpop.f32.mrb[0].mxu0
      %v2387 = vadd.f32 0.0, %v2386
      %v2388 = vpop.f32.mrb[0].mxu0
      %v2389 = vpop.f32.mrb[0].mxu0
      %v2390 = vadd.f32 0.0, %v2389
      %v2391 = vpop.f32.mrb[0].mxu0
      %2392 = vmatprep.mubr.bf16.mxu0 0
      %2393 = vmatmul.mubr.bf16.gmra.mrb[0].mxu0 %v2341
      %v2394 = vpop.f32.mrb[0].mxu0
      %v2395 = vadd.f32 0.0, %v2394
      %v2396 = vpop.f32.mrb[0].mxu0
      %v2397 = vpop.f32.mrb[0].mxu0
      %v2398 = vadd.f32 0.0, %v2397
      %v2399 = vpop.f32.mrb[0].mxu0
      %2400 = vmatprep.mubr.bf16.mxu0 0
      %2401 = vmatmul.mubr.bf16.gmra.mrb[0].mxu0 %v2344
      %v2402 = vpop.f32.mrb[0].mxu0
      %v2403 = vadd.f32 0.0, %v2402
      %v2404 = vpop.f32.mrb[0].mxu0
      %v2405 = vpop.f32.mrb[0].mxu0
      %v2406 = vadd.f32 0.0, %v2405
      %v2407 = vpop.f32.mrb[0].mxu0
      %2408 = vmatprep.mubr.bf16.mxu0 0
      %2409 = vmatmul.mubr.bf16.gmra.mrb[0].mxu0 %v2347
      %v2410 = vpop.f32.mrb[0].mxu0
      %v2411 = vadd.f32 0.0, %v2410
      %v2412 = vpop.f32.mrb[0].mxu0
      %v2413 = vpop.f32.mrb[0].mxu0
      %v2414 = vadd.f32 0.0, %v2413
      %v2415 = vpop.f32.mrb[0].mxu0
      %2416 = vmatprep.mubr.bf16.mxu0 0
      %2417 = vmatmul.mubr.bf16.gmra.mrb[0].mxu0 %v2350
      %v2418 = vpop.f32.mrb[0].mxu0
      %v2419 = vadd.f32 0.0, %v2418
      %v2420 = vpop.f32.mrb[0].mxu0
      %v2421 = vpop.f32.mrb[0].mxu0
      %v2422 = vadd.f32 0.0, %v2421
      %v2423 = vpop.f32.mrb[0].mxu0
      %2424 = vdwg.mxu0
      %v2425 = vadd.f32 %v2302, %v2387
      %v2426 = vadd.f32 %v2303, %v2390
      %v2427 = vadd.f32 %v2304, %v2395
      %v2428 = vadd.f32 %v2305, %v2398
      %v2429 = vadd.f32 %v2306, %v2403
      %v2430 = vadd.f32 %v2307, %v2406
      %v2431 = vadd.f32 %v2308, %v2411
      %v2432 = vadd.f32 %v2309, %v2414
      %v2433 = vadd.f32 %v2310, %v2419
      %v2434 = vadd.f32 %v2311, %v2422
      %v2435 = vrot.slane %v449, 6
      %v2436 = vrot.slane %v450, 6
      %v2437 = vsel %vm1208, %v2435, %v2436
      %v2438 = vrot.slane %v451, 6
      %v2439 = vsel %vm1208, %v2436, %v2438
      %v2440 = vrot.slane %v452, 6
      %v2441 = vsel %vm1208, %v2438, %v2440
      %v2442 = vrot.slane %v453, 6
      %v2443 = vsel %vm1208, %v2440, %v2442
      %v2444 = vrot.slane %v454, 6
      %v2445 = vsel %vm1208, %v2442, %v2444
      %v2447 = vsel %vm554, %v2437, 0
      %v2450 = vsel %vm554, %v2439, 0
      %v2453 = vsel %vm554, %v2441, 0
      %v2456 = vsel %vm554, %v2443, 0
      %v2459 = vsel %vm554, %v2445, 0
      %2461 = vmatprep.subr.bf16.mxu0 0
      %2462 = vmatpush1.bf16.msra.mxu0 %v1236
      %2463 = vmatprep.subr.bf16.mxu0 0
      %2464 = vmatpush1.bf16.msra.mxu0 %v1237
      %2465 = vmatprep.subr.bf16.mxu0 0
      %2466 = vmatpush1.bf16.msra.mxu0 %v1238
      %2467 = vmatprep.subr.bf16.mxu0 0
      %2468 = vmatpush1.bf16.msra.mxu0 %v1239
      %2469 = vmatprep.subr.bf16.mxu0 0
      %2470 = vmatpush1.bf16.msra.mxu0 0
      %2471 = vmatprep.subr.bf16.mxu0 0
      %2472 = vmatpush1.bf16.msra.mxu0 0
      %2473 = vmatprep.subr.bf16.mxu0 0
      %2474 = vmatpush1.bf16.msra.mxu0 0
      %2475 = vmatprep.subr.bf16.mxu0 0
      %2476 = vmatpush1.bf16.msra.mxu0 0
      %2477 = vmatprep.subr.bf16.mxu0 0
      %2478 = vmatpush1.bf16.msra.mxu0 0
      %2479 = vmatprep.subr.bf16.mxu0 0
      %2480 = vmatpush1.bf16.msra.mxu0 0
      %2481 = vmatprep.subr.bf16.mxu0 0
      %2482 = vmatpush1.bf16.msra.mxu0 0
      %2483 = vmatprep.subr.bf16.mxu0 0
      %2484 = vmatpush1.bf16.msra.mxu0 0
      %2485 = vmatprep.subr.bf16.mxu0 0
      %2486 = vmatpush1.bf16.msra.mxu0 0
      %2487 = vmatprep.subr.bf16.mxu0 0
      %2488 = vmatpush1.bf16.msra.mxu0 0
      %2489 = vmatprep.subr.bf16.mxu0 0
      %2490 = vmatpush1.bf16.msra.mxu0 0
      %2491 = vmatprep.subr.bf16.mxu0 0
      %2492 = vmatpush1.bf16.msra.mxu0 0
      %2493 = vmatprep.mubr.bf16.mxu0 0
      %2494 = vmatmul.mubr.bf16.gmra.mrb[0].mxu0 %v2447
      %v2495 = vpop.f32.mrb[0].mxu0
      %v2496 = vadd.f32 0.0, %v2495
      %v2497 = vpop.f32.mrb[0].mxu0
      %v2498 = vpop.f32.mrb[0].mxu0
      %v2499 = vadd.f32 0.0, %v2498
      %v2500 = vpop.f32.mrb[0].mxu0
      %2501 = vmatprep.mubr.bf16.mxu0 0
      %2502 = vmatmul.mubr.bf16.gmra.mrb[0].mxu0 %v2450
      %v2503 = vpop.f32.mrb[0].mxu0
      %v2504 = vadd.f32 0.0, %v2503
      %v2505 = vpop.f32.mrb[0].mxu0
      %v2506 = vpop.f32.mrb[0].mxu0
      %v2507 = vadd.f32 0.0, %v2506
      %v2508 = vpop.f32.mrb[0].mxu0
      %2509 = vmatprep.mubr.bf16.mxu0 0
      %2510 = vmatmul.mubr.bf16.gmra.mrb[0].mxu0 %v2453
      %v2511 = vpop.f32.mrb[0].mxu0
      %v2512 = vadd.f32 0.0, %v2511
      %v2513 = vpop.f32.mrb[0].mxu0
      %v2514 = vpop.f32.mrb[0].mxu0
      %v2515 = vadd.f32 0.0, %v2514
      %v2516 = vpop.f32.mrb[0].mxu0
      %2517 = vmatprep.mubr.bf16.mxu0 0
      %2518 = vmatmul.mubr.bf16.gmra.mrb[0].mxu0 %v2456
      %v2519 = vpop.f32.mrb[0].mxu0
      %v2520 = vadd.f32 0.0, %v2519
      %v2521 = vpop.f32.mrb[0].mxu0
      %v2522 = vpop.f32.mrb[0].mxu0
      %v2523 = vadd.f32 0.0, %v2522
      %v2524 = vpop.f32.mrb[0].mxu0
      %2525 = vmatprep.mubr.bf16.mxu0 0
      %2526 = vmatmul.mubr.bf16.gmra.mrb[0].mxu0 %v2459
      %v2527 = vpop.f32.mrb[0].mxu0
      %v2528 = vadd.f32 0.0, %v2527
      %v2529 = vpop.f32.mrb[0].mxu0
      %v2530 = vpop.f32.mrb[0].mxu0
      %v2531 = vadd.f32 0.0, %v2530
      %v2532 = vpop.f32.mrb[0].mxu0
      %2533 = vdwg.mxu0
      %v2534 = vadd.f32 %v2425, %v2496
      %v2535 = vadd.f32 %v2426, %v2499
      %v2536 = vadd.f32 %v2427, %v2504
      %v2537 = vadd.f32 %v2428, %v2507
      %v2538 = vadd.f32 %v2429, %v2512
      %v2539 = vadd.f32 %v2430, %v2515
      %v2540 = vadd.f32 %v2431, %v2520
      %v2541 = vadd.f32 %v2432, %v2523
      %v2542 = vadd.f32 %v2433, %v2528
      %v2543 = vadd.f32 %v2434, %v2531
      %v2545 = vrot.slane %v450, 2
      %v2546 = vrot.slane %v451, 2
      %v2547 = vsel %vm1352, %v2545, %v2546
      %v2548 = vrot.slane %v452, 2
      %v2549 = vsel %vm1352, %v2546, %v2548
      %v2550 = vrot.slane %v453, 2
      %v2551 = vsel %vm1352, %v2548, %v2550
      %v2552 = vrot.slane %v454, 2
      %v2553 = vsel %vm1352, %v2550, %v2552
      %v2554 = vrot.slane %v455, 2
      %v2555 = vsel %vm1352, %v2552, %v2554
      %v2557 = vsel %vm554, %v2547, 0
      %v2560 = vsel %vm554, %v2549, 0
      %v2563 = vsel %vm554, %v2551, 0
      %v2566 = vsel %vm554, %v2553, 0
      %v2569 = vsel %vm554, %v2555, 0
      %2571 = vmatprep.subr.bf16.mxu0 0
      %2572 = vmatpush1.bf16.msra.mxu0 %v1380
      %2573 = vmatprep.subr.bf16.mxu0 0
      %2574 = vmatpush1.bf16.msra.mxu0 %v1381
      %2575 = vmatprep.subr.bf16.mxu0 0
      %2576 = vmatpush1.bf16.msra.mxu0 %v1382
      %2577 = vmatprep.subr.bf16.mxu0 0
      %2578 = vmatpush1.bf16.msra.mxu0 %v1383
      %2579 = vmatprep.subr.bf16.mxu0 0
      %2580 = vmatpush1.bf16.msra.mxu0 0
      %2581 = vmatprep.subr.bf16.mxu0 0
      %2582 = vmatpush1.bf16.msra.mxu0 0
      %2583 = vmatprep.subr.bf16.mxu0 0
      %2584 = vmatpush1.bf16.msra.mxu0 0
      %2585 = vmatprep.subr.bf16.mxu0 0
      %2586 = vmatpush1.bf16.msra.mxu0 0
      %2587 = vmatprep.subr.bf16.mxu0 0
      %2588 = vmatpush1.bf16.msra.mxu0 0
      %2589 = vmatprep.subr.bf16.mxu0 0
      %2590 = vmatpush1.bf16.msra.mxu0 0
      %2591 = vmatprep.subr.bf16.mxu0 0
      %2592 = vmatpush1.bf16.msra.mxu0 0
      %2593 = vmatprep.subr.bf16.mxu0 0
      %2594 = vmatpush1.bf16.msra.mxu0 0
      %2595 = vmatprep.subr.bf16.mxu0 0
      %2596 = vmatpush1.bf16.msra.mxu0 0
      %2597 = vmatprep.subr.bf16.mxu0 0
      %2598 = vmatpush1.bf16.msra.mxu0 0
      %2599 = vmatprep.subr.bf16.mxu0 0
      %2600 = vmatpush1.bf16.msra.mxu0 0
      %2601 = vmatprep.subr.bf16.mxu0 0
      %2602 = vmatpush1.bf16.msra.mxu0 0
      %2603 = vmatprep.mubr.bf16.mxu0 0
      %2604 = vmatmul.mubr.bf16.gmra.mrb[0].mxu0 %v2557
      %v2605 = vpop.f32.mrb[0].mxu0
      %v2606 = vadd.f32 0.0, %v2605
      %v2607 = vpop.f32.mrb[0].mxu0
      %v2608 = vpop.f32.mrb[0].mxu0
      %v2609 = vadd.f32 0.0, %v2608
      %v2610 = vpop.f32.mrb[0].mxu0
      %2611 = vmatprep.mubr.bf16.mxu0 0
      %2612 = vmatmul.mubr.bf16.gmra.mrb[0].mxu0 %v2560
      %v2613 = vpop.f32.mrb[0].mxu0
      %v2614 = vadd.f32 0.0, %v2613
      %v2615 = vpop.f32.mrb[0].mxu0
      %v2616 = vpop.f32.mrb[0].mxu0
      %v2617 = vadd.f32 0.0, %v2616
      %v2618 = vpop.f32.mrb[0].mxu0
      %2619 = vmatprep.mubr.bf16.mxu0 0
      %2620 = vmatmul.mubr.bf16.gmra.mrb[0].mxu0 %v2563
      %v2621 = vpop.f32.mrb[0].mxu0
      %v2622 = vadd.f32 0.0, %v2621
      %v2623 = vpop.f32.mrb[0].mxu0
      %v2624 = vpop.f32.mrb[0].mxu0
      %v2625 = vadd.f32 0.0, %v2624
      %v2626 = vpop.f32.mrb[0].mxu0
      %2627 = vmatprep.mubr.bf16.mxu0 0
      %2628 = vmatmul.mubr.bf16.gmra.mrb[0].mxu0 %v2566
      %v2629 = vpop.f32.mrb[0].mxu0
      %v2630 = vadd.f32 0.0, %v2629
      %v2631 = vpop.f32.mrb[0].mxu0
      %v2632 = vpop.f32.mrb[0].mxu0
      %v2633 = vadd.f32 0.0, %v2632
      %v2634 = vpop.f32.mrb[0].mxu0
      %2635 = vmatprep.mubr.bf16.mxu0 0
      %2636 = vmatmul.mubr.bf16.gmra.mrb[0].mxu0 %v2569
      %v2637 = vpop.f32.mrb[0].mxu0
      %v2638 = vadd.f32 0.0, %v2637
      %v2639 = vpop.f32.mrb[0].mxu0
      %v2640 = vpop.f32.mrb[0].mxu0
      %v2641 = vadd.f32 0.0, %v2640
      %v2642 = vpop.f32.mrb[0].mxu0
      %2643 = vdwg.mxu0
      %v2644 = vadd.f32 %v2534, %v2606
      %v2645 = vadd.f32 %v2535, %v2609
      %v2646 = vadd.f32 %v2536, %v2614
      %v2647 = vadd.f32 %v2537, %v2617
      %v2648 = vadd.f32 %v2538, %v2622
      %v2649 = vadd.f32 %v2539, %v2625
      %v2650 = vadd.f32 %v2540, %v2630
      %v2651 = vadd.f32 %v2541, %v2633
      %v2652 = vadd.f32 %v2542, %v2638
      %v2653 = vadd.f32 %v2543, %v2641
      %v2654 = vrot.slane %v1885, 2
      %v2655 = vrot.slane %v1881, 3
      %v2656 = vor.u32 %v2654, %v2655
      %v2657 = vrot.slane %v1893, 2
      %v2658 = vrot.slane %v1889, 3
      %v2659 = vor.u32 %v2657, %v2658
      %v2660 = vsel %vm1495, %v2656, %v2659
      %v2661 = vrot.slane %v1901, 2
      %v2662 = vrot.slane %v1897, 3
      %v2663 = vor.u32 %v2661, %v2662
      %v2664 = vsel %vm1495, %v2659, %v2663
      %v2665 = vrot.slane %v1909, 2
      %v2666 = vrot.slane %v1905, 3
      %v2667 = vor.u32 %v2665, %v2666
      %v2668 = vsel %vm1495, %v2663, %v2667
      %v2669 = vrot.slane %v2331, 2
      %v2670 = vrot.slane %v1913, 3
      %v2671 = vor.u32 %v2669, %v2670
      %v2672 = vsel %vm1495, %v2667, %v2671
      %v2674 = vshrl.u32 %v455, 16
      %v2676 = vrot.slane %v2674, 2
      %v2677 = vshll.u32 %v455, 16
      %v2679 = vrot.slane %v2677, 3
      %v2680 = vor.u32 %v2676, %v2679
      %v2681 = vsel %vm1495, %v2671, %v2680
      %v2683 = vsel %vm554, %v2660, 0
      %v2686 = vsel %vm554, %v2664, 0
      %v2689 = vsel %vm554, %v2668, 0
      %v2692 = vsel %vm554, %v2672, 0
      %v2695 = vsel %vm554, %v2681, 0
      %2697 = vmatprep.subr.bf16.mxu0 0
      %2698 = vmatpush1.bf16.msra.mxu0 %v1540
      %2699 = vmatprep.subr.bf16.mxu0 0
      %2700 = vmatpush1.bf16.msra.mxu0 %v1541
      %2701 = vmatprep.subr.bf16.mxu0 0
      %2702 = vmatpush1.bf16.msra.mxu0 %v1542
      %2703 = vmatprep.subr.bf16.mxu0 0
      %2704 = vmatpush1.bf16.msra.mxu0 %v1543
      %2705 = vmatprep.subr.bf16.mxu0 0
      %2706 = vmatpush1.bf16.msra.mxu0 0
      %2707 = vmatprep.subr.bf16.mxu0 0
      %2708 = vmatpush1.bf16.msra.mxu0 0
      %2709 = vmatprep.subr.bf16.mxu0 0
      %2710 = vmatpush1.bf16.msra.mxu0 0
      %2711 = vmatprep.subr.bf16.mxu0 0
      %2712 = vmatpush1.bf16.msra.mxu0 0
      %2713 = vmatprep.subr.bf16.mxu0 0
      %2714 = vmatpush1.bf16.msra.mxu0 0
      %2715 = vmatprep.subr.bf16.mxu0 0
      %2716 = vmatpush1.bf16.msra.mxu0 0
      %2717 = vmatprep.subr.bf16.mxu0 0
      %2718 = vmatpush1.bf16.msra.mxu0 0
      %2719 = vmatprep.subr.bf16.mxu0 0
      %2720 = vmatpush1.bf16.msra.mxu0 0
      %2721 = vmatprep.subr.bf16.mxu0 0
      %2722 = vmatpush1.bf16.msra.mxu0 0
      %2723 = vmatprep.subr.bf16.mxu0 0
      %2724 = vmatpush1.bf16.msra.mxu0 0
      %2725 = vmatprep.subr.bf16.mxu0 0
      %2726 = vmatpush1.bf16.msra.mxu0 0
      %2727 = vmatprep.subr.bf16.mxu0 0
      %2728 = vmatpush1.bf16.msra.mxu0 0
      %2729 = vmatprep.mubr.bf16.mxu0 0
      %2730 = vmatmul.mubr.bf16.gmra.mrb[0].mxu0 %v2683
      %v2731 = vpop.f32.mrb[0].mxu0
      %v2732 = vadd.f32 0.0, %v2731
      %v2733 = vpop.f32.mrb[0].mxu0
      %v2734 = vpop.f32.mrb[0].mxu0
      %v2735 = vadd.f32 0.0, %v2734
      %v2736 = vpop.f32.mrb[0].mxu0
      %2737 = vmatprep.mubr.bf16.mxu0 0
      %2738 = vmatmul.mubr.bf16.gmra.mrb[0].mxu0 %v2686
      %v2739 = vpop.f32.mrb[0].mxu0
      %v2740 = vadd.f32 0.0, %v2739
      %v2741 = vpop.f32.mrb[0].mxu0
      %v2742 = vpop.f32.mrb[0].mxu0
      %v2743 = vadd.f32 0.0, %v2742
      %v2744 = vpop.f32.mrb[0].mxu0
      %2745 = vmatprep.mubr.bf16.mxu0 0
      %2746 = vmatmul.mubr.bf16.gmra.mrb[0].mxu0 %v2689
      %v2747 = vpop.f32.mrb[0].mxu0
      %v2748 = vadd.f32 0.0, %v2747
      %v2749 = vpop.f32.mrb[0].mxu0
      %v2750 = vpop.f32.mrb[0].mxu0
      %v2751 = vadd.f32 0.0, %v2750
      %v2752 = vpop.f32.mrb[0].mxu0
      %2753 = vmatprep.mubr.bf16.mxu0 0
      %2754 = vmatmul.mubr.bf16.gmra.mrb[0].mxu0 %v2692
      %v2755 = vpop.f32.mrb[0].mxu0
      %v2756 = vadd.f32 0.0, %v2755
      %v2757 = vpop.f32.mrb[0].mxu0
      %v2758 = vpop.f32.mrb[0].mxu0
      %v2759 = vadd.f32 0.0, %v2758
      %v2760 = vpop.f32.mrb[0].mxu0
      %2761 = vmatprep.mubr.bf16.mxu0 0
      %2762 = vmatmul.mubr.bf16.gmra.mrb[0].mxu0 %v2695
      %v2763 = vpop.f32.mrb[0].mxu0
      %v2764 = vadd.f32 0.0, %v2763
      %v2765 = vpop.f32.mrb[0].mxu0
      %v2766 = vpop.f32.mrb[0].mxu0
      %v2767 = vadd.f32 0.0, %v2766
      %v2768 = vpop.f32.mrb[0].mxu0
      %2769 = vdwg.mxu0
      %v2770 = vadd.f32 %v2644, %v2732
      %v2771 = vadd.f32 %v2645, %v2735
      %v2772 = vadd.f32 %v2646, %v2740
      %v2773 = vadd.f32 %v2647, %v2743
      %v2774 = vadd.f32 %v2648, %v2748
      %v2775 = vadd.f32 %v2649, %v2751
      %v2776 = vadd.f32 %v2650, %v2756
      %v2777 = vadd.f32 %v2651, %v2759
      %v2778 = vadd.f32 %v2652, %v2764
      %v2779 = vadd.f32 %v2653, %v2767
      %v2780 = vrot.slane %v450, 3
      %v2781 = vrot.slane %v451, 3
      %v2782 = vsel %vm1655, %v2780, %v2781
      %v2783 = vrot.slane %v452, 3
      %v2784 = vsel %vm1655, %v2781, %v2783
      %v2785 = vrot.slane %v453, 3
      %v2786 = vsel %vm1655, %v2783, %v2785
      %v2787 = vrot.slane %v454, 3
      %v2788 = vsel %vm1655, %v2785, %v2787
      %v2789 = vrot.slane %v455, 3
      %v2790 = vsel %vm1655, %v2787, %v2789
      %v2792 = vsel %vm554, %v2782, 0
      %v2795 = vsel %vm554, %v2784, 0
      %v2798 = vsel %vm554, %v2786, 0
      %v2801 = vsel %vm554, %v2788, 0
      %v2804 = vsel %vm554, %v2790, 0
      %2806 = vmatprep.subr.bf16.mxu0 0
      %2807 = vmatpush1.bf16.msra.mxu0 %v1683
      %2808 = vmatprep.subr.bf16.mxu0 0
      %2809 = vmatpush1.bf16.msra.mxu0 %v1684
      %2810 = vmatprep.subr.bf16.mxu0 0
      %2811 = vmatpush1.bf16.msra.mxu0 %v1685
      %2812 = vmatprep.subr.bf16.mxu0 0
      %2813 = vmatpush1.bf16.msra.mxu0 %v1686
      %2814 = vmatprep.subr.bf16.mxu0 0
      %2815 = vmatpush1.bf16.msra.mxu0 0
      %2816 = vmatprep.subr.bf16.mxu0 0
      %2817 = vmatpush1.bf16.msra.mxu0 0
      %2818 = vmatprep.subr.bf16.mxu0 0
      %2819 = vmatpush1.bf16.msra.mxu0 0
      %2820 = vmatprep.subr.bf16.mxu0 0
      %2821 = vmatpush1.bf16.msra.mxu0 0
      %2822 = vmatprep.subr.bf16.mxu0 0
      %2823 = vmatpush1.bf16.msra.mxu0 0
      %2824 = vmatprep.subr.bf16.mxu0 0
      %2825 = vmatpush1.bf16.msra.mxu0 0
      %2826 = vmatprep.subr.bf16.mxu0 0
      %2827 = vmatpush1.bf16.msra.mxu0 0
      %2828 = vmatprep.subr.bf16.mxu0 0
      %2829 = vmatpush1.bf16.msra.mxu0 0
      %2830 = vmatprep.subr.bf16.mxu0 0
      %2831 = vmatpush1.bf16.msra.mxu0 0
      %2832 = vmatprep.subr.bf16.mxu0 0
      %2833 = vmatpush1.bf16.msra.mxu0 0
      %2834 = vmatprep.subr.bf16.mxu0 0
      %2835 = vmatpush1.bf16.msra.mxu0 0
      %2836 = vmatprep.subr.bf16.mxu0 0
      %2837 = vmatpush1.bf16.msra.mxu0 0
      %2838 = vmatprep.mubr.bf16.mxu0 0
      %2839 = vmatmul.mubr.bf16.gmra.mrb[0].mxu0 %v2792
      %v2840 = vpop.f32.mrb[0].mxu0
      %v2841 = vadd.f32 0.0, %v2840
      %v2842 = vpop.f32.mrb[0].mxu0
      %v2843 = vpop.f32.mrb[0].mxu0
      %v2844 = vadd.f32 0.0, %v2843
      %v2845 = vpop.f32.mrb[0].mxu0
      %2846 = vmatprep.mubr.bf16.mxu0 0
      %2847 = vmatmul.mubr.bf16.gmra.mrb[0].mxu0 %v2795
      %v2848 = vpop.f32.mrb[0].mxu0
      %v2849 = vadd.f32 0.0, %v2848
      %v2850 = vpop.f32.mrb[0].mxu0
      %v2851 = vpop.f32.mrb[0].mxu0
      %v2852 = vadd.f32 0.0, %v2851
      %v2853 = vpop.f32.mrb[0].mxu0
      %2854 = vmatprep.mubr.bf16.mxu0 0
      %2855 = vmatmul.mubr.bf16.gmra.mrb[0].mxu0 %v2798
      %v2856 = vpop.f32.mrb[0].mxu0
      %v2857 = vadd.f32 0.0, %v2856
      %v2858 = vpop.f32.mrb[0].mxu0
      %v2859 = vpop.f32.mrb[0].mxu0
      %v2860 = vadd.f32 0.0, %v2859
      %v2861 = vpop.f32.mrb[0].mxu0
      %2862 = vmatprep.mubr.bf16.mxu0 0
      %2863 = vmatmul.mubr.bf16.gmra.mrb[0].mxu0 %v2801
      %v2864 = vpop.f32.mrb[0].mxu0
      %v2865 = vadd.f32 0.0, %v2864
      %v2866 = vpop.f32.mrb[0].mxu0
      %v2867 = vpop.f32.mrb[0].mxu0
      %v2868 = vadd.f32 0.0, %v2867
      %v2869 = vpop.f32.mrb[0].mxu0
      %2870 = vmatprep.mubr.bf16.mxu0 0
      %2871 = vmatmul.mubr.bf16.gmra.mrb[0].mxu0 %v2804
      %v2872 = vpop.f32.mrb[0].mxu0
      %v2873 = vadd.f32 0.0, %v2872
      %v2874 = vpop.f32.mrb[0].mxu0
      %v2875 = vpop.f32.mrb[0].mxu0
      %v2876 = vadd.f32 0.0, %v2875
      %v2877 = vpop.f32.mrb[0].mxu0
      %2878 = vdwg.mxu0
      %v2879 = vadd.f32 %v2770, %v2841
      %v2880 = vadd.f32 %v2771, %v2844
      %v2881 = vadd.f32 %v2772, %v2849
      %v2882 = vadd.f32 %v2773, %v2852
      %v2883 = vadd.f32 %v2774, %v2857
      %v2884 = vadd.f32 %v2775, %v2860
      %v2885 = vadd.f32 %v2776, %v2865
      %v2886 = vadd.f32 %v2777, %v2868
      %v2887 = vadd.f32 %v2778, %v2873
      %v2888 = vadd.f32 %v2779, %v2876
      %v2889 = vadd.f32 %v2879, %v1792
      %v2890 = vadd.f32 %v2880, %v1792
      %v2891 = vadd.f32 %v2881, %v1792
      %v2892 = vadd.f32 %v2882, %v1792
      %v2893 = vadd.f32 %v2883, %v1792
      %v2894 = vadd.f32 %v2884, %v1792
      %v2895 = vadd.f32 %v2885, %v1792
      %v2896 = vadd.f32 %v2886, %v1792
      %v2897 = vadd.f32 %v2887, %v1792
      %v2898 = vadd.f32 %v2888, %v1792
      %v2899 = vmax.f32 %v2889, 0.0
      %v2900 = vmax.f32 %v2890, 0.0
      %v2901 = vmax.f32 %v2891, 0.0
      %v2902 = vmax.f32 %v2892, 0.0
      %v2903 = vmax.f32 %v2893, 0.0
      %v2904 = vmax.f32 %v2894, 0.0
      %v2905 = vmax.f32 %v2895, 0.0
      %v2906 = vmax.f32 %v2896, 0.0
      %v2907 = vmax.f32 %v2897, 0.0
      %v2908 = vmax.f32 %v2898, 0.0
      %v2909 = vmul.f32 %v2899, %v1816
      %v2910 = vmul.f32 %v2900, %v1821
      %v2911 = vmul.f32 %v2901, %v1826
      %v2912 = vmul.f32 %v2902, %v1831
      %v2913 = vmul.f32 %v2903, %v1836
      %v2914 = vmul.f32 %v2904, %v1841
      %v2915 = vmul.f32 %v2905, %v1846
      %v2916 = vmul.f32 %v2906, %v1851
      %v2917 = vmul.f32 %v2907, %v1856
      %v2918 = vmul.f32 %v2908, %v1861
      %vm2919 = vcmask 519168
      %2920 = vst.msk [vmem:[#allocation2] sm:$0xf] %vm2919, 0
      %vm2921 = vcmask 517120
      %vm2922 = vsmask.f32 1280
      %vm2923 = vmand %vm2921, %vm2922
      %v2924 = vld [vmem:[#allocation2 + $0x4] sm:$0x3]
      %v2925 = vsel %vm2923, 0, %v2924
      %2926 = vst [vmem:[#allocation2 + $0x4] sm:$0x3] %v2925
      %s2927 = scalar_lea.vmem [#allocation2], 56
      %2928 = vst.msk [vmem:[%s2927] sm:$0xf] %vm2919, 0
      %v2929 = vld [vmem:[%s2927 + $0x4] sm:$0x3]
      %v2930 = vsel %vm2923, 0, %v2929
      %2931 = vst [vmem:[%s2927 + $0x4] sm:$0x3] %v2930
      %vm2932 = vcmask 519169
      %vm2933 = vsmask.f32 7942
      %vm2934 = vmand %vm2932, %vm2933
      %v2935 = vld [vmem:[#allocation2 + $0x2c] sm:$0xe]
      %v2936 = vsel %vm2934, 0, %v2935
      %2937 = vst [vmem:[#allocation2 + $0x2c] sm:$0xe] %v2936
      %2938 = vst.msk [vmem:[#allocation2 + $0x30] sm:$0xf] %vm2919, 0
      %vm2939 = vcmask 518144
      %2940 = vst.msk [vmem:[#allocation2 + $0x34] sm:$0x7] %vm2939, 0
      %v2941 = vld [vmem:[%s2927 + $0x2c] sm:$0xe]
      %v2942 = vsel %vm2934, 0, %v2941
      %2943 = vst [vmem:[%s2927 + $0x2c] sm:$0xe] %v2942
      %2944 = vst.msk [vmem:[%s2927 + $0x30] sm:$0xf] %vm2919, 0
      %2945 = vst.msk [vmem:[%s2927 + $0x34] sm:$0x7] %vm2939, 0
      %v2946 = vpack.c.bf16 %v1864, %v1863
      %v2947 = vpack.c.bf16 %v1866, %v1865
      %v2948 = vpack.c.bf16 %v1868, %v1867
      %v2949 = vpack.c.bf16 %v1870, %v1869
      %v2950 = vpack.c.bf16 %v1872, %v1871
      %v2956 = vunpack.c.l.b16 %v2946
      %v2957 = vunpack.c.h.b16 %v2946
      %v2958 = vunpack.c.l.b16 %v2947
      %v2959 = vunpack.c.h.b16 %v2947
      %v2960 = vunpack.c.l.b16 %v2948
      %v2961 = vunpack.c.h.b16 %v2948
      %v2962 = vunpack.c.l.b16 %v2949
      %v2963 = vunpack.c.h.b16 %v2949
      %v2964 = vunpack.c.l.b16 %v2950
      %v2965 = vunpack.c.h.b16 %v2950
      %v2966 = vpack.c.b16 %v2956, %v2956
      %v2967 = vpack.c.b16 %v2957, %v2957
      %v2968 = vpack.c.b16 %v2958, %v2958
      %v2969 = vpack.c.b16 %v2959, %v2959
      %v2970 = vpack.c.b16 %v2960, %v2960
      %v2971 = vpack.c.b16 %v2961, %v2961
      %v2972 = vpack.c.b16 %v2962, %v2962
      %v2973 = vpack.c.b16 %v2963, %v2963
      %v2974 = vpack.c.b16 %v2964, %v2964
      %v2975 = vpack.c.b16 %v2965, %v2965
      %vm2976 = vsmask.f32 5392
      %vm2977 = vmor %vm2922, %vm2976
      %v2979 = vshrl.u32 %v2966, 16
      %v2981 = vrot.slane %v2979, 6
      %v2982 = vshll.u32 %v2966, 16
      %v2984 = vrot.slane %v2982, 7
      %v2985 = vor.u32 %v2981, %v2984
      %v2986 = vrot.slane %v2985, 4
      %v2988 = vshrl.u32 %v2967, 16
      %v2990 = vrot.slane %v2988, 6
      %v2991 = vshll.u32 %v2967, 16
      %v2993 = vrot.slane %v2991, 7
      %v2994 = vor.u32 %v2990, %v2993
      %v2995 = vsel %vm2977, %v2986, %v2994
      %v2996 = vrot.slane %v2994, 4
      %v2998 = vshrl.u32 %v2968, 16
      %v3000 = vrot.slane %v2998, 6
      %v3001 = vshll.u32 %v2968, 16
      %v3003 = vrot.slane %v3001, 7
      %v3004 = vor.u32 %v3000, %v3003
      %v3005 = vsel %vm2977, %v2996, %v3004
      %v3006 = vrot.slane %v3004, 4
      %v3008 = vshrl.u32 %v2969, 16
      %v3010 = vrot.slane %v3008, 6
      %v3011 = vshll.u32 %v2969, 16
      %v3013 = vrot.slane %v3011, 7
      %v3014 = vor.u32 %v3010, %v3013
      %v3015 = vsel %vm2977, %v3006, %v3014
      %v3016 = vrot.slane %v3014, 4
      %v3018 = vshrl.u32 %v2970, 16
      %v3020 = vrot.slane %v3018, 6
      %v3021 = vshll.u32 %v2970, 16
      %v3023 = vrot.slane %v3021, 7
      %v3024 = vor.u32 %v3020, %v3023
      %v3025 = vsel %vm2977, %v3016, %v3024
      %v3026 = vrot.slane %v3024, 4
      %v3028 = vshrl.u32 %v2971, 16
      %v3030 = vrot.slane %v3028, 6
      %v3031 = vshll.u32 %v2971, 16
      %v3033 = vrot.slane %v3031, 7
      %v3034 = vor.u32 %v3030, %v3033
      %v3035 = vsel %vm2977, %v3026, %v3034
      %v3036 = vrot.slane %v3034, 4
      %v3038 = vshrl.u32 %v2972, 16
      %v3040 = vrot.slane %v3038, 6
      %v3041 = vshll.u32 %v2972, 16
      %v3043 = vrot.slane %v3041, 7
      %v3044 = vor.u32 %v3040, %v3043
      %v3045 = vsel %vm2977, %v3036, %v3044
      %v3046 = vrot.slane %v3044, 4
      %v3048 = vshrl.u32 %v2973, 16
      %v3050 = vrot.slane %v3048, 6
      %v3051 = vshll.u32 %v2973, 16
      %v3053 = vrot.slane %v3051, 7
      %v3054 = vor.u32 %v3050, %v3053
      %v3055 = vsel %vm2977, %v3046, %v3054
      %v3056 = vrot.slane %v3054, 4
      %v3058 = vshrl.u32 %v2974, 16
      %v3060 = vrot.slane %v3058, 6
      %v3061 = vshll.u32 %v2974, 16
      %v3063 = vrot.slane %v3061, 7
      %v3064 = vor.u32 %v3060, %v3063
      %v3065 = vsel %vm2977, %v3056, %v3064
      %v3066 = vrot.slane %v3064, 4
      %v3068 = vshrl.u32 %v2975, 16
      %v3070 = vrot.slane %v3068, 6
      %v3071 = vshll.u32 %v2975, 16
      %v3073 = vrot.slane %v3071, 7
      %v3074 = vor.u32 %v3070, %v3073
      %v3075 = vsel %vm2977, %v3066, %v3074
      %v3076 = vrot.slane %v3074, 4
      %v3088 = vld [vmem:[#allocation2 + $0x4] sm:$0xe]
      %v3089 = vsel %vm2934, %v2985, %v3088
      %3090 = vst [vmem:[#allocation2 + $0x4] sm:$0xe] %v3089
      %3091 = vst.msk [vmem:[#allocation2 + $0x8] sm:$0xf] %vm2919, %v2995
      %3092 = vst.msk [vmem:[#allocation2 + $0xc] sm:$0xf] %vm2919, %v3005
      %3093 = vst.msk [vmem:[#allocation2 + $0x10] sm:$0xf] %vm2919, %v3015
      %3094 = vst.msk [vmem:[#allocation2 + $0x14] sm:$0xf] %vm2919, %v3025
      %3095 = vst.msk [vmem:[#allocation2 + $0x18] sm:$0xf] %vm2919, %v3035
      %3096 = vst.msk [vmem:[#allocation2 + $0x1c] sm:$0xf] %vm2919, %v3045
      %3097 = vst.msk [vmem:[#allocation2 + $0x20] sm:$0xf] %vm2919, %v3055
      %3098 = vst.msk [vmem:[#allocation2 + $0x24] sm:$0xf] %vm2919, %v3065
      %3099 = vst.msk [vmem:[#allocation2 + $0x28] sm:$0xf] %vm2919, %v3075
      %v3100 = vld [vmem:[#allocation2 + $0x2c] sm:$0x3]
      %v3101 = vsel %vm2923, %v3076, %v3100
      %3102 = vst [vmem:[#allocation2 + $0x2c] sm:$0x3] %v3101
      %v3103 = vpack.c.bf16 %v2910, %v2909
      %v3104 = vpack.c.bf16 %v2912, %v2911
      %v3105 = vpack.c.bf16 %v2914, %v2913
      %v3106 = vpack.c.bf16 %v2916, %v2915
      %v3107 = vpack.c.bf16 %v2918, %v2917
      %v3113 = vunpack.c.l.b16 %v3103
      %v3114 = vunpack.c.h.b16 %v3103
      %v3115 = vunpack.c.l.b16 %v3104
      %v3116 = vunpack.c.h.b16 %v3104
      %v3117 = vunpack.c.l.b16 %v3105
      %v3118 = vunpack.c.h.b16 %v3105
      %v3119 = vunpack.c.l.b16 %v3106
      %v3120 = vunpack.c.h.b16 %v3106
      %v3121 = vunpack.c.l.b16 %v3107
      %v3122 = vunpack.c.h.b16 %v3107
      %v3123 = vpack.c.b16 %v3113, %v3113
      %v3124 = vpack.c.b16 %v3114, %v3114
      %v3125 = vpack.c.b16 %v3115, %v3115
      %v3126 = vpack.c.b16 %v3116, %v3116
      %v3127 = vpack.c.b16 %v3117, %v3117
      %v3128 = vpack.c.b16 %v3118, %v3118
      %v3129 = vpack.c.b16 %v3119, %v3119
      %v3130 = vpack.c.b16 %v3120, %v3120
      %v3131 = vpack.c.b16 %v3121, %v3121
      %v3132 = vpack.c.b16 %v3122, %v3122
      %v3134 = vshrl.u32 %v3123, 16
      %v3136 = vrot.slane %v3134, 6
      %v3137 = vshll.u32 %v3123, 16
      %v3139 = vrot.slane %v3137, 7
      %v3140 = vor.u32 %v3136, %v3139
      %v3141 = vrot.slane %v3140, 4
      %v3143 = vshrl.u32 %v3124, 16
      %v3145 = vrot.slane %v3143, 6
      %v3146 = vshll.u32 %v3124, 16
      %v3148 = vrot.slane %v3146, 7
      %v3149 = vor.u32 %v3145, %v3148
      %v3150 = vsel %vm2977, %v3141, %v3149
      %v3151 = vrot.slane %v3149, 4
      %v3153 = vshrl.u32 %v3125, 16
      %v3155 = vrot.slane %v3153, 6
      %v3156 = vshll.u32 %v3125, 16
      %v3158 = vrot.slane %v3156, 7
      %v3159 = vor.u32 %v3155, %v3158
      %v3160 = vsel %vm2977, %v3151, %v3159
      %v3161 = vrot.slane %v3159, 4
      %v3163 = vshrl.u32 %v3126, 16
      %v3165 = vrot.slane %v3163, 6
      %v3166 = vshll.u32 %v3126, 16
      %v3168 = vrot.slane %v3166, 7
      %v3169 = vor.u32 %v3165, %v3168
      %v3170 = vsel %vm2977, %v3161, %v3169
      %v3171 = vrot.slane %v3169, 4
      %v3173 = vshrl.u32 %v3127, 16
      %v3175 = vrot.slane %v3173, 6
      %v3176 = vshll.u32 %v3127, 16
      %v3178 = vrot.slane %v3176, 7
      %v3179 = vor.u32 %v3175, %v3178
      %v3180 = vsel %vm2977, %v3171, %v3179
      %v3181 = vrot.slane %v3179, 4
      %v3183 = vshrl.u32 %v3128, 16
      %v3185 = vrot.slane %v3183, 6
      %v3186 = vshll.u32 %v3128, 16
      %v3188 = vrot.slane %v3186, 7
      %v3189 = vor.u32 %v3185, %v3188
      %v3190 = vsel %vm2977, %v3181, %v3189
      %v3191 = vrot.slane %v3189, 4
      %v3193 = vshrl.u32 %v3129, 16
      %v3195 = vrot.slane %v3193, 6
      %v3196 = vshll.u32 %v3129, 16
      %v3198 = vrot.slane %v3196, 7
      %v3199 = vor.u32 %v3195, %v3198
      %v3200 = vsel %vm2977, %v3191, %v3199
      %v3201 = vrot.slane %v3199, 4
      %v3203 = vshrl.u32 %v3130, 16
      %v3205 = vrot.slane %v3203, 6
      %v3206 = vshll.u32 %v3130, 16
      %v3208 = vrot.slane %v3206, 7
      %v3209 = vor.u32 %v3205, %v3208
      %v3210 = vsel %vm2977, %v3201, %v3209
      %v3211 = vrot.slane %v3209, 4
      %v3213 = vshrl.u32 %v3131, 16
      %v3215 = vrot.slane %v3213, 6
      %v3216 = vshll.u32 %v3131, 16
      %v3218 = vrot.slane %v3216, 7
      %v3219 = vor.u32 %v3215, %v3218
      %v3220 = vsel %vm2977, %v3211, %v3219
      %v3221 = vrot.slane %v3219, 4
      %v3223 = vshrl.u32 %v3132, 16
      %v3225 = vrot.slane %v3223, 6
      %v3226 = vshll.u32 %v3132, 16
      %v3228 = vrot.slane %v3226, 7
      %v3229 = vor.u32 %v3225, %v3228
      %v3230 = vsel %vm2977, %v3221, %v3229
      %v3231 = vrot.slane %v3229, 4
      %v3243 = vld [vmem:[%s2927 + $0x4] sm:$0xe]
      %v3244 = vsel %vm2934, %v3140, %v3243
      %3245 = vst [vmem:[%s2927 + $0x4] sm:$0xe] %v3244
      %3246 = vst.msk [vmem:[%s2927 + $0x8] sm:$0xf] %vm2919, %v3150
      %3247 = vst.msk [vmem:[%s2927 + $0xc] sm:$0xf] %vm2919, %v3160
      %3248 = vst.msk [vmem:[%s2927 + $0x10] sm:$0xf] %vm2919, %v3170
      %3249 = vst.msk [vmem:[%s2927 + $0x14] sm:$0xf] %vm2919, %v3180
      %3250 = vst.msk [vmem:[%s2927 + $0x18] sm:$0xf] %vm2919, %v3190
      %3251 = vst.msk [vmem:[%s2927 + $0x1c] sm:$0xf] %vm2919, %v3200
      %3252 = vst.msk [vmem:[%s2927 + $0x20] sm:$0xf] %vm2919, %v3210
      %3253 = vst.msk [vmem:[%s2927 + $0x24] sm:$0xf] %vm2919, %v3220
      %3254 = vst.msk [vmem:[%s2927 + $0x28] sm:$0xf] %vm2919, %v3230
      %v3255 = vld [vmem:[%s2927 + $0x2c] sm:$0x3]
      %v3256 = vsel %vm2923, %v3231, %v3255
      %3257 = vst [vmem:[%s2927 + $0x2c] sm:$0x3] %v3256
      %v3258 = vld [vmem:[#allocation2] sm:$0xf]
      %v3259 = vld [vmem:[#allocation2 + $0x4] sm:$0xf]
      %v3260 = vld [vmem:[#allocation2 + $0x8] sm:$0xf]
      %v3261 = vld [vmem:[#allocation2 + $0xc] sm:$0xf]
      %v3262 = vld [vmem:[#allocation2 + $0x10] sm:$0xf]
      %v3263 = vld [vmem:[#allocation2 + $0x14] sm:$0xf]
      %v3264 = vld [vmem:[#allocation2 + $0x18] sm:$0xf]
      %v3265 = vld [vmem:[#allocation2 + $0x1c] sm:$0xf]
      %v3266 = vld [vmem:[#allocation2 + $0x20] sm:$0xf]
      %v3267 = vld [vmem:[#allocation2 + $0x24] sm:$0xf]
      %v3268 = vld [vmem:[#allocation2 + $0x28] sm:$0xf]
      %v3269 = vld [vmem:[#allocation2 + $0x2c] sm:$0xf]
      %v3270 = vld [vmem:[#allocation2 + $0x30] sm:$0xf]
      %s3271 = scalar_lea.vmem %s1, 288
      %v3272 = vld [vmem:[%s3271] sm:$0xf]
      %v3273 = vld [vmem:[%s3271 + $0x4] sm:$0xf]
      %v3274 = vld [vmem:[%s3271 + $0x8] sm:$0xf]
      %v3275 = vld [vmem:[%s3271 + $0xc] sm:$0xf]
      %v3276 = vld [vmem:[%s3271 + $0x10] sm:$0xf]
      %v3277 = vld [vmem:[%s3271 + $0x14] sm:$0xf]
      %v3278 = vld [vmem:[%s3271 + $0x18] sm:$0xf]
      %v3279 = vld [vmem:[%s3271 + $0x1c] sm:$0xf]
      %s3280 = scalar_lea.vmem %s1, 320
      %v3281 = vld [vmem:[%s3280] sm:$0xf]
      %v3282 = vld [vmem:[%s3280 + $0x4] sm:$0xf]
      %v3283 = vld [vmem:[%s3280 + $0x8] sm:$0xf]
      %v3284 = vld [vmem:[%s3280 + $0xc] sm:$0xf]
      %v3285 = vld [vmem:[%s3280 + $0x10] sm:$0xf]
      %v3286 = vld [vmem:[%s3280 + $0x14] sm:$0xf]
      %v3287 = vld [vmem:[%s3280 + $0x18] sm:$0xf]
      %v3288 = vld [vmem:[%s3280 + $0x1c] sm:$0xf]
      %v3300 = vunpack.c.l.b16 %v3258
      %v3301 = vunpack.c.l.b16 %v3259
      %v3302 = vunpack.c.l.b16 %v3260
      %v3303 = vunpack.c.l.b16 %v3261
      %v3304 = vunpack.c.l.b16 %v3262
      %v3305 = vunpack.c.l.b16 %v3263
      %v3306 = vunpack.c.l.b16 %v3264
      %v3307 = vunpack.c.l.b16 %v3265
      %v3308 = vunpack.c.l.b16 %v3266
      %v3309 = vunpack.c.l.b16 %v3267
      %v3310 = vunpack.c.l.b16 %v3268
      %v3311 = vpack.c.b16 %v3301, %v3300
      %v3312 = vpack.c.b16 %v3303, %v3302
      %v3313 = vpack.c.b16 %v3305, %v3304
      %v3314 = vpack.c.b16 %v3307, %v3306
      %v3315 = vpack.c.b16 %v3309, %v3308
      %v3316 = vpack.c.b16 %v3310, %v3310
      %v3318 = vshrl.u32 %v3311, 16
      %v3320 = vshll.u32 %v3311, 16
      %v3322 = vrot.slane %v3320, 1
      %v3323 = vor.u32 %v3318, %v3322
      %v3325 = vshll.u32 %v3312, 16
      %v3327 = vrot.slane %v3325, 1
      %v3328 = vsel %vm485, %v3323, %v3327
      %v3329 = vshrl.u32 %v3312, 16
      %v3331 = vor.u32 %v3329, %v3327
      %v3333 = vshll.u32 %v3313, 16
      %v3335 = vrot.slane %v3333, 1
      %v3336 = vsel %vm485, %v3331, %v3335
      %v3337 = vshrl.u32 %v3313, 16
      %v3339 = vor.u32 %v3337, %v3335
      %v3341 = vshll.u32 %v3314, 16
      %v3343 = vrot.slane %v3341, 1
      %v3344 = vsel %vm485, %v3339, %v3343
      %v3345 = vshrl.u32 %v3314, 16
      %v3347 = vor.u32 %v3345, %v3343
      %v3349 = vshll.u32 %v3315, 16
      %v3351 = vrot.slane %v3349, 1
      %v3352 = vsel %vm485, %v3347, %v3351
      %v3353 = vshrl.u32 %v3315, 16
      %v3355 = vor.u32 %v3353, %v3351
      %v3357 = vshll.u32 %v3316, 16
      %v3359 = vrot.slane %v3357, 1
      %v3360 = vsel %vm485, %v3355, %v3359
      %v3369 = vunpack.c.l.b16 %v3281
      %v3370 = vunpack.c.l.b16 %v3282
      %v3371 = vunpack.c.l.b16 %v3283
      %v3372 = vunpack.c.l.b16 %v3284
      %v3373 = vunpack.c.l.b16 %v3285
      %v3374 = vunpack.c.l.b16 %v3286
      %v3375 = vunpack.c.l.b16 %v3287
      %v3376 = vunpack.c.l.b16 %v3288
      %v3377 = vpack.c.b16 %v3370, %v3369
      %v3378 = vpack.c.b16 %v3372, %v3371
      %v3379 = vpack.c.b16 %v3374, %v3373
      %v3380 = vpack.c.b16 %v3376, %v3375
      %v3386 = vsel %vm554, %v3328, 0
      %v3389 = vsel %vm554, %v3336, 0
      %v3392 = vsel %vm554, %v3344, 0
      %v3395 = vsel %vm554, %v3352, 0
      %v3398 = vsel %vm554, %v3360, 0
      %3400 = vmatprep.subr.bf16.mxu0 0
      %3401 = vmatpush1.bf16.msra.mxu0 %v3377
      %3402 = vmatprep.subr.bf16.mxu0 0
      %3403 = vmatpush1.bf16.msra.mxu0 %v3378
      %3404 = vmatprep.subr.bf16.mxu0 0
      %3405 = vmatpush1.bf16.msra.mxu0 %v3379
      %3406 = vmatprep.subr.bf16.mxu0 0
      %3407 = vmatpush1.bf16.msra.mxu0 %v3380
      %3408 = vmatprep.subr.bf16.mxu0 0
      %3409 = vmatpush1.bf16.msra.mxu0 0
      %3410 = vmatprep.subr.bf16.mxu0 0
      %3411 = vmatpush1.bf16.msra.mxu0 0
      %3412 = vmatprep.subr.bf16.mxu0 0
      %3413 = vmatpush1.bf16.msra.mxu0 0
      %3414 = vmatprep.subr.bf16.mxu0 0
      %3415 = vmatpush1.bf16.msra.mxu0 0
      %3416 = vmatprep.subr.bf16.mxu0 0
      %3417 = vmatpush1.bf16.msra.mxu0 0
      %3418 = vmatprep.subr.bf16.mxu0 0
      %3419 = vmatpush1.bf16.msra.mxu0 0
      %3420 = vmatprep.subr.bf16.mxu0 0
      %3421 = vmatpush1.bf16.msra.mxu0 0
      %3422 = vmatprep.subr.bf16.mxu0 0
      %3423 = vmatpush1.bf16.msra.mxu0 0
      %3424 = vmatprep.subr.bf16.mxu0 0
      %3425 = vmatpush1.bf16.msra.mxu0 0
      %3426 = vmatprep.subr.bf16.mxu0 0
      %3427 = vmatpush1.bf16.msra.mxu0 0
      %3428 = vmatprep.subr.bf16.mxu0 0
      %3429 = vmatpush1.bf16.msra.mxu0 0
      %3430 = vmatprep.subr.bf16.mxu0 0
      %3431 = vmatpush1.bf16.msra.mxu0 0
      %3432 = vmatprep.mubr.bf16.mxu0 0
      %3433 = vmatmul.mubr.bf16.gmra.mrb[0].mxu0 %v3386
      %v3434 = vpop.f32.mrb[0].mxu0
      %v3435 = vadd.f32 0.0, %v3434
      %v3436 = vpop.f32.mrb[0].mxu0
      %v3437 = vpop.f32.mrb[0].mxu0
      %v3438 = vadd.f32 0.0, %v3437
      %v3439 = vpop.f32.mrb[0].mxu0
      %3440 = vmatprep.mubr.bf16.mxu0 0
      %3441 = vmatmul.mubr.bf16.gmra.mrb[0].mxu0 %v3389
      %v3442 = vpop.f32.mrb[0].mxu0
      %v3443 = vadd.f32 0.0, %v3442
      %v3444 = vpop.f32.mrb[0].mxu0
      %v3445 = vpop.f32.mrb[0].mxu0
      %v3446 = vadd.f32 0.0, %v3445
      %v3447 = vpop.f32.mrb[0].mxu0
      %3448 = vmatprep.mubr.bf16.mxu0 0
      %3449 = vmatmul.mubr.bf16.gmra.mrb[0].mxu0 %v3392
      %v3450 = vpop.f32.mrb[0].mxu0
      %v3451 = vadd.f32 0.0, %v3450
      %v3452 = vpop.f32.mrb[0].mxu0
      %v3453 = vpop.f32.mrb[0].mxu0
      %v3454 = vadd.f32 0.0, %v3453
      %v3455 = vpop.f32.mrb[0].mxu0
      %3456 = vmatprep.mubr.bf16.mxu0 0
      %3457 = vmatmul.mubr.bf16.gmra.mrb[0].mxu0 %v3395
      %v3458 = vpop.f32.mrb[0].mxu0
      %v3459 = vadd.f32 0.0, %v3458
      %v3460 = vpop.f32.mrb[0].mxu0
      %v3461 = vpop.f32.mrb[0].mxu0
      %v3462 = vadd.f32 0.0, %v3461
      %v3463 = vpop.f32.mrb[0].mxu0
      %3464 = vmatprep.mubr.bf16.mxu0 0
      %3465 = vmatmul.mubr.bf16.gmra.mrb[0].mxu0 %v3398
      %v3466 = vpop.f32.mrb[0].mxu0
      %v3467 = vadd.f32 0.0, %v3466
      %v3468 = vpop.f32.mrb[0].mxu0
      %v3469 = vpop.f32.mrb[0].mxu0
      %v3470 = vadd.f32 0.0, %v3469
      %v3471 = vpop.f32.mrb[0].mxu0
      %3472 = vdwg.mxu0
      %v3481 = vunpack.c.l.b16 %v3272
      %v3482 = vunpack.c.l.b16 %v3273
      %v3483 = vunpack.c.l.b16 %v3274
      %v3484 = vunpack.c.l.b16 %v3275
      %v3485 = vunpack.c.l.b16 %v3276
      %v3486 = vunpack.c.l.b16 %v3277
      %v3487 = vunpack.c.l.b16 %v3278
      %v3488 = vunpack.c.l.b16 %v3279
      %v3489 = vpack.c.b16 %v3482, %v3481
      %v3490 = vpack.c.b16 %v3484, %v3483
      %v3491 = vpack.c.b16 %v3486, %v3485
      %v3492 = vpack.c.b16 %v3488, %v3487
      %v3497 = vsel %vm554, %v3311, 0
      %v3499 = vsel %vm554, %v3312, 0
      %v3501 = vsel %vm554, %v3313, 0
      %v3503 = vsel %vm554, %v3314, 0
      %v3505 = vsel %vm554, %v3315, 0
      %3507 = vmatprep.subr.bf16.mxu0 0
      %3508 = vmatpush1.bf16.msra.mxu0 %v3489
      %3509 = vmatprep.subr.bf16.mxu0 0
      %3510 = vmatpush1.bf16.msra.mxu0 %v3490
      %3511 = vmatprep.subr.bf16.mxu0 0
      %3512 = vmatpush1.bf16.msra.mxu0 %v3491
      %3513 = vmatprep.subr.bf16.mxu0 0
      %3514 = vmatpush1.bf16.msra.mxu0 %v3492
      %3515 = vmatprep.subr.bf16.mxu0 0
      %3516 = vmatpush1.bf16.msra.mxu0 0
      %3517 = vmatprep.subr.bf16.mxu0 0
      %3518 = vmatpush1.bf16.msra.mxu0 0
      %3519 = vmatprep.subr.bf16.mxu0 0
      %3520 = vmatpush1.bf16.msra.mxu0 0
      %3521 = vmatprep.subr.bf16.mxu0 0
      %3522 = vmatpush1.bf16.msra.mxu0 0
      %3523 = vmatprep.subr.bf16.mxu0 0
      %3524 = vmatpush1.bf16.msra.mxu0 0
      %3525 = vmatprep.subr.bf16.mxu0 0
      %3526 = vmatpush1.bf16.msra.mxu0 0
      %3527 = vmatprep.subr.bf16.mxu0 0
      %3528 = vmatpush1.bf16.msra.mxu0 0
      %3529 = vmatprep.subr.bf16.mxu0 0
      %3530 = vmatpush1.bf16.msra.mxu0 0
      %3531 = vmatprep.subr.bf16.mxu0 0
      %3532 = vmatpush1.bf16.msra.mxu0 0
      %3533 = vmatprep.subr.bf16.mxu0 0
      %3534 = vmatpush1.bf16.msra.mxu0 0
      %3535 = vmatprep.subr.bf16.mxu0 0
      %3536 = vmatpush1.bf16.msra.mxu0 0
      %3537 = vmatprep.subr.bf16.mxu0 0
      %3538 = vmatpush1.bf16.msra.mxu0 0
      %3539 = vmatprep.mubr.bf16.mxu0 0
      %3540 = vmatmul.mubr.bf16.gmra.mrb[0].mxu0 %v3497
      %v3541 = vpop.f32.mrb[0].mxu0
      %v3542 = vadd.f32 %v3435, %v3541
      %v3543 = vpop.f32.mrb[0].mxu0
      %v3544 = vpop.f32.mrb[0].mxu0
      %v3545 = vadd.f32 %v3438, %v3544
      %v3546 = vpop.f32.mrb[0].mxu0
      %3547 = vmatprep.mubr.bf16.mxu0 0
      %3548 = vmatmul.mubr.bf16.gmra.mrb[0].mxu0 %v3499
      %v3549 = vpop.f32.mrb[0].mxu0
      %v3550 = vadd.f32 %v3443, %v3549
      %v3551 = vpop.f32.mrb[0].mxu0
      %v3552 = vpop.f32.mrb[0].mxu0
      %v3553 = vadd.f32 %v3446, %v3552
      %v3554 = vpop.f32.mrb[0].mxu0
      %3555 = vmatprep.mubr.bf16.mxu0 0
      %3556 = vmatmul.mubr.bf16.gmra.mrb[0].mxu0 %v3501
      %v3557 = vpop.f32.mrb[0].mxu0
      %v3558 = vadd.f32 %v3451, %v3557
      %v3559 = vpop.f32.mrb[0].mxu0
      %v3560 = vpop.f32.mrb[0].mxu0
      %v3561 = vadd.f32 %v3454, %v3560
      %v3562 = vpop.f32.mrb[0].mxu0
      %3563 = vmatprep.mubr.bf16.mxu0 0
      %3564 = vmatmul.mubr.bf16.gmra.mrb[0].mxu0 %v3503
      %v3565 = vpop.f32.mrb[0].mxu0
      %v3566 = vadd.f32 %v3459, %v3565
      %v3567 = vpop.f32.mrb[0].mxu0
      %v3568 = vpop.f32.mrb[0].mxu0
      %v3569 = vadd.f32 %v3462, %v3568
      %v3570 = vpop.f32.mrb[0].mxu0
      %3571 = vmatprep.mubr.bf16.mxu0 0
      %3572 = vmatmul.mubr.bf16.gmra.mrb[0].mxu0 %v3505
      %v3573 = vpop.f32.mrb[0].mxu0
      %v3574 = vadd.f32 %v3467, %v3573
      %v3575 = vpop.f32.mrb[0].mxu0
      %v3576 = vpop.f32.mrb[0].mxu0
      %v3577 = vadd.f32 %v3470, %v3576
      %v3578 = vpop.f32.mrb[0].mxu0
      %3579 = vdwg.mxu0
      %s3580 = scalar_lea.vmem %s1, 352
      %v3581 = vld [vmem:[%s3580] sm:$0xf]
      %v3582 = vld [vmem:[%s3580 + $0x4] sm:$0xf]
      %v3583 = vld [vmem:[%s3580 + $0x8] sm:$0xf]
      %v3584 = vld [vmem:[%s3580 + $0xc] sm:$0xf]
      %v3585 = vld [vmem:[%s3580 + $0x10] sm:$0xf]
      %v3586 = vld [vmem:[%s3580 + $0x14] sm:$0xf]
      %v3587 = vld [vmem:[%s3580 + $0x18] sm:$0xf]
      %v3588 = vld [vmem:[%s3580 + $0x1c] sm:$0xf]
      %v3589 = vrot.slane %v3311, 1
      %v3590 = vrot.slane %v3312, 1
      %v3591 = vsel %vm765, %v3589, %v3590
      %v3592 = vrot.slane %v3313, 1
      %v3593 = vsel %vm765, %v3590, %v3592
      %v3594 = vrot.slane %v3314, 1
      %v3595 = vsel %vm765, %v3592, %v3594
      %v3596 = vrot.slane %v3315, 1
      %v3597 = vsel %vm765, %v3594, %v3596
      %v3598 = vrot.slane %v3316, 1
      %v3599 = vsel %vm765, %v3596, %v3598
      %v3608 = vunpack.c.l.b16 %v3581
      %v3609 = vunpack.c.l.b16 %v3582
      %v3610 = vunpack.c.l.b16 %v3583
      %v3611 = vunpack.c.l.b16 %v3584
      %v3612 = vunpack.c.l.b16 %v3585
      %v3613 = vunpack.c.l.b16 %v3586
      %v3614 = vunpack.c.l.b16 %v3587
      %v3615 = vunpack.c.l.b16 %v3588
      %v3616 = vpack.c.b16 %v3609, %v3608
      %v3617 = vpack.c.b16 %v3611, %v3610
      %v3618 = vpack.c.b16 %v3613, %v3612
      %v3619 = vpack.c.b16 %v3615, %v3614
      %v3625 = vsel %vm554, %v3591, 0
      %v3628 = vsel %vm554, %v3593, 0
      %v3631 = vsel %vm554, %v3595, 0
      %v3634 = vsel %vm554, %v3597, 0
      %v3637 = vsel %vm554, %v3599, 0
      %3639 = vmatprep.subr.bf16.mxu0 0
      %3640 = vmatpush1.bf16.msra.mxu0 %v3616
      %3641 = vmatprep.subr.bf16.mxu0 0
      %3642 = vmatpush1.bf16.msra.mxu0 %v3617
      %3643 = vmatprep.subr.bf16.mxu0 0
      %3644 = vmatpush1.bf16.msra.mxu0 %v3618
      %3645 = vmatprep.subr.bf16.mxu0 0
      %3646 = vmatpush1.bf16.msra.mxu0 %v3619
      %3647 = vmatprep.subr.bf16.mxu0 0
      %3648 = vmatpush1.bf16.msra.mxu0 0
      %3649 = vmatprep.subr.bf16.mxu0 0
      %3650 = vmatpush1.bf16.msra.mxu0 0
      %3651 = vmatprep.subr.bf16.mxu0 0
      %3652 = vmatpush1.bf16.msra.mxu0 0
      %3653 = vmatprep.subr.bf16.mxu0 0
      %3654 = vmatpush1.bf16.msra.mxu0 0
      %3655 = vmatprep.subr.bf16.mxu0 0
      %3656 = vmatpush1.bf16.msra.mxu0 0
      %3657 = vmatprep.subr.bf16.mxu0 0
      %3658 = vmatpush1.bf16.msra.mxu0 0
      %3659 = vmatprep.subr.bf16.mxu0 0
      %3660 = vmatpush1.bf16.msra.mxu0 0
      %3661 = vmatprep.subr.bf16.mxu0 0
      %3662 = vmatpush1.bf16.msra.mxu0 0
      %3663 = vmatprep.subr.bf16.mxu0 0
      %3664 = vmatpush1.bf16.msra.mxu0 0
      %3665 = vmatprep.subr.bf16.mxu0 0
      %3666 = vmatpush1.bf16.msra.mxu0 0
      %3667 = vmatprep.subr.bf16.mxu0 0
      %3668 = vmatpush1.bf16.msra.mxu0 0
      %3669 = vmatprep.subr.bf16.mxu0 0
      %3670 = vmatpush1.bf16.msra.mxu0 0
      %3671 = vmatprep.mubr.bf16.mxu0 0
      %3672 = vmatmul.mubr.bf16.gmra.mrb[0].mxu0 %v3625
      %v3673 = vpop.f32.mrb[0].mxu0
      %v3674 = vadd.f32 0.0, %v3673
      %v3675 = vpop.f32.mrb[0].mxu0
      %v3676 = vpop.f32.mrb[0].mxu0
      %v3677 = vadd.f32 0.0, %v3676
      %v3678 = vpop.f32.mrb[0].mxu0
      %3679 = vmatprep.mubr.bf16.mxu0 0
      %3680 = vmatmul.mubr.bf16.gmra.mrb[0].mxu0 %v3628
      %v3681 = vpop.f32.mrb[0].mxu0
      %v3682 = vadd.f32 0.0, %v3681
      %v3683 = vpop.f32.mrb[0].mxu0
      %v3684 = vpop.f32.mrb[0].mxu0
      %v3685 = vadd.f32 0.0, %v3684
      %v3686 = vpop.f32.mrb[0].mxu0
      %3687 = vmatprep.mubr.bf16.mxu0 0
      %3688 = vmatmul.mubr.bf16.gmra.mrb[0].mxu0 %v3631
      %v3689 = vpop.f32.mrb[0].mxu0
      %v3690 = vadd.f32 0.0, %v3689
      %v3691 = vpop.f32.mrb[0].mxu0
      %v3692 = vpop.f32.mrb[0].mxu0
      %v3693 = vadd.f32 0.0, %v3692
      %v3694 = vpop.f32.mrb[0].mxu0
      %3695 = vmatprep.mubr.bf16.mxu0 0
      %3696 = vmatmul.mubr.bf16.gmra.mrb[0].mxu0 %v3634
      %v3697 = vpop.f32.mrb[0].mxu0
      %v3698 = vadd.f32 0.0, %v3697
      %v3699 = vpop.f32.mrb[0].mxu0
      %v3700 = vpop.f32.mrb[0].mxu0
      %v3701 = vadd.f32 0.0, %v3700
      %v3702 = vpop.f32.mrb[0].mxu0
      %3703 = vmatprep.mubr.bf16.mxu0 0
      %3704 = vmatmul.mubr.bf16.gmra.mrb[0].mxu0 %v3637
      %v3705 = vpop.f32.mrb[0].mxu0
      %v3706 = vadd.f32 0.0, %v3705
      %v3707 = vpop.f32.mrb[0].mxu0
      %v3708 = vpop.f32.mrb[0].mxu0
      %v3709 = vadd.f32 0.0, %v3708
      %v3710 = vpop.f32.mrb[0].mxu0
      %3711 = vdwg.mxu0
      %v3712 = vadd.f32 %v3542, %v3674
      %v3713 = vadd.f32 %v3545, %v3677
      %v3714 = vadd.f32 %v3550, %v3682
      %v3715 = vadd.f32 %v3553, %v3685
      %v3716 = vadd.f32 %v3558, %v3690
      %v3717 = vadd.f32 %v3561, %v3693
      %v3718 = vadd.f32 %v3566, %v3698
      %v3719 = vadd.f32 %v3569, %v3701
      %v3720 = vadd.f32 %v3574, %v3706
      %v3721 = vadd.f32 %v3577, %v3709
      %s3722 = scalar_lea.vmem %s1, 384
      %v3723 = vld [vmem:[%s3722] sm:$0xf]
      %v3724 = vld [vmem:[%s3722 + $0x4] sm:$0xf]
      %v3725 = vld [vmem:[%s3722 + $0x8] sm:$0xf]
      %v3726 = vld [vmem:[%s3722 + $0xc] sm:$0xf]
      %v3727 = vld [vmem:[%s3722 + $0x10] sm:$0xf]
      %v3728 = vld [vmem:[%s3722 + $0x14] sm:$0xf]
      %v3729 = vld [vmem:[%s3722 + $0x18] sm:$0xf]
      %v3730 = vld [vmem:[%s3722 + $0x1c] sm:$0xf]
      %v3732 = vunpack.c.l.b16 %v3269
      %v3733 = vpack.c.b16 %v3302, %v3301
      %v3734 = vpack.c.b16 %v3304, %v3303
      %v3735 = vpack.c.b16 %v3306, %v3305
      %v3736 = vpack.c.b16 %v3308, %v3307
      %v3737 = vpack.c.b16 %v3310, %v3309
      %v3738 = vpack.c.b16 %v3732, %v3732
      %v3739 = vrot.slane %v3733, 1
      %v3740 = vrot.slane %v3734, 1
      %v3741 = vsel %vm765, %v3739, %v3740
      %v3742 = vrot.slane %v3735, 1
      %v3743 = vsel %vm765, %v3740, %v3742
      %v3744 = vrot.slane %v3736, 1
      %v3745 = vsel %vm765, %v3742, %v3744
      %v3746 = vrot.slane %v3737, 1
      %v3747 = vsel %vm765, %v3744, %v3746
      %v3748 = vrot.slane %v3738, 1
      %v3749 = vsel %vm765, %v3746, %v3748
      %v3758 = vunpack.c.l.b16 %v3723
      %v3759 = vunpack.c.l.b16 %v3724
      %v3760 = vunpack.c.l.b16 %v3725
      %v3761 = vunpack.c.l.b16 %v3726
      %v3762 = vunpack.c.l.b16 %v3727
      %v3763 = vunpack.c.l.b16 %v3728
      %v3764 = vunpack.c.l.b16 %v3729
      %v3765 = vunpack.c.l.b16 %v3730
      %v3766 = vpack.c.b16 %v3759, %v3758
      %v3767 = vpack.c.b16 %v3761, %v3760
      %v3768 = vpack.c.b16 %v3763, %v3762
      %v3769 = vpack.c.b16 %v3765, %v3764
      %v3775 = vsel %vm554, %v3741, 0
      %v3778 = vsel %vm554, %v3743, 0
      %v3781 = vsel %vm554, %v3745, 0
      %v3784 = vsel %vm554, %v3747, 0
      %v3787 = vsel %vm554, %v3749, 0
      %3789 = vmatprep.subr.bf16.mxu0 0
      %3790 = vmatpush1.bf16.msra.mxu0 %v3766
      %3791 = vmatprep.subr.bf16.mxu0 0
      %3792 = vmatpush1.bf16.msra.mxu0 %v3767
      %3793 = vmatprep.subr.bf16.mxu0 0
      %3794 = vmatpush1.bf16.msra.mxu0 %v3768
      %3795 = vmatprep.subr.bf16.mxu0 0
      %3796 = vmatpush1.bf16.msra.mxu0 %v3769
      %3797 = vmatprep.subr.bf16.mxu0 0
      %3798 = vmatpush1.bf16.msra.mxu0 0
      %3799 = vmatprep.subr.bf16.mxu0 0
      %3800 = vmatpush1.bf16.msra.mxu0 0
      %3801 = vmatprep.subr.bf16.mxu0 0
      %3802 = vmatpush1.bf16.msra.mxu0 0
      %3803 = vmatprep.subr.bf16.mxu0 0
      %3804 = vmatpush1.bf16.msra.mxu0 0
      %3805 = vmatprep.subr.bf16.mxu0 0
      %3806 = vmatpush1.bf16.msra.mxu0 0
      %3807 = vmatprep.subr.bf16.mxu0 0
      %3808 = vmatpush1.bf16.msra.mxu0 0
      %3809 = vmatprep.subr.bf16.mxu0 0
      %3810 = vmatpush1.bf16.msra.mxu0 0
      %3811 = vmatprep.subr.bf16.mxu0 0
      %3812 = vmatpush1.bf16.msra.mxu0 0
      %3813 = vmatprep.subr.bf16.mxu0 0
      %3814 = vmatpush1.bf16.msra.mxu0 0
      %3815 = vmatprep.subr.bf16.mxu0 0
      %3816 = vmatpush1.bf16.msra.mxu0 0
      %3817 = vmatprep.subr.bf16.mxu0 0
      %3818 = vmatpush1.bf16.msra.mxu0 0
      %3819 = vmatprep.subr.bf16.mxu0 0
      %3820 = vmatpush1.bf16.msra.mxu0 0
      %3821 = vmatprep.mubr.bf16.mxu0 0
      %3822 = vmatmul.mubr.bf16.gmra.mrb[0].mxu0 %v3775
      %v3823 = vpop.f32.mrb[0].mxu0
      %v3824 = vadd.f32 0.0, %v3823
      %v3825 = vpop.f32.mrb[0].mxu0
      %v3826 = vpop.f32.mrb[0].mxu0
      %v3827 = vadd.f32 0.0, %v3826
      %v3828 = vpop.f32.mrb[0].mxu0
      %3829 = vmatprep.mubr.bf16.mxu0 0
      %3830 = vmatmul.mubr.bf16.gmra.mrb[0].mxu0 %v3778
      %v3831 = vpop.f32.mrb[0].mxu0
      %v3832 = vadd.f32 0.0, %v3831
      %v3833 = vpop.f32.mrb[0].mxu0
      %v3834 = vpop.f32.mrb[0].mxu0
      %v3835 = vadd.f32 0.0, %v3834
      %v3836 = vpop.f32.mrb[0].mxu0
      %3837 = vmatprep.mubr.bf16.mxu0 0
      %3838 = vmatmul.mubr.bf16.gmra.mrb[0].mxu0 %v3781
      %v3839 = vpop.f32.mrb[0].mxu0
      %v3840 = vadd.f32 0.0, %v3839
      %v3841 = vpop.f32.mrb[0].mxu0
      %v3842 = vpop.f32.mrb[0].mxu0
      %v3843 = vadd.f32 0.0, %v3842
      %v3844 = vpop.f32.mrb[0].mxu0
      %3845 = vmatprep.mubr.bf16.mxu0 0
      %3846 = vmatmul.mubr.bf16.gmra.mrb[0].mxu0 %v3784
      %v3847 = vpop.f32.mrb[0].mxu0
      %v3848 = vadd.f32 0.0, %v3847
      %v3849 = vpop.f32.mrb[0].mxu0
      %v3850 = vpop.f32.mrb[0].mxu0
      %v3851 = vadd.f32 0.0, %v3850
      %v3852 = vpop.f32.mrb[0].mxu0
      %3853 = vmatprep.mubr.bf16.mxu0 0
      %3854 = vmatmul.mubr.bf16.gmra.mrb[0].mxu0 %v3787
      %v3855 = vpop.f32.mrb[0].mxu0
      %v3856 = vadd.f32 0.0, %v3855
      %v3857 = vpop.f32.mrb[0].mxu0
      %v3858 = vpop.f32.mrb[0].mxu0
      %v3859 = vadd.f32 0.0, %v3858
      %v3860 = vpop.f32.mrb[0].mxu0
      %3861 = vdwg.mxu0
      %v3862 = vadd.f32 %v3712, %v3824
      %v3863 = vadd.f32 %v3713, %v3827
      %v3864 = vadd.f32 %v3714, %v3832
      %v3865 = vadd.f32 %v3715, %v3835
      %v3866 = vadd.f32 %v3716, %v3840
      %v3867 = vadd.f32 %v3717, %v3843
      %v3868 = vadd.f32 %v3718, %v3848
      %v3869 = vadd.f32 %v3719, %v3851
      %v3870 = vadd.f32 %v3720, %v3856
      %v3871 = vadd.f32 %v3721, %v3859
      %s3872 = scalar_lea.vmem %s1, 416
      %v3873 = vld [vmem:[%s3872] sm:$0xf]
      %v3874 = vld [vmem:[%s3872 + $0x4] sm:$0xf]
      %v3875 = vld [vmem:[%s3872 + $0x8] sm:$0xf]
      %v3876 = vld [vmem:[%s3872 + $0xc] sm:$0xf]
      %v3877 = vld [vmem:[%s3872 + $0x10] sm:$0xf]
      %v3878 = vld [vmem:[%s3872 + $0x14] sm:$0xf]
      %v3879 = vld [vmem:[%s3872 + $0x18] sm:$0xf]
      %v3880 = vld [vmem:[%s3872 + $0x1c] sm:$0xf]
      %vm3881 = vsmask.f32 6400
      %v3883 = vshrl.u32 %v3733, 16
      %v3885 = vrot.slane %v3883, 1
      %v3886 = vshll.u32 %v3733, 16
      %v3888 = vrot.slane %v3886, 2
      %v3889 = vor.u32 %v3885, %v3888
      %v3891 = vshrl.u32 %v3734, 16
      %v3893 = vrot.slane %v3891, 1
      %v3894 = vshll.u32 %v3734, 16
      %v3896 = vrot.slane %v3894, 2
      %v3897 = vor.u32 %v3893, %v3896
      %v3898 = vsel %vm3881, %v3889, %v3897
      %v3900 = vshrl.u32 %v3735, 16
      %v3902 = vrot.slane %v3900, 1
      %v3903 = vshll.u32 %v3735, 16
      %v3905 = vrot.slane %v3903, 2
      %v3906 = vor.u32 %v3902, %v3905
      %v3907 = vsel %vm3881, %v3897, %v3906
      %v3909 = vshrl.u32 %v3736, 16
      %v3911 = vrot.slane %v3909, 1
      %v3912 = vshll.u32 %v3736, 16
      %v3914 = vrot.slane %v3912, 2
      %v3915 = vor.u32 %v3911, %v3914
      %v3916 = vsel %vm3881, %v3906, %v3915
      %v3918 = vshrl.u32 %v3737, 16
      %v3920 = vrot.slane %v3918, 1
      %v3921 = vshll.u32 %v3737, 16
      %v3923 = vrot.slane %v3921, 2
      %v3924 = vor.u32 %v3920, %v3923
      %v3925 = vsel %vm3881, %v3915, %v3924
      %v3927 = vshrl.u32 %v3738, 16
      %v3929 = vrot.slane %v3927, 1
      %v3930 = vshll.u32 %v3738, 16
      %v3932 = vrot.slane %v3930, 2
      %v3933 = vor.u32 %v3929, %v3932
      %v3934 = vsel %vm3881, %v3924, %v3933
      %v3943 = vunpack.c.l.b16 %v3873
      %v3944 = vunpack.c.l.b16 %v3874
      %v3945 = vunpack.c.l.b16 %v3875
      %v3946 = vunpack.c.l.b16 %v3876
      %v3947 = vunpack.c.l.b16 %v3877
      %v3948 = vunpack.c.l.b16 %v3878
      %v3949 = vunpack.c.l.b16 %v3879
      %v3950 = vunpack.c.l.b16 %v3880
      %v3951 = vpack.c.b16 %v3944, %v3943
      %v3952 = vpack.c.b16 %v3946, %v3945
      %v3953 = vpack.c.b16 %v3948, %v3947
      %v3954 = vpack.c.b16 %v3950, %v3949
      %v3960 = vsel %vm554, %v3898, 0
      %v3963 = vsel %vm554, %v3907, 0
      %v3966 = vsel %vm554, %v3916, 0
      %v3969 = vsel %vm554, %v3925, 0
      %v3972 = vsel %vm554, %v3934, 0
      %3974 = vmatprep.subr.bf16.mxu0 0
      %3975 = vmatpush1.bf16.msra.mxu0 %v3951
      %3976 = vmatprep.subr.bf16.mxu0 0
      %3977 = vmatpush1.bf16.msra.mxu0 %v3952
      %3978 = vmatprep.subr.bf16.mxu0 0
      %3979 = vmatpush1.bf16.msra.mxu0 %v3953
      %3980 = vmatprep.subr.bf16.mxu0 0
      %3981 = vmatpush1.bf16.msra.mxu0 %v3954
      %3982 = vmatprep.subr.bf16.mxu0 0
      %3983 = vmatpush1.bf16.msra.mxu0 0
      %3984 = vmatprep.subr.bf16.mxu0 0
      %3985 = vmatpush1.bf16.msra.mxu0 0
      %3986 = vmatprep.subr.bf16.mxu0 0
      %3987 = vmatpush1.bf16.msra.mxu0 0
      %3988 = vmatprep.subr.bf16.mxu0 0
      %3989 = vmatpush1.bf16.msra.mxu0 0
      %3990 = vmatprep.subr.bf16.mxu0 0
      %3991 = vmatpush1.bf16.msra.mxu0 0
      %3992 = vmatprep.subr.bf16.mxu0 0
      %3993 = vmatpush1.bf16.msra.mxu0 0
      %3994 = vmatprep.subr.bf16.mxu0 0
      %3995 = vmatpush1.bf16.msra.mxu0 0
      %3996 = vmatprep.subr.bf16.mxu0 0
      %3997 = vmatpush1.bf16.msra.mxu0 0
      %3998 = vmatprep.subr.bf16.mxu0 0
      %3999 = vmatpush1.bf16.msra.mxu0 0
      %4000 = vmatprep.subr.bf16.mxu0 0
      %4001 = vmatpush1.bf16.msra.mxu0 0
      %4002 = vmatprep.subr.bf16.mxu0 0
      %4003 = vmatpush1.bf16.msra.mxu0 0
      %4004 = vmatprep.subr.bf16.mxu0 0
      %4005 = vmatpush1.bf16.msra.mxu0 0
      %4006 = vmatprep.mubr.bf16.mxu0 0
      %4007 = vmatmul.mubr.bf16.gmra.mrb[0].mxu0 %v3960
      %v4008 = vpop.f32.mrb[0].mxu0
      %v4009 = vadd.f32 0.0, %v4008
      %v4010 = vpop.f32.mrb[0].mxu0
      %v4011 = vpop.f32.mrb[0].mxu0
      %v4012 = vadd.f32 0.0, %v4011
      %v4013 = vpop.f32.mrb[0].mxu0
      %4014 = vmatprep.mubr.bf16.mxu0 0
      %4015 = vmatmul.mubr.bf16.gmra.mrb[0].mxu0 %v3963
      %v4016 = vpop.f32.mrb[0].mxu0
      %v4017 = vadd.f32 0.0, %v4016
      %v4018 = vpop.f32.mrb[0].mxu0
      %v4019 = vpop.f32.mrb[0].mxu0
      %v4020 = vadd.f32 0.0, %v4019
      %v4021 = vpop.f32.mrb[0].mxu0
      %4022 = vmatprep.mubr.bf16.mxu0 0
      %4023 = vmatmul.mubr.bf16.gmra.mrb[0].mxu0 %v3966
      %v4024 = vpop.f32.mrb[0].mxu0
      %v4025 = vadd.f32 0.0, %v4024
      %v4026 = vpop.f32.mrb[0].mxu0
      %v4027 = vpop.f32.mrb[0].mxu0
      %v4028 = vadd.f32 0.0, %v4027
      %v4029 = vpop.f32.mrb[0].mxu0
      %4030 = vmatprep.mubr.bf16.mxu0 0
      %4031 = vmatmul.mubr.bf16.gmra.mrb[0].mxu0 %v3969
      %v4032 = vpop.f32.mrb[0].mxu0
      %v4033 = vadd.f32 0.0, %v4032
      %v4034 = vpop.f32.mrb[0].mxu0
      %v4035 = vpop.f32.mrb[0].mxu0
      %v4036 = vadd.f32 0.0, %v4035
      %v4037 = vpop.f32.mrb[0].mxu0
      %4038 = vmatprep.mubr.bf16.mxu0 0
      %4039 = vmatmul.mubr.bf16.gmra.mrb[0].mxu0 %v3972
      %v4040 = vpop.f32.mrb[0].mxu0
      %v4041 = vadd.f32 0.0, %v4040
      %v4042 = vpop.f32.mrb[0].mxu0
      %v4043 = vpop.f32.mrb[0].mxu0
      %v4044 = vadd.f32 0.0, %v4043
      %v4045 = vpop.f32.mrb[0].mxu0
      %4046 = vdwg.mxu0
      %v4047 = vadd.f32 %v3862, %v4009
      %v4048 = vadd.f32 %v3863, %v4012
      %v4049 = vadd.f32 %v3864, %v4017
      %v4050 = vadd.f32 %v3865, %v4020
      %v4051 = vadd.f32 %v3866, %v4025
      %v4052 = vadd.f32 %v3867, %v4028
      %v4053 = vadd.f32 %v3868, %v4033
      %v4054 = vadd.f32 %v3869, %v4036
      %v4055 = vadd.f32 %v3870, %v4041
      %v4056 = vadd.f32 %v3871, %v4044
      %s4057 = scalar_lea.vmem %s1, 448
      %v4058 = vld [vmem:[%s4057] sm:$0xf]
      %v4059 = vld [vmem:[%s4057 + $0x4] sm:$0xf]
      %v4060 = vld [vmem:[%s4057 + $0x8] sm:$0xf]
      %v4061 = vld [vmem:[%s4057 + $0xc] sm:$0xf]
      %v4062 = vld [vmem:[%s4057 + $0x10] sm:$0xf]
      %v4063 = vld [vmem:[%s4057 + $0x14] sm:$0xf]
      %v4064 = vld [vmem:[%s4057 + $0x18] sm:$0xf]
      %v4065 = vld [vmem:[%s4057 + $0x1c] sm:$0xf]
      %v4066 = vrot.slane %v3733, 2
      %v4067 = vrot.slane %v3734, 2
      %v4068 = vsel %vm1352, %v4066, %v4067
      %v4069 = vrot.slane %v3735, 2
      %v4070 = vsel %vm1352, %v4067, %v4069
      %v4071 = vrot.slane %v3736, 2
      %v4072 = vsel %vm1352, %v4069, %v4071
      %v4073 = vrot.slane %v3737, 2
      %v4074 = vsel %vm1352, %v4071, %v4073
      %v4075 = vrot.slane %v3738, 2
      %v4076 = vsel %vm1352, %v4073, %v4075
      %v4085 = vunpack.c.l.b16 %v4058
      %v4086 = vunpack.c.l.b16 %v4059
      %v4087 = vunpack.c.l.b16 %v4060
      %v4088 = vunpack.c.l.b16 %v4061
      %v4089 = vunpack.c.l.b16 %v4062
      %v4090 = vunpack.c.l.b16 %v4063
      %v4091 = vunpack.c.l.b16 %v4064
      %v4092 = vunpack.c.l.b16 %v4065
      %v4093 = vpack.c.b16 %v4086, %v4085
      %v4094 = vpack.c.b16 %v4088, %v4087
      %v4095 = vpack.c.b16 %v4090, %v4089
      %v4096 = vpack.c.b16 %v4092, %v4091
      %v4102 = vsel %vm554, %v4068, 0
      %v4105 = vsel %vm554, %v4070, 0
      %v4108 = vsel %vm554, %v4072, 0
      %v4111 = vsel %vm554, %v4074, 0
      %v4114 = vsel %vm554, %v4076, 0
      %4116 = vmatprep.subr.bf16.mxu0 0
      %4117 = vmatpush1.bf16.msra.mxu0 %v4093
      %4118 = vmatprep.subr.bf16.mxu0 0
      %4119 = vmatpush1.bf16.msra.mxu0 %v4094
      %4120 = vmatprep.subr.bf16.mxu0 0
      %4121 = vmatpush1.bf16.msra.mxu0 %v4095
      %4122 = vmatprep.subr.bf16.mxu0 0
      %4123 = vmatpush1.bf16.msra.mxu0 %v4096
      %4124 = vmatprep.subr.bf16.mxu0 0
      %4125 = vmatpush1.bf16.msra.mxu0 0
      %4126 = vmatprep.subr.bf16.mxu0 0
      %4127 = vmatpush1.bf16.msra.mxu0 0
      %4128 = vmatprep.subr.bf16.mxu0 0
      %4129 = vmatpush1.bf16.msra.mxu0 0
      %4130 = vmatprep.subr.bf16.mxu0 0
      %4131 = vmatpush1.bf16.msra.mxu0 0
      %4132 = vmatprep.subr.bf16.mxu0 0
      %4133 = vmatpush1.bf16.msra.mxu0 0
      %4134 = vmatprep.subr.bf16.mxu0 0
      %4135 = vmatpush1.bf16.msra.mxu0 0
      %4136 = vmatprep.subr.bf16.mxu0 0
      %4137 = vmatpush1.bf16.msra.mxu0 0
      %4138 = vmatprep.subr.bf16.mxu0 0
      %4139 = vmatpush1.bf16.msra.mxu0 0
      %4140 = vmatprep.subr.bf16.mxu0 0
      %4141 = vmatpush1.bf16.msra.mxu0 0
      %4142 = vmatprep.subr.bf16.mxu0 0
      %4143 = vmatpush1.bf16.msra.mxu0 0
      %4144 = vmatprep.subr.bf16.mxu0 0
      %4145 = vmatpush1.bf16.msra.mxu0 0
      %4146 = vmatprep.subr.bf16.mxu0 0
      %4147 = vmatpush1.bf16.msra.mxu0 0
      %4148 = vmatprep.mubr.bf16.mxu0 0
      %4149 = vmatmul.mubr.bf16.gmra.mrb[0].mxu0 %v4102
      %v4150 = vpop.f32.mrb[0].mxu0
      %v4151 = vadd.f32 0.0, %v4150
      %v4152 = vpop.f32.mrb[0].mxu0
      %v4153 = vpop.f32.mrb[0].mxu0
      %v4154 = vadd.f32 0.0, %v4153
      %v4155 = vpop.f32.mrb[0].mxu0
      %4156 = vmatprep.mubr.bf16.mxu0 0
      %4157 = vmatmul.mubr.bf16.gmra.mrb[0].mxu0 %v4105
      %v4158 = vpop.f32.mrb[0].mxu0
      %v4159 = vadd.f32 0.0, %v4158
      %v4160 = vpop.f32.mrb[0].mxu0
      %v4161 = vpop.f32.mrb[0].mxu0
      %v4162 = vadd.f32 0.0, %v4161
      %v4163 = vpop.f32.mrb[0].mxu0
      %4164 = vmatprep.mubr.bf16.mxu0 0
      %4165 = vmatmul.mubr.bf16.gmra.mrb[0].mxu0 %v4108
      %v4166 = vpop.f32.mrb[0].mxu0
      %v4167 = vadd.f32 0.0, %v4166
      %v4168 = vpop.f32.mrb[0].mxu0
      %v4169 = vpop.f32.mrb[0].mxu0
      %v4170 = vadd.f32 0.0, %v4169
      %v4171 = vpop.f32.mrb[0].mxu0
      %4172 = vmatprep.mubr.bf16.mxu0 0
      %4173 = vmatmul.mubr.bf16.gmra.mrb[0].mxu0 %v4111
      %v4174 = vpop.f32.mrb[0].mxu0
      %v4175 = vadd.f32 0.0, %v4174
      %v4176 = vpop.f32.mrb[0].mxu0
      %v4177 = vpop.f32.mrb[0].mxu0
      %v4178 = vadd.f32 0.0, %v4177
      %v4179 = vpop.f32.mrb[0].mxu0
      %4180 = vmatprep.mubr.bf16.mxu0 0
      %4181 = vmatmul.mubr.bf16.gmra.mrb[0].mxu0 %v4114
      %v4182 = vpop.f32.mrb[0].mxu0
      %v4183 = vadd.f32 0.0, %v4182
      %v4184 = vpop.f32.mrb[0].mxu0
      %v4185 = vpop.f32.mrb[0].mxu0
      %v4186 = vadd.f32 0.0, %v4185
      %v4187 = vpop.f32.mrb[0].mxu0
      %4188 = vdwg.mxu0
      %v4189 = vadd.f32 %v4047, %v4151
      %v4190 = vadd.f32 %v4048, %v4154
      %v4191 = vadd.f32 %v4049, %v4159
      %v4192 = vadd.f32 %v4050, %v4162
      %v4193 = vadd.f32 %v4051, %v4167
      %v4194 = vadd.f32 %v4052, %v4170
      %v4195 = vadd.f32 %v4053, %v4175
      %v4196 = vadd.f32 %v4054, %v4178
      %v4197 = vadd.f32 %v4055, %v4183
      %v4198 = vadd.f32 %v4056, %v4186
      %s4199 = scalar_lea.vmem %s1, 480
      %v4200 = vld [vmem:[%s4199] sm:$0xf]
      %v4201 = vld [vmem:[%s4199 + $0x4] sm:$0xf]
      %v4202 = vld [vmem:[%s4199 + $0x8] sm:$0xf]
      %v4203 = vld [vmem:[%s4199 + $0xc] sm:$0xf]
      %v4204 = vld [vmem:[%s4199 + $0x10] sm:$0xf]
      %v4205 = vld [vmem:[%s4199 + $0x14] sm:$0xf]
      %v4206 = vld [vmem:[%s4199 + $0x18] sm:$0xf]
      %v4207 = vld [vmem:[%s4199 + $0x1c] sm:$0xf]
      %v4209 = vunpack.c.l.b16 %v3270
      %v4210 = vpack.c.b16 %v3732, %v3310
      %v4211 = vpack.c.b16 %v4209, %v4209
      %v4212 = vrot.slane %v3312, 2
      %v4213 = vrot.slane %v3313, 2
      %v4214 = vsel %vm1352, %v4212, %v4213
      %v4215 = vrot.slane %v3314, 2
      %v4216 = vsel %vm1352, %v4213, %v4215
      %v4217 = vrot.slane %v3315, 2
      %v4218 = vsel %vm1352, %v4215, %v4217
      %v4219 = vrot.slane %v4210, 2
      %v4220 = vsel %vm1352, %v4217, %v4219
      %v4221 = vrot.slane %v4211, 2
      %v4222 = vsel %vm1352, %v4219, %v4221
      %v4231 = vunpack.c.l.b16 %v4200
      %v4232 = vunpack.c.l.b16 %v4201
      %v4233 = vunpack.c.l.b16 %v4202
      %v4234 = vunpack.c.l.b16 %v4203
      %v4235 = vunpack.c.l.b16 %v4204
      %v4236 = vunpack.c.l.b16 %v4205
      %v4237 = vunpack.c.l.b16 %v4206
      %v4238 = vunpack.c.l.b16 %v4207
      %v4239 = vpack.c.b16 %v4232, %v4231
      %v4240 = vpack.c.b16 %v4234, %v4233
      %v4241 = vpack.c.b16 %v4236, %v4235
      %v4242 = vpack.c.b16 %v4238, %v4237
      %v4248 = vsel %vm554, %v4214, 0
      %v4251 = vsel %vm554, %v4216, 0
      %v4254 = vsel %vm554, %v4218, 0
      %v4257 = vsel %vm554, %v4220, 0
      %v4260 = vsel %vm554, %v4222, 0
      %4262 = vmatprep.subr.bf16.mxu0 0
      %4263 = vmatpush1.bf16.msra.mxu0 %v4239
      %4264 = vmatprep.subr.bf16.mxu0 0
      %4265 = vmatpush1.bf16.msra.mxu0 %v4240
      %4266 = vmatprep.subr.bf16.mxu0 0
      %4267 = vmatpush1.bf16.msra.mxu0 %v4241
      %4268 = vmatprep.subr.bf16.mxu0 0
      %4269 = vmatpush1.bf16.msra.mxu0 %v4242
      %4270 = vmatprep.subr.bf16.mxu0 0
      %4271 = vmatpush1.bf16.msra.mxu0 0
      %4272 = vmatprep.subr.bf16.mxu0 0
      %4273 = vmatpush1.bf16.msra.mxu0 0
      %4274 = vmatprep.subr.bf16.mxu0 0
      %4275 = vmatpush1.bf16.msra.mxu0 0
      %4276 = vmatprep.subr.bf16.mxu0 0
      %4277 = vmatpush1.bf16.msra.mxu0 0
      %4278 = vmatprep.subr.bf16.mxu0 0
      %4279 = vmatpush1.bf16.msra.mxu0 0
      %4280 = vmatprep.subr.bf16.mxu0 0
      %4281 = vmatpush1.bf16.msra.mxu0 0
      %4282 = vmatprep.subr.bf16.mxu0 0
      %4283 = vmatpush1.bf16.msra.mxu0 0
      %4284 = vmatprep.subr.bf16.mxu0 0
      %4285 = vmatpush1.bf16.msra.mxu0 0
      %4286 = vmatprep.subr.bf16.mxu0 0
      %4287 = vmatpush1.bf16.msra.mxu0 0
      %4288 = vmatprep.subr.bf16.mxu0 0
      %4289 = vmatpush1.bf16.msra.mxu0 0
      %4290 = vmatprep.subr.bf16.mxu0 0
      %4291 = vmatpush1.bf16.msra.mxu0 0
      %4292 = vmatprep.subr.bf16.mxu0 0
      %4293 = vmatpush1.bf16.msra.mxu0 0
      %4294 = vmatprep.mubr.bf16.mxu0 0
      %4295 = vmatmul.mubr.bf16.gmra.mrb[0].mxu0 %v4248
      %v4296 = vpop.f32.mrb[0].mxu0
      %v4297 = vadd.f32 0.0, %v4296
      %v4298 = vpop.f32.mrb[0].mxu0
      %v4299 = vpop.f32.mrb[0].mxu0
      %v4300 = vadd.f32 0.0, %v4299
      %v4301 = vpop.f32.mrb[0].mxu0
      %4302 = vmatprep.mubr.bf16.mxu0 0
      %4303 = vmatmul.mubr.bf16.gmra.mrb[0].mxu0 %v4251
      %v4304 = vpop.f32.mrb[0].mxu0
      %v4305 = vadd.f32 0.0, %v4304
      %v4306 = vpop.f32.mrb[0].mxu0
      %v4307 = vpop.f32.mrb[0].mxu0
      %v4308 = vadd.f32 0.0, %v4307
      %v4309 = vpop.f32.mrb[0].mxu0
      %4310 = vmatprep.mubr.bf16.mxu0 0
      %4311 = vmatmul.mubr.bf16.gmra.mrb[0].mxu0 %v4254
      %v4312 = vpop.f32.mrb[0].mxu0
      %v4313 = vadd.f32 0.0, %v4312
      %v4314 = vpop.f32.mrb[0].mxu0
      %v4315 = vpop.f32.mrb[0].mxu0
      %v4316 = vadd.f32 0.0, %v4315
      %v4317 = vpop.f32.mrb[0].mxu0
      %4318 = vmatprep.mubr.bf16.mxu0 0
      %4319 = vmatmul.mubr.bf16.gmra.mrb[0].mxu0 %v4257
      %v4320 = vpop.f32.mrb[0].mxu0
      %v4321 = vadd.f32 0.0, %v4320
      %v4322 = vpop.f32.mrb[0].mxu0
      %v4323 = vpop.f32.mrb[0].mxu0
      %v4324 = vadd.f32 0.0, %v4323
      %v4325 = vpop.f32.mrb[0].mxu0
      %4326 = vmatprep.mubr.bf16.mxu0 0
      %4327 = vmatmul.mubr.bf16.gmra.mrb[0].mxu0 %v4260
      %v4328 = vpop.f32.mrb[0].mxu0
      %v4329 = vadd.f32 0.0, %v4328
      %v4330 = vpop.f32.mrb[0].mxu0
      %v4331 = vpop.f32.mrb[0].mxu0
      %v4332 = vadd.f32 0.0, %v4331
      %v4333 = vpop.f32.mrb[0].mxu0
      %4334 = vdwg.mxu0
      %v4335 = vadd.f32 %v4189, %v4297
      %v4336 = vadd.f32 %v4190, %v4300
      %v4337 = vadd.f32 %v4191, %v4305
      %v4338 = vadd.f32 %v4192, %v4308
      %v4339 = vadd.f32 %v4193, %v4313
      %v4340 = vadd.f32 %v4194, %v4316
      %v4341 = vadd.f32 %v4195, %v4321
      %v4342 = vadd.f32 %v4196, %v4324
      %v4343 = vadd.f32 %v4197, %v4329
      %v4344 = vadd.f32 %v4198, %v4332
      %s4345 = scalar_lea.vmem %s1, 512
      %v4346 = vld [vmem:[%s4345] sm:$0xf]
      %v4347 = vld [vmem:[%s4345 + $0x4] sm:$0xf]
      %v4348 = vld [vmem:[%s4345 + $0x8] sm:$0xf]
      %v4349 = vld [vmem:[%s4345 + $0xc] sm:$0xf]
      %v4350 = vld [vmem:[%s4345 + $0x10] sm:$0xf]
      %v4351 = vld [vmem:[%s4345 + $0x14] sm:$0xf]
      %v4352 = vld [vmem:[%s4345 + $0x18] sm:$0xf]
      %v4353 = vld [vmem:[%s4345 + $0x1c] sm:$0xf]
      %v4354 = vrot.slane %v3329, 2
      %v4355 = vrot.slane %v3325, 3
      %v4356 = vor.u32 %v4354, %v4355
      %v4357 = vrot.slane %v3337, 2
      %v4358 = vrot.slane %v3333, 3
      %v4359 = vor.u32 %v4357, %v4358
      %v4360 = vsel %vm1495, %v4356, %v4359
      %v4361 = vrot.slane %v3345, 2
      %v4362 = vrot.slane %v3341, 3
      %v4363 = vor.u32 %v4361, %v4362
      %v4364 = vsel %vm1495, %v4359, %v4363
      %v4365 = vrot.slane %v3353, 2
      %v4366 = vrot.slane %v3349, 3
      %v4367 = vor.u32 %v4365, %v4366
      %v4368 = vsel %vm1495, %v4363, %v4367
      %v4370 = vshrl.u32 %v4210, 16
      %v4372 = vrot.slane %v4370, 2
      %v4373 = vshll.u32 %v4210, 16
      %v4375 = vrot.slane %v4373, 3
      %v4376 = vor.u32 %v4372, %v4375
      %v4377 = vsel %vm1495, %v4367, %v4376
      %v4379 = vshrl.u32 %v4211, 16
      %v4381 = vrot.slane %v4379, 2
      %v4382 = vshll.u32 %v4211, 16
      %v4384 = vrot.slane %v4382, 3
      %v4385 = vor.u32 %v4381, %v4384
      %v4386 = vsel %vm1495, %v4376, %v4385
      %v4395 = vunpack.c.l.b16 %v4346
      %v4396 = vunpack.c.l.b16 %v4347
      %v4397 = vunpack.c.l.b16 %v4348
      %v4398 = vunpack.c.l.b16 %v4349
      %v4399 = vunpack.c.l.b16 %v4350
      %v4400 = vunpack.c.l.b16 %v4351
      %v4401 = vunpack.c.l.b16 %v4352
      %v4402 = vunpack.c.l.b16 %v4353
      %v4403 = vpack.c.b16 %v4396, %v4395
      %v4404 = vpack.c.b16 %v4398, %v4397
      %v4405 = vpack.c.b16 %v4400, %v4399
      %v4406 = vpack.c.b16 %v4402, %v4401
      %v4412 = vsel %vm554, %v4360, 0
      %v4415 = vsel %vm554, %v4364, 0
      %v4418 = vsel %vm554, %v4368, 0
      %v4421 = vsel %vm554, %v4377, 0
      %v4424 = vsel %vm554, %v4386, 0
      %4426 = vmatprep.subr.bf16.mxu0 0
      %4427 = vmatpush1.bf16.msra.mxu0 %v4403
      %4428 = vmatprep.subr.bf16.mxu0 0
      %4429 = vmatpush1.bf16.msra.mxu0 %v4404
      %4430 = vmatprep.subr.bf16.mxu0 0
      %4431 = vmatpush1.bf16.msra.mxu0 %v4405
      %4432 = vmatprep.subr.bf16.mxu0 0
      %4433 = vmatpush1.bf16.msra.mxu0 %v4406
      %4434 = vmatprep.subr.bf16.mxu0 0
      %4435 = vmatpush1.bf16.msra.mxu0 0
      %4436 = vmatprep.subr.bf16.mxu0 0
      %4437 = vmatpush1.bf16.msra.mxu0 0
      %4438 = vmatprep.subr.bf16.mxu0 0
      %4439 = vmatpush1.bf16.msra.mxu0 0
      %4440 = vmatprep.subr.bf16.mxu0 0
      %4441 = vmatpush1.bf16.msra.mxu0 0
      %4442 = vmatprep.subr.bf16.mxu0 0
      %4443 = vmatpush1.bf16.msra.mxu0 0
      %4444 = vmatprep.subr.bf16.mxu0 0
      %4445 = vmatpush1.bf16.msra.mxu0 0
      %4446 = vmatprep.subr.bf16.mxu0 0
      %4447 = vmatpush1.bf16.msra.mxu0 0
      %4448 = vmatprep.subr.bf16.mxu0 0
      %4449 = vmatpush1.bf16.msra.mxu0 0
      %4450 = vmatprep.subr.bf16.mxu0 0
      %4451 = vmatpush1.bf16.msra.mxu0 0
      %4452 = vmatprep.subr.bf16.mxu0 0
      %4453 = vmatpush1.bf16.msra.mxu0 0
      %4454 = vmatprep.subr.bf16.mxu0 0
      %4455 = vmatpush1.bf16.msra.mxu0 0
      %4456 = vmatprep.subr.bf16.mxu0 0
      %4457 = vmatpush1.bf16.msra.mxu0 0
      %4458 = vmatprep.mubr.bf16.mxu0 0
      %4459 = vmatmul.mubr.bf16.gmra.mrb[0].mxu0 %v4412
      %v4460 = vpop.f32.mrb[0].mxu0
      %v4461 = vadd.f32 0.0, %v4460
      %v4462 = vpop.f32.mrb[0].mxu0
      %v4463 = vpop.f32.mrb[0].mxu0
      %v4464 = vadd.f32 0.0, %v4463
      %v4465 = vpop.f32.mrb[0].mxu0
      %4466 = vmatprep.mubr.bf16.mxu0 0
      %4467 = vmatmul.mubr.bf16.gmra.mrb[0].mxu0 %v4415
      %v4468 = vpop.f32.mrb[0].mxu0
      %v4469 = vadd.f32 0.0, %v4468
      %v4470 = vpop.f32.mrb[0].mxu0
      %v4471 = vpop.f32.mrb[0].mxu0
      %v4472 = vadd.f32 0.0, %v4471
      %v4473 = vpop.f32.mrb[0].mxu0
      %4474 = vmatprep.mubr.bf16.mxu0 0
      %4475 = vmatmul.mubr.bf16.gmra.mrb[0].mxu0 %v4418
      %v4476 = vpop.f32.mrb[0].mxu0
      %v4477 = vadd.f32 0.0, %v4476
      %v4478 = vpop.f32.mrb[0].mxu0
      %v4479 = vpop.f32.mrb[0].mxu0
      %v4480 = vadd.f32 0.0, %v4479
      %v4481 = vpop.f32.mrb[0].mxu0
      %4482 = vmatprep.mubr.bf16.mxu0 0
      %4483 = vmatmul.mubr.bf16.gmra.mrb[0].mxu0 %v4421
      %v4484 = vpop.f32.mrb[0].mxu0
      %v4485 = vadd.f32 0.0, %v4484
      %v4486 = vpop.f32.mrb[0].mxu0
      %v4487 = vpop.f32.mrb[0].mxu0
      %v4488 = vadd.f32 0.0, %v4487
      %v4489 = vpop.f32.mrb[0].mxu0
      %4490 = vmatprep.mubr.bf16.mxu0 0
      %4491 = vmatmul.mubr.bf16.gmra.mrb[0].mxu0 %v4424
      %v4492 = vpop.f32.mrb[0].mxu0
      %v4493 = vadd.f32 0.0, %v4492
      %v4494 = vpop.f32.mrb[0].mxu0
      %v4495 = vpop.f32.mrb[0].mxu0
      %v4496 = vadd.f32 0.0, %v4495
      %v4497 = vpop.f32.mrb[0].mxu0
      %4498 = vdwg.mxu0
      %v4499 = vadd.f32 %v4335, %v4461
      %v4500 = vadd.f32 %v4336, %v4464
      %v4501 = vadd.f32 %v4337, %v4469
      %v4502 = vadd.f32 %v4338, %v4472
      %v4503 = vadd.f32 %v4339, %v4477
      %v4504 = vadd.f32 %v4340, %v4480
      %v4505 = vadd.f32 %v4341, %v4485
      %v4506 = vadd.f32 %v4342, %v4488
      %v4507 = vadd.f32 %v4343, %v4493
      %v4508 = vadd.f32 %v4344, %v4496
      %s4509 = scalar_lea.vmem %s1, 544
      %v4510 = vld [vmem:[%s4509] sm:$0xf]
      %v4511 = vld [vmem:[%s4509 + $0x4] sm:$0xf]
      %v4512 = vld [vmem:[%s4509 + $0x8] sm:$0xf]
      %v4513 = vld [vmem:[%s4509 + $0xc] sm:$0xf]
      %v4514 = vld [vmem:[%s4509 + $0x10] sm:$0xf]
      %v4515 = vld [vmem:[%s4509 + $0x14] sm:$0xf]
      %v4516 = vld [vmem:[%s4509 + $0x18] sm:$0xf]
      %v4517 = vld [vmem:[%s4509 + $0x1c] sm:$0xf]
      %v4518 = vrot.slane %v3312, 3
      %v4519 = vrot.slane %v3313, 3
      %v4520 = vsel %vm1655, %v4518, %v4519
      %v4521 = vrot.slane %v3314, 3
      %v4522 = vsel %vm1655, %v4519, %v4521
      %v4523 = vrot.slane %v3315, 3
      %v4524 = vsel %vm1655, %v4521, %v4523
      %v4525 = vrot.slane %v4210, 3
      %v4526 = vsel %vm1655, %v4523, %v4525
      %v4527 = vrot.slane %v4211, 3
      %v4528 = vsel %vm1655, %v4525, %v4527
      %v4537 = vunpack.c.l.b16 %v4510
      %v4538 = vunpack.c.l.b16 %v4511
      %v4539 = vunpack.c.l.b16 %v4512
      %v4540 = vunpack.c.l.b16 %v4513
      %v4541 = vunpack.c.l.b16 %v4514
      %v4542 = vunpack.c.l.b16 %v4515
      %v4543 = vunpack.c.l.b16 %v4516
      %v4544 = vunpack.c.l.b16 %v4517
      %v4545 = vpack.c.b16 %v4538, %v4537
      %v4546 = vpack.c.b16 %v4540, %v4539
      %v4547 = vpack.c.b16 %v4542, %v4541
      %v4548 = vpack.c.b16 %v4544, %v4543
      %v4554 = vsel %vm554, %v4520, 0
      %v4557 = vsel %vm554, %v4522, 0
      %v4560 = vsel %vm554, %v4524, 0
      %v4563 = vsel %vm554, %v4526, 0
      %v4566 = vsel %vm554, %v4528, 0
      %4568 = vmatprep.subr.bf16.mxu0 0
      %4569 = vmatpush1.bf16.msra.mxu0 %v4545
      %4570 = vmatprep.subr.bf16.mxu0 0
      %4571 = vmatpush1.bf16.msra.mxu0 %v4546
      %4572 = vmatprep.subr.bf16.mxu0 0
      %4573 = vmatpush1.bf16.msra.mxu0 %v4547
      %4574 = vmatprep.subr.bf16.mxu0 0
      %4575 = vmatpush1.bf16.msra.mxu0 %v4548
      %4576 = vmatprep.subr.bf16.mxu0 0
      %4577 = vmatpush1.bf16.msra.mxu0 0
      %4578 = vmatprep.subr.bf16.mxu0 0
      %4579 = vmatpush1.bf16.msra.mxu0 0
      %4580 = vmatprep.subr.bf16.mxu0 0
      %4581 = vmatpush1.bf16.msra.mxu0 0
      %4582 = vmatprep.subr.bf16.mxu0 0
      %4583 = vmatpush1.bf16.msra.mxu0 0
      %4584 = vmatprep.subr.bf16.mxu0 0
      %4585 = vmatpush1.bf16.msra.mxu0 0
      %4586 = vmatprep.subr.bf16.mxu0 0
      %4587 = vmatpush1.bf16.msra.mxu0 0
      %4588 = vmatprep.subr.bf16.mxu0 0
      %4589 = vmatpush1.bf16.msra.mxu0 0
      %4590 = vmatprep.subr.bf16.mxu0 0
      %4591 = vmatpush1.bf16.msra.mxu0 0
      %4592 = vmatprep.subr.bf16.mxu0 0
      %4593 = vmatpush1.bf16.msra.mxu0 0
      %4594 = vmatprep.subr.bf16.mxu0 0
      %4595 = vmatpush1.bf16.msra.mxu0 0
      %4596 = vmatprep.subr.bf16.mxu0 0
      %4597 = vmatpush1.bf16.msra.mxu0 0
      %4598 = vmatprep.subr.bf16.mxu0 0
      %4599 = vmatpush1.bf16.msra.mxu0 0
      %4600 = vmatprep.mubr.bf16.mxu0 0
      %4601 = vmatmul.mubr.bf16.gmra.mrb[0].mxu0 %v4554
      %v4602 = vpop.f32.mrb[0].mxu0
      %v4603 = vadd.f32 0.0, %v4602
      %v4604 = vpop.f32.mrb[0].mxu0
      %v4605 = vpop.f32.mrb[0].mxu0
      %v4606 = vadd.f32 0.0, %v4605
      %v4607 = vpop.f32.mrb[0].mxu0
      %4608 = vmatprep.mubr.bf16.mxu0 0
      %4609 = vmatmul.mubr.bf16.gmra.mrb[0].mxu0 %v4557
      %v4610 = vpop.f32.mrb[0].mxu0
      %v4611 = vadd.f32 0.0, %v4610
      %v4612 = vpop.f32.mrb[0].mxu0
      %v4613 = vpop.f32.mrb[0].mxu0
      %v4614 = vadd.f32 0.0, %v4613
      %v4615 = vpop.f32.mrb[0].mxu0
      %4616 = vmatprep.mubr.bf16.mxu0 0
      %4617 = vmatmul.mubr.bf16.gmra.mrb[0].mxu0 %v4560
      %v4618 = vpop.f32.mrb[0].mxu0
      %v4619 = vadd.f32 0.0, %v4618
      %v4620 = vpop.f32.mrb[0].mxu0
      %v4621 = vpop.f32.mrb[0].mxu0
      %v4622 = vadd.f32 0.0, %v4621
      %v4623 = vpop.f32.mrb[0].mxu0
      %4624 = vmatprep.mubr.bf16.mxu0 0
      %4625 = vmatmul.mubr.bf16.gmra.mrb[0].mxu0 %v4563
      %v4626 = vpop.f32.mrb[0].mxu0
      %v4627 = vadd.f32 0.0, %v4626
      %v4628 = vpop.f32.mrb[0].mxu0
      %v4629 = vpop.f32.mrb[0].mxu0
      %v4630 = vadd.f32 0.0, %v4629
      %v4631 = vpop.f32.mrb[0].mxu0
      %4632 = vmatprep.mubr.bf16.mxu0 0
      %4633 = vmatmul.mubr.bf16.gmra.mrb[0].mxu0 %v4566
      %v4634 = vpop.f32.mrb[0].mxu0
      %v4635 = vadd.f32 0.0, %v4634
      %v4636 = vpop.f32.mrb[0].mxu0
      %v4637 = vpop.f32.mrb[0].mxu0
      %v4638 = vadd.f32 0.0, %v4637
      %v4639 = vpop.f32.mrb[0].mxu0
      %4640 = vdwg.mxu0
      %v4641 = vadd.f32 %v4499, %v4603
      %v4642 = vadd.f32 %v4500, %v4606
      %v4643 = vadd.f32 %v4501, %v4611
      %v4644 = vadd.f32 %v4502, %v4614
      %v4645 = vadd.f32 %v4503, %v4619
      %v4646 = vadd.f32 %v4504, %v4622
      %v4647 = vadd.f32 %v4505, %v4627
      %v4648 = vadd.f32 %v4506, %v4630
      %v4649 = vadd.f32 %v4507, %v4635
      %v4650 = vadd.f32 %v4508, %v4638
      %v4651 = vlaneseq
      %v4652 = vshrl.u32 %v4651, 7
      %v4653 = vsub.s32 0, %v4652
      %v4654 = vrot.slane %v467, %v4653
      %v4655 = vadd.f32 %v4641, %v4654
      %v4656 = vadd.f32 %v4642, %v4654
      %v4657 = vadd.f32 %v4643, %v4654
      %v4658 = vadd.f32 %v4644, %v4654
      %v4659 = vadd.f32 %v4645, %v4654
      %v4660 = vadd.f32 %v4646, %v4654
      %v4661 = vadd.f32 %v4647, %v4654
      %v4662 = vadd.f32 %v4648, %v4654
      %v4663 = vadd.f32 %v4649, %v4654
      %v4664 = vadd.f32 %v4650, %v4654
      %vm4676 = vcmask 1044480
      %v4677 = vrot.slane %v402, 3
      %v4678 = vrot.slane %v403, 3
      %v4679 = vsel %vm4676, %v4677, %v4678
      %v4680 = vrot.slane %v404, 3
      %v4681 = vsel %vm4676, %v4678, %v4680
      %v4682 = vrot.slane %v405, 3
      %v4683 = vsel %vm4676, %v4680, %v4682
      %v4684 = vrot.slane %v406, 3
      %v4685 = vsel %vm4676, %v4682, %v4684
      %v4686 = vrot.slane %v407, 3
      %v4687 = vsel %vm4676, %v4684, %v4686
      %v4688 = vrot.slane %v408, 3
      %v4689 = vsel %vm4676, %v4686, %v4688
      %v4690 = vrot.slane %v409, 3
      %v4691 = vsel %vm4676, %v4688, %v4690
      %v4692 = vrot.slane %v410, 3
      %v4693 = vsel %vm4676, %v4690, %v4692
      %v4694 = vrot.slane %v411, 3
      %v4695 = vsel %vm4676, %v4692, %v4694
      %v4696 = vrot.slane %v412, 3
      %v4697 = vsel %vm4676, %v4694, %v4696
      %v4708 = vadd.f32 %v4655, %v4679
      %v4709 = vadd.f32 %v4656, %v4681
      %v4710 = vadd.f32 %v4657, %v4683
      %v4711 = vadd.f32 %v4658, %v4685
      %v4712 = vadd.f32 %v4659, %v4687
      %v4713 = vadd.f32 %v4660, %v4689
      %v4714 = vadd.f32 %v4661, %v4691
      %v4715 = vadd.f32 %v4662, %v4693
      %v4716 = vadd.f32 %v4663, %v4695
      %v4717 = vadd.f32 %v4664, %v4697
      %v4718 = vld [vmem:[%s2927] sm:$0xf]
      %v4719 = vld [vmem:[%s2927 + $0x4] sm:$0xf]
      %v4720 = vld [vmem:[%s2927 + $0x8] sm:$0xf]
      %v4721 = vld [vmem:[%s2927 + $0xc] sm:$0xf]
      %v4722 = vld [vmem:[%s2927 + $0x10] sm:$0xf]
      %v4723 = vld [vmem:[%s2927 + $0x14] sm:$0xf]
      %v4724 = vld [vmem:[%s2927 + $0x18] sm:$0xf]
      %v4725 = vld [vmem:[%s2927 + $0x1c] sm:$0xf]
      %v4726 = vld [vmem:[%s2927 + $0x20] sm:$0xf]
      %v4727 = vld [vmem:[%s2927 + $0x24] sm:$0xf]
      %v4728 = vld [vmem:[%s2927 + $0x28] sm:$0xf]
      %v4729 = vld [vmem:[%s2927 + $0x2c] sm:$0xf]
      %v4730 = vld [vmem:[%s2927 + $0x30] sm:$0xf]
      %v4742 = vunpack.c.l.b16 %v4718
      %v4743 = vunpack.c.l.b16 %v4719
      %v4744 = vunpack.c.l.b16 %v4720
      %v4745 = vunpack.c.l.b16 %v4721
      %v4746 = vunpack.c.l.b16 %v4722
      %v4747 = vunpack.c.l.b16 %v4723
      %v4748 = vunpack.c.l.b16 %v4724
      %v4749 = vunpack.c.l.b16 %v4725
      %v4750 = vunpack.c.l.b16 %v4726
      %v4751 = vunpack.c.l.b16 %v4727
      %v4752 = vunpack.c.l.b16 %v4728
      %v4753 = vpack.c.b16 %v4743, %v4742
      %v4754 = vpack.c.b16 %v4745, %v4744
      %v4755 = vpack.c.b16 %v4747, %v4746
      %v4756 = vpack.c.b16 %v4749, %v4748
      %v4757 = vpack.c.b16 %v4751, %v4750
      %v4758 = vpack.c.b16 %v4752, %v4752
      %v4760 = vshrl.u32 %v4753, 16
      %v4762 = vshll.u32 %v4753, 16
      %v4764 = vrot.slane %v4762, 1
      %v4765 = vor.u32 %v4760, %v4764
      %v4767 = vshll.u32 %v4754, 16
      %v4769 = vrot.slane %v4767, 1
      %v4770 = vsel %vm485, %v4765, %v4769
      %v4771 = vshrl.u32 %v4754, 16
      %v4773 = vor.u32 %v4771, %v4769
      %v4775 = vshll.u32 %v4755, 16
      %v4777 = vrot.slane %v4775, 1
      %v4778 = vsel %vm485, %v4773, %v4777
      %v4779 = vshrl.u32 %v4755, 16
      %v4781 = vor.u32 %v4779, %v4777
      %v4783 = vshll.u32 %v4756, 16
      %v4785 = vrot.slane %v4783, 1
      %v4786 = vsel %vm485, %v4781, %v4785
      %v4787 = vshrl.u32 %v4756, 16
      %v4789 = vor.u32 %v4787, %v4785
      %v4791 = vshll.u32 %v4757, 16
      %v4793 = vrot.slane %v4791, 1
      %v4794 = vsel %vm485, %v4789, %v4793
      %v4795 = vshrl.u32 %v4757, 16
      %v4797 = vor.u32 %v4795, %v4793
      %v4799 = vshll.u32 %v4758, 16
      %v4801 = vrot.slane %v4799, 1
      %v4802 = vsel %vm485, %v4797, %v4801
      %v4804 = vsel %vm554, %v4770, 0
      %v4807 = vsel %vm554, %v4778, 0
      %v4810 = vsel %vm554, %v4786, 0
      %v4813 = vsel %vm554, %v4794, 0
      %v4816 = vsel %vm554, %v4802, 0
      %4818 = vmatprep.subr.bf16.mxu0 0
      %4819 = vmatpush1.bf16.msra.mxu0 %v3377
      %4820 = vmatprep.subr.bf16.mxu0 0
      %4821 = vmatpush1.bf16.msra.mxu0 %v3378
      %4822 = vmatprep.subr.bf16.mxu0 0
      %4823 = vmatpush1.bf16.msra.mxu0 %v3379
      %4824 = vmatprep.subr.bf16.mxu0 0
      %4825 = vmatpush1.bf16.msra.mxu0 %v3380
      %4826 = vmatprep.subr.bf16.mxu0 0
      %4827 = vmatpush1.bf16.msra.mxu0 0
      %4828 = vmatprep.subr.bf16.mxu0 0
      %4829 = vmatpush1.bf16.msra.mxu0 0
      %4830 = vmatprep.subr.bf16.mxu0 0
      %4831 = vmatpush1.bf16.msra.mxu0 0
      %4832 = vmatprep.subr.bf16.mxu0 0
      %4833 = vmatpush1.bf16.msra.mxu0 0
      %4834 = vmatprep.subr.bf16.mxu0 0
      %4835 = vmatpush1.bf16.msra.mxu0 0
      %4836 = vmatprep.subr.bf16.mxu0 0
      %4837 = vmatpush1.bf16.msra.mxu0 0
      %4838 = vmatprep.subr.bf16.mxu0 0
      %4839 = vmatpush1.bf16.msra.mxu0 0
      %4840 = vmatprep.subr.bf16.mxu0 0
      %4841 = vmatpush1.bf16.msra.mxu0 0
      %4842 = vmatprep.subr.bf16.mxu0 0
      %4843 = vmatpush1.bf16.msra.mxu0 0
      %4844 = vmatprep.subr.bf16.mxu0 0
      %4845 = vmatpush1.bf16.msra.mxu0 0
      %4846 = vmatprep.subr.bf16.mxu0 0
      %4847 = vmatpush1.bf16.msra.mxu0 0
      %4848 = vmatprep.subr.bf16.mxu0 0
      %4849 = vmatpush1.bf16.msra.mxu0 0
      %4850 = vmatprep.mubr.bf16.mxu0 0
      %4851 = vmatmul.mubr.bf16.gmra.mrb[0].mxu0 %v4804
      %v4852 = vpop.f32.mrb[0].mxu0
      %v4853 = vadd.f32 0.0, %v4852
      %v4854 = vpop.f32.mrb[0].mxu0
      %v4855 = vpop.f32.mrb[0].mxu0
      %v4856 = vadd.f32 0.0, %v4855
      %v4857 = vpop.f32.mrb[0].mxu0
      %4858 = vmatprep.mubr.bf16.mxu0 0
      %4859 = vmatmul.mubr.bf16.gmra.mrb[0].mxu0 %v4807
      %v4860 = vpop.f32.mrb[0].mxu0
      %v4861 = vadd.f32 0.0, %v4860
      %v4862 = vpop.f32.mrb[0].mxu0
      %v4863 = vpop.f32.mrb[0].mxu0
      %v4864 = vadd.f32 0.0, %v4863
      %v4865 = vpop.f32.mrb[0].mxu0
      %4866 = vmatprep.mubr.bf16.mxu0 0
      %4867 = vmatmul.mubr.bf16.gmra.mrb[0].mxu0 %v4810
      %v4868 = vpop.f32.mrb[0].mxu0
      %v4869 = vadd.f32 0.0, %v4868
      %v4870 = vpop.f32.mrb[0].mxu0
      %v4871 = vpop.f32.mrb[0].mxu0
      %v4872 = vadd.f32 0.0, %v4871
      %v4873 = vpop.f32.mrb[0].mxu0
      %4874 = vmatprep.mubr.bf16.mxu0 0
      %4875 = vmatmul.mubr.bf16.gmra.mrb[0].mxu0 %v4813
      %v4876 = vpop.f32.mrb[0].mxu0
      %v4877 = vadd.f32 0.0, %v4876
      %v4878 = vpop.f32.mrb[0].mxu0
      %v4879 = vpop.f32.mrb[0].mxu0
      %v4880 = vadd.f32 0.0, %v4879
      %v4881 = vpop.f32.mrb[0].mxu0
      %4882 = vmatprep.mubr.bf16.mxu0 0
      %4883 = vmatmul.mubr.bf16.gmra.mrb[0].mxu0 %v4816
      %v4884 = vpop.f32.mrb[0].mxu0
      %v4885 = vadd.f32 0.0, %v4884
      %v4886 = vpop.f32.mrb[0].mxu0
      %v4887 = vpop.f32.mrb[0].mxu0
      %v4888 = vadd.f32 0.0, %v4887
      %v4889 = vpop.f32.mrb[0].mxu0
      %4890 = vdwg.mxu0
      %v4891 = vsel %vm554, %v4753, 0
      %v4893 = vsel %vm554, %v4754, 0
      %v4895 = vsel %vm554, %v4755, 0
      %v4897 = vsel %vm554, %v4756, 0
      %v4899 = vsel %vm554, %v4757, 0
      %4901 = vmatprep.subr.bf16.mxu0 0
      %4902 = vmatpush1.bf16.msra.mxu0 %v3489
      %4903 = vmatprep.subr.bf16.mxu0 0
      %4904 = vmatpush1.bf16.msra.mxu0 %v3490
      %4905 = vmatprep.subr.bf16.mxu0 0
      %4906 = vmatpush1.bf16.msra.mxu0 %v3491
      %4907 = vmatprep.subr.bf16.mxu0 0
      %4908 = vmatpush1.bf16.msra.mxu0 %v3492
      %4909 = vmatprep.subr.bf16.mxu0 0
      %4910 = vmatpush1.bf16.msra.mxu0 0
      %4911 = vmatprep.subr.bf16.mxu0 0
      %4912 = vmatpush1.bf16.msra.mxu0 0
      %4913 = vmatprep.subr.bf16.mxu0 0
      %4914 = vmatpush1.bf16.msra.mxu0 0
      %4915 = vmatprep.subr.bf16.mxu0 0
      %4916 = vmatpush1.bf16.msra.mxu0 0
      %4917 = vmatprep.subr.bf16.mxu0 0
      %4918 = vmatpush1.bf16.msra.mxu0 0
      %4919 = vmatprep.subr.bf16.mxu0 0
      %4920 = vmatpush1.bf16.msra.mxu0 0
      %4921 = vmatprep.subr.bf16.mxu0 0
      %4922 = vmatpush1.bf16.msra.mxu0 0
      %4923 = vmatprep.subr.bf16.mxu0 0
      %4924 = vmatpush1.bf16.msra.mxu0 0
      %4925 = vmatprep.subr.bf16.mxu0 0
      %4926 = vmatpush1.bf16.msra.mxu0 0
      %4927 = vmatprep.subr.bf16.mxu0 0
      %4928 = vmatpush1.bf16.msra.mxu0 0
      %4929 = vmatprep.subr.bf16.mxu0 0
      %4930 = vmatpush1.bf16.msra.mxu0 0
      %4931 = vmatprep.subr.bf16.mxu0 0
      %4932 = vmatpush1.bf16.msra.mxu0 0
      %4933 = vmatprep.mubr.bf16.mxu0 0
      %4934 = vmatmul.mubr.bf16.gmra.mrb[0].mxu0 %v4891
      %v4935 = vpop.f32.mrb[0].mxu0
      %v4936 = vadd.f32 %v4853, %v4935
      %v4937 = vpop.f32.mrb[0].mxu0
      %v4938 = vpop.f32.mrb[0].mxu0
      %v4939 = vadd.f32 %v4856, %v4938
      %v4940 = vpop.f32.mrb[0].mxu0
      %4941 = vmatprep.mubr.bf16.mxu0 0
      %4942 = vmatmul.mubr.bf16.gmra.mrb[0].mxu0 %v4893
      %v4943 = vpop.f32.mrb[0].mxu0
      %v4944 = vadd.f32 %v4861, %v4943
      %v4945 = vpop.f32.mrb[0].mxu0
      %v4946 = vpop.f32.mrb[0].mxu0
      %v4947 = vadd.f32 %v4864, %v4946
      %v4948 = vpop.f32.mrb[0].mxu0
      %4949 = vmatprep.mubr.bf16.mxu0 0
      %4950 = vmatmul.mubr.bf16.gmra.mrb[0].mxu0 %v4895
      %v4951 = vpop.f32.mrb[0].mxu0
      %v4952 = vadd.f32 %v4869, %v4951
      %v4953 = vpop.f32.mrb[0].mxu0
      %v4954 = vpop.f32.mrb[0].mxu0
      %v4955 = vadd.f32 %v4872, %v4954
      %v4956 = vpop.f32.mrb[0].mxu0
      %4957 = vmatprep.mubr.bf16.mxu0 0
      %4958 = vmatmul.mubr.bf16.gmra.mrb[0].mxu0 %v4897
      %v4959 = vpop.f32.mrb[0].mxu0
      %v4960 = vadd.f32 %v4877, %v4959
      %v4961 = vpop.f32.mrb[0].mxu0
      %v4962 = vpop.f32.mrb[0].mxu0
      %v4963 = vadd.f32 %v4880, %v4962
      %v4964 = vpop.f32.mrb[0].mxu0
      %4965 = vmatprep.mubr.bf16.mxu0 0
      %4966 = vmatmul.mubr.bf16.gmra.mrb[0].mxu0 %v4899
      %v4967 = vpop.f32.mrb[0].mxu0
      %v4968 = vadd.f32 %v4885, %v4967
      %v4969 = vpop.f32.mrb[0].mxu0
      %v4970 = vpop.f32.mrb[0].mxu0
      %v4971 = vadd.f32 %v4888, %v4970
      %v4972 = vpop.f32.mrb[0].mxu0
      %4973 = vdwg.mxu0
      %v4974 = vrot.slane %v4753, 1
      %v4975 = vrot.slane %v4754, 1
      %v4976 = vsel %vm765, %v4974, %v4975
      %v4977 = vrot.slane %v4755, 1
      %v4978 = vsel %vm765, %v4975, %v4977
      %v4979 = vrot.slane %v4756, 1
      %v4980 = vsel %vm765, %v4977, %v4979
      %v4981 = vrot.slane %v4757, 1
      %v4982 = vsel %vm765, %v4979, %v4981
      %v4983 = vrot.slane %v4758, 1
      %v4984 = vsel %vm765, %v4981, %v4983
      %v4986 = vsel %vm554, %v4976, 0
      %v4989 = vsel %vm554, %v4978, 0
      %v4992 = vsel %vm554, %v4980, 0
      %v4995 = vsel %vm554, %v4982, 0
      %v4998 = vsel %vm554, %v4984, 0
      %5000 = vmatprep.subr.bf16.mxu0 0
      %5001 = vmatpush1.bf16.msra.mxu0 %v3616
      %5002 = vmatprep.subr.bf16.mxu0 0
      %5003 = vmatpush1.bf16.msra.mxu0 %v3617
      %5004 = vmatprep.subr.bf16.mxu0 0
      %5005 = vmatpush1.bf16.msra.mxu0 %v3618
      %5006 = vmatprep.subr.bf16.mxu0 0
      %5007 = vmatpush1.bf16.msra.mxu0 %v3619
      %5008 = vmatprep.subr.bf16.mxu0 0
      %5009 = vmatpush1.bf16.msra.mxu0 0
      %5010 = vmatprep.subr.bf16.mxu0 0
      %5011 = vmatpush1.bf16.msra.mxu0 0
      %5012 = vmatprep.subr.bf16.mxu0 0
      %5013 = vmatpush1.bf16.msra.mxu0 0
      %5014 = vmatprep.subr.bf16.mxu0 0
      %5015 = vmatpush1.bf16.msra.mxu0 0
      %5016 = vmatprep.subr.bf16.mxu0 0
      %5017 = vmatpush1.bf16.msra.mxu0 0
      %5018 = vmatprep.subr.bf16.mxu0 0
      %5019 = vmatpush1.bf16.msra.mxu0 0
      %5020 = vmatprep.subr.bf16.mxu0 0
      %5021 = vmatpush1.bf16.msra.mxu0 0
      %5022 = vmatprep.subr.bf16.mxu0 0
      %5023 = vmatpush1.bf16.msra.mxu0 0
      %5024 = vmatprep.subr.bf16.mxu0 0
      %5025 = vmatpush1.bf16.msra.mxu0 0
      %5026 = vmatprep.subr.bf16.mxu0 0
      %5027 = vmatpush1.bf16.msra.mxu0 0
      %5028 = vmatprep.subr.bf16.mxu0 0
      %5029 = vmatpush1.bf16.msra.mxu0 0
      %5030 = vmatprep.subr.bf16.mxu0 0
      %5031 = vmatpush1.bf16.msra.mxu0 0
      %5032 = vmatprep.mubr.bf16.mxu0 0
      %5033 = vmatmul.mubr.bf16.gmra.mrb[0].mxu0 %v4986
      %v5034 = vpop.f32.mrb[0].mxu0
      %v5035 = vadd.f32 0.0, %v5034
      %v5036 = vpop.f32.mrb[0].mxu0
      %v5037 = vpop.f32.mrb[0].mxu0
      %v5038 = vadd.f32 0.0, %v5037
      %v5039 = vpop.f32.mrb[0].mxu0
      %5040 = vmatprep.mubr.bf16.mxu0 0
      %5041 = vmatmul.mubr.bf16.gmra.mrb[0].mxu0 %v4989
      %v5042 = vpop.f32.mrb[0].mxu0
      %v5043 = vadd.f32 0.0, %v5042
      %v5044 = vpop.f32.mrb[0].mxu0
      %v5045 = vpop.f32.mrb[0].mxu0
      %v5046 = vadd.f32 0.0, %v5045
      %v5047 = vpop.f32.mrb[0].mxu0
      %5048 = vmatprep.mubr.bf16.mxu0 0
      %5049 = vmatmul.mubr.bf16.gmra.mrb[0].mxu0 %v4992
      %v5050 = vpop.f32.mrb[0].mxu0
      %v5051 = vadd.f32 0.0, %v5050
      %v5052 = vpop.f32.mrb[0].mxu0
      %v5053 = vpop.f32.mrb[0].mxu0
      %v5054 = vadd.f32 0.0, %v5053
      %v5055 = vpop.f32.mrb[0].mxu0
      %5056 = vmatprep.mubr.bf16.mxu0 0
      %5057 = vmatmul.mubr.bf16.gmra.mrb[0].mxu0 %v4995
      %v5058 = vpop.f32.mrb[0].mxu0
      %v5059 = vadd.f32 0.0, %v5058
      %v5060 = vpop.f32.mrb[0].mxu0
      %v5061 = vpop.f32.mrb[0].mxu0
      %v5062 = vadd.f32 0.0, %v5061
      %v5063 = vpop.f32.mrb[0].mxu0
      %5064 = vmatprep.mubr.bf16.mxu0 0
      %5065 = vmatmul.mubr.bf16.gmra.mrb[0].mxu0 %v4998
      %v5066 = vpop.f32.mrb[0].mxu0
      %v5067 = vadd.f32 0.0, %v5066
      %v5068 = vpop.f32.mrb[0].mxu0
      %v5069 = vpop.f32.mrb[0].mxu0
      %v5070 = vadd.f32 0.0, %v5069
      %v5071 = vpop.f32.mrb[0].mxu0
      %5072 = vdwg.mxu0
      %v5073 = vadd.f32 %v4936, %v5035
      %v5074 = vadd.f32 %v4939, %v5038
      %v5075 = vadd.f32 %v4944, %v5043
      %v5076 = vadd.f32 %v4947, %v5046
      %v5077 = vadd.f32 %v4952, %v5051
      %v5078 = vadd.f32 %v4955, %v5054
      %v5079 = vadd.f32 %v4960, %v5059
      %v5080 = vadd.f32 %v4963, %v5062
      %v5081 = vadd.f32 %v4968, %v5067
      %v5082 = vadd.f32 %v4971, %v5070
      %v5084 = vunpack.c.l.b16 %v4729
      %v5085 = vpack.c.b16 %v4744, %v4743
      %v5086 = vpack.c.b16 %v4746, %v4745
      %v5087 = vpack.c.b16 %v4748, %v4747
      %v5088 = vpack.c.b16 %v4750, %v4749
      %v5089 = vpack.c.b16 %v4752, %v4751
      %v5090 = vpack.c.b16 %v5084, %v5084
      %v5091 = vrot.slane %v5085, 1
      %v5092 = vrot.slane %v5086, 1
      %v5093 = vsel %vm765, %v5091, %v5092
      %v5094 = vrot.slane %v5087, 1
      %v5095 = vsel %vm765, %v5092, %v5094
      %v5096 = vrot.slane %v5088, 1
      %v5097 = vsel %vm765, %v5094, %v5096
      %v5098 = vrot.slane %v5089, 1
      %v5099 = vsel %vm765, %v5096, %v5098
      %v5100 = vrot.slane %v5090, 1
      %v5101 = vsel %vm765, %v5098, %v5100
      %v5103 = vsel %vm554, %v5093, 0
      %v5106 = vsel %vm554, %v5095, 0
      %v5109 = vsel %vm554, %v5097, 0
      %v5112 = vsel %vm554, %v5099, 0
      %v5115 = vsel %vm554, %v5101, 0
      %5117 = vmatprep.subr.bf16.mxu0 0
      %5118 = vmatpush1.bf16.msra.mxu0 %v3766
      %5119 = vmatprep.subr.bf16.mxu0 0
      %5120 = vmatpush1.bf16.msra.mxu0 %v3767
      %5121 = vmatprep.subr.bf16.mxu0 0
      %5122 = vmatpush1.bf16.msra.mxu0 %v3768
      %5123 = vmatprep.subr.bf16.mxu0 0
      %5124 = vmatpush1.bf16.msra.mxu0 %v3769
      %5125 = vmatprep.subr.bf16.mxu0 0
      %5126 = vmatpush1.bf16.msra.mxu0 0
      %5127 = vmatprep.subr.bf16.mxu0 0
      %5128 = vmatpush1.bf16.msra.mxu0 0
      %5129 = vmatprep.subr.bf16.mxu0 0
      %5130 = vmatpush1.bf16.msra.mxu0 0
      %5131 = vmatprep.subr.bf16.mxu0 0
      %5132 = vmatpush1.bf16.msra.mxu0 0
      %5133 = vmatprep.subr.bf16.mxu0 0
      %5134 = vmatpush1.bf16.msra.mxu0 0
      %5135 = vmatprep.subr.bf16.mxu0 0
      %5136 = vmatpush1.bf16.msra.mxu0 0
      %5137 = vmatprep.subr.bf16.mxu0 0
      %5138 = vmatpush1.bf16.msra.mxu0 0
      %5139 = vmatprep.subr.bf16.mxu0 0
      %5140 = vmatpush1.bf16.msra.mxu0 0
      %5141 = vmatprep.subr.bf16.mxu0 0
      %5142 = vmatpush1.bf16.msra.mxu0 0
      %5143 = vmatprep.subr.bf16.mxu0 0
      %5144 = vmatpush1.bf16.msra.mxu0 0
      %5145 = vmatprep.subr.bf16.mxu0 0
      %5146 = vmatpush1.bf16.msra.mxu0 0
      %5147 = vmatprep.subr.bf16.mxu0 0
      %5148 = vmatpush1.bf16.msra.mxu0 0
      %5149 = vmatprep.mubr.bf16.mxu0 0
      %5150 = vmatmul.mubr.bf16.gmra.mrb[0].mxu0 %v5103
      %v5151 = vpop.f32.mrb[0].mxu0
      %v5152 = vadd.f32 0.0, %v5151
      %v5153 = vpop.f32.mrb[0].mxu0
      %v5154 = vpop.f32.mrb[0].mxu0
      %v5155 = vadd.f32 0.0, %v5154
      %v5156 = vpop.f32.mrb[0].mxu0
      %5157 = vmatprep.mubr.bf16.mxu0 0
      %5158 = vmatmul.mubr.bf16.gmra.mrb[0].mxu0 %v5106
      %v5159 = vpop.f32.mrb[0].mxu0
      %v5160 = vadd.f32 0.0, %v5159
      %v5161 = vpop.f32.mrb[0].mxu0
      %v5162 = vpop.f32.mrb[0].mxu0
      %v5163 = vadd.f32 0.0, %v5162
      %v5164 = vpop.f32.mrb[0].mxu0
      %5165 = vmatprep.mubr.bf16.mxu0 0
      %5166 = vmatmul.mubr.bf16.gmra.mrb[0].mxu0 %v5109
      %v5167 = vpop.f32.mrb[0].mxu0
      %v5168 = vadd.f32 0.0, %v5167
      %v5169 = vpop.f32.mrb[0].mxu0
      %v5170 = vpop.f32.mrb[0].mxu0
      %v5171 = vadd.f32 0.0, %v5170
      %v5172 = vpop.f32.mrb[0].mxu0
      %5173 = vmatprep.mubr.bf16.mxu0 0
      %5174 = vmatmul.mubr.bf16.gmra.mrb[0].mxu0 %v5112
      %v5175 = vpop.f32.mrb[0].mxu0
      %v5176 = vadd.f32 0.0, %v5175
      %v5177 = vpop.f32.mrb[0].mxu0
      %v5178 = vpop.f32.mrb[0].mxu0
      %v5179 = vadd.f32 0.0, %v5178
      %v5180 = vpop.f32.mrb[0].mxu0
      %5181 = vmatprep.mubr.bf16.mxu0 0
      %5182 = vmatmul.mubr.bf16.gmra.mrb[0].mxu0 %v5115
      %v5183 = vpop.f32.mrb[0].mxu0
      %v5184 = vadd.f32 0.0, %v5183
      %v5185 = vpop.f32.mrb[0].mxu0
      %v5186 = vpop.f32.mrb[0].mxu0
      %v5187 = vadd.f32 0.0, %v5186
      %v5188 = vpop.f32.mrb[0].mxu0
      %5189 = vdwg.mxu0
      %v5190 = vadd.f32 %v5073, %v5152
      %v5191 = vadd.f32 %v5074, %v5155
      %v5192 = vadd.f32 %v5075, %v5160
      %v5193 = vadd.f32 %v5076, %v5163
      %v5194 = vadd.f32 %v5077, %v5168
      %v5195 = vadd.f32 %v5078, %v5171
      %v5196 = vadd.f32 %v5079, %v5176
      %v5197 = vadd.f32 %v5080, %v5179
      %v5198 = vadd.f32 %v5081, %v5184
      %v5199 = vadd.f32 %v5082, %v5187
      %v5201 = vshrl.u32 %v5085, 16
      %v5203 = vrot.slane %v5201, 1
      %v5204 = vshll.u32 %v5085, 16
      %v5206 = vrot.slane %v5204, 2
      %v5207 = vor.u32 %v5203, %v5206
      %v5209 = vshrl.u32 %v5086, 16
      %v5211 = vrot.slane %v5209, 1
      %v5212 = vshll.u32 %v5086, 16
      %v5214 = vrot.slane %v5212, 2
      %v5215 = vor.u32 %v5211, %v5214
      %v5216 = vsel %vm3881, %v5207, %v5215
      %v5218 = vshrl.u32 %v5087, 16
      %v5220 = vrot.slane %v5218, 1
      %v5221 = vshll.u32 %v5087, 16
      %v5223 = vrot.slane %v5221, 2
      %v5224 = vor.u32 %v5220, %v5223
      %v5225 = vsel %vm3881, %v5215, %v5224
      %v5227 = vshrl.u32 %v5088, 16
      %v5229 = vrot.slane %v5227, 1
      %v5230 = vshll.u32 %v5088, 16
      %v5232 = vrot.slane %v5230, 2
      %v5233 = vor.u32 %v5229, %v5232
      %v5234 = vsel %vm3881, %v5224, %v5233
      %v5236 = vshrl.u32 %v5089, 16
      %v5238 = vrot.slane %v5236, 1
      %v5239 = vshll.u32 %v5089, 16
      %v5241 = vrot.slane %v5239, 2
      %v5242 = vor.u32 %v5238, %v5241
      %v5243 = vsel %vm3881, %v5233, %v5242
      %v5245 = vshrl.u32 %v5090, 16
      %v5247 = vrot.slane %v5245, 1
      %v5248 = vshll.u32 %v5090, 16
      %v5250 = vrot.slane %v5248, 2
      %v5251 = vor.u32 %v5247, %v5250
      %v5252 = vsel %vm3881, %v5242, %v5251
      %v5254 = vsel %vm554, %v5216, 0
      %v5257 = vsel %vm554, %v5225, 0
      %v5260 = vsel %vm554, %v5234, 0
      %v5263 = vsel %vm554, %v5243, 0
      %v5266 = vsel %vm554, %v5252, 0
      %5268 = vmatprep.subr.bf16.mxu0 0
      %5269 = vmatpush1.bf16.msra.mxu0 %v3951
      %5270 = vmatprep.subr.bf16.mxu0 0
      %5271 = vmatpush1.bf16.msra.mxu0 %v3952
      %5272 = vmatprep.subr.bf16.mxu0 0
      %5273 = vmatpush1.bf16.msra.mxu0 %v3953
      %5274 = vmatprep.subr.bf16.mxu0 0
      %5275 = vmatpush1.bf16.msra.mxu0 %v3954
      %5276 = vmatprep.subr.bf16.mxu0 0
      %5277 = vmatpush1.bf16.msra.mxu0 0
      %5278 = vmatprep.subr.bf16.mxu0 0
      %5279 = vmatpush1.bf16.msra.mxu0 0
      %5280 = vmatprep.subr.bf16.mxu0 0
      %5281 = vmatpush1.bf16.msra.mxu0 0
      %5282 = vmatprep.subr.bf16.mxu0 0
      %5283 = vmatpush1.bf16.msra.mxu0 0
      %5284 = vmatprep.subr.bf16.mxu0 0
      %5285 = vmatpush1.bf16.msra.mxu0 0
      %5286 = vmatprep.subr.bf16.mxu0 0
      %5287 = vmatpush1.bf16.msra.mxu0 0
      %5288 = vmatprep.subr.bf16.mxu0 0
      %5289 = vmatpush1.bf16.msra.mxu0 0
      %5290 = vmatprep.subr.bf16.mxu0 0
      %5291 = vmatpush1.bf16.msra.mxu0 0
      %5292 = vmatprep.subr.bf16.mxu0 0
      %5293 = vmatpush1.bf16.msra.mxu0 0
      %5294 = vmatprep.subr.bf16.mxu0 0
      %5295 = vmatpush1.bf16.msra.mxu0 0
      %5296 = vmatprep.subr.bf16.mxu0 0
      %5297 = vmatpush1.bf16.msra.mxu0 0
      %5298 = vmatprep.subr.bf16.mxu0 0
      %5299 = vmatpush1.bf16.msra.mxu0 0
      %5300 = vmatprep.mubr.bf16.mxu0 0
      %5301 = vmatmul.mubr.bf16.gmra.mrb[0].mxu0 %v5254
      %v5302 = vpop.f32.mrb[0].mxu0
      %v5303 = vadd.f32 0.0, %v5302
      %v5304 = vpop.f32.mrb[0].mxu0
      %v5305 = vpop.f32.mrb[0].mxu0
      %v5306 = vadd.f32 0.0, %v5305
      %v5307 = vpop.f32.mrb[0].mxu0
      %5308 = vmatprep.mubr.bf16.mxu0 0
      %5309 = vmatmul.mubr.bf16.gmra.mrb[0].mxu0 %v5257
      %v5310 = vpop.f32.mrb[0].mxu0
      %v5311 = vadd.f32 0.0, %v5310
      %v5312 = vpop.f32.mrb[0].mxu0
      %v5313 = vpop.f32.mrb[0].mxu0
      %v5314 = vadd.f32 0.0, %v5313
      %v5315 = vpop.f32.mrb[0].mxu0
      %5316 = vmatprep.mubr.bf16.mxu0 0
      %5317 = vmatmul.mubr.bf16.gmra.mrb[0].mxu0 %v5260
      %v5318 = vpop.f32.mrb[0].mxu0
      %v5319 = vadd.f32 0.0, %v5318
      %v5320 = vpop.f32.mrb[0].mxu0
      %v5321 = vpop.f32.mrb[0].mxu0
      %v5322 = vadd.f32 0.0, %v5321
      %v5323 = vpop.f32.mrb[0].mxu0
      %5324 = vmatprep.mubr.bf16.mxu0 0
      %5325 = vmatmul.mubr.bf16.gmra.mrb[0].mxu0 %v5263
      %v5326 = vpop.f32.mrb[0].mxu0
      %v5327 = vadd.f32 0.0, %v5326
      %v5328 = vpop.f32.mrb[0].mxu0
      %v5329 = vpop.f32.mrb[0].mxu0
      %v5330 = vadd.f32 0.0, %v5329
      %v5331 = vpop.f32.mrb[0].mxu0
      %5332 = vmatprep.mubr.bf16.mxu0 0
      %5333 = vmatmul.mubr.bf16.gmra.mrb[0].mxu0 %v5266
      %v5334 = vpop.f32.mrb[0].mxu0
      %v5335 = vadd.f32 0.0, %v5334
      %v5336 = vpop.f32.mrb[0].mxu0
      %v5337 = vpop.f32.mrb[0].mxu0
      %v5338 = vadd.f32 0.0, %v5337
      %v5339 = vpop.f32.mrb[0].mxu0
      %5340 = vdwg.mxu0
      %v5341 = vadd.f32 %v5190, %v5303
      %v5342 = vadd.f32 %v5191, %v5306
      %v5343 = vadd.f32 %v5192, %v5311
      %v5344 = vadd.f32 %v5193, %v5314
      %v5345 = vadd.f32 %v5194, %v5319
      %v5346 = vadd.f32 %v5195, %v5322
      %v5347 = vadd.f32 %v5196, %v5327
      %v5348 = vadd.f32 %v5197, %v5330
      %v5349 = vadd.f32 %v5198, %v5335
      %v5350 = vadd.f32 %v5199, %v5338
      %v5351 = vrot.slane %v5085, 2
      %v5352 = vrot.slane %v5086, 2
      %v5353 = vsel %vm1352, %v5351, %v5352
      %v5354 = vrot.slane %v5087, 2
      %v5355 = vsel %vm1352, %v5352, %v5354
      %v5356 = vrot.slane %v5088, 2
      %v5357 = vsel %vm1352, %v5354, %v5356
      %v5358 = vrot.slane %v5089, 2
      %v5359 = vsel %vm1352, %v5356, %v5358
      %v5360 = vrot.slane %v5090, 2
      %v5361 = vsel %vm1352, %v5358, %v5360
      %v5363 = vsel %vm554, %v5353, 0
      %v5366 = vsel %vm554, %v5355, 0
      %v5369 = vsel %vm554, %v5357, 0
      %v5372 = vsel %vm554, %v5359, 0
      %v5375 = vsel %vm554, %v5361, 0
      %5377 = vmatprep.subr.bf16.mxu0 0
      %5378 = vmatpush1.bf16.msra.mxu0 %v4093
      %5379 = vmatprep.subr.bf16.mxu0 0
      %5380 = vmatpush1.bf16.msra.mxu0 %v4094
      %5381 = vmatprep.subr.bf16.mxu0 0
      %5382 = vmatpush1.bf16.msra.mxu0 %v4095
      %5383 = vmatprep.subr.bf16.mxu0 0
      %5384 = vmatpush1.bf16.msra.mxu0 %v4096
      %5385 = vmatprep.subr.bf16.mxu0 0
      %5386 = vmatpush1.bf16.msra.mxu0 0
      %5387 = vmatprep.subr.bf16.mxu0 0
      %5388 = vmatpush1.bf16.msra.mxu0 0
      %5389 = vmatprep.subr.bf16.mxu0 0
      %5390 = vmatpush1.bf16.msra.mxu0 0
      %5391 = vmatprep.subr.bf16.mxu0 0
      %5392 = vmatpush1.bf16.msra.mxu0 0
      %5393 = vmatprep.subr.bf16.mxu0 0
      %5394 = vmatpush1.bf16.msra.mxu0 0
      %5395 = vmatprep.subr.bf16.mxu0 0
      %5396 = vmatpush1.bf16.msra.mxu0 0
      %5397 = vmatprep.subr.bf16.mxu0 0
      %5398 = vmatpush1.bf16.msra.mxu0 0
      %5399 = vmatprep.subr.bf16.mxu0 0
      %5400 = vmatpush1.bf16.msra.mxu0 0
      %5401 = vmatprep.subr.bf16.mxu0 0
      %5402 = vmatpush1.bf16.msra.mxu0 0
      %5403 = vmatprep.subr.bf16.mxu0 0
      %5404 = vmatpush1.bf16.msra.mxu0 0
      %5405 = vmatprep.subr.bf16.mxu0 0
      %5406 = vmatpush1.bf16.msra.mxu0 0
      %5407 = vmatprep.subr.bf16.mxu0 0
      %5408 = vmatpush1.bf16.msra.mxu0 0
      %5409 = vmatprep.mubr.bf16.mxu0 0
      %5410 = vmatmul.mubr.bf16.gmra.mrb[0].mxu0 %v5363
      %v5411 = vpop.f32.mrb[0].mxu0
      %v5412 = vadd.f32 0.0, %v5411
      %v5413 = vpop.f32.mrb[0].mxu0
      %v5414 = vpop.f32.mrb[0].mxu0
      %v5415 = vadd.f32 0.0, %v5414
      %v5416 = vpop.f32.mrb[0].mxu0
      %5417 = vmatprep.mubr.bf16.mxu0 0
      %5418 = vmatmul.mubr.bf16.gmra.mrb[0].mxu0 %v5366
      %v5419 = vpop.f32.mrb[0].mxu0
      %v5420 = vadd.f32 0.0, %v5419
      %v5421 = vpop.f32.mrb[0].mxu0
      %v5422 = vpop.f32.mrb[0].mxu0
      %v5423 = vadd.f32 0.0, %v5422
      %v5424 = vpop.f32.mrb[0].mxu0
      %5425 = vmatprep.mubr.bf16.mxu0 0
      %5426 = vmatmul.mubr.bf16.gmra.mrb[0].mxu0 %v5369
      %v5427 = vpop.f32.mrb[0].mxu0
      %v5428 = vadd.f32 0.0, %v5427
      %v5429 = vpop.f32.mrb[0].mxu0
      %v5430 = vpop.f32.mrb[0].mxu0
      %v5431 = vadd.f32 0.0, %v5430
      %v5432 = vpop.f32.mrb[0].mxu0
      %5433 = vmatprep.mubr.bf16.mxu0 0
      %5434 = vmatmul.mubr.bf16.gmra.mrb[0].mxu0 %v5372
      %v5435 = vpop.f32.mrb[0].mxu0
      %v5436 = vadd.f32 0.0, %v5435
      %v5437 = vpop.f32.mrb[0].mxu0
      %v5438 = vpop.f32.mrb[0].mxu0
      %v5439 = vadd.f32 0.0, %v5438
      %v5440 = vpop.f32.mrb[0].mxu0
      %5441 = vmatprep.mubr.bf16.mxu0 0
      %5442 = vmatmul.mubr.bf16.gmra.mrb[0].mxu0 %v5375
      %v5443 = vpop.f32.mrb[0].mxu0
      %v5444 = vadd.f32 0.0, %v5443
      %v5445 = vpop.f32.mrb[0].mxu0
      %v5446 = vpop.f32.mrb[0].mxu0
      %v5447 = vadd.f32 0.0, %v5446
      %v5448 = vpop.f32.mrb[0].mxu0
      %5449 = vdwg.mxu0
      %v5450 = vadd.f32 %v5341, %v5412
      %v5451 = vadd.f32 %v5342, %v5415
      %v5452 = vadd.f32 %v5343, %v5420
      %v5453 = vadd.f32 %v5344, %v5423
      %v5454 = vadd.f32 %v5345, %v5428
      %v5455 = vadd.f32 %v5346, %v5431
      %v5456 = vadd.f32 %v5347, %v5436
      %v5457 = vadd.f32 %v5348, %v5439
      %v5458 = vadd.f32 %v5349, %v5444
      %v5459 = vadd.f32 %v5350, %v5447
      %v5461 = vunpack.c.l.b16 %v4730
      %v5462 = vpack.c.b16 %v5084, %v4752
      %v5463 = vpack.c.b16 %v5461, %v5461
      %v5464 = vrot.slane %v4754, 2
      %v5465 = vrot.slane %v4755, 2
      %v5466 = vsel %vm1352, %v5464, %v5465
      %v5467 = vrot.slane %v4756, 2
      %v5468 = vsel %vm1352, %v5465, %v5467
      %v5469 = vrot.slane %v4757, 2
      %v5470 = vsel %vm1352, %v5467, %v5469
      %v5471 = vrot.slane %v5462, 2
      %v5472 = vsel %vm1352, %v5469, %v5471
      %v5473 = vrot.slane %v5463, 2
      %v5474 = vsel %vm1352, %v5471, %v5473
      %v5476 = vsel %vm554, %v5466, 0
      %v5479 = vsel %vm554, %v5468, 0
      %v5482 = vsel %vm554, %v5470, 0
      %v5485 = vsel %vm554, %v5472, 0
      %v5488 = vsel %vm554, %v5474, 0
      %5490 = vmatprep.subr.bf16.mxu0 0
      %5491 = vmatpush1.bf16.msra.mxu0 %v4239
      %5492 = vmatprep.subr.bf16.mxu0 0
      %5493 = vmatpush1.bf16.msra.mxu0 %v4240
      %5494 = vmatprep.subr.bf16.mxu0 0
      %5495 = vmatpush1.bf16.msra.mxu0 %v4241
      %5496 = vmatprep.subr.bf16.mxu0 0
      %5497 = vmatpush1.bf16.msra.mxu0 %v4242
      %5498 = vmatprep.subr.bf16.mxu0 0
      %5499 = vmatpush1.bf16.msra.mxu0 0
      %5500 = vmatprep.subr.bf16.mxu0 0
      %5501 = vmatpush1.bf16.msra.mxu0 0
      %5502 = vmatprep.subr.bf16.mxu0 0
      %5503 = vmatpush1.bf16.msra.mxu0 0
      %5504 = vmatprep.subr.bf16.mxu0 0
      %5505 = vmatpush1.bf16.msra.mxu0 0
      %5506 = vmatprep.subr.bf16.mxu0 0
      %5507 = vmatpush1.bf16.msra.mxu0 0
      %5508 = vmatprep.subr.bf16.mxu0 0
      %5509 = vmatpush1.bf16.msra.mxu0 0
      %5510 = vmatprep.subr.bf16.mxu0 0
      %5511 = vmatpush1.bf16.msra.mxu0 0
      %5512 = vmatprep.subr.bf16.mxu0 0
      %5513 = vmatpush1.bf16.msra.mxu0 0
      %5514 = vmatprep.subr.bf16.mxu0 0
      %5515 = vmatpush1.bf16.msra.mxu0 0
      %5516 = vmatprep.subr.bf16.mxu0 0
      %5517 = vmatpush1.bf16.msra.mxu0 0
      %5518 = vmatprep.subr.bf16.mxu0 0
      %5519 = vmatpush1.bf16.msra.mxu0 0
      %5520 = vmatprep.subr.bf16.mxu0 0
      %5521 = vmatpush1.bf16.msra.mxu0 0
      %5522 = vmatprep.mubr.bf16.mxu0 0
      %5523 = vmatmul.mubr.bf16.gmra.mrb[0].mxu0 %v5476
      %v5524 = vpop.f32.mrb[0].mxu0
      %v5525 = vadd.f32 0.0, %v5524
      %v5526 = vpop.f32.mrb[0].mxu0
      %v5527 = vpop.f32.mrb[0].mxu0
      %v5528 = vadd.f32 0.0, %v5527
      %v5529 = vpop.f32.mrb[0].mxu0
      %5530 = vmatprep.mubr.bf16.mxu0 0
      %5531 = vmatmul.mubr.bf16.gmra.mrb[0].mxu0 %v5479
      %v5532 = vpop.f32.mrb[0].mxu0
      %v5533 = vadd.f32 0.0, %v5532
      %v5534 = vpop.f32.mrb[0].mxu0
      %v5535 = vpop.f32.mrb[0].mxu0
      %v5536 = vadd.f32 0.0, %v5535
      %v5537 = vpop.f32.mrb[0].mxu0
      %5538 = vmatprep.mubr.bf16.mxu0 0
      %5539 = vmatmul.mubr.bf16.gmra.mrb[0].mxu0 %v5482
      %v5540 = vpop.f32.mrb[0].mxu0
      %v5541 = vadd.f32 0.0, %v5540
      %v5542 = vpop.f32.mrb[0].mxu0
      %v5543 = vpop.f32.mrb[0].mxu0
      %v5544 = vadd.f32 0.0, %v5543
      %v5545 = vpop.f32.mrb[0].mxu0
      %5546 = vmatprep.mubr.bf16.mxu0 0
      %5547 = vmatmul.mubr.bf16.gmra.mrb[0].mxu0 %v5485
      %v5548 = vpop.f32.mrb[0].mxu0
      %v5549 = vadd.f32 0.0, %v5548
      %v5550 = vpop.f32.mrb[0].mxu0
      %v5551 = vpop.f32.mrb[0].mxu0
      %v5552 = vadd.f32 0.0, %v5551
      %v5553 = vpop.f32.mrb[0].mxu0
      %5554 = vmatprep.mubr.bf16.mxu0 0
      %5555 = vmatmul.mubr.bf16.gmra.mrb[0].mxu0 %v5488
      %v5556 = vpop.f32.mrb[0].mxu0
      %v5557 = vadd.f32 0.0, %v5556
      %v5558 = vpop.f32.mrb[0].mxu0
      %v5559 = vpop.f32.mrb[0].mxu0
      %v5560 = vadd.f32 0.0, %v5559
      %v5561 = vpop.f32.mrb[0].mxu0
      %5562 = vdwg.mxu0
      %v5563 = vadd.f32 %v5450, %v5525
      %v5564 = vadd.f32 %v5451, %v5528
      %v5565 = vadd.f32 %v5452, %v5533
      %v5566 = vadd.f32 %v5453, %v5536
      %v5567 = vadd.f32 %v5454, %v5541
      %v5568 = vadd.f32 %v5455, %v5544
      %v5569 = vadd.f32 %v5456, %v5549
      %v5570 = vadd.f32 %v5457, %v5552
      %v5571 = vadd.f32 %v5458, %v5557
      %v5572 = vadd.f32 %v5459, %v5560
      %v5573 = vrot.slane %v4771, 2
      %v5574 = vrot.slane %v4767, 3
      %v5575 = vor.u32 %v5573, %v5574
      %v5576 = vrot.slane %v4779, 2
      %v5577 = vrot.slane %v4775, 3
      %v5578 = vor.u32 %v5576, %v5577
      %v5579 = vsel %vm1495, %v5575, %v5578
      %v5580 = vrot.slane %v4787, 2
      %v5581 = vrot.slane %v4783, 3
      %v5582 = vor.u32 %v5580, %v5581
      %v5583 = vsel %vm1495, %v5578, %v5582
      %v5584 = vrot.slane %v4795, 2
      %v5585 = vrot.slane %v4791, 3
      %v5586 = vor.u32 %v5584, %v5585
      %v5587 = vsel %vm1495, %v5582, %v5586
      %v5589 = vshrl.u32 %v5462, 16
      %v5591 = vrot.slane %v5589, 2
      %v5592 = vshll.u32 %v5462, 16
      %v5594 = vrot.slane %v5592, 3
      %v5595 = vor.u32 %v5591, %v5594
      %v5596 = vsel %vm1495, %v5586, %v5595
      %v5598 = vshrl.u32 %v5463, 16
      %v5600 = vrot.slane %v5598, 2
      %v5601 = vshll.u32 %v5463, 16
      %v5603 = vrot.slane %v5601, 3
      %v5604 = vor.u32 %v5600, %v5603
      %v5605 = vsel %vm1495, %v5595, %v5604
      %v5607 = vsel %vm554, %v5579, 0
      %v5610 = vsel %vm554, %v5583, 0
      %v5613 = vsel %vm554, %v5587, 0
      %v5616 = vsel %vm554, %v5596, 0
      %v5619 = vsel %vm554, %v5605, 0
      %5621 = vmatprep.subr.bf16.mxu0 0
      %5622 = vmatpush1.bf16.msra.mxu0 %v4403
      %5623 = vmatprep.subr.bf16.mxu0 0
      %5624 = vmatpush1.bf16.msra.mxu0 %v4404
      %5625 = vmatprep.subr.bf16.mxu0 0
      %5626 = vmatpush1.bf16.msra.mxu0 %v4405
      %5627 = vmatprep.subr.bf16.mxu0 0
      %5628 = vmatpush1.bf16.msra.mxu0 %v4406
      %5629 = vmatprep.subr.bf16.mxu0 0
      %5630 = vmatpush1.bf16.msra.mxu0 0
      %5631 = vmatprep.subr.bf16.mxu0 0
      %5632 = vmatpush1.bf16.msra.mxu0 0
      %5633 = vmatprep.subr.bf16.mxu0 0
      %5634 = vmatpush1.bf16.msra.mxu0 0
      %5635 = vmatprep.subr.bf16.mxu0 0
      %5636 = vmatpush1.bf16.msra.mxu0 0
      %5637 = vmatprep.subr.bf16.mxu0 0
      %5638 = vmatpush1.bf16.msra.mxu0 0
      %5639 = vmatprep.subr.bf16.mxu0 0
      %5640 = vmatpush1.bf16.msra.mxu0 0
      %5641 = vmatprep.subr.bf16.mxu0 0
      %5642 = vmatpush1.bf16.msra.mxu0 0
      %5643 = vmatprep.subr.bf16.mxu0 0
      %5644 = vmatpush1.bf16.msra.mxu0 0
      %5645 = vmatprep.subr.bf16.mxu0 0
      %5646 = vmatpush1.bf16.msra.mxu0 0
      %5647 = vmatprep.subr.bf16.mxu0 0
      %5648 = vmatpush1.bf16.msra.mxu0 0
      %5649 = vmatprep.subr.bf16.mxu0 0
      %5650 = vmatpush1.bf16.msra.mxu0 0
      %5651 = vmatprep.subr.bf16.mxu0 0
      %5652 = vmatpush1.bf16.msra.mxu0 0
      %5653 = vmatprep.mubr.bf16.mxu0 0
      %5654 = vmatmul.mubr.bf16.gmra.mrb[0].mxu0 %v5607
      %v5655 = vpop.f32.mrb[0].mxu0
      %v5656 = vadd.f32 0.0, %v5655
      %v5657 = vpop.f32.mrb[0].mxu0
      %v5658 = vpop.f32.mrb[0].mxu0
      %v5659 = vadd.f32 0.0, %v5658
      %v5660 = vpop.f32.mrb[0].mxu0
      %5661 = vmatprep.mubr.bf16.mxu0 0
      %5662 = vmatmul.mubr.bf16.gmra.mrb[0].mxu0 %v5610
      %v5663 = vpop.f32.mrb[0].mxu0
      %v5664 = vadd.f32 0.0, %v5663
      %v5665 = vpop.f32.mrb[0].mxu0
      %v5666 = vpop.f32.mrb[0].mxu0
      %v5667 = vadd.f32 0.0, %v5666
      %v5668 = vpop.f32.mrb[0].mxu0
      %5669 = vmatprep.mubr.bf16.mxu0 0
      %5670 = vmatmul.mubr.bf16.gmra.mrb[0].mxu0 %v5613
      %v5671 = vpop.f32.mrb[0].mxu0
      %v5672 = vadd.f32 0.0, %v5671
      %v5673 = vpop.f32.mrb[0].mxu0
      %v5674 = vpop.f32.mrb[0].mxu0
      %v5675 = vadd.f32 0.0, %v5674
      %v5676 = vpop.f32.mrb[0].mxu0
      %5677 = vmatprep.mubr.bf16.mxu0 0
      %5678 = vmatmul.mubr.bf16.gmra.mrb[0].mxu0 %v5616
      %v5679 = vpop.f32.mrb[0].mxu0
      %v5680 = vadd.f32 0.0, %v5679
      %v5681 = vpop.f32.mrb[0].mxu0
      %v5682 = vpop.f32.mrb[0].mxu0
      %v5683 = vadd.f32 0.0, %v5682
      %v5684 = vpop.f32.mrb[0].mxu0
      %5685 = vmatprep.mubr.bf16.mxu0 0
      %5686 = vmatmul.mubr.bf16.gmra.mrb[0].mxu0 %v5619
      %v5687 = vpop.f32.mrb[0].mxu0
      %v5688 = vadd.f32 0.0, %v5687
      %v5689 = vpop.f32.mrb[0].mxu0
      %v5690 = vpop.f32.mrb[0].mxu0
      %v5691 = vadd.f32 0.0, %v5690
      %v5692 = vpop.f32.mrb[0].mxu0
      %5693 = vdwg.mxu0
      %v5694 = vadd.f32 %v5563, %v5656
      %v5695 = vadd.f32 %v5564, %v5659
      %v5696 = vadd.f32 %v5565, %v5664
      %v5697 = vadd.f32 %v5566, %v5667
      %v5698 = vadd.f32 %v5567, %v5672
      %v5699 = vadd.f32 %v5568, %v5675
      %v5700 = vadd.f32 %v5569, %v5680
      %v5701 = vadd.f32 %v5570, %v5683
      %v5702 = vadd.f32 %v5571, %v5688
      %v5703 = vadd.f32 %v5572, %v5691
      %v5704 = vrot.slane %v4754, 3
      %v5705 = vrot.slane %v4755, 3
      %v5706 = vsel %vm1655, %v5704, %v5705
      %v5707 = vrot.slane %v4756, 3
      %v5708 = vsel %vm1655, %v5705, %v5707
      %v5709 = vrot.slane %v4757, 3
      %v5710 = vsel %vm1655, %v5707, %v5709
      %v5711 = vrot.slane %v5462, 3
      %v5712 = vsel %vm1655, %v5709, %v5711
      %v5713 = vrot.slane %v5463, 3
      %v5714 = vsel %vm1655, %v5711, %v5713
      %v5716 = vsel %vm554, %v5706, 0
      %v5719 = vsel %vm554, %v5708, 0
      %v5722 = vsel %vm554, %v5710, 0
      %v5725 = vsel %vm554, %v5712, 0
      %v5728 = vsel %vm554, %v5714, 0
      %5730 = vmatprep.subr.bf16.mxu0 0
      %5731 = vmatpush1.bf16.msra.mxu0 %v4545
      %5732 = vmatprep.subr.bf16.mxu0 0
      %5733 = vmatpush1.bf16.msra.mxu0 %v4546
      %5734 = vmatprep.subr.bf16.mxu0 0
      %5735 = vmatpush1.bf16.msra.mxu0 %v4547
      %5736 = vmatprep.subr.bf16.mxu0 0
      %5737 = vmatpush1.bf16.msra.mxu0 %v4548
      %5738 = vmatprep.subr.bf16.mxu0 0
      %5739 = vmatpush1.bf16.msra.mxu0 0
      %5740 = vmatprep.subr.bf16.mxu0 0
      %5741 = vmatpush1.bf16.msra.mxu0 0
      %5742 = vmatprep.subr.bf16.mxu0 0
      %5743 = vmatpush1.bf16.msra.mxu0 0
      %5744 = vmatprep.subr.bf16.mxu0 0
      %5745 = vmatpush1.bf16.msra.mxu0 0
      %5746 = vmatprep.subr.bf16.mxu0 0
      %5747 = vmatpush1.bf16.msra.mxu0 0
      %5748 = vmatprep.subr.bf16.mxu0 0
      %5749 = vmatpush1.bf16.msra.mxu0 0
      %5750 = vmatprep.subr.bf16.mxu0 0
      %5751 = vmatpush1.bf16.msra.mxu0 0
      %5752 = vmatprep.subr.bf16.mxu0 0
      %5753 = vmatpush1.bf16.msra.mxu0 0
      %5754 = vmatprep.subr.bf16.mxu0 0
      %5755 = vmatpush1.bf16.msra.mxu0 0
      %5756 = vmatprep.subr.bf16.mxu0 0
      %5757 = vmatpush1.bf16.msra.mxu0 0
      %5758 = vmatprep.subr.bf16.mxu0 0
      %5759 = vmatpush1.bf16.msra.mxu0 0
      %5760 = vmatprep.subr.bf16.mxu0 0
      %5761 = vmatpush1.bf16.msra.mxu0 0
      %5762 = vmatprep.mubr.bf16.mxu0 0
      %5763 = vmatmul.mubr.bf16.gmra.mrb[0].mxu0 %v5716
      %v5764 = vpop.f32.mrb[0].mxu0
      %v5765 = vadd.f32 0.0, %v5764
      %v5766 = vpop.f32.mrb[0].mxu0
      %v5767 = vpop.f32.mrb[0].mxu0
      %v5768 = vadd.f32 0.0, %v5767
      %v5769 = vpop.f32.mrb[0].mxu0
      %5770 = vmatprep.mubr.bf16.mxu0 0
      %5771 = vmatmul.mubr.bf16.gmra.mrb[0].mxu0 %v5719
      %v5772 = vpop.f32.mrb[0].mxu0
      %v5773 = vadd.f32 0.0, %v5772
      %v5774 = vpop.f32.mrb[0].mxu0
      %v5775 = vpop.f32.mrb[0].mxu0
      %v5776 = vadd.f32 0.0, %v5775
      %v5777 = vpop.f32.mrb[0].mxu0
      %5778 = vmatprep.mubr.bf16.mxu0 0
      %5779 = vmatmul.mubr.bf16.gmra.mrb[0].mxu0 %v5722
      %v5780 = vpop.f32.mrb[0].mxu0
      %v5781 = vadd.f32 0.0, %v5780
      %v5782 = vpop.f32.mrb[0].mxu0
      %v5783 = vpop.f32.mrb[0].mxu0
      %v5784 = vadd.f32 0.0, %v5783
      %v5785 = vpop.f32.mrb[0].mxu0
      %5786 = vmatprep.mubr.bf16.mxu0 0
      %5787 = vmatmul.mubr.bf16.gmra.mrb[0].mxu0 %v5725
      %v5788 = vpop.f32.mrb[0].mxu0
      %v5789 = vadd.f32 0.0, %v5788
      %v5790 = vpop.f32.mrb[0].mxu0
      %v5791 = vpop.f32.mrb[0].mxu0
      %v5792 = vadd.f32 0.0, %v5791
      %v5793 = vpop.f32.mrb[0].mxu0
      %5794 = vmatprep.mubr.bf16.mxu0 0
      %5795 = vmatmul.mubr.bf16.gmra.mrb[0].mxu0 %v5728
      %v5796 = vpop.f32.mrb[0].mxu0
      %v5797 = vadd.f32 0.0, %v5796
      %v5798 = vpop.f32.mrb[0].mxu0
      %v5799 = vpop.f32.mrb[0].mxu0
      %v5800 = vadd.f32 0.0, %v5799
      %v5801 = vpop.f32.mrb[0].mxu0
      %5802 = vdwg.mxu0
      %v5803 = vadd.f32 %v5694, %v5765
      %v5804 = vadd.f32 %v5695, %v5768
      %v5805 = vadd.f32 %v5696, %v5773
      %v5806 = vadd.f32 %v5697, %v5776
      %v5807 = vadd.f32 %v5698, %v5781
      %v5808 = vadd.f32 %v5699, %v5784
      %v5809 = vadd.f32 %v5700, %v5789
      %v5810 = vadd.f32 %v5701, %v5792
      %v5811 = vadd.f32 %v5702, %v5797
      %v5812 = vadd.f32 %v5703, %v5800
      %v5813 = vadd.f32 %v5803, %v4654
      %v5814 = vadd.f32 %v5804, %v4654
      %v5815 = vadd.f32 %v5805, %v4654
      %v5816 = vadd.f32 %v5806, %v4654
      %v5817 = vadd.f32 %v5807, %v4654
      %v5818 = vadd.f32 %v5808, %v4654
      %v5819 = vadd.f32 %v5809, %v4654
      %v5820 = vadd.f32 %v5810, %v4654
      %v5821 = vadd.f32 %v5811, %v4654
      %v5822 = vadd.f32 %v5812, %v4654
      %v5834 = vrot.slane %v417, 3
      %v5835 = vrot.slane %v418, 3
      %v5836 = vsel %vm4676, %v5834, %v5835
      %v5837 = vrot.slane %v419, 3
      %v5838 = vsel %vm4676, %v5835, %v5837
      %v5839 = vrot.slane %v420, 3
      %v5840 = vsel %vm4676, %v5837, %v5839
      %v5841 = vrot.slane %v421, 3
      %v5842 = vsel %vm4676, %v5839, %v5841
      %v5843 = vrot.slane %v422, 3
      %v5844 = vsel %vm4676, %v5841, %v5843
      %v5845 = vrot.slane %v423, 3
      %v5846 = vsel %vm4676, %v5843, %v5845
      %v5847 = vrot.slane %v424, 3
      %v5848 = vsel %vm4676, %v5845, %v5847
      %v5849 = vrot.slane %v425, 3
      %v5850 = vsel %vm4676, %v5847, %v5849
      %v5851 = vrot.slane %v426, 3
      %v5852 = vsel %vm4676, %v5849, %v5851
      %v5853 = vrot.slane %v427, 3
      %v5854 = vsel %vm4676, %v5851, %v5853
      %v5865 = vadd.f32 %v5813, %v5836
      %v5866 = vadd.f32 %v5814, %v5838
      %v5867 = vadd.f32 %v5815, %v5840
      %v5868 = vadd.f32 %v5816, %v5842
      %v5869 = vadd.f32 %v5817, %v5844
      %v5870 = vadd.f32 %v5818, %v5846
      %v5871 = vadd.f32 %v5819, %v5848
      %v5872 = vadd.f32 %v5820, %v5850
      %v5873 = vadd.f32 %v5821, %v5852
      %v5874 = vadd.f32 %v5822, %v5854
      %v5875 = vpack.c.bf16 %v432, %v431
      %v5876 = vpack.c.bf16 %v434, %v433
      %v5877 = vpack.c.bf16 %v436, %v435
      %v5878 = vpack.c.bf16 %v438, %v437
      %v5879 = vpack.c.bf16 %v440, %v439
      %v5880 = vpack.c.bf16 %v441, %v441
      %v5881 = vld [vmem:[%s9] sm:$0x1]
      %v5882 = vld [vmem:[%s9 + $0x1] sm:$0x1]
      %v5883 = vld [vmem:[%s9 + $0x2] sm:$0x1]
      %v5884 = vld [vmem:[%s9 + $0x3] sm:$0x1]
      %v5885 = vld [vmem:[%s9 + $0x4] sm:$0x1]
      %v5886 = vld [vmem:[%s9 + $0x5] sm:$0x1]
      %v5887 = vld [vmem:[%s9 + $0x6] sm:$0x1]
      %v5888 = vld [vmem:[%s4] sm:$0xf]
      %v5889 = vld [vmem:[%s4 + $0x4] sm:$0xf]
      %v5890 = vld [vmem:[%s4 + $0x8] sm:$0xf]
      %v5891 = vld [vmem:[%s4 + $0xc] sm:$0xf]
      %v5892 = vld [vmem:[%s4 + $0x10] sm:$0xf]
      %v5893 = vld [vmem:[%s4 + $0x14] sm:$0xf]
      %v5894 = vld [vmem:[%s4 + $0x18] sm:$0xf]
      %v5895 = vld [vmem:[%s4 + $0x1c] sm:$0xf]
      %v5897 = vshrl.u32 %v5875, 16
      %v5899 = vrot.slane %v5897, 1
      %v5900 = vshll.u32 %v5875, 16
      %v5902 = vrot.slane %v5900, 2
      %v5903 = vor.u32 %v5899, %v5902
      %v5905 = vshrl.u32 %v5876, 16
      %v5907 = vrot.slane %v5905, 1
      %v5908 = vshll.u32 %v5876, 16
      %v5910 = vrot.slane %v5908, 2
      %v5911 = vor.u32 %v5907, %v5910
      %v5912 = vsel %vm3881, %v5903, %v5911
      %v5914 = vshrl.u32 %v5877, 16
      %v5916 = vrot.slane %v5914, 1
      %v5917 = vshll.u32 %v5877, 16
      %v5919 = vrot.slane %v5917, 2
      %v5920 = vor.u32 %v5916, %v5919
      %v5921 = vsel %vm3881, %v5911, %v5920
      %v5923 = vshrl.u32 %v5878, 16
      %v5925 = vrot.slane %v5923, 1
      %v5926 = vshll.u32 %v5878, 16
      %v5928 = vrot.slane %v5926, 2
      %v5929 = vor.u32 %v5925, %v5928
      %v5930 = vsel %vm3881, %v5920, %v5929
      %v5932 = vshrl.u32 %v5879, 16
      %v5934 = vrot.slane %v5932, 1
      %v5935 = vshll.u32 %v5879, 16
      %v5937 = vrot.slane %v5935, 2
      %v5938 = vor.u32 %v5934, %v5937
      %v5939 = vsel %vm3881, %v5929, %v5938
      %v5941 = vshrl.u32 %v5880, 16
      %v5943 = vrot.slane %v5941, 1
      %v5944 = vshll.u32 %v5880, 16
      %v5946 = vrot.slane %v5944, 2
      %v5947 = vor.u32 %v5943, %v5946
      %v5948 = vsel %vm3881, %v5938, %v5947
      %v5957 = vunpack.c.l.b16 %v5888
      %v5958 = vunpack.c.l.b16 %v5889
      %v5959 = vunpack.c.l.b16 %v5890
      %v5960 = vunpack.c.l.b16 %v5891
      %v5961 = vunpack.c.l.b16 %v5892
      %v5962 = vunpack.c.l.b16 %v5893
      %v5963 = vunpack.c.l.b16 %v5894
      %v5964 = vunpack.c.l.b16 %v5895
      %v5965 = vpack.c.b16 %v5958, %v5957
      %v5966 = vpack.c.b16 %v5960, %v5959
      %v5967 = vpack.c.b16 %v5962, %v5961
      %v5968 = vpack.c.b16 %v5964, %v5963
      %v5974 = vsel %vm554, %v5912, 0
      %v5977 = vsel %vm554, %v5921, 0
      %v5980 = vsel %vm554, %v5930, 0
      %v5983 = vsel %vm554, %v5939, 0
      %v5986 = vsel %vm554, %v5948, 0
      %5988 = vmatprep.subr.bf16.mxu0 0
      %5989 = vmatpush1.bf16.msra.mxu0 %v5965
      %5990 = vmatprep.subr.bf16.mxu0 0
      %5991 = vmatpush1.bf16.msra.mxu0 %v5966
      %5992 = vmatprep.subr.bf16.mxu0 0
      %5993 = vmatpush1.bf16.msra.mxu0 %v5967
      %5994 = vmatprep.subr.bf16.mxu0 0
      %5995 = vmatpush1.bf16.msra.mxu0 %v5968
      %5996 = vmatprep.subr.bf16.mxu0 0
      %5997 = vmatpush1.bf16.msra.mxu0 0
      %5998 = vmatprep.subr.bf16.mxu0 0
      %5999 = vmatpush1.bf16.msra.mxu0 0
      %6000 = vmatprep.subr.bf16.mxu0 0
      %6001 = vmatpush1.bf16.msra.mxu0 0
      %6002 = vmatprep.subr.bf16.mxu0 0
      %6003 = vmatpush1.bf16.msra.mxu0 0
      %6004 = vmatprep.subr.bf16.mxu0 0
      %6005 = vmatpush1.bf16.msra.mxu0 0
      %6006 = vmatprep.subr.bf16.mxu0 0
      %6007 = vmatpush1.bf16.msra.mxu0 0
      %6008 = vmatprep.subr.bf16.mxu0 0
      %6009 = vmatpush1.bf16.msra.mxu0 0
      %6010 = vmatprep.subr.bf16.mxu0 0
      %6011 = vmatpush1.bf16.msra.mxu0 0
      %6012 = vmatprep.subr.bf16.mxu0 0
      %6013 = vmatpush1.bf16.msra.mxu0 0
      %6014 = vmatprep.subr.bf16.mxu0 0
      %6015 = vmatpush1.bf16.msra.mxu0 0
      %6016 = vmatprep.subr.bf16.mxu0 0
      %6017 = vmatpush1.bf16.msra.mxu0 0
      %6018 = vmatprep.subr.bf16.mxu0 0
      %6019 = vmatpush1.bf16.msra.mxu0 0
      %6020 = vmatprep.mubr.bf16.mxu0 0
      %6021 = vmatmul.mubr.bf16.gmra.mrb[0].mxu0 %v5974
      %v6022 = vpop.f32.mrb[0].mxu0
      %v6023 = vadd.f32 0.0, %v6022
      %v6024 = vpop.f32.mrb[0].mxu0
      %v6025 = vpop.f32.mrb[0].mxu0
      %v6026 = vadd.f32 0.0, %v6025
      %v6027 = vpop.f32.mrb[0].mxu0
      %6028 = vmatprep.mubr.bf16.mxu0 0
      %6029 = vmatmul.mubr.bf16.gmra.mrb[0].mxu0 %v5977
      %v6030 = vpop.f32.mrb[0].mxu0
      %v6031 = vadd.f32 0.0, %v6030
      %v6032 = vpop.f32.mrb[0].mxu0
      %v6033 = vpop.f32.mrb[0].mxu0
      %v6034 = vadd.f32 0.0, %v6033
      %v6035 = vpop.f32.mrb[0].mxu0
      %6036 = vmatprep.mubr.bf16.mxu0 0
      %6037 = vmatmul.mubr.bf16.gmra.mrb[0].mxu0 %v5980
      %v6038 = vpop.f32.mrb[0].mxu0
      %v6039 = vadd.f32 0.0, %v6038
      %v6040 = vpop.f32.mrb[0].mxu0
      %v6041 = vpop.f32.mrb[0].mxu0
      %v6042 = vadd.f32 0.0, %v6041
      %v6043 = vpop.f32.mrb[0].mxu0
      %6044 = vmatprep.mubr.bf16.mxu0 0
      %6045 = vmatmul.mubr.bf16.gmra.mrb[0].mxu0 %v5983
      %v6046 = vpop.f32.mrb[0].mxu0
      %v6047 = vadd.f32 0.0, %v6046
      %v6048 = vpop.f32.mrb[0].mxu0
      %v6049 = vpop.f32.mrb[0].mxu0
      %v6050 = vadd.f32 0.0, %v6049
      %v6051 = vpop.f32.mrb[0].mxu0
      %6052 = vmatprep.mubr.bf16.mxu0 0
      %6053 = vmatmul.mubr.bf16.gmra.mrb[0].mxu0 %v5986
      %v6054 = vpop.f32.mrb[0].mxu0
      %v6055 = vadd.f32 0.0, %v6054
      %v6056 = vpop.f32.mrb[0].mxu0
      %v6057 = vpop.f32.mrb[0].mxu0
      %v6058 = vadd.f32 0.0, %v6057
      %v6059 = vpop.f32.mrb[0].mxu0
      %6060 = vdwg.mxu0
      %v6061 = vld [vmem:[%s5] sm:$0xf]
      %v6062 = vld [vmem:[%s5 + $0x4] sm:$0xf]
      %v6063 = vld [vmem:[%s5 + $0x8] sm:$0xf]
      %v6064 = vld [vmem:[%s5 + $0xc] sm:$0xf]
      %v6065 = vld [vmem:[%s5 + $0x10] sm:$0xf]
      %v6066 = vld [vmem:[%s5 + $0x14] sm:$0xf]
      %v6067 = vld [vmem:[%s5 + $0x18] sm:$0xf]
      %v6068 = vld [vmem:[%s5 + $0x1c] sm:$0xf]
      %v6077 = vunpack.c.l.b16 %v6061
      %v6078 = vunpack.c.l.b16 %v6062
      %v6079 = vunpack.c.l.b16 %v6063
      %v6080 = vunpack.c.l.b16 %v6064
      %v6081 = vunpack.c.l.b16 %v6065
      %v6082 = vunpack.c.l.b16 %v6066
      %v6083 = vunpack.c.l.b16 %v6067
      %v6084 = vunpack.c.l.b16 %v6068
      %v6085 = vpack.c.b16 %v6078, %v6077
      %v6086 = vpack.c.b16 %v6080, %v6079
      %v6087 = vpack.c.b16 %v6082, %v6081
      %v6088 = vpack.c.b16 %v6084, %v6083
      %6093 = vmatprep.subr.bf16.mxu0 0
      %6094 = vmatpush1.bf16.msra.mxu0 %v6085
      %6095 = vmatprep.subr.bf16.mxu0 0
      %6096 = vmatpush1.bf16.msra.mxu0 %v6086
      %6097 = vmatprep.subr.bf16.mxu0 0
      %6098 = vmatpush1.bf16.msra.mxu0 %v6087
      %6099 = vmatprep.subr.bf16.mxu0 0
      %6100 = vmatpush1.bf16.msra.mxu0 %v6088
      %6101 = vmatprep.subr.bf16.mxu0 0
      %6102 = vmatpush1.bf16.msra.mxu0 0
      %6103 = vmatprep.subr.bf16.mxu0 0
      %6104 = vmatpush1.bf16.msra.mxu0 0
      %6105 = vmatprep.subr.bf16.mxu0 0
      %6106 = vmatpush1.bf16.msra.mxu0 0
      %6107 = vmatprep.subr.bf16.mxu0 0
      %6108 = vmatpush1.bf16.msra.mxu0 0
      %6109 = vmatprep.subr.bf16.mxu0 0
      %6110 = vmatpush1.bf16.msra.mxu0 0
      %6111 = vmatprep.subr.bf16.mxu0 0
      %6112 = vmatpush1.bf16.msra.mxu0 0
      %6113 = vmatprep.subr.bf16.mxu0 0
      %6114 = vmatpush1.bf16.msra.mxu0 0
      %6115 = vmatprep.subr.bf16.mxu0 0
      %6116 = vmatpush1.bf16.msra.mxu0 0
      %6117 = vmatprep.subr.bf16.mxu0 0
      %6118 = vmatpush1.bf16.msra.mxu0 0
      %6119 = vmatprep.subr.bf16.mxu0 0
      %6120 = vmatpush1.bf16.msra.mxu0 0
      %6121 = vmatprep.subr.bf16.mxu0 0
      %6122 = vmatpush1.bf16.msra.mxu0 0
      %6123 = vmatprep.subr.bf16.mxu0 0
      %6124 = vmatpush1.bf16.msra.mxu0 0
      %6125 = vmatprep.mubr.bf16.mxu0 0
      %6126 = vmatmul.mubr.bf16.gmra.mrb[0].mxu0 %v1102
      %v6127 = vpop.f32.mrb[0].mxu0
      %v6128 = vadd.f32 0.0, %v6127
      %v6129 = vpop.f32.mrb[0].mxu0
      %v6130 = vpop.f32.mrb[0].mxu0
      %v6131 = vadd.f32 0.0, %v6130
      %v6132 = vpop.f32.mrb[0].mxu0
      %6133 = vmatprep.mubr.bf16.mxu0 0
      %6134 = vmatmul.mubr.bf16.gmra.mrb[0].mxu0 %v1105
      %v6135 = vpop.f32.mrb[0].mxu0
      %v6136 = vadd.f32 0.0, %v6135
      %v6137 = vpop.f32.mrb[0].mxu0
      %v6138 = vpop.f32.mrb[0].mxu0
      %v6139 = vadd.f32 0.0, %v6138
      %v6140 = vpop.f32.mrb[0].mxu0
      %6141 = vmatprep.mubr.bf16.mxu0 0
      %6142 = vmatmul.mubr.bf16.gmra.mrb[0].mxu0 %v1108
      %v6143 = vpop.f32.mrb[0].mxu0
      %v6144 = vadd.f32 0.0, %v6143
      %v6145 = vpop.f32.mrb[0].mxu0
      %v6146 = vpop.f32.mrb[0].mxu0
      %v6147 = vadd.f32 0.0, %v6146
      %v6148 = vpop.f32.mrb[0].mxu0
      %6149 = vmatprep.mubr.bf16.mxu0 0
      %6150 = vmatmul.mubr.bf16.gmra.mrb[0].mxu0 %v1111
      %v6151 = vpop.f32.mrb[0].mxu0
      %v6152 = vadd.f32 0.0, %v6151
      %v6153 = vpop.f32.mrb[0].mxu0
      %v6154 = vpop.f32.mrb[0].mxu0
      %v6155 = vadd.f32 0.0, %v6154
      %v6156 = vpop.f32.mrb[0].mxu0
      %6157 = vmatprep.mubr.bf16.mxu0 0
      %6158 = vmatmul.mubr.bf16.gmra.mrb[0].mxu0 %v1114
      %v6159 = vpop.f32.mrb[0].mxu0
      %v6160 = vadd.f32 0.0, %v6159
      %v6161 = vpop.f32.mrb[0].mxu0
      %v6162 = vpop.f32.mrb[0].mxu0
      %v6163 = vadd.f32 0.0, %v6162
      %v6164 = vpop.f32.mrb[0].mxu0
      %6165 = vdwg.mxu0
      %v6166 = vld [vmem:[%s6] sm:$0xf]
      %v6167 = vld [vmem:[%s6 + $0x4] sm:$0xf]
      %v6168 = vld [vmem:[%s6 + $0x8] sm:$0xf]
      %v6169 = vld [vmem:[%s6 + $0xc] sm:$0xf]
      %v6170 = vld [vmem:[%s6 + $0x10] sm:$0xf]
      %v6171 = vld [vmem:[%s6 + $0x14] sm:$0xf]
      %v6172 = vld [vmem:[%s6 + $0x18] sm:$0xf]
      %v6173 = vld [vmem:[%s6 + $0x1c] sm:$0xf]
      %v6182 = vunpack.c.l.b16 %v6166
      %v6183 = vunpack.c.l.b16 %v6167
      %v6184 = vunpack.c.l.b16 %v6168
      %v6185 = vunpack.c.l.b16 %v6169
      %v6186 = vunpack.c.l.b16 %v6170
      %v6187 = vunpack.c.l.b16 %v6171
      %v6188 = vunpack.c.l.b16 %v6172
      %v6189 = vunpack.c.l.b16 %v6173
      %v6190 = vpack.c.b16 %v6183, %v6182
      %v6191 = vpack.c.b16 %v6185, %v6184
      %v6192 = vpack.c.b16 %v6187, %v6186
      %v6193 = vpack.c.b16 %v6189, %v6188
      %6198 = vmatprep.subr.bf16.mxu0 0
      %6199 = vmatpush1.bf16.msra.mxu0 %v6190
      %6200 = vmatprep.subr.bf16.mxu0 0
      %6201 = vmatpush1.bf16.msra.mxu0 %v6191
      %6202 = vmatprep.subr.bf16.mxu0 0
      %6203 = vmatpush1.bf16.msra.mxu0 %v6192
      %6204 = vmatprep.subr.bf16.mxu0 0
      %6205 = vmatpush1.bf16.msra.mxu0 %v6193
      %6206 = vmatprep.subr.bf16.mxu0 0
      %6207 = vmatpush1.bf16.msra.mxu0 0
      %6208 = vmatprep.subr.bf16.mxu0 0
      %6209 = vmatpush1.bf16.msra.mxu0 0
      %6210 = vmatprep.subr.bf16.mxu0 0
      %6211 = vmatpush1.bf16.msra.mxu0 0
      %6212 = vmatprep.subr.bf16.mxu0 0
      %6213 = vmatpush1.bf16.msra.mxu0 0
      %6214 = vmatprep.subr.bf16.mxu0 0
      %6215 = vmatpush1.bf16.msra.mxu0 0
      %6216 = vmatprep.subr.bf16.mxu0 0
      %6217 = vmatpush1.bf16.msra.mxu0 0
      %6218 = vmatprep.subr.bf16.mxu0 0
      %6219 = vmatpush1.bf16.msra.mxu0 0
      %6220 = vmatprep.subr.bf16.mxu0 0
      %6221 = vmatpush1.bf16.msra.mxu0 0
      %6222 = vmatprep.subr.bf16.mxu0 0
      %6223 = vmatpush1.bf16.msra.mxu0 0
      %6224 = vmatprep.subr.bf16.mxu0 0
      %6225 = vmatpush1.bf16.msra.mxu0 0
      %6226 = vmatprep.subr.bf16.mxu0 0
      %6227 = vmatpush1.bf16.msra.mxu0 0
      %6228 = vmatprep.subr.bf16.mxu0 0
      %6229 = vmatpush1.bf16.msra.mxu0 0
      %6230 = vmatprep.mubr.bf16.mxu0 0
      %6231 = vmatmul.mubr.bf16.gmra.mrb[0].mxu0 %v2338
      %v6232 = vpop.f32.mrb[0].mxu0
      %v6233 = vadd.f32 0.0, %v6232
      %v6234 = vpop.f32.mrb[0].mxu0
      %v6235 = vpop.f32.mrb[0].mxu0
      %v6236 = vadd.f32 0.0, %v6235
      %v6237 = vpop.f32.mrb[0].mxu0
      %6238 = vmatprep.mubr.bf16.mxu0 0
      %6239 = vmatmul.mubr.bf16.gmra.mrb[0].mxu0 %v2341
      %v6240 = vpop.f32.mrb[0].mxu0
      %v6241 = vadd.f32 0.0, %v6240
      %v6242 = vpop.f32.mrb[0].mxu0
      %v6243 = vpop.f32.mrb[0].mxu0
      %v6244 = vadd.f32 0.0, %v6243
      %v6245 = vpop.f32.mrb[0].mxu0
      %6246 = vmatprep.mubr.bf16.mxu0 0
      %6247 = vmatmul.mubr.bf16.gmra.mrb[0].mxu0 %v2344
      %v6248 = vpop.f32.mrb[0].mxu0
      %v6249 = vadd.f32 0.0, %v6248
      %v6250 = vpop.f32.mrb[0].mxu0
      %v6251 = vpop.f32.mrb[0].mxu0
      %v6252 = vadd.f32 0.0, %v6251
      %v6253 = vpop.f32.mrb[0].mxu0
      %6254 = vmatprep.mubr.bf16.mxu0 0
      %6255 = vmatmul.mubr.bf16.gmra.mrb[0].mxu0 %v2347
      %v6256 = vpop.f32.mrb[0].mxu0
      %v6257 = vadd.f32 0.0, %v6256
      %v6258 = vpop.f32.mrb[0].mxu0
      %v6259 = vpop.f32.mrb[0].mxu0
      %v6260 = vadd.f32 0.0, %v6259
      %v6261 = vpop.f32.mrb[0].mxu0
      %6262 = vmatprep.mubr.bf16.mxu0 0
      %6263 = vmatmul.mubr.bf16.gmra.mrb[0].mxu0 %v2350
      %v6264 = vpop.f32.mrb[0].mxu0
      %v6265 = vadd.f32 0.0, %v6264
      %v6266 = vpop.f32.mrb[0].mxu0
      %v6267 = vpop.f32.mrb[0].mxu0
      %v6268 = vadd.f32 0.0, %v6267
      %v6269 = vpop.f32.mrb[0].mxu0
      %6270 = vdwg.mxu0
      %v6271 = vadd.f32 %v6023, %v6233
      %v6272 = vadd.f32 %v6026, %v6236
      %v6273 = vadd.f32 %v6031, %v6241
      %v6274 = vadd.f32 %v6034, %v6244
      %v6275 = vadd.f32 %v6039, %v6249
      %v6276 = vadd.f32 %v6042, %v6252
      %v6277 = vadd.f32 %v6047, %v6257
      %v6278 = vadd.f32 %v6050, %v6260
      %v6279 = vadd.f32 %v6055, %v6265
      %v6280 = vadd.f32 %v6058, %v6268
      %v6281 = vlaneseq
      %v6282 = vshrl.u32 %v6281, 7
      %v6283 = vsub.s32 0, %v6282
      %v6284 = vrot.slane %v5881, %v6283
      %v6285 = vadd.f32 %v6271, %v6284
      %v6286 = vadd.f32 %v6272, %v6284
      %v6287 = vadd.f32 %v6273, %v6284
      %v6288 = vadd.f32 %v6274, %v6284
      %v6289 = vadd.f32 %v6275, %v6284
      %v6290 = vadd.f32 %v6276, %v6284
      %v6291 = vadd.f32 %v6277, %v6284
      %v6292 = vadd.f32 %v6278, %v6284
      %v6293 = vadd.f32 %v6279, %v6284
      %v6294 = vadd.f32 %v6280, %v6284
      %v6295 = vadd.f32 %v6023, %v6128
      %v6296 = vadd.f32 %v6026, %v6131
      %v6297 = vadd.f32 %v6031, %v6136
      %v6298 = vadd.f32 %v6034, %v6139
      %v6299 = vadd.f32 %v6039, %v6144
      %v6300 = vadd.f32 %v6042, %v6147
      %v6301 = vadd.f32 %v6047, %v6152
      %v6302 = vadd.f32 %v6050, %v6155
      %v6303 = vadd.f32 %v6055, %v6160
      %v6304 = vadd.f32 %v6058, %v6163
      %v6305 = vadd.f32 %v6295, %v6284
      %v6306 = vadd.f32 %v6296, %v6284
      %v6307 = vadd.f32 %v6297, %v6284
      %v6308 = vadd.f32 %v6298, %v6284
      %v6309 = vadd.f32 %v6299, %v6284
      %v6310 = vadd.f32 %v6300, %v6284
      %v6311 = vadd.f32 %v6301, %v6284
      %v6312 = vadd.f32 %v6302, %v6284
      %v6313 = vadd.f32 %v6303, %v6284
      %v6314 = vadd.f32 %v6304, %v6284
      %v6315 = vlaneseq
      %v6316 = vshrl.u32 %v6315, 7
      %v6317 = vsub.s32 0, %v6316
      %v6318 = vrot.slane %v5885, %v6317
      %6320 = vrot.lane.b32.xlu0 %v6318, 64
      %v6321 = vpop.permute.xlu0 %6320
      %v6323 = vadd.f32 %v6128, %v6321
      %v6324 = vadd.f32 %v6131, %v6321
      %v6325 = vadd.f32 %v6136, %v6321
      %v6326 = vadd.f32 %v6139, %v6321
      %v6327 = vadd.f32 %v6144, %v6321
      %v6328 = vadd.f32 %v6147, %v6321
      %v6329 = vadd.f32 %v6152, %v6321
      %v6330 = vadd.f32 %v6155, %v6321
      %v6331 = vadd.f32 %v6160, %v6321
      %v6332 = vadd.f32 %v6163, %v6321
      %v6333 = vmul.f32 %v6323, %v1816
      %v6334 = vmul.f32 %v6324, %v1821
      %v6335 = vmul.f32 %v6325, %v1826
      %v6336 = vmul.f32 %v6326, %v1831
      %v6337 = vmul.f32 %v6327, %v1836
      %v6338 = vmul.f32 %v6328, %v1841
      %v6339 = vmul.f32 %v6329, %v1846
      %v6340 = vmul.f32 %v6330, %v1851
      %v6341 = vmul.f32 %v6331, %v1856
      %v6342 = vmul.f32 %v6332, %v1861
      %v6343 = vlaneseq
      %v6344 = vshrl.u32 %v6343, 7
      %v6345 = vsub.s32 0, %v6344
      %v6346 = vrot.slane %v5886, %v6345
      %6348 = vrot.lane.b32.xlu0 %v6346, 64
      %v6349 = vpop.permute.xlu0 %6348
      %v6351 = vadd.f32 %v6233, %v6349
      %v6352 = vadd.f32 %v6236, %v6349
      %v6353 = vadd.f32 %v6241, %v6349
      %v6354 = vadd.f32 %v6244, %v6349
      %v6355 = vadd.f32 %v6249, %v6349
      %v6356 = vadd.f32 %v6252, %v6349
      %v6357 = vadd.f32 %v6257, %v6349
      %v6358 = vadd.f32 %v6260, %v6349
      %v6359 = vadd.f32 %v6265, %v6349
      %v6360 = vadd.f32 %v6268, %v6349
      %v6361 = vmul.f32 %v6351, %v1816
      %v6362 = vmul.f32 %v6352, %v1821
      %v6363 = vmul.f32 %v6353, %v1826
      %v6364 = vmul.f32 %v6354, %v1831
      %v6365 = vmul.f32 %v6355, %v1836
      %v6366 = vmul.f32 %v6356, %v1841
      %v6367 = vmul.f32 %v6357, %v1846
      %v6368 = vmul.f32 %v6358, %v1851
      %v6369 = vmul.f32 %v6359, %v1856
      %v6370 = vmul.f32 %v6360, %v1861
      %v6371 = vsel %vm554, %v6285, 0.0
      %6372 = vadd.xlane.f32.xlu0 %v6371
      %v6373 = vpop.xlane.xlu0 %6372
      %v6374 = vsel %vm554, %v6286, 0.0
      %6375 = vadd.xlane.f32.xlu0 %v6374
      %v6376 = vpop.xlane.xlu0 %6375
      %v6377 = vsel %vm554, %v6287, 0.0
      %6378 = vadd.xlane.f32.xlu0 %v6377
      %v6379 = vpop.xlane.xlu0 %6378
      %v6380 = vsel %vm554, %v6288, 0.0
      %6381 = vadd.xlane.f32.xlu0 %v6380
      %v6382 = vpop.xlane.xlu0 %6381
      %v6383 = vsel %vm554, %v6289, 0.0
      %6384 = vadd.xlane.f32.xlu0 %v6383
      %v6385 = vpop.xlane.xlu0 %6384
      %v6386 = vsel %vm554, %v6290, 0.0
      %6387 = vadd.xlane.f32.xlu0 %v6386
      %v6388 = vpop.xlane.xlu0 %6387
      %v6389 = vsel %vm554, %v6291, 0.0
      %6390 = vadd.xlane.f32.xlu0 %v6389
      %v6391 = vpop.xlane.xlu0 %6390
      %v6392 = vsel %vm554, %v6292, 0.0
      %6393 = vadd.xlane.f32.xlu0 %v6392
      %v6394 = vpop.xlane.xlu0 %6393
      %v6395 = vsel %vm554, %v6293, 0.0
      %6396 = vadd.xlane.f32.xlu0 %v6395
      %v6397 = vpop.xlane.xlu0 %6396
      %v6398 = vsel %vm554, %v6294, 0.0
      %6399 = vadd.xlane.f32.xlu0 %v6398
      %v6400 = vpop.xlane.xlu0 %6399
      %v6401 = vrcp.pop 64.0
      %v6402 = vmul.f32 %v6373, %v6401
      %v6403 = vmul.f32 %v6376, %v6401
      %v6404 = vmul.f32 %v6379, %v6401
      %v6405 = vmul.f32 %v6382, %v6401
      %v6406 = vmul.f32 %v6385, %v6401
      %v6407 = vmul.f32 %v6388, %v6401
      %v6408 = vmul.f32 %v6391, %v6401
      %v6409 = vmul.f32 %v6394, %v6401
      %v6410 = vmul.f32 %v6397, %v6401
      %v6411 = vmul.f32 %v6400, %v6401
      %v6412 = vsub.f32 %v6285, %v6402
      %v6413 = vsub.f32 %v6286, %v6403
      %v6414 = vsub.f32 %v6287, %v6404
      %v6415 = vsub.f32 %v6288, %v6405
      %v6416 = vsub.f32 %v6289, %v6406
      %v6417 = vsub.f32 %v6290, %v6407
      %v6418 = vsub.f32 %v6291, %v6408
      %v6419 = vsub.f32 %v6292, %v6409
      %v6420 = vsub.f32 %v6293, %v6410
      %v6421 = vsub.f32 %v6294, %v6411
      %v6422 = vmul.f32 %v6412, %v6412
      %v6423 = vmul.f32 %v6413, %v6413
      %v6424 = vmul.f32 %v6414, %v6414
      %v6425 = vmul.f32 %v6415, %v6415
      %v6426 = vmul.f32 %v6416, %v6416
      %v6427 = vmul.f32 %v6417, %v6417
      %v6428 = vmul.f32 %v6418, %v6418
      %v6429 = vmul.f32 %v6419, %v6419
      %v6430 = vmul.f32 %v6420, %v6420
      %v6431 = vmul.f32 %v6421, %v6421
      %v6432 = vsel %vm554, %v6422, 0.0
      %6433 = vadd.xlane.f32.xlu0 %v6432
      %v6434 = vpop.xlane.xlu0 %6433
      %v6435 = vsel %vm554, %v6423, 0.0
      %6436 = vadd.xlane.f32.xlu0 %v6435
      %v6437 = vpop.xlane.xlu0 %6436
      %v6438 = vsel %vm554, %v6424, 0.0
      %6439 = vadd.xlane.f32.xlu0 %v6438
      %v6440 = vpop.xlane.xlu0 %6439
      %v6441 = vsel %vm554, %v6425, 0.0
      %6442 = vadd.xlane.f32.xlu0 %v6441
      %v6443 = vpop.xlane.xlu0 %6442
      %v6444 = vsel %vm554, %v6426, 0.0
      %6445 = vadd.xlane.f32.xlu0 %v6444
      %v6446 = vpop.xlane.xlu0 %6445
      %v6447 = vsel %vm554, %v6427, 0.0
      %6448 = vadd.xlane.f32.xlu0 %v6447
      %v6449 = vpop.xlane.xlu0 %6448
      %v6450 = vsel %vm554, %v6428, 0.0
      %6451 = vadd.xlane.f32.xlu0 %v6450
      %v6452 = vpop.xlane.xlu0 %6451
      %v6453 = vsel %vm554, %v6429, 0.0
      %6454 = vadd.xlane.f32.xlu0 %v6453
      %v6455 = vpop.xlane.xlu0 %6454
      %v6456 = vsel %vm554, %v6430, 0.0
      %6457 = vadd.xlane.f32.xlu0 %v6456
      %v6458 = vpop.xlane.xlu0 %6457
      %v6459 = vsel %vm554, %v6431, 0.0
      %6460 = vadd.xlane.f32.xlu0 %v6459
      %v6461 = vpop.xlane.xlu0 %6460
      %v6462 = vmul.f32 %v6434, %v6401
      %v6463 = vmul.f32 %v6437, %v6401
      %v6464 = vmul.f32 %v6440, %v6401
      %v6465 = vmul.f32 %v6443, %v6401
      %v6466 = vmul.f32 %v6446, %v6401
      %v6467 = vmul.f32 %v6449, %v6401
      %v6468 = vmul.f32 %v6452, %v6401
      %v6469 = vmul.f32 %v6455, %v6401
      %v6470 = vmul.f32 %v6458, %v6401
      %v6471 = vmul.f32 %v6461, %v6401
      %v6472 = vadd.f32 %v6462, 1e-06
      %v6473 = vadd.f32 %v6463, 1e-06
      %v6474 = vadd.f32 %v6464, 1e-06
      %v6475 = vadd.f32 %v6465, 1e-06
      %v6476 = vadd.f32 %v6466, 1e-06
      %v6477 = vadd.f32 %v6467, 1e-06
      %v6478 = vadd.f32 %v6468, 1e-06
      %v6479 = vadd.f32 %v6469, 1e-06
      %v6480 = vadd.f32 %v6470, 1e-06
      %v6481 = vadd.f32 %v6471, 1e-06
      %v6482 = vrsqrt.pop %v6472
      %v6483 = vrsqrt.pop %v6473
      %v6484 = vrsqrt.pop %v6474
      %v6485 = vrsqrt.pop %v6475
      %v6486 = vrsqrt.pop %v6476
      %v6487 = vrsqrt.pop %v6477
      %v6488 = vrsqrt.pop %v6478
      %v6489 = vrsqrt.pop %v6479
      %v6490 = vrsqrt.pop %v6480
      %v6491 = vrsqrt.pop %v6481
      %v6492 = vmul.f32 %v6412, %v6482
      %v6493 = vmul.f32 %v6413, %v6483
      %v6494 = vmul.f32 %v6414, %v6484
      %v6495 = vmul.f32 %v6415, %v6485
      %v6496 = vmul.f32 %v6416, %v6486
      %v6497 = vmul.f32 %v6417, %v6487
      %v6498 = vmul.f32 %v6418, %v6488
      %v6499 = vmul.f32 %v6419, %v6489
      %v6500 = vmul.f32 %v6420, %v6490
      %v6501 = vmul.f32 %v6421, %v6491
      %v6502 = vlaneseq
      %v6503 = vshrl.u32 %v6502, 7
      %v6504 = vsub.s32 0, %v6503
      %v6505 = vrot.slane %v5882, %v6504
      %v6506 = vmul.f32 %v6492, %v6505
      %v6507 = vmul.f32 %v6493, %v6505
      %v6508 = vmul.f32 %v6494, %v6505
      %v6509 = vmul.f32 %v6495, %v6505
      %v6510 = vmul.f32 %v6496, %v6505
      %v6511 = vmul.f32 %v6497, %v6505
      %v6512 = vmul.f32 %v6498, %v6505
      %v6513 = vmul.f32 %v6499, %v6505
      %v6514 = vmul.f32 %v6500, %v6505
      %v6515 = vmul.f32 %v6501, %v6505
      %v6516 = vlaneseq
      %v6517 = vshrl.u32 %v6516, 7
      %v6518 = vsub.s32 0, %v6517
      %v6519 = vrot.slane %v5883, %v6518
      %v6520 = vadd.f32 %v6506, %v6519
      %v6521 = vadd.f32 %v6507, %v6519
      %v6522 = vadd.f32 %v6508, %v6519
      %v6523 = vadd.f32 %v6509, %v6519
      %v6524 = vadd.f32 %v6510, %v6519
      %v6525 = vadd.f32 %v6511, %v6519
      %v6526 = vadd.f32 %v6512, %v6519
      %v6527 = vadd.f32 %v6513, %v6519
      %v6528 = vadd.f32 %v6514, %v6519
      %v6529 = vadd.f32 %v6515, %v6519
      %v6530 = vpack.c.bf16 %v6521, %v6520
      %v6531 = vpack.c.bf16 %v6523, %v6522
      %v6532 = vpack.c.bf16 %v6525, %v6524
      %v6533 = vpack.c.bf16 %v6527, %v6526
      %v6534 = vpack.c.bf16 %v6529, %v6528
      %v6535 = vsel %vm554, %v6305, 0.0
      %6536 = vadd.xlane.f32.xlu0 %v6535
      %v6537 = vpop.xlane.xlu0 %6536
      %v6538 = vsel %vm554, %v6306, 0.0
      %6539 = vadd.xlane.f32.xlu0 %v6538
      %v6540 = vpop.xlane.xlu0 %6539
      %v6541 = vsel %vm554, %v6307, 0.0
      %6542 = vadd.xlane.f32.xlu0 %v6541
      %v6543 = vpop.xlane.xlu0 %6542
      %v6544 = vsel %vm554, %v6308, 0.0
      %6545 = vadd.xlane.f32.xlu0 %v6544
      %v6546 = vpop.xlane.xlu0 %6545
      %v6547 = vsel %vm554, %v6309, 0.0
      %6548 = vadd.xlane.f32.xlu0 %v6547
      %v6549 = vpop.xlane.xlu0 %6548
      %v6550 = vsel %vm554, %v6310, 0.0
      %6551 = vadd.xlane.f32.xlu0 %v6550
      %v6552 = vpop.xlane.xlu0 %6551
      %v6553 = vsel %vm554, %v6311, 0.0
      %6554 = vadd.xlane.f32.xlu0 %v6553
      %v6555 = vpop.xlane.xlu0 %6554
      %v6556 = vsel %vm554, %v6312, 0.0
      %6557 = vadd.xlane.f32.xlu0 %v6556
      %v6558 = vpop.xlane.xlu0 %6557
      %v6559 = vsel %vm554, %v6313, 0.0
      %6560 = vadd.xlane.f32.xlu0 %v6559
      %v6561 = vpop.xlane.xlu0 %6560
      %v6562 = vsel %vm554, %v6314, 0.0
      %6563 = vadd.xlane.f32.xlu0 %v6562
      %v6564 = vpop.xlane.xlu0 %6563
      %v6565 = vmul.f32 %v6537, %v6401
      %v6566 = vmul.f32 %v6540, %v6401
      %v6567 = vmul.f32 %v6543, %v6401
      %v6568 = vmul.f32 %v6546, %v6401
      %v6569 = vmul.f32 %v6549, %v6401
      %v6570 = vmul.f32 %v6552, %v6401
      %v6571 = vmul.f32 %v6555, %v6401
      %v6572 = vmul.f32 %v6558, %v6401
      %v6573 = vmul.f32 %v6561, %v6401
      %v6574 = vmul.f32 %v6564, %v6401
      %v6575 = vsub.f32 %v6305, %v6565
      %v6576 = vsub.f32 %v6306, %v6566
      %v6577 = vsub.f32 %v6307, %v6567
      %v6578 = vsub.f32 %v6308, %v6568
      %v6579 = vsub.f32 %v6309, %v6569
      %v6580 = vsub.f32 %v6310, %v6570
      %v6581 = vsub.f32 %v6311, %v6571
      %v6582 = vsub.f32 %v6312, %v6572
      %v6583 = vsub.f32 %v6313, %v6573
      %v6584 = vsub.f32 %v6314, %v6574
      %v6585 = vmul.f32 %v6575, %v6575
      %v6586 = vmul.f32 %v6576, %v6576
      %v6587 = vmul.f32 %v6577, %v6577
      %v6588 = vmul.f32 %v6578, %v6578
      %v6589 = vmul.f32 %v6579, %v6579
      %v6590 = vmul.f32 %v6580, %v6580
      %v6591 = vmul.f32 %v6581, %v6581
      %v6592 = vmul.f32 %v6582, %v6582
      %v6593 = vmul.f32 %v6583, %v6583
      %v6594 = vmul.f32 %v6584, %v6584
      %v6595 = vsel %vm554, %v6585, 0.0
      %6596 = vadd.xlane.f32.xlu0 %v6595
      %v6597 = vpop.xlane.xlu0 %6596
      %v6598 = vsel %vm554, %v6586, 0.0
      %6599 = vadd.xlane.f32.xlu0 %v6598
      %v6600 = vpop.xlane.xlu0 %6599
      %v6601 = vsel %vm554, %v6587, 0.0
      %6602 = vadd.xlane.f32.xlu0 %v6601
      %v6603 = vpop.xlane.xlu0 %6602
      %v6604 = vsel %vm554, %v6588, 0.0
      %6605 = vadd.xlane.f32.xlu0 %v6604
      %v6606 = vpop.xlane.xlu0 %6605
      %v6607 = vsel %vm554, %v6589, 0.0
      %6608 = vadd.xlane.f32.xlu0 %v6607
      %v6609 = vpop.xlane.xlu0 %6608
      %v6610 = vsel %vm554, %v6590, 0.0
      %6611 = vadd.xlane.f32.xlu0 %v6610
      %v6612 = vpop.xlane.xlu0 %6611
      %v6613 = vsel %vm554, %v6591, 0.0
      %6614 = vadd.xlane.f32.xlu0 %v6613
      %v6615 = vpop.xlane.xlu0 %6614
      %v6616 = vsel %vm554, %v6592, 0.0
      %6617 = vadd.xlane.f32.xlu0 %v6616
      %v6618 = vpop.xlane.xlu0 %6617
      %v6619 = vsel %vm554, %v6593, 0.0
      %6620 = vadd.xlane.f32.xlu0 %v6619
      %v6621 = vpop.xlane.xlu0 %6620
      %v6622 = vsel %vm554, %v6594, 0.0
      %6623 = vadd.xlane.f32.xlu0 %v6622
      %v6624 = vpop.xlane.xlu0 %6623
      %v6625 = vmul.f32 %v6597, %v6401
      %v6626 = vmul.f32 %v6600, %v6401
      %v6627 = vmul.f32 %v6603, %v6401
      %v6628 = vmul.f32 %v6606, %v6401
      %v6629 = vmul.f32 %v6609, %v6401
      %v6630 = vmul.f32 %v6612, %v6401
      %v6631 = vmul.f32 %v6615, %v6401
      %v6632 = vmul.f32 %v6618, %v6401
      %v6633 = vmul.f32 %v6621, %v6401
      %v6634 = vmul.f32 %v6624, %v6401
      %v6635 = vadd.f32 %v6625, 1e-06
      %v6636 = vadd.f32 %v6626, 1e-06
      %v6637 = vadd.f32 %v6627, 1e-06
      %v6638 = vadd.f32 %v6628, 1e-06
      %v6639 = vadd.f32 %v6629, 1e-06
      %v6640 = vadd.f32 %v6630, 1e-06
      %v6641 = vadd.f32 %v6631, 1e-06
      %v6642 = vadd.f32 %v6632, 1e-06
      %v6643 = vadd.f32 %v6633, 1e-06
      %v6644 = vadd.f32 %v6634, 1e-06
      %v6645 = vrsqrt.pop %v6635
      %v6646 = vrsqrt.pop %v6636
      %v6647 = vrsqrt.pop %v6637
      %v6648 = vrsqrt.pop %v6638
      %v6649 = vrsqrt.pop %v6639
      %v6650 = vrsqrt.pop %v6640
      %v6651 = vrsqrt.pop %v6641
      %v6652 = vrsqrt.pop %v6642
      %v6653 = vrsqrt.pop %v6643
      %v6654 = vrsqrt.pop %v6644
      %v6655 = vmul.f32 %v6575, %v6645
      %v6656 = vmul.f32 %v6576, %v6646
      %v6657 = vmul.f32 %v6577, %v6647
      %v6658 = vmul.f32 %v6578, %v6648
      %v6659 = vmul.f32 %v6579, %v6649
      %v6660 = vmul.f32 %v6580, %v6650
      %v6661 = vmul.f32 %v6581, %v6651
      %v6662 = vmul.f32 %v6582, %v6652
      %v6663 = vmul.f32 %v6583, %v6653
      %v6664 = vmul.f32 %v6584, %v6654
      %v6665 = vmul.f32 %v6655, %v6505
      %v6666 = vmul.f32 %v6656, %v6505
      %v6667 = vmul.f32 %v6657, %v6505
      %v6668 = vmul.f32 %v6658, %v6505
      %v6669 = vmul.f32 %v6659, %v6505
      %v6670 = vmul.f32 %v6660, %v6505
      %v6671 = vmul.f32 %v6661, %v6505
      %v6672 = vmul.f32 %v6662, %v6505
      %v6673 = vmul.f32 %v6663, %v6505
      %v6674 = vmul.f32 %v6664, %v6505
      %v6675 = vadd.f32 %v6665, %v6519
      %v6676 = vadd.f32 %v6666, %v6519
      %v6677 = vadd.f32 %v6667, %v6519
      %v6678 = vadd.f32 %v6668, %v6519
      %v6679 = vadd.f32 %v6669, %v6519
      %v6680 = vadd.f32 %v6670, %v6519
      %v6681 = vadd.f32 %v6671, %v6519
      %v6682 = vadd.f32 %v6672, %v6519
      %v6683 = vadd.f32 %v6673, %v6519
      %v6684 = vadd.f32 %v6674, %v6519
      %v6685 = vpack.c.bf16 %v6676, %v6675
      %v6686 = vpack.c.bf16 %v6678, %v6677
      %v6687 = vpack.c.bf16 %v6680, %v6679
      %v6688 = vpack.c.bf16 %v6682, %v6681
      %v6689 = vpack.c.bf16 %v6684, %v6683
      %v6690 = vld [vmem:[%s7] sm:$0xf]
      %v6691 = vld [vmem:[%s7 + $0x4] sm:$0xf]
      %v6692 = vld [vmem:[%s7 + $0x8] sm:$0xf]
      %v6693 = vld [vmem:[%s7 + $0xc] sm:$0xf]
      %v6694 = vld [vmem:[%s7 + $0x10] sm:$0xf]
      %v6695 = vld [vmem:[%s7 + $0x14] sm:$0xf]
      %v6696 = vld [vmem:[%s7 + $0x18] sm:$0xf]
      %v6697 = vld [vmem:[%s7 + $0x1c] sm:$0xf]
      %v6698 = vlaneseq
      %v6699 = vshrl.u32 %v6698, 7
      %v6700 = vsub.s32 0, %v6699
      %v6701 = vrot.slane %v5884, %v6700
      %v6710 = vunpack.c.l.b16 %v6690
      %v6711 = vunpack.c.l.b16 %v6691
      %v6712 = vunpack.c.l.b16 %v6692
      %v6713 = vunpack.c.l.b16 %v6693
      %v6714 = vunpack.c.l.b16 %v6694
      %v6715 = vunpack.c.l.b16 %v6695
      %v6716 = vunpack.c.l.b16 %v6696
      %v6717 = vunpack.c.l.b16 %v6697
      %v6718 = vpack.c.b16 %v6711, %v6710
      %v6719 = vpack.c.b16 %v6713, %v6712
      %v6720 = vpack.c.b16 %v6715, %v6714
      %v6721 = vpack.c.b16 %v6717, %v6716
      %v6727 = vsel %vm554, %v6530, 0
      %v6730 = vsel %vm554, %v6531, 0
      %v6733 = vsel %vm554, %v6532, 0
      %v6736 = vsel %vm554, %v6533, 0
      %v6739 = vsel %vm554, %v6534, 0
      %6741 = vmatprep.subr.bf16.mxu0 0
      %6742 = vmatpush1.bf16.msra.mxu0 %v6718
      %6743 = vmatprep.subr.bf16.mxu0 0
      %6744 = vmatpush1.bf16.msra.mxu0 %v6719
      %6745 = vmatprep.subr.bf16.mxu0 0
      %6746 = vmatpush1.bf16.msra.mxu0 %v6720
      %6747 = vmatprep.subr.bf16.mxu0 0
      %6748 = vmatpush1.bf16.msra.mxu0 %v6721
      %6749 = vmatprep.subr.bf16.mxu0 0
      %6750 = vmatpush1.bf16.msra.mxu0 0
      %6751 = vmatprep.subr.bf16.mxu0 0
      %6752 = vmatpush1.bf16.msra.mxu0 0
      %6753 = vmatprep.subr.bf16.mxu0 0
      %6754 = vmatpush1.bf16.msra.mxu0 0
      %6755 = vmatprep.subr.bf16.mxu0 0
      %6756 = vmatpush1.bf16.msra.mxu0 0
      %6757 = vmatprep.subr.bf16.mxu0 0
      %6758 = vmatpush1.bf16.msra.mxu0 0
      %6759 = vmatprep.subr.bf16.mxu0 0
      %6760 = vmatpush1.bf16.msra.mxu0 0
      %6761 = vmatprep.subr.bf16.mxu0 0
      %6762 = vmatpush1.bf16.msra.mxu0 0
      %6763 = vmatprep.subr.bf16.mxu0 0
      %6764 = vmatpush1.bf16.msra.mxu0 0
      %6765 = vmatprep.subr.bf16.mxu0 0
      %6766 = vmatpush1.bf16.msra.mxu0 0
      %6767 = vmatprep.subr.bf16.mxu0 0
      %6768 = vmatpush1.bf16.msra.mxu0 0
      %6769 = vmatprep.subr.bf16.mxu0 0
      %6770 = vmatpush1.bf16.msra.mxu0 0
      %6771 = vmatprep.subr.bf16.mxu0 0
      %6772 = vmatpush1.bf16.msra.mxu0 0
      %6773 = vmatprep.mubr.bf16.mxu0 0
      %6774 = vmatmul.mubr.bf16.gmra.mrb[0].mxu0 %v6727
      %v6775 = vpop.f32.mrb[0].mxu0
      %v6776 = vadd.f32 %v6701, %v6775
      %v6777 = vpop.f32.mrb[0].mxu0
      %v6778 = vpop.f32.mrb[0].mxu0
      %v6779 = vadd.f32 %v6701, %v6778
      %v6780 = vpop.f32.mrb[0].mxu0
      %6781 = vmatprep.mubr.bf16.mxu0 0
      %6782 = vmatmul.mubr.bf16.gmra.mrb[0].mxu0 %v6730
      %v6783 = vpop.f32.mrb[0].mxu0
      %v6784 = vadd.f32 %v6701, %v6783
      %v6785 = vpop.f32.mrb[0].mxu0
      %v6786 = vpop.f32.mrb[0].mxu0
      %v6787 = vadd.f32 %v6701, %v6786
      %v6788 = vpop.f32.mrb[0].mxu0
      %6789 = vmatprep.mubr.bf16.mxu0 0
      %6790 = vmatmul.mubr.bf16.gmra.mrb[0].mxu0 %v6733
      %v6791 = vpop.f32.mrb[0].mxu0
      %v6792 = vadd.f32 %v6701, %v6791
      %v6793 = vpop.f32.mrb[0].mxu0
      %v6794 = vpop.f32.mrb[0].mxu0
      %v6795 = vadd.f32 %v6701, %v6794
      %v6796 = vpop.f32.mrb[0].mxu0
      %6797 = vmatprep.mubr.bf16.mxu0 0
      %6798 = vmatmul.mubr.bf16.gmra.mrb[0].mxu0 %v6736
      %v6799 = vpop.f32.mrb[0].mxu0
      %v6800 = vadd.f32 %v6701, %v6799
      %v6801 = vpop.f32.mrb[0].mxu0
      %v6802 = vpop.f32.mrb[0].mxu0
      %v6803 = vadd.f32 %v6701, %v6802
      %v6804 = vpop.f32.mrb[0].mxu0
      %6805 = vmatprep.mubr.bf16.mxu0 0
      %6806 = vmatmul.mubr.bf16.gmra.mrb[0].mxu0 %v6739
      %v6807 = vpop.f32.mrb[0].mxu0
      %v6808 = vadd.f32 %v6701, %v6807
      %v6809 = vpop.f32.mrb[0].mxu0
      %v6810 = vpop.f32.mrb[0].mxu0
      %v6811 = vadd.f32 %v6701, %v6810
      %v6812 = vpop.f32.mrb[0].mxu0
      %6813 = vdwg.mxu0
      %v6815 = vsel %vm554, %v6685, 0
      %v6818 = vsel %vm554, %v6686, 0
      %v6821 = vsel %vm554, %v6687, 0
      %v6824 = vsel %vm554, %v6688, 0
      %v6827 = vsel %vm554, %v6689, 0
      %6829 = vmatprep.subr.bf16.mxu0 0
      %6830 = vmatpush1.bf16.msra.mxu0 %v6718
      %6831 = vmatprep.subr.bf16.mxu0 0
      %6832 = vmatpush1.bf16.msra.mxu0 %v6719
      %6833 = vmatprep.subr.bf16.mxu0 0
      %6834 = vmatpush1.bf16.msra.mxu0 %v6720
      %6835 = vmatprep.subr.bf16.mxu0 0
      %6836 = vmatpush1.bf16.msra.mxu0 %v6721
      %6837 = vmatprep.subr.bf16.mxu0 0
      %6838 = vmatpush1.bf16.msra.mxu0 0
      %6839 = vmatprep.subr.bf16.mxu0 0
      %6840 = vmatpush1.bf16.msra.mxu0 0
      %6841 = vmatprep.subr.bf16.mxu0 0
      %6842 = vmatpush1.bf16.msra.mxu0 0
      %6843 = vmatprep.subr.bf16.mxu0 0
      %6844 = vmatpush1.bf16.msra.mxu0 0
      %6845 = vmatprep.subr.bf16.mxu0 0
      %6846 = vmatpush1.bf16.msra.mxu0 0
      %6847 = vmatprep.subr.bf16.mxu0 0
      %6848 = vmatpush1.bf16.msra.mxu0 0
      %6849 = vmatprep.subr.bf16.mxu0 0
      %6850 = vmatpush1.bf16.msra.mxu0 0
      %6851 = vmatprep.subr.bf16.mxu0 0
      %6852 = vmatpush1.bf16.msra.mxu0 0
      %6853 = vmatprep.subr.bf16.mxu0 0
      %6854 = vmatpush1.bf16.msra.mxu0 0
      %6855 = vmatprep.subr.bf16.mxu0 0
      %6856 = vmatpush1.bf16.msra.mxu0 0
      %6857 = vmatprep.subr.bf16.mxu0 0
      %6858 = vmatpush1.bf16.msra.mxu0 0
      %6859 = vmatprep.subr.bf16.mxu0 0
      %6860 = vmatpush1.bf16.msra.mxu0 0
      %6861 = vmatprep.mubr.bf16.mxu0 0
      %6862 = vmatmul.mubr.bf16.gmra.mrb[0].mxu0 %v6815
      %v6863 = vpop.f32.mrb[0].mxu0
      %v6864 = vadd.f32 %v6701, %v6863
      %v6865 = vpop.f32.mrb[0].mxu0
      %v6866 = vpop.f32.mrb[0].mxu0
      %v6867 = vadd.f32 %v6701, %v6866
      %v6868 = vpop.f32.mrb[0].mxu0
      %6869 = vmatprep.mubr.bf16.mxu0 0
      %6870 = vmatmul.mubr.bf16.gmra.mrb[0].mxu0 %v6818
      %v6871 = vpop.f32.mrb[0].mxu0
      %v6872 = vadd.f32 %v6701, %v6871
      %v6873 = vpop.f32.mrb[0].mxu0
      %v6874 = vpop.f32.mrb[0].mxu0
      %v6875 = vadd.f32 %v6701, %v6874
      %v6876 = vpop.f32.mrb[0].mxu0
      %6877 = vmatprep.mubr.bf16.mxu0 0
      %6878 = vmatmul.mubr.bf16.gmra.mrb[0].mxu0 %v6821
      %v6879 = vpop.f32.mrb[0].mxu0
      %v6880 = vadd.f32 %v6701, %v6879
      %v6881 = vpop.f32.mrb[0].mxu0
      %v6882 = vpop.f32.mrb[0].mxu0
      %v6883 = vadd.f32 %v6701, %v6882
      %v6884 = vpop.f32.mrb[0].mxu0
      %6885 = vmatprep.mubr.bf16.mxu0 0
      %6886 = vmatmul.mubr.bf16.gmra.mrb[0].mxu0 %v6824
      %v6887 = vpop.f32.mrb[0].mxu0
      %v6888 = vadd.f32 %v6701, %v6887
      %v6889 = vpop.f32.mrb[0].mxu0
      %v6890 = vpop.f32.mrb[0].mxu0
      %v6891 = vadd.f32 %v6701, %v6890
      %v6892 = vpop.f32.mrb[0].mxu0
      %6893 = vmatprep.mubr.bf16.mxu0 0
      %6894 = vmatmul.mubr.bf16.gmra.mrb[0].mxu0 %v6827
      %v6895 = vpop.f32.mrb[0].mxu0
      %v6896 = vadd.f32 %v6701, %v6895
      %v6897 = vpop.f32.mrb[0].mxu0
      %v6898 = vpop.f32.mrb[0].mxu0
      %v6899 = vadd.f32 %v6701, %v6898
      %v6900 = vpop.f32.mrb[0].mxu0
      %6901 = vdwg.mxu0
      %v6902 = vpack.c.bf16 %v6779, %v6776
      %v6903 = vpack.c.bf16 %v6787, %v6784
      %v6904 = vpack.c.bf16 %v6795, %v6792
      %v6905 = vpack.c.bf16 %v6803, %v6800
      %v6906 = vpack.c.bf16 %v6811, %v6808
      %v6907 = vpack.c.bf16 %v6334, %v6333
      %v6908 = vpack.c.bf16 %v6336, %v6335
      %v6909 = vpack.c.bf16 %v6338, %v6337
      %v6910 = vpack.c.bf16 %v6340, %v6339
      %v6911 = vpack.c.bf16 %v6342, %v6341
      %6912 = vxpose.xlu0.c.b16.start [1/8] %v6902, 128
      %6913 = vxpose.xlu0.c.b16.cont [2/8] %v6903, 128
      %6914 = vxpose.xlu0.c.b16.cont [3/8] %v6904, 128
      %6915 = vxpose.xlu0.c.b16.cont [4/8] %v6905, 128
      %6916 = vxpose.xlu0.c.b16.cont [5/8] %v6906, 128
      %6917 = vxpose.xlu0.c.b16.cont [6/8] 0, 128
      %6918 = vxpose.xlu0.c.b16.cont [7/8] 0, 128
      %6919 = vxpose.xlu0.c.b16.end [8/8] 0, 128
      %v6920 = vpop.trf.xlu0
      %v6921 = vpop.trf.xlu0
      %v6922 = vpop.trf.xlu0
      %v6923 = vpop.trf.xlu0
      %v6924 = vpop.trf.xlu0
      %v6925 = vpop.trf.xlu0
      %v6926 = vpop.trf.xlu0
      %v6927 = vpop.trf.xlu0
      %6933 = vrot.lane.b32.xlu0 %v6907, 64
      %v6934 = vpop.permute.xlu0 %6933
      %6935 = vrot.lane.b32.xlu0 %v6908, 64
      %v6936 = vpop.permute.xlu0 %6935
      %6937 = vrot.lane.b32.xlu0 %v6909, 64
      %v6938 = vpop.permute.xlu0 %6937
      %6939 = vrot.lane.b32.xlu0 %v6910, 64
      %v6940 = vpop.permute.xlu0 %6939
      %6941 = vrot.lane.b32.xlu0 %v6911, 64
      %v6942 = vpop.permute.xlu0 %6941
      %vm6948 = vcmask 654336
      %v6950 = vsel %vm6948, %v6920, 0
      %v6953 = vsel %vm6948, %v6921, 0
      %v6956 = vsel %vm6948, %v6922, 0
      %v6959 = vsel %vm6948, %v6923, 0
      %6961 = vmatprep.subr.bf16.mxu0 0
      %6962 = vmatpush1.bf16.msra.mxu0 %v6934
      %6963 = vmatprep.subr.bf16.mxu0 0
      %6964 = vmatpush1.bf16.msra.mxu0 %v6936
      %6965 = vmatprep.subr.bf16.mxu0 0
      %6966 = vmatpush1.bf16.msra.mxu0 %v6938
      %6967 = vmatprep.subr.bf16.mxu0 0
      %6968 = vmatpush1.bf16.msra.mxu0 %v6940
      %6969 = vmatprep.subr.bf16.mxu0 0
      %6970 = vmatpush1.bf16.msra.mxu0 %v6942
      %6971 = vmatprep.subr.bf16.mxu0 0
      %6972 = vmatpush1.bf16.msra.mxu0 0
      %6973 = vmatprep.subr.bf16.mxu0 0
      %6974 = vmatpush1.bf16.msra.mxu0 0
      %6975 = vmatprep.subr.bf16.mxu0 0
      %6976 = vmatpush1.bf16.msra.mxu0 0
      %6977 = vmatprep.subr.bf16.mxu0 0
      %6978 = vmatpush1.bf16.msra.mxu0 0
      %6979 = vmatprep.subr.bf16.mxu0 0
      %6980 = vmatpush1.bf16.msra.mxu0 0
      %6981 = vmatprep.subr.bf16.mxu0 0
      %6982 = vmatpush1.bf16.msra.mxu0 0
      %6983 = vmatprep.subr.bf16.mxu0 0
      %6984 = vmatpush1.bf16.msra.mxu0 0
      %6985 = vmatprep.subr.bf16.mxu0 0
      %6986 = vmatpush1.bf16.msra.mxu0 0
      %6987 = vmatprep.subr.bf16.mxu0 0
      %6988 = vmatpush1.bf16.msra.mxu0 0
      %6989 = vmatprep.subr.bf16.mxu0 0
      %6990 = vmatpush1.bf16.msra.mxu0 0
      %6991 = vmatprep.subr.bf16.mxu0 0
      %6992 = vmatpush1.bf16.msra.mxu0 0
      %6993 = vmatprep.mubr.bf16.mxu0 0
      %6994 = vmatmul.mubr.bf16.gmra.mrb[0].mxu0 %v6950
      %v6995 = vpop.f32.mrb[0].mxu0
      %v6996 = vadd.f32 0.0, %v6995
      %v6997 = vpop.f32.mrb[0].mxu0
      %v6998 = vpop.f32.mrb[0].mxu0
      %v6999 = vadd.f32 0.0, %v6998
      %v7000 = vpop.f32.mrb[0].mxu0
      %7001 = vmatprep.mubr.bf16.mxu0 0
      %7002 = vmatmul.mubr.bf16.gmra.mrb[0].mxu0 %v6953
      %v7003 = vpop.f32.mrb[0].mxu0
      %v7004 = vadd.f32 0.0, %v7003
      %v7005 = vpop.f32.mrb[0].mxu0
      %v7006 = vpop.f32.mrb[0].mxu0
      %v7007 = vadd.f32 0.0, %v7006
      %v7008 = vpop.f32.mrb[0].mxu0
      %7009 = vmatprep.mubr.bf16.mxu0 0
      %7010 = vmatmul.mubr.bf16.gmra.mrb[0].mxu0 %v6956
      %v7011 = vpop.f32.mrb[0].mxu0
      %v7012 = vadd.f32 0.0, %v7011
      %v7013 = vpop.f32.mrb[0].mxu0
      %v7014 = vpop.f32.mrb[0].mxu0
      %v7015 = vadd.f32 0.0, %v7014
      %v7016 = vpop.f32.mrb[0].mxu0
      %7017 = vmatprep.mubr.bf16.mxu0 0
      %7018 = vmatmul.mubr.bf16.gmra.mrb[0].mxu0 %v6959
      %v7019 = vpop.f32.mrb[0].mxu0
      %v7020 = vadd.f32 0.0, %v7019
      %v7021 = vpop.f32.mrb[0].mxu0
      %v7022 = vpop.f32.mrb[0].mxu0
      %v7023 = vadd.f32 0.0, %v7022
      %v7024 = vpop.f32.mrb[0].mxu0
      %7025 = vdwg.mxu0
      %v7026 = vmul.f32 %v6996, 0.125
      %v7027 = vmul.f32 %v6999, 0.125
      %v7028 = vmul.f32 %v7004, 0.125
      %v7029 = vmul.f32 %v7007, 0.125
      %v7030 = vmul.f32 %v7012, 0.125
      %v7031 = vmul.f32 %v7015, 0.125
      %v7032 = vmul.f32 %v7020, 0.125
      %v7033 = vmul.f32 %v7023, 0.125
      %v7034 = vsel %vm554, %v7026, -inf
      %7035 = vmax.xlane.f32.xlu0 %v7034
      %v7036 = vpop.xlane.xlu0 %7035
      %v7037 = vsel %vm554, %v7027, -inf
      %7038 = vmax.xlane.f32.xlu0 %v7037
      %v7039 = vpop.xlane.xlu0 %7038
      %v7040 = vsel %vm554, %v7028, -inf
      %7041 = vmax.xlane.f32.xlu0 %v7040
      %v7042 = vpop.xlane.xlu0 %7041
      %v7043 = vsel %vm554, %v7029, -inf
      %7044 = vmax.xlane.f32.xlu0 %v7043
      %v7045 = vpop.xlane.xlu0 %7044
      %v7046 = vsel %vm554, %v7030, -inf
      %7047 = vmax.xlane.f32.xlu0 %v7046
      %v7048 = vpop.xlane.xlu0 %7047
      %v7049 = vsel %vm554, %v7031, -inf
      %7050 = vmax.xlane.f32.xlu0 %v7049
      %v7051 = vpop.xlane.xlu0 %7050
      %v7052 = vsel %vm554, %v7032, -inf
      %7053 = vmax.xlane.f32.xlu0 %v7052
      %v7054 = vpop.xlane.xlu0 %7053
      %v7055 = vsel %vm554, %v7033, -inf
      %7056 = vmax.xlane.f32.xlu0 %v7055
      %v7057 = vpop.xlane.xlu0 %7056
      %v7058 = vsub.f32 %v7026, %v7036
      %v7059 = vsub.f32 %v7027, %v7039
      %v7060 = vsub.f32 %v7028, %v7042
      %v7061 = vsub.f32 %v7029, %v7045
      %v7062 = vsub.f32 %v7030, %v7048
      %v7063 = vsub.f32 %v7031, %v7051
      %v7064 = vsub.f32 %v7032, %v7054
      %v7065 = vsub.f32 %v7033, %v7057
      %v7066 = vmul.f32 %v7058, 1.442695
      %v7067 = vpow.pop %v7066
      %v7068 = vmul.f32 %v7059, 1.442695
      %v7069 = vpow.pop %v7068
      %v7070 = vmul.f32 %v7060, 1.442695
      %v7071 = vpow.pop %v7070
      %v7072 = vmul.f32 %v7061, 1.442695
      %v7073 = vpow.pop %v7072
      %v7074 = vmul.f32 %v7062, 1.442695
      %v7075 = vpow.pop %v7074
      %v7076 = vmul.f32 %v7063, 1.442695
      %v7077 = vpow.pop %v7076
      %v7078 = vmul.f32 %v7064, 1.442695
      %v7079 = vpow.pop %v7078
      %v7080 = vmul.f32 %v7065, 1.442695
      %v7081 = vpow.pop %v7080
      %v7082 = vsel %vm554, %v7067, 0.0
      %7083 = vadd.xlane.f32.xlu0 %v7082
      %v7084 = vpop.xlane.xlu0 %7083
      %v7085 = vsel %vm554, %v7069, 0.0
      %7086 = vadd.xlane.f32.xlu0 %v7085
      %v7087 = vpop.xlane.xlu0 %7086
      %v7088 = vsel %vm554, %v7071, 0.0
      %7089 = vadd.xlane.f32.xlu0 %v7088
      %v7090 = vpop.xlane.xlu0 %7089
      %v7091 = vsel %vm554, %v7073, 0.0
      %7092 = vadd.xlane.f32.xlu0 %v7091
      %v7093 = vpop.xlane.xlu0 %7092
      %v7094 = vsel %vm554, %v7075, 0.0
      %7095 = vadd.xlane.f32.xlu0 %v7094
      %v7096 = vpop.xlane.xlu0 %7095
      %v7097 = vsel %vm554, %v7077, 0.0
      %7098 = vadd.xlane.f32.xlu0 %v7097
      %v7099 = vpop.xlane.xlu0 %7098
      %v7100 = vsel %vm554, %v7079, 0.0
      %7101 = vadd.xlane.f32.xlu0 %v7100
      %v7102 = vpop.xlane.xlu0 %7101
      %v7103 = vsel %vm554, %v7081, 0.0
      %7104 = vadd.xlane.f32.xlu0 %v7103
      %v7105 = vpop.xlane.xlu0 %7104
      %v7106 = vrcp.pop %v7084
      %v7107 = vrcp.pop %v7087
      %v7108 = vrcp.pop %v7090
      %v7109 = vrcp.pop %v7093
      %v7110 = vrcp.pop %v7096
      %v7111 = vrcp.pop %v7099
      %v7112 = vrcp.pop %v7102
      %v7113 = vrcp.pop %v7105
      %v7114 = vmul.f32 %v7067, %v7106
      %v7115 = vmul.f32 %v7069, %v7107
      %v7116 = vmul.f32 %v7071, %v7108
      %v7117 = vmul.f32 %v7073, %v7109
      %v7118 = vmul.f32 %v7075, %v7110
      %v7119 = vmul.f32 %v7077, %v7111
      %v7120 = vmul.f32 %v7079, %v7112
      %v7121 = vmul.f32 %v7081, %v7113
      %v7122 = vpack.c.bf16 %v7115, %v7114
      %v7123 = vpack.c.bf16 %v7117, %v7116
      %v7124 = vpack.c.bf16 %v7119, %v7118
      %v7125 = vpack.c.bf16 %v7121, %v7120
      %v7127 = vsel %vm554, %v6934, 0
      %v7130 = vsel %vm554, %v6936, 0
      %v7133 = vsel %vm554, %v6938, 0
      %v7136 = vsel %vm554, %v6940, 0
      %v7139 = vsel %vm554, %v6942, 0
      %v7142 = vsel %vm554, %v7122, 0
      %v7145 = vsel %vm554, %v7123, 0
      %v7148 = vsel %vm554, %v7124, 0
      %v7151 = vsel %vm554, %v7125, 0
      %7153 = vmatprep.subr.bf16.mxu0 0
      %7154 = vmatpush1.bf16.xpose.msra.mxu0 %v7142
      %7155 = vmatprep.subr.bf16.mxu0 0
      %7156 = vmatpush1.bf16.xpose.msra.mxu0 %v7145
      %7157 = vmatprep.subr.bf16.mxu0 0
      %7158 = vmatpush1.bf16.xpose.msra.mxu0 %v7148
      %7159 = vmatprep.subr.bf16.mxu0 0
      %7160 = vmatpush1.bf16.xpose.msra.mxu0 %v7151
      %7161 = vmatprep.subr.bf16.mxu0 0
      %7162 = vmatpush1.bf16.xpose.msra.mxu0 0
      %7163 = vmatprep.subr.bf16.mxu0 0
      %7164 = vmatpush1.bf16.xpose.msra.mxu0 0
      %7165 = vmatprep.subr.bf16.mxu0 0
      %7166 = vmatpush1.bf16.xpose.msra.mxu0 0
      %7167 = vmatprep.subr.bf16.mxu0 0
      %7168 = vmatpush1.bf16.xpose.msra.mxu0 0
      %7169 = vmatprep.subr.bf16.mxu0 0
      %7170 = vmatpush1.bf16.xpose.msra.mxu0 0
      %7171 = vmatprep.subr.bf16.mxu0 0
      %7172 = vmatpush1.bf16.xpose.msra.mxu0 0
      %7173 = vmatprep.subr.bf16.mxu0 0
      %7174 = vmatpush1.bf16.xpose.msra.mxu0 0
      %7175 = vmatprep.subr.bf16.mxu0 0
      %7176 = vmatpush1.bf16.xpose.msra.mxu0 0
      %7177 = vmatprep.subr.bf16.mxu0 0
      %7178 = vmatpush1.bf16.xpose.msra.mxu0 0
      %7179 = vmatprep.subr.bf16.mxu0 0
      %7180 = vmatpush1.bf16.xpose.msra.mxu0 0
      %7181 = vmatprep.subr.bf16.mxu0 0
      %7182 = vmatpush1.bf16.xpose.msra.mxu0 0
      %7183 = vmatprep.subr.bf16.mxu0 0
      %7184 = vmatpush1.bf16.xpose.msra.mxu0 0
      %7185 = vmatprep.mubr.bf16.mxu0 0
      %7186 = vmatmul.mubr.bf16.gmra.mrb[0].mxu0 %v7127
      %v7187 = vpop.f32.mrb[0].mxu0
      %v7188 = vadd.f32 %v5865, %v7187
      %v7189 = vpop.f32.mrb[0].mxu0
      %v7190 = vpop.f32.mrb[0].mxu0
      %v7191 = vadd.f32 %v5866, %v7190
      %v7192 = vpop.f32.mrb[0].mxu0
      %7193 = vmatprep.mubr.bf16.mxu0 0
      %7194 = vmatmul.mubr.bf16.gmra.mrb[0].mxu0 %v7130
      %v7195 = vpop.f32.mrb[0].mxu0
      %v7196 = vadd.f32 %v5867, %v7195
      %v7197 = vpop.f32.mrb[0].mxu0
      %v7198 = vpop.f32.mrb[0].mxu0
      %v7199 = vadd.f32 %v5868, %v7198
      %v7200 = vpop.f32.mrb[0].mxu0
      %7201 = vmatprep.mubr.bf16.mxu0 0
      %7202 = vmatmul.mubr.bf16.gmra.mrb[0].mxu0 %v7133
      %v7203 = vpop.f32.mrb[0].mxu0
      %v7204 = vadd.f32 %v5869, %v7203
      %v7205 = vpop.f32.mrb[0].mxu0
      %v7206 = vpop.f32.mrb[0].mxu0
      %v7207 = vadd.f32 %v5870, %v7206
      %v7208 = vpop.f32.mrb[0].mxu0
      %7209 = vmatprep.mubr.bf16.mxu0 0
      %7210 = vmatmul.mubr.bf16.gmra.mrb[0].mxu0 %v7136
      %v7211 = vpop.f32.mrb[0].mxu0
      %v7212 = vadd.f32 %v5871, %v7211
      %v7213 = vpop.f32.mrb[0].mxu0
      %v7214 = vpop.f32.mrb[0].mxu0
      %v7215 = vadd.f32 %v5872, %v7214
      %v7216 = vpop.f32.mrb[0].mxu0
      %7217 = vmatprep.mubr.bf16.mxu0 0
      %7218 = vmatmul.mubr.bf16.gmra.mrb[0].mxu0 %v7139
      %v7219 = vpop.f32.mrb[0].mxu0
      %v7220 = vadd.f32 %v5873, %v7219
      %v7221 = vpop.f32.mrb[0].mxu0
      %v7222 = vpop.f32.mrb[0].mxu0
      %v7223 = vadd.f32 %v5874, %v7222
      %v7224 = vpop.f32.mrb[0].mxu0
      %7225 = vdwg.mxu0
      %v7226 = vpack.c.bf16 %v6867, %v6864
      %v7227 = vpack.c.bf16 %v6875, %v6872
      %v7228 = vpack.c.bf16 %v6883, %v6880
      %v7229 = vpack.c.bf16 %v6891, %v6888
      %v7230 = vpack.c.bf16 %v6899, %v6896
      %v7231 = vpack.c.bf16 %v6362, %v6361
      %v7232 = vpack.c.bf16 %v6364, %v6363
      %v7233 = vpack.c.bf16 %v6366, %v6365
      %v7234 = vpack.c.bf16 %v6368, %v6367
      %v7235 = vpack.c.bf16 %v6370, %v6369
      %7236 = vxpose.xlu0.c.b16.start [1/8] %v7226, 128
      %7237 = vxpose.xlu0.c.b16.cont [2/8] %v7227, 128
      %7238 = vxpose.xlu0.c.b16.cont [3/8] %v7228, 128
      %7239 = vxpose.xlu0.c.b16.cont [4/8] %v7229, 128
      %7240 = vxpose.xlu0.c.b16.cont [5/8] %v7230, 128
      %7241 = vxpose.xlu0.c.b16.cont [6/8] 0, 128
      %7242 = vxpose.xlu0.c.b16.cont [7/8] 0, 128
      %7243 = vxpose.xlu0.c.b16.end [8/8] 0, 128
      %v7244 = vpop.trf.xlu0
      %v7245 = vpop.trf.xlu0
      %v7246 = vpop.trf.xlu0
      %v7247 = vpop.trf.xlu0
      %v7248 = vpop.trf.xlu0
      %v7249 = vpop.trf.xlu0
      %v7250 = vpop.trf.xlu0
      %v7251 = vpop.trf.xlu0
      %7257 = vrot.lane.b32.xlu0 %v7231, 64
      %v7258 = vpop.permute.xlu0 %7257
      %7259 = vrot.lane.b32.xlu0 %v7232, 64
      %v7260 = vpop.permute.xlu0 %7259
      %7261 = vrot.lane.b32.xlu0 %v7233, 64
      %v7262 = vpop.permute.xlu0 %7261
      %7263 = vrot.lane.b32.xlu0 %v7234, 64
      %v7264 = vpop.permute.xlu0 %7263
      %7265 = vrot.lane.b32.xlu0 %v7235, 64
      %v7266 = vpop.permute.xlu0 %7265
      %v7273 = vsel %vm6948, %v7244, 0
      %v7276 = vsel %vm6948, %v7245, 0
      %v7279 = vsel %vm6948, %v7246, 0
      %v7282 = vsel %vm6948, %v7247, 0
      %7284 = vmatprep.subr.bf16.mxu0 0
      %7285 = vmatpush1.bf16.msra.mxu0 %v7258
      %7286 = vmatprep.subr.bf16.mxu0 0
      %7287 = vmatpush1.bf16.msra.mxu0 %v7260
      %7288 = vmatprep.subr.bf16.mxu0 0
      %7289 = vmatpush1.bf16.msra.mxu0 %v7262
      %7290 = vmatprep.subr.bf16.mxu0 0
      %7291 = vmatpush1.bf16.msra.mxu0 %v7264
      %7292 = vmatprep.subr.bf16.mxu0 0
      %7293 = vmatpush1.bf16.msra.mxu0 %v7266
      %7294 = vmatprep.subr.bf16.mxu0 0
      %7295 = vmatpush1.bf16.msra.mxu0 0
      %7296 = vmatprep.subr.bf16.mxu0 0
      %7297 = vmatpush1.bf16.msra.mxu0 0
      %7298 = vmatprep.subr.bf16.mxu0 0
      %7299 = vmatpush1.bf16.msra.mxu0 0
      %7300 = vmatprep.subr.bf16.mxu0 0
      %7301 = vmatpush1.bf16.msra.mxu0 0
      %7302 = vmatprep.subr.bf16.mxu0 0
      %7303 = vmatpush1.bf16.msra.mxu0 0
      %7304 = vmatprep.subr.bf16.mxu0 0
      %7305 = vmatpush1.bf16.msra.mxu0 0
      %7306 = vmatprep.subr.bf16.mxu0 0
      %7307 = vmatpush1.bf16.msra.mxu0 0
      %7308 = vmatprep.subr.bf16.mxu0 0
      %7309 = vmatpush1.bf16.msra.mxu0 0
      %7310 = vmatprep.subr.bf16.mxu0 0
      %7311 = vmatpush1.bf16.msra.mxu0 0
      %7312 = vmatprep.subr.bf16.mxu0 0
      %7313 = vmatpush1.bf16.msra.mxu0 0
      %7314 = vmatprep.subr.bf16.mxu0 0
      %7315 = vmatpush1.bf16.msra.mxu0 0
      %7316 = vmatprep.mubr.bf16.mxu0 0
      %7317 = vmatmul.mubr.bf16.gmra.mrb[0].mxu0 %v7273
      %v7318 = vpop.f32.mrb[0].mxu0
      %v7319 = vadd.f32 0.0, %v7318
      %v7320 = vpop.f32.mrb[0].mxu0
      %v7321 = vpop.f32.mrb[0].mxu0
      %v7322 = vadd.f32 0.0, %v7321
      %v7323 = vpop.f32.mrb[0].mxu0
      %7324 = vmatprep.mubr.bf16.mxu0 0
      %7325 = vmatmul.mubr.bf16.gmra.mrb[0].mxu0 %v7276
      %v7326 = vpop.f32.mrb[0].mxu0
      %v7327 = vadd.f32 0.0, %v7326
      %v7328 = vpop.f32.mrb[0].mxu0
      %v7329 = vpop.f32.mrb[0].mxu0
      %v7330 = vadd.f32 0.0, %v7329
      %v7331 = vpop.f32.mrb[0].mxu0
      %7332 = vmatprep.mubr.bf16.mxu0 0
      %7333 = vmatmul.mubr.bf16.gmra.mrb[0].mxu0 %v7279
      %v7334 = vpop.f32.mrb[0].mxu0
      %v7335 = vadd.f32 0.0, %v7334
      %v7336 = vpop.f32.mrb[0].mxu0
      %v7337 = vpop.f32.mrb[0].mxu0
      %v7338 = vadd.f32 0.0, %v7337
      %v7339 = vpop.f32.mrb[0].mxu0
      %7340 = vmatprep.mubr.bf16.mxu0 0
      %7341 = vmatmul.mubr.bf16.gmra.mrb[0].mxu0 %v7282
      %v7342 = vpop.f32.mrb[0].mxu0
      %v7343 = vadd.f32 0.0, %v7342
      %v7344 = vpop.f32.mrb[0].mxu0
      %v7345 = vpop.f32.mrb[0].mxu0
      %v7346 = vadd.f32 0.0, %v7345
      %v7347 = vpop.f32.mrb[0].mxu0
      %7348 = vdwg.mxu0
      %v7349 = vmul.f32 %v7319, 0.125
      %v7350 = vmul.f32 %v7322, 0.125
      %v7351 = vmul.f32 %v7327, 0.125
      %v7352 = vmul.f32 %v7330, 0.125
      %v7353 = vmul.f32 %v7335, 0.125
      %v7354 = vmul.f32 %v7338, 0.125
      %v7355 = vmul.f32 %v7343, 0.125
      %v7356 = vmul.f32 %v7346, 0.125
      %v7357 = vsel %vm554, %v7349, -inf
      %7358 = vmax.xlane.f32.xlu0 %v7357
      %v7359 = vpop.xlane.xlu0 %7358
      %v7360 = vsel %vm554, %v7350, -inf
      %7361 = vmax.xlane.f32.xlu0 %v7360
      %v7362 = vpop.xlane.xlu0 %7361
      %v7363 = vsel %vm554, %v7351, -inf
      %7364 = vmax.xlane.f32.xlu0 %v7363
      %v7365 = vpop.xlane.xlu0 %7364
      %v7366 = vsel %vm554, %v7352, -inf
      %7367 = vmax.xlane.f32.xlu0 %v7366
      %v7368 = vpop.xlane.xlu0 %7367
      %v7369 = vsel %vm554, %v7353, -inf
      %7370 = vmax.xlane.f32.xlu0 %v7369
      %v7371 = vpop.xlane.xlu0 %7370
      %v7372 = vsel %vm554, %v7354, -inf
      %7373 = vmax.xlane.f32.xlu0 %v7372
      %v7374 = vpop.xlane.xlu0 %7373
      %v7375 = vsel %vm554, %v7355, -inf
      %7376 = vmax.xlane.f32.xlu0 %v7375
      %v7377 = vpop.xlane.xlu0 %7376
      %v7378 = vsel %vm554, %v7356, -inf
      %7379 = vmax.xlane.f32.xlu0 %v7378
      %v7380 = vpop.xlane.xlu0 %7379
      %v7381 = vsub.f32 %v7349, %v7359
      %v7382 = vsub.f32 %v7350, %v7362
      %v7383 = vsub.f32 %v7351, %v7365
      %v7384 = vsub.f32 %v7352, %v7368
      %v7385 = vsub.f32 %v7353, %v7371
      %v7386 = vsub.f32 %v7354, %v7374
      %v7387 = vsub.f32 %v7355, %v7377
      %v7388 = vsub.f32 %v7356, %v7380
      %v7389 = vmul.f32 %v7381, 1.442695
      %v7390 = vpow.pop %v7389
      %v7391 = vmul.f32 %v7382, 1.442695
      %v7392 = vpow.pop %v7391
      %v7393 = vmul.f32 %v7383, 1.442695
      %v7394 = vpow.pop %v7393
      %v7395 = vmul.f32 %v7384, 1.442695
      %v7396 = vpow.pop %v7395
      %v7397 = vmul.f32 %v7385, 1.442695
      %v7398 = vpow.pop %v7397
      %v7399 = vmul.f32 %v7386, 1.442695
      %v7400 = vpow.pop %v7399
      %v7401 = vmul.f32 %v7387, 1.442695
      %v7402 = vpow.pop %v7401
      %v7403 = vmul.f32 %v7388, 1.442695
      %v7404 = vpow.pop %v7403
      %v7405 = vsel %vm554, %v7390, 0.0
      %7406 = vadd.xlane.f32.xlu0 %v7405
      %v7407 = vpop.xlane.xlu0 %7406
      %v7408 = vsel %vm554, %v7392, 0.0
      %7409 = vadd.xlane.f32.xlu0 %v7408
      %v7410 = vpop.xlane.xlu0 %7409
      %v7411 = vsel %vm554, %v7394, 0.0
      %7412 = vadd.xlane.f32.xlu0 %v7411
      %v7413 = vpop.xlane.xlu0 %7412
      %v7414 = vsel %vm554, %v7396, 0.0
      %7415 = vadd.xlane.f32.xlu0 %v7414
      %v7416 = vpop.xlane.xlu0 %7415
      %v7417 = vsel %vm554, %v7398, 0.0
      %7418 = vadd.xlane.f32.xlu0 %v7417
      %v7419 = vpop.xlane.xlu0 %7418
      %v7420 = vsel %vm554, %v7400, 0.0
      %7421 = vadd.xlane.f32.xlu0 %v7420
      %v7422 = vpop.xlane.xlu0 %7421
      %v7423 = vsel %vm554, %v7402, 0.0
      %7424 = vadd.xlane.f32.xlu0 %v7423
      %v7425 = vpop.xlane.xlu0 %7424
      %v7426 = vsel %vm554, %v7404, 0.0
      %7427 = vadd.xlane.f32.xlu0 %v7426
      %v7428 = vpop.xlane.xlu0 %7427
      %v7429 = vrcp.pop %v7407
      %v7430 = vrcp.pop %v7410
      %v7431 = vrcp.pop %v7413
      %v7432 = vrcp.pop %v7416
      %v7433 = vrcp.pop %v7419
      %v7434 = vrcp.pop %v7422
      %v7435 = vrcp.pop %v7425
      %v7436 = vrcp.pop %v7428
      %v7437 = vmul.f32 %v7390, %v7429
      %v7438 = vmul.f32 %v7392, %v7430
      %v7439 = vmul.f32 %v7394, %v7431
      %v7440 = vmul.f32 %v7396, %v7432
      %v7441 = vmul.f32 %v7398, %v7433
      %v7442 = vmul.f32 %v7400, %v7434
      %v7443 = vmul.f32 %v7402, %v7435
      %v7444 = vmul.f32 %v7404, %v7436
      %v7445 = vpack.c.bf16 %v7438, %v7437
      %v7446 = vpack.c.bf16 %v7440, %v7439
      %v7447 = vpack.c.bf16 %v7442, %v7441
      %v7448 = vpack.c.bf16 %v7444, %v7443
      %v7450 = vsel %vm554, %v7258, 0
      %v7453 = vsel %vm554, %v7260, 0
      %v7456 = vsel %vm554, %v7262, 0
      %v7459 = vsel %vm554, %v7264, 0
      %v7462 = vsel %vm554, %v7266, 0
      %v7465 = vsel %vm554, %v7445, 0
      %v7468 = vsel %vm554, %v7446, 0
      %v7471 = vsel %vm554, %v7447, 0
      %v7474 = vsel %vm554, %v7448, 0
      %7476 = vmatprep.subr.bf16.mxu0 0
      %7477 = vmatpush1.bf16.xpose.msra.mxu0 %v7465
      %7478 = vmatprep.subr.bf16.mxu0 0
      %7479 = vmatpush1.bf16.xpose.msra.mxu0 %v7468
      %7480 = vmatprep.subr.bf16.mxu0 0
      %7481 = vmatpush1.bf16.xpose.msra.mxu0 %v7471
      %7482 = vmatprep.subr.bf16.mxu0 0
      %7483 = vmatpush1.bf16.xpose.msra.mxu0 %v7474
      %7484 = vmatprep.subr.bf16.mxu0 0
      %7485 = vmatpush1.bf16.xpose.msra.mxu0 0
      %7486 = vmatprep.subr.bf16.mxu0 0
      %7487 = vmatpush1.bf16.xpose.msra.mxu0 0
      %7488 = vmatprep.subr.bf16.mxu0 0
      %7489 = vmatpush1.bf16.xpose.msra.mxu0 0
      %7490 = vmatprep.subr.bf16.mxu0 0
      %7491 = vmatpush1.bf16.xpose.msra.mxu0 0
      %7492 = vmatprep.subr.bf16.mxu0 0
      %7493 = vmatpush1.bf16.xpose.msra.mxu0 0
      %7494 = vmatprep.subr.bf16.mxu0 0
      %7495 = vmatpush1.bf16.xpose.msra.mxu0 0
      %7496 = vmatprep.subr.bf16.mxu0 0
      %7497 = vmatpush1.bf16.xpose.msra.mxu0 0
      %7498 = vmatprep.subr.bf16.mxu0 0
      %7499 = vmatpush1.bf16.xpose.msra.mxu0 0
      %7500 = vmatprep.subr.bf16.mxu0 0
      %7501 = vmatpush1.bf16.xpose.msra.mxu0 0
      %7502 = vmatprep.subr.bf16.mxu0 0
      %7503 = vmatpush1.bf16.xpose.msra.mxu0 0
      %7504 = vmatprep.subr.bf16.mxu0 0
      %7505 = vmatpush1.bf16.xpose.msra.mxu0 0
      %7506 = vmatprep.subr.bf16.mxu0 0
      %7507 = vmatpush1.bf16.xpose.msra.mxu0 0
      %7508 = vmatprep.mubr.bf16.mxu0 0
      %7509 = vmatmul.mubr.bf16.gmra.mrb[0].mxu0 %v7450
      %v7510 = vpop.f32.mrb[0].mxu0
      %v7511 = vadd.f32 %v4708, %v7510
      %v7512 = vpop.f32.mrb[0].mxu0
      %v7513 = vpop.f32.mrb[0].mxu0
      %v7514 = vadd.f32 %v4709, %v7513
      %v7515 = vpop.f32.mrb[0].mxu0
      %7516 = vmatprep.mubr.bf16.mxu0 0
      %7517 = vmatmul.mubr.bf16.gmra.mrb[0].mxu0 %v7453
      %v7518 = vpop.f32.mrb[0].mxu0
      %v7519 = vadd.f32 %v4710, %v7518
      %v7520 = vpop.f32.mrb[0].mxu0
      %v7521 = vpop.f32.mrb[0].mxu0
      %v7522 = vadd.f32 %v4711, %v7521
      %v7523 = vpop.f32.mrb[0].mxu0
      %7524 = vmatprep.mubr.bf16.mxu0 0
      %7525 = vmatmul.mubr.bf16.gmra.mrb[0].mxu0 %v7456
      %v7526 = vpop.f32.mrb[0].mxu0
      %v7527 = vadd.f32 %v4712, %v7526
      %v7528 = vpop.f32.mrb[0].mxu0
      %v7529 = vpop.f32.mrb[0].mxu0
      %v7530 = vadd.f32 %v4713, %v7529
      %v7531 = vpop.f32.mrb[0].mxu0
      %7532 = vmatprep.mubr.bf16.mxu0 0
      %7533 = vmatmul.mubr.bf16.gmra.mrb[0].mxu0 %v7459
      %v7534 = vpop.f32.mrb[0].mxu0
      %v7535 = vadd.f32 %v4714, %v7534
      %v7536 = vpop.f32.mrb[0].mxu0
      %v7537 = vpop.f32.mrb[0].mxu0
      %v7538 = vadd.f32 %v4715, %v7537
      %v7539 = vpop.f32.mrb[0].mxu0
      %7540 = vmatprep.mubr.bf16.mxu0 0
      %7541 = vmatmul.mubr.bf16.gmra.mrb[0].mxu0 %v7462
      %v7542 = vpop.f32.mrb[0].mxu0
      %v7543 = vadd.f32 %v4716, %v7542
      %v7544 = vpop.f32.mrb[0].mxu0
      %v7545 = vpop.f32.mrb[0].mxu0
      %v7546 = vadd.f32 %v4717, %v7545
      %v7547 = vpop.f32.mrb[0].mxu0
      %7548 = vdwg.mxu0
      %7559 = vrot.lane.b32.xlu0 %v7511, 64
      %v7560 = vpop.permute.xlu0 %7559
      %7561 = vrot.lane.b32.xlu0 %v7514, 64
      %v7562 = vpop.permute.xlu0 %7561
      %7563 = vrot.lane.b32.xlu0 %v7519, 64
      %v7564 = vpop.permute.xlu0 %7563
      %7565 = vrot.lane.b32.xlu0 %v7522, 64
      %v7566 = vpop.permute.xlu0 %7565
      %7567 = vrot.lane.b32.xlu0 %v7527, 64
      %v7568 = vpop.permute.xlu0 %7567
      %7569 = vrot.lane.b32.xlu0 %v7530, 64
      %v7570 = vpop.permute.xlu0 %7569
      %7571 = vrot.lane.b32.xlu0 %v7535, 64
      %v7572 = vpop.permute.xlu0 %7571
      %7573 = vrot.lane.b32.xlu0 %v7538, 64
      %v7574 = vpop.permute.xlu0 %7573
      %7575 = vrot.lane.b32.xlu0 %v7543, 64
      %v7576 = vpop.permute.xlu0 %7575
      %7577 = vrot.lane.b32.xlu0 %v7546, 64
      %v7578 = vpop.permute.xlu0 %7577
      %v7589 = vsel %vm554, %v7188, %v7560
      %v7590 = vsel %vm554, %v7191, %v7562
      %v7591 = vsel %vm554, %v7196, %v7564
      %v7592 = vsel %vm554, %v7199, %v7566
      %v7593 = vsel %vm554, %v7204, %v7568
      %v7594 = vsel %vm554, %v7207, %v7570
      %v7595 = vsel %vm554, %v7212, %v7572
      %v7596 = vsel %vm554, %v7215, %v7574
      %v7597 = vsel %vm554, %v7220, %v7576
      %v7598 = vsel %vm554, %v7223, %v7578
      %7599 = vst [vmem:[%s394] sm:$0xff] %v7589
      %7600 = vst [vmem:[%s394 + $0x8] sm:$0xff] %v7590
      %7601 = vst [vmem:[%s394 + $0x10] sm:$0xff] %v7591
      %7602 = vst [vmem:[%s394 + $0x18] sm:$0xff] %v7592
      %7603 = vst [vmem:[%s394 + $0x20] sm:$0xff] %v7593
      %7604 = vst [vmem:[%s394 + $0x28] sm:$0xff] %v7594
      %7605 = vst [vmem:[%s394 + $0x30] sm:$0xff] %v7595
      %7606 = vst [vmem:[%s394 + $0x38] sm:$0xff] %v7596
      %7607 = vst [vmem:[%s394 + $0x40] sm:$0xff] %v7597
      %7608 = vst [vmem:[%s394 + $0x48] sm:$0xff] %v7598
      %7614 = vrot.lane.b32.xlu0 %v7226, 64
      %v7615 = vpop.permute.xlu0 %7614
      %7616 = vrot.lane.b32.xlu0 %v7227, 64
      %v7617 = vpop.permute.xlu0 %7616
      %7618 = vrot.lane.b32.xlu0 %v7228, 64
      %v7619 = vpop.permute.xlu0 %7618
      %7620 = vrot.lane.b32.xlu0 %v7229, 64
      %v7621 = vpop.permute.xlu0 %7620
      %7622 = vrot.lane.b32.xlu0 %v7230, 64
      %v7623 = vpop.permute.xlu0 %7622
      %v7626 = vsel %vm554, %v6902, %v7615
      %v7630 = vsel %vm554, %v6903, %v7617
      %v7634 = vsel %vm554, %v6904, %v7619
      %v7638 = vsel %vm554, %v6905, %v7621
      %v7642 = vsel %vm554, %v6906, %v7623
      %v7644 = vld [vmem:[%s8] sm:$0xf]
      %v7645 = vld [vmem:[%s8 + $0x4] sm:$0xf]
      %v7646 = vld [vmem:[%s8 + $0x8] sm:$0xf]
      %v7647 = vld [vmem:[%s8 + $0xc] sm:$0xf]
      %v7648 = vld [vmem:[%s8 + $0x10] sm:$0xf]
      %v7649 = vld [vmem:[%s8 + $0x14] sm:$0xf]
      %v7650 = vld [vmem:[%s8 + $0x18] sm:$0xf]
      %v7651 = vld [vmem:[%s8 + $0x1c] sm:$0xf]
      %v7652 = vld [vmem:[%s8 + $0x20] sm:$0xf]
      %v7653 = vld [vmem:[%s8 + $0x24] sm:$0xf]
      %v7654 = vld [vmem:[%s8 + $0x28] sm:$0xf]
      %v7655 = vld [vmem:[%s8 + $0x2c] sm:$0xf]
      %v7656 = vld [vmem:[%s8 + $0x30] sm:$0xf]
      %v7657 = vld [vmem:[%s8 + $0x34] sm:$0xf]
      %v7658 = vld [vmem:[%s8 + $0x38] sm:$0xf]
      %v7659 = vld [vmem:[%s8 + $0x3c] sm:$0xf]
      %v7660 = vlaneseq
      %v7661 = vshrl.u32 %v7660, 7
      %v7662 = vsub.s32 0, %v7661
      %v7663 = vrot.slane %v5887, %v7662
      %v7680 = vunpack.c.l.b16 %v7644
      %v7681 = vunpack.c.l.b16 %v7645
      %v7682 = vunpack.c.l.b16 %v7646
      %v7683 = vunpack.c.l.b16 %v7647
      %v7684 = vunpack.c.l.b16 %v7648
      %v7685 = vunpack.c.l.b16 %v7649
      %v7686 = vunpack.c.l.b16 %v7650
      %v7687 = vunpack.c.l.b16 %v7651
      %v7688 = vunpack.c.l.b16 %v7652
      %v7689 = vunpack.c.l.b16 %v7653
      %v7690 = vunpack.c.l.b16 %v7654
      %v7691 = vunpack.c.l.b16 %v7655
      %v7692 = vunpack.c.l.b16 %v7656
      %v7693 = vunpack.c.l.b16 %v7657
      %v7694 = vunpack.c.l.b16 %v7658
      %v7695 = vunpack.c.l.b16 %v7659
      %v7696 = vpack.c.b16 %v7681, %v7680
      %v7697 = vpack.c.b16 %v7683, %v7682
      %v7698 = vpack.c.b16 %v7685, %v7684
      %v7699 = vpack.c.b16 %v7687, %v7686
      %v7700 = vpack.c.b16 %v7689, %v7688
      %v7701 = vpack.c.b16 %v7691, %v7690
      %v7702 = vpack.c.b16 %v7693, %v7692
      %v7703 = vpack.c.b16 %v7695, %v7694
      %7712 = vmatprep.subr.bf16.mxu0 0
      %7713 = vmatpush1.bf16.msra.mxu0 %v7696
      %7714 = vmatprep.subr.bf16.mxu0 0
      %7715 = vmatpush1.bf16.msra.mxu0 %v7697
      %7716 = vmatprep.subr.bf16.mxu0 0
      %7717 = vmatpush1.bf16.msra.mxu0 %v7698
      %7718 = vmatprep.subr.bf16.mxu0 0
      %7719 = vmatpush1.bf16.msra.mxu0 %v7699
      %7720 = vmatprep.subr.bf16.mxu0 0
      %7721 = vmatpush1.bf16.msra.mxu0 %v7700
      %7722 = vmatprep.subr.bf16.mxu0 0
      %7723 = vmatpush1.bf16.msra.mxu0 %v7701
      %7724 = vmatprep.subr.bf16.mxu0 0
      %7725 = vmatpush1.bf16.msra.mxu0 %v7702
      %7726 = vmatprep.subr.bf16.mxu0 0
      %7727 = vmatpush1.bf16.msra.mxu0 %v7703
      %7728 = vmatprep.subr.bf16.mxu0 0
      %7729 = vmatpush1.bf16.msra.mxu0 0
      %7730 = vmatprep.subr.bf16.mxu0 0
      %7731 = vmatpush1.bf16.msra.mxu0 0
      %7732 = vmatprep.subr.bf16.mxu0 0
      %7733 = vmatpush1.bf16.msra.mxu0 0
      %7734 = vmatprep.subr.bf16.mxu0 0
      %7735 = vmatpush1.bf16.msra.mxu0 0
      %7736 = vmatprep.subr.bf16.mxu0 0
      %7737 = vmatpush1.bf16.msra.mxu0 0
      %7738 = vmatprep.subr.bf16.mxu0 0
      %7739 = vmatpush1.bf16.msra.mxu0 0
      %7740 = vmatprep.subr.bf16.mxu0 0
      %7741 = vmatpush1.bf16.msra.mxu0 0
      %7742 = vmatprep.subr.bf16.mxu0 0
      %7743 = vmatpush1.bf16.msra.mxu0 0
      %7744 = vmatprep.mubr.bf16.mxu0 0
      %7745 = vmatmul.mubr.bf16.gmra.mrb[0].mxu0 %v7626
      %v7746 = vpop.f32.mrb[0].mxu0
      %v7747 = vadd.f32 %v7663, %v7746
      %v7748 = vpop.f32.mrb[0].mxu0
      %v7749 = vpop.f32.mrb[0].mxu0
      %v7750 = vadd.f32 %v7663, %v7749
      %v7751 = vpop.f32.mrb[0].mxu0
      %7752 = vmatprep.mubr.bf16.mxu0 0
      %7753 = vmatmul.mubr.bf16.gmra.mrb[0].mxu0 %v7630
      %v7754 = vpop.f32.mrb[0].mxu0
      %v7755 = vadd.f32 %v7663, %v7754
      %v7756 = vpop.f32.mrb[0].mxu0
      %v7757 = vpop.f32.mrb[0].mxu0
      %v7758 = vadd.f32 %v7663, %v7757
      %v7759 = vpop.f32.mrb[0].mxu0
      %7760 = vmatprep.mubr.bf16.mxu0 0
      %7761 = vmatmul.mubr.bf16.gmra.mrb[0].mxu0 %v7634
      %v7762 = vpop.f32.mrb[0].mxu0
      %v7763 = vadd.f32 %v7663, %v7762
      %v7764 = vpop.f32.mrb[0].mxu0
      %v7765 = vpop.f32.mrb[0].mxu0
      %v7766 = vadd.f32 %v7663, %v7765
      %v7767 = vpop.f32.mrb[0].mxu0
      %7768 = vmatprep.mubr.bf16.mxu0 0
      %7769 = vmatmul.mubr.bf16.gmra.mrb[0].mxu0 %v7638
      %v7770 = vpop.f32.mrb[0].mxu0
      %v7771 = vadd.f32 %v7663, %v7770
      %v7772 = vpop.f32.mrb[0].mxu0
      %v7773 = vpop.f32.mrb[0].mxu0
      %v7774 = vadd.f32 %v7663, %v7773
      %v7775 = vpop.f32.mrb[0].mxu0
      %7776 = vmatprep.mubr.bf16.mxu0 0
      %7777 = vmatmul.mubr.bf16.gmra.mrb[0].mxu0 %v7642
      %v7778 = vpop.f32.mrb[0].mxu0
      %v7779 = vadd.f32 %v7663, %v7778
      %v7780 = vpop.f32.mrb[0].mxu0
      %v7781 = vpop.f32.mrb[0].mxu0
      %v7782 = vadd.f32 %v7663, %v7781
      %v7783 = vpop.f32.mrb[0].mxu0
      %7784 = vdwg.mxu0
      %v7796 = vrot.slane %v431, 3
      %v7797 = vrot.slane %v432, 3
      %v7798 = vsel %vm4676, %v7796, %v7797
      %v7799 = vrot.slane %v433, 3
      %v7800 = vsel %vm4676, %v7797, %v7799
      %v7801 = vrot.slane %v434, 3
      %v7802 = vsel %vm4676, %v7799, %v7801
      %v7803 = vrot.slane %v435, 3
      %v7804 = vsel %vm4676, %v7801, %v7803
      %v7805 = vrot.slane %v436, 3
      %v7806 = vsel %vm4676, %v7803, %v7805
      %v7807 = vrot.slane %v437, 3
      %v7808 = vsel %vm4676, %v7805, %v7807
      %v7809 = vrot.slane %v438, 3
      %v7810 = vsel %vm4676, %v7807, %v7809
      %v7811 = vrot.slane %v439, 3
      %v7812 = vsel %vm4676, %v7809, %v7811
      %v7813 = vrot.slane %v440, 3
      %v7814 = vsel %vm4676, %v7811, %v7813
      %v7815 = vrot.slane %v441, 3
      %v7816 = vsel %vm4676, %v7813, %v7815
      %v7827 = vadd.f32 %v7747, %v7798
      %v7828 = vadd.f32 %v7750, %v7800
      %v7829 = vadd.f32 %v7755, %v7802
      %v7830 = vadd.f32 %v7758, %v7804
      %v7831 = vadd.f32 %v7763, %v7806
      %v7832 = vadd.f32 %v7766, %v7808
      %v7833 = vadd.f32 %v7771, %v7810
      %v7834 = vadd.f32 %v7774, %v7812
      %v7835 = vadd.f32 %v7779, %v7814
      %v7836 = vadd.f32 %v7782, %v7816
      %7837 = vst.msk [vmem:[%s399] sm:$0xff] %vm554, %v7827
      %7838 = vst.msk [vmem:[%s399 + $0x8] sm:$0xff] %vm554, %v7828
      %7839 = vst.msk [vmem:[%s399 + $0x10] sm:$0xff] %vm554, %v7829
      %7840 = vst.msk [vmem:[%s399 + $0x18] sm:$0xff] %vm554, %v7830
      %7841 = vst.msk [vmem:[%s399 + $0x20] sm:$0xff] %vm554, %v7831
      %7842 = vst.msk [vmem:[%s399 + $0x28] sm:$0xff] %vm554, %v7832
      %7843 = vst.msk [vmem:[%s399 + $0x30] sm:$0xff] %vm554, %v7833
      %7844 = vst.msk [vmem:[%s399 + $0x38] sm:$0xff] %vm554, %v7834
      %7845 = vst.msk [vmem:[%s399 + $0x40] sm:$0xff] %vm554, %v7835
      %7846 = vst.msk [vmem:[%s399 + $0x48] sm:$0xff] %vm554, %v7836
      %p7847 = scmp.lt.s32.totalorder %s23, 1
      %s7848 = scalar_select %p7847, %s23, 1
      %s7849 = smul.addr %s7848, 10
      %s7850 = smul.addr %s7849, 8
      %s7851 = scalar_lea.vmem %s10, %s7850
      %p7852 = scmp.lt.s32.totalorder %s23, 1
      %s7853 = scalar_select %p7852, %s23, 1
      %s7854 = smul.addr %s7853, 10
      %s7855 = smul.addr %s7854, 8
      %s7856 = scalar_lea.vmem %s11, %s7855
      // Predicated region
      $region61: #{bie_forward.1} parent=59 // pred_check
        %p7857 = pneg %p256
      $region62: #{bie_forward.1} parent=59 // pred_check_branch
        %7859 = sbr.rel (%p7857) target = $region64
      $region63: #{bie_forward.1} parent=59 // pred_region
        _
      $region64: #{bie_forward.1} parent=59 // pred_fallthru
        _
      // Predicated region
      $region65: #{bie_forward.1} parent=59 // pred_check
        %p7860 = pneg %p282
      $region66: #{bie_forward.1} parent=59 // pred_check_branch
        %7862 = sbr.rel (%p7860) target = $region68
      $region67: #{bie_forward.1} parent=59 // pred_region
        _
      $region68: #{bie_forward.1} parent=59 // pred_fallthru
        _
    $region60: #{bie_forward.1} parent=5 // pred_fallthru
      _
    %p7863 = scmp.le.s32.totalorder 2, %s18
    // Predicated region
    $region69: #{bie_forward.1} parent=5 // pred_check
      %p7864 = pneg %p7863
    $region70: #{bie_forward.1} parent=5 // pred_check_branch
      %7866 = sbr.rel (%p7864) target = $region72
    $region71: #{bie_forward.1} parent=5 // pred_region
      %s7867 = ssub.s32 %s18, 2
      // Predicated region
      $region73: #{bie_forward.1} parent=71 // pred_check
        %p7868 = pneg %p262
      $region74: #{bie_forward.1} parent=71 // pred_check_branch
        %7870 = sbr.rel (%p7868) target = $region76
      $region75: #{bie_forward.1} parent=71 // pred_region
        %p7871 = scmp.lt.s32.totalorder %s24, 1
        %s7872 = scalar_select %p7871, %s24, 1
        %s7873 = smul.addr %s7872, 10
        %s7874 = smul.addr %s7873, 8
        %s7875 = scalar_lea.vmem %s10, %s7874
      $region76: #{bie_forward.1} parent=71 // pred_fallthru
        _
      // Predicated region
      $region77: #{bie_forward.1} parent=71 // pred_check
        %p7876 = pneg %p288
      $region78: #{bie_forward.1} parent=71 // pred_check_branch
        %7878 = sbr.rel (%p7876) target = $region80
      $region79: #{bie_forward.1} parent=71 // pred_region
        %p7879 = scmp.lt.s32.totalorder %s24, 1
        %s7880 = scalar_select %p7879, %s24, 1
        %s7881 = smul.addr %s7880, 10
        %s7882 = smul.addr %s7881, 8
        %s7883 = scalar_lea.vmem %s11, %s7882
      $region80: #{bie_forward.1} parent=71 // pred_fallthru
        _
    $region72: #{bie_forward.1} parent=5 // pred_fallthru
      _
  $region6: #{bie_forward.1} parent=0 // loop_footer
    %s22 = sadd.s32 1, %s18
  $region7: #{bie_forward.1} parent=0 // loop_footer_branch
    %17 = sbr.rel target = $region3
  $region8: #{bie_forward.1} parent=0 // loop_exit
    _

</llo_original>
